<compile_context>
chip_gen: v7x
topology: tpu7x:2x2x1
jax: 0.10.0
libtpu: 0.0.40
codegen_flags: <defaults>
</compile_context>

<pallas_src>
import math
from functools import partial

import jax
import jax.numpy as jnp
from jax.experimental import pallas as pl
from jax.experimental.pallas import tpu as pltpu

# ----------------------------- small config --------------------------------
IMG_RES = 16
PATCH = 8
C_IN = 3
D_VIS = 32            # vision_width == visual_encoder.embed_dim
N_HEADS_V = 4
MLP_V = 4 * D_VIS
DEPTH_V = 2

D_TXT = 32            # BERT hidden size
N_HEADS_T = 4
FFN_T = 4 * D_TXT
DEPTH_T = 2
VOCAB = 64
SEQ_LEN = 8

PAD_ID, CLS_ID, MASK_ID = 0, 1, 2
LN_EPS_V = 1e-6
LN_EPS_T = 1e-12
NEG_PAD = -1e4        # BERT-style additive key-padding mask
OUT_LANES = 128       # lane-dense argmax output width


# ------------------------- in-kernel building blocks ------------------------
def _bdot(x, w):
    """MXU matmul: bf16 operands, f32 accumulation."""
    return jnp.dot(x.astype(jnp.bfloat16), w.astype(jnp.bfloat16),
                   preferred_element_type=jnp.float32)


def _layernorm(x, g, b, eps):
    # One-pass LN: derive mean/var from sum(x) and sum(x*x) (one fewer pass /
    # fewer XLU reductions than mean followed by mean((x-mu)^2)).
    d = x.shape[-1]
    s1 = jnp.sum(x, axis=-1, keepdims=True)
    s2 = jnp.sum(x * x, axis=-1, keepdims=True)
    mu = s1 * (1.0 / d)
    var = s2 * (1.0 / d) - mu * mu
    return (x - mu) * jax.lax.rsqrt(var + eps) * g + b


def _gelu(x):
    # TODO(synk): HF BERT/ViT use exact erf-GELU; tanh approximation kept for robust Mosaic lowering.
    return jax.nn.gelu(x, approximate=True)


def _softmax_rows(s):
    s = s - jnp.max(s, axis=-1, keepdims=True)
    e = jnp.exp(s)
    return e * pl.reciprocal(jnp.sum(e, axis=-1, keepdims=True), approx=True)


def _self_attn(x, mask, qkv_w, qkv_b, o_w, o_b, n_heads):
    """Self-attention with a single fused QKV projection (lane-dense matmuls).

    Per-head score/value matmuls use static lane slices of the fused [*, 3D]
    result; heads are re-joined by one lane-concat + one output projection.
    """
    d = qkv_w.shape[-1] // 3
    dh = d // n_heads
    scale = 1.0 / math.sqrt(dh)
    qkv = _bdot(x, qkv_w) + qkv_b                    # [S, 3D] f32, ONE matmul
    ctx = []
    for h in range(n_heads):
        qh = qkv[:, h * dh:(h + 1) * dh]
        kh = qkv[:, d + h * dh:d + (h + 1) * dh]
        vh = qkv[:, 2 * d + h * dh:2 * d + (h + 1) * dh]
        s = jax.lax.dot_general(qh.astype(jnp.bfloat16), kh.astype(jnp.bfloat16),
                                (((1,), (1,)), ((), ())),
                                preferred_element_type=jnp.float32) * scale
        if mask is not None:
            s = s + mask                              # [1, S] key-padding mask
        p = _softmax_rows(s)
        ctx.append(jnp.dot(p.astype(jnp.bfloat16), vh.astype(jnp.bfloat16),
                           preferred_element_type=jnp.float32))
    ctx = jnp.concatenate(ctx, axis=-1)               # [S, D] lane-dense
    return _bdot(ctx, o_w) + o_b


def _cross_attn(x, k_src, v_src, q_w, q_b, o_w, o_b, n_heads):
    """Cross-attention; K/V were projected ONCE per layer (encoder kernel)."""
    d = q_w.shape[-1]
    dh = d // n_heads
    scale = 1.0 / math.sqrt(dh)
    q = _bdot(x, q_w) + q_b                           # [S, D], one matmul
    kb = k_src.astype(jnp.bfloat16)                   # [T, D]
    vb = v_src.astype(jnp.bfloat16)
    ctx = []
    for h in range(n_heads):
        qh = q[:, h * dh:(h + 1) * dh].astype(jnp.bfloat16)
        kh = kb[:, h * dh:(h + 1) * dh]
        vh = vb[:, h * dh:(h + 1) * dh]
        s = jax.lax.dot_general(qh, kh, (((1,), (1,)), ((), ())),
                                preferred_element_type=jnp.float32) * scale
        p = _softmax_rows(s)                          # image_atts all-ones -> no mask
        ctx.append(jnp.dot(p.astype(jnp.bfloat16), vh,
                           preferred_element_type=jnp.float32))
    ctx = jnp.concatenate(ctx, axis=-1)
    # TODO(synk): pad the image-token axis (T=5 here, 577->640 at real size) to
    # a lane multiple with a -inf mask for lane-dense score reductions.
    return _bdot(ctx, o_w) + o_b


# -------------------- fused ViT + cross-K/V precompute kernel ----------------
def _encoder_kernel(patch_ref, pw_ref, pre_ref,
                    ln1_g, ln1_b, qkv_w, qkv_b, o_w, o_b,
                    ln2_g, ln2_b, fc1_w, fc1_b, fc2_w, fc2_b,
                    lnf_g, lnf_b,
                    cak_w, cak_b, cav_w, cav_b,
                    cak_ref, cav_ref, *, depth, depth_t, n_heads, eps):
    # Patch embedding (Conv2d as a matmul over (C,ph,pw)-flattened patches).
    # Row 0 of patch_ref is zeros (CLS slot); pre_ref folds in cls token /
    # conv bias / positional embedding.
    x = _bdot(patch_ref[...], pw_ref[...]) + pre_ref[...]
    for l in range(depth):
        h = _layernorm(x, ln1_g[l], ln1_b[l], eps)
        x = x + _self_attn(h, None, qkv_w[l], qkv_b[l], o_w[l], o_b[l], n_heads)
        h = _layernorm(x, ln2_g[l], ln2_b[l], eps)
        h = _gelu(_bdot(h, fc1_w[l]) + fc1_b[l])
        x = x + _bdot(h, fc2_w[l]) + fc2_b[l]
    img = _layernorm(x, lnf_g[...], lnf_b[...], eps)          # [T, D_VIS]
    # Cross-attention K/V projected ONCE per BERT layer from the single image
    # encoding; shared by every masked variant of the gridded BERT kernel.
    for l in range(depth_t):
        cak_ref[l] = _bdot(img, cak_w[l]) + cak_b[l]
        cav_ref[l] = _bdot(img, cav_w[l]) + cav_b[l]


# -------------- per-variant BERT-MLM + argmax kernel (grid over Bm) ----------
def _bert_kernel(wl_ref, x_ref, kpm_ref, cak_ref, cav_ref,
                 emb_ln_g, emb_ln_b,
                 sa_qkv_w, sa_qkv_b, sa_o_w, sa_o_b, sa_ln_g, sa_ln_b,
                 ca_q_w, ca_q_b, ca_o_w, ca_o_b, ca_ln_g, ca_ln_b,
                 ff1_w, ff1_b, ff2_w, ff2_b, ff_ln_g, ff_ln_b,
                 mlm_w, mlm_b, mlm_ln_g, mlm_ln_b, dec_w, dec_b,
                 idx_ref, *, depth, n_heads, eps):
    i = pl.program_id(0)                      # variant index; masked pos = i + 1
    active = (i + 1) < wl_ref[0]              # skip padding-only variants

    @pl.when(active)
    def _run():
        x = _layernorm(x_ref[0], emb_ln_g[...], emb_ln_b[...], eps)   # [S, D]
        kpm = kpm_ref[...]                                            # [1, S]
        for l in range(depth):
            a = _self_attn(x, kpm, sa_qkv_w[l], sa_qkv_b[l],
                           sa_o_w[l], sa_o_b[l], n_heads)
            x = _layernorm(x + a, sa_ln_g[l], sa_ln_b[l], eps)
            c = _cross_attn(x, cak_ref[l], cav_ref[l], ca_q_w[l], ca_q_b[l],
                            ca_o_w[l], ca_o_b[l], n_heads)
            x = _layernorm(x + c, ca_ln_g[l], ca_ln_b[l], eps)
            h = _gelu(_bdot(x, ff1_w[l]) + ff1_b[l])
            h = _bdot(h, ff2_w[l]) + ff2_b[l]
            x = _layernorm(x + h, ff_ln_g[l], ff_ln_b[l], eps)
        # MLM head + vocab decoder only on the single masked row (logits[0][i+1]).
        pos = i + 1
        sel = (jax.lax.broadcasted_iota(jnp.int32, x.shape, 0) == pos
               ).astype(jnp.float32)
        xm = jnp.sum(x * sel, axis=0, keepdims=True)                  # [1, D]
        h = _gelu(_bdot(xm, mlm_w[...]) + mlm_b[...])
        h = _layernorm(h, mlm_ln_g[...], mlm_ln_b[...], eps)
        # TODO(synk): at real vocab sizes, tile dec_w over a grid axis with a
        # running (max, argmax) accumulator instead of full [1, V] logits.
        logits = _bdot(h, dec_w[...]) + dec_b[...]                    # [1, V]
        # argmax directly on logits (softmax is monotone); first-max tie-break.
        vmax = jnp.max(logits, axis=-1, keepdims=True)
        ids = jax.lax.broadcasted_iota(jnp.int32, logits.shape, 1)
        cand = jnp.where(logits >= vmax, ids, logits.shape[-1])
        idx = jnp.min(cand, axis=-1, keepdims=True)                   # [1, 1] int32
        idx_ref[...] = jnp.broadcast_to(idx[None, :, :], (1, 1, OUT_LANES))

    @pl.when(jnp.logical_not(active))
    def _skip():
        idx_ref[...] = jnp.zeros((1, 1, OUT_LANES), jnp.int32)


# ----------------------------- model glue (jitted) ---------------------------
def encoder_cross_kv(image, pv, pt):
    """NCHW image -> per-BERT-layer cross-attention K/V, one fused pallas_call."""
    B, C, H, W = image.shape                     # B == 1
    nh, nw = H // PATCH, W // PATCH
    x = image.reshape(B, C, nh, PATCH, nw, PATCH)
    x = x.transpose(0, 2, 4, 1, 3, 5).reshape(B * nh * nw, C * PATCH * PATCH)
    # zero row for the CLS slot so the patch matmul covers all token rows
    patches_ext = jnp.concatenate([jnp.zeros((1, x.shape[1]), jnp.float32), x], axis=0)
    # fold cls token / conv bias / positional embedding into one additive term
    pre_add = jnp.concatenate([pv['cls'] + pv['pos'][:1],
                               pv['patch_b'] + pv['pos'][1:]], axis=0)
    t_v = pre_add.shape[0]
    kernel = partial(_encoder_kernel, depth=DEPTH_V, depth_t=DEPTH_T,
                     n_heads=N_HEADS_V, eps=LN_EPS_V)
    return pl.pallas_call(
        kernel,
        out_shape=(jax.ShapeDtypeStruct((DEPTH_T, t_v, D_TXT), jnp.float32),
                   jax.ShapeDtypeStruct((DEPTH_T, t_v, D_TXT), jnp.float32)),
    )(patches_ext, pv['patch_w'], pre_add,
      pv['ln1_g'], pv['ln1_b'], pv['qkv_w'], pv['qkv_b'], pv['o_w'], pv['o_b'],
      pv['ln2_g'], pv['ln2_b'], pv['fc1_w'], pv['fc1_b'], pv['fc2_w'], pv['fc2_b'],
      pv['lnf_g'], pv['lnf_b'],
      pt['ca_k_w'], pt['ca_k_b'], pt['ca_v_w'], pt['ca_v_b'])


_BERT_WEIGHT_KEYS = (
    'emb_ln_g', 'emb_ln_b',
    'sa_qkv_w', 'sa_qkv_b', 'sa_o_w', 'sa_o_b', 'sa_ln_g', 'sa_ln_b',
    'ca_q_w', 'ca_q_b', 'ca_o_w', 'ca_o_b', 'ca_ln_g', 'ca_ln_b',
    'ff1_w', 'ff1_b', 'ff2_w', 'ff2_b', 'ff_ln_g', 'ff_ln_b',
    'mlm_w', 'mlm_b', 'mlm_ln_g', 'mlm_ln_b', 'dec_w', 'dec_b',
)
# TODO(synk): at real depth/hidden, stream per-layer weights (depth grid axis or
# pltpu.emit_pipeline) instead of whole-[L, ...] VMEM-resident operands.


def bert_mlm_argmax(masked_ids, attn_row, ca_k, ca_v, word_length, p):
    """Grid over masked variants; returns the argmax id at each masked position."""
    Bm, S = masked_ids.shape
    x = (p['word_emb'][masked_ids]
         + p['pos_emb'][None, :S, :]
         + p['type_emb'][0][None, None, :]).astype(jnp.float32)       # [Bm, S, D]
    # additive key-padding mask shared by all variants (no cross-variant mask needed)
    kpm = ((1.0 - attn_row.astype(jnp.float32)) * NEG_PAD)[None, :]   # [1, S]
    wl = jnp.reshape(word_length, (1,)).astype(jnp.int32)

    def _whole(a):
        nd = a.ndim
        return pl.BlockSpec(a.shape, lambda i, wl_ref, _nd=nd: (0,) * _nd)

    weights = [p[k] for k in _BERT_WEIGHT_KEYS]
    in_specs = ([pl.BlockSpec((1, S, D_TXT), lambda i, wl_ref: (i, 0, 0)),
                 _whole(kpm), _whole(ca_k), _whole(ca_v)]
                + [_whole(w) for w in weights])
    grid_spec = pltpu.PrefetchScalarGridSpec(
        num_scalar_prefetch=1, grid=(Bm,),
        in_specs=in_specs,
        out_specs=pl.BlockSpec((1, 1, OUT_LANES), lambda i, wl_ref: (i, 0, 0)))
    kernel = partial(_bert_kernel, depth=DEPTH_T, n_heads=N_HEADS_T, eps=LN_EPS_T)
    out = pl.pallas_call(
        kernel,
        grid_spec=grid_spec,
        out_shape=jax.ShapeDtypeStruct((Bm, 1, OUT_LANES), jnp.int32),
        compiler_params=pltpu.CompilerParams(
            dimension_semantics=("parallel",)),      # v7x: variants across 2 TCs
    )(wl, x, kpm, ca_k, ca_v, *weights)
    return out[:, 0, 0]                              # [Bm] int32


@jax.jit
def _albef_device(image, input_ids, attention_mask, params):
    # image_atts (all ones) -> additive cross-attention mask of 0 -> dropped entirely.
    ca_k, ca_v = encoder_cross_kv(image, params['vit'], params['bert'])
    S = input_ids.shape[1]
    ids0 = input_ids[0]
    pos = jnp.arange(1, S)                            # every maskable slot (static)
    masked_ids = jnp.where(jnp.arange(S)[None, :] == pos[:, None], MASK_ID, ids0[None, :])
    word_length = jnp.count_nonzero(input_ids).astype(jnp.int32)
    preds = bert_mlm_argmax(masked_ids, attention_mask[0], ca_k, ca_v,
                            word_length, params['bert'])
    return preds, word_length


def albef_forward(image, input_ids, attention_mask, params):
    """Mirrors ALBEF.forward: returns python list [cls_id, pseudo_label_1, ...]."""
    preds, word_length = jax.block_until_ready(
        _albef_device(image, input_ids, attention_mask, params))
    preds_np, wl = jax.device_get((preds, word_length))   # single host transfer
    wl = int(wl)
    return [CLS_ID] + [int(preds_np[j]) for j in range(wl - 1)]


# ----------------------------- parameter init --------------------------------
def init_params(key):
    keys = iter(jax.random.split(key, 64))

    def wf(shape, std=0.02):                 # f32 (embeddings / additive terms)
        return jax.random.normal(next(keys), shape, jnp.float32) * std

    def wb(shape, std=0.02):                 # bf16 (MXU matmul weights)
        return (jax.random.normal(next(keys), shape, jnp.float32) * std
                ).astype(jnp.bfloat16)

    zeros = lambda s: jnp.zeros(s, jnp.float32)
    ones = lambda s: jnp.ones(s, jnp.float32)

    n_patches = (IMG_RES // PATCH) ** 2
    vit = dict(
        patch_w=wb((C_IN * PATCH * PATCH, D_VIS)), patch_b=zeros((1, D_VIS)),
        cls=wf((1, D_VIS)), pos=wf((n_patches + 1, D_VIS)),
        ln1_g=ones((DEPTH_V, 1, D_VIS)), ln1_b=zeros((DEPTH_V, 1, D_VIS)),
        qkv_w=wb((DEPTH_V, D_VIS, 3 * D_VIS)), qkv_b=zeros((DEPTH_V, 1, 3 * D_VIS)),
        o_w=wb((DEPTH_V, D_VIS, D_VIS)), o_b=zeros((DEPTH_V, 1, D_VIS)),
        ln2_g=ones((DEPTH_V, 1, D_VIS)), ln2_b=zeros((DEPTH_V, 1, D_VIS)),
        fc1_w=wb((DEPTH_V, D_VIS, MLP_V)), fc1_b=zeros((DEPTH_V, 1, MLP_V)),
        fc2_w=wb((DEPTH_V, MLP_V, D_VIS)), fc2_b=zeros((DEPTH_V, 1, D_VIS)),
        lnf_g=ones((1, D_VIS)), lnf_b=zeros((1, D_VIS)),
    )

    bert = dict(
        word_emb=wf((VOCAB, D_TXT)), pos_emb=wf((SEQ_LEN, D_TXT)), type_emb=wf((2, D_TXT)),
        emb_ln_g=ones((1, D_TXT)), emb_ln_b=zeros((1, D_TXT)),
        sa_qkv_w=wb((DEPTH_T, D_TXT, 3 * D_TXT)), sa_qkv_b=zeros((DEPTH_T, 1, 3 * D_TXT)),
        sa_o_w=wb((DEPTH_T, D_TXT, D_TXT)), sa_o_b=zeros((DEPTH_T, 1, D_TXT)),
        sa_ln_g=ones((DEPTH_T, 1, D_TXT)), sa_ln_b=zeros((DEPTH_T, 1, D_TXT)),
        ca_q_w=wb((DEPTH_T, D_TXT, D_TXT)), ca_q_b=zeros((DEPTH_T, 1, D_TXT)),
        ca_k_w=wb((DEPTH_T, D_VIS, D_TXT)), ca_k_b=zeros((DEPTH_T, 1, D_TXT)),
        ca_v_w=wb((DEPTH_T, D_VIS, D_TXT)), ca_v_b=zeros((DEPTH_T, 1, D_TXT)),
        ca_o_w=wb((DEPTH_T, D_TXT, D_TXT)), ca_o_b=zeros((DEPTH_T, 1, D_TXT)),
        ca_ln_g=ones((DEPTH_T, 1, D_TXT)), ca_ln_b=zeros((DEPTH_T, 1, D_TXT)),
        ff1_w=wb((DEPTH_T, D_TXT, FFN_T)), ff1_b=zeros((DEPTH_T, 1, FFN_T)),
        ff2_w=wb((DEPTH_T, FFN_T, D_TXT)), ff2_b=zeros((DEPTH_T, 1, D_TXT)),
        ff_ln_g=ones((DEPTH_T, 1, D_TXT)), ff_ln_b=zeros((DEPTH_T, 1, D_TXT)),
        mlm_w=wb((D_TXT, D_TXT)), mlm_b=zeros((1, D_TXT)),
        mlm_ln_g=ones((1, D_TXT)), mlm_ln_b=zeros((1, D_TXT)),
        dec_w=wb((D_TXT, VOCAB)), dec_b=zeros((1, VOCAB)),
    )
    return dict(vit=vit, bert=bert)


# ----------------------------- main -----------------------------------------
if __name__ == "__main__":
    key = jax.random.PRNGKey(0)
    k_img, k_ids = jax.random.split(key)

    image = jax.random.normal(k_img, (1, C_IN, IMG_RES, IMG_RES), jnp.float32)

    n_words = 5  # CLS + 4 real tokens, rest padding
    body = jax.random.randint(k_ids, (n_words - 1,), 3, VOCAB, dtype=jnp.int32)
    input_ids = jnp.concatenate([jnp.array([CLS_ID], jnp.int32), body,
                                 jnp.zeros((SEQ_LEN - n_words,), jnp.int32)])[None, :]
    attention_mask = (input_ids != PAD_ID).astype(jnp.int32)

    params = init_params(jax.random.PRNGKey(42))

    pred_tokens = albef_forward(image, input_ids, attention_mask, params)
    assert len(pred_tokens) == n_words
    assert all(isinstance(t, int) for t in pred_tokens)
    print("KERNEL_OK")
</pallas_src>

<mosaic_0001>
module attributes {stable_mosaic.version = 11 : i64} {
  func.func @_encoder_kernel(%arg0: memref<5x192xf32, #tpu.memory_space<vmem>>, %arg1: memref<192x32xbf16, #tpu.memory_space<vmem>>, %arg2: memref<5x32xf32, #tpu.memory_space<vmem>>, %arg3: memref<2x1x32xf32, #tpu.memory_space<vmem>>, %arg4: memref<2x1x32xf32, #tpu.memory_space<vmem>>, %arg5: memref<2x32x96xbf16, #tpu.memory_space<vmem>>, %arg6: memref<2x1x96xf32, #tpu.memory_space<vmem>>, %arg7: memref<2x32x32xbf16, #tpu.memory_space<vmem>>, %arg8: memref<2x1x32xf32, #tpu.memory_space<vmem>>, %arg9: memref<2x1x32xf32, #tpu.memory_space<vmem>>, %arg10: memref<2x1x32xf32, #tpu.memory_space<vmem>>, %arg11: memref<2x32x128xbf16, #tpu.memory_space<vmem>>, %arg12: memref<2x1x128xf32, #tpu.memory_space<vmem>>, %arg13: memref<2x128x32xbf16, #tpu.memory_space<vmem>>, %arg14: memref<2x1x32xf32, #tpu.memory_space<vmem>>, %arg15: memref<1x32xf32, #tpu.memory_space<vmem>>, %arg16: memref<1x32xf32, #tpu.memory_space<vmem>>, %arg17: memref<2x32x32xbf16, #tpu.memory_space<vmem>>, %arg18: memref<2x1x32xf32, #tpu.memory_space<vmem>>, %arg19: memref<2x32x32xbf16, #tpu.memory_space<vmem>>, %arg20: memref<2x1x32xf32, #tpu.memory_space<vmem>>, %arg21: memref<2x5x32xf32, #tpu.memory_space<vmem>>, %arg22: memref<2x5x32xf32, #tpu.memory_space<vmem>>) attributes {dimension_semantics = [], scalar_prefetch = 0 : i64, scratch_operands = 0 : i64, tpu.core_type = #tpu.core_type<tc>} {
    %c0 = arith.constant 0 : index
    %c0_0 = arith.constant 0 : index
    %0 = vector.load %arg0[%c0, %c0_0] : memref<5x192xf32, #tpu.memory_space<vmem>>, vector<5x192xf32>
    %c0_1 = arith.constant 0 : index
    %c0_2 = arith.constant 0 : index
    %1 = vector.load %arg1[%c0_1, %c0_2] : memref<192x32xbf16, #tpu.memory_space<vmem>>, vector<192x32xbf16>
    %2 = arith.truncf %0 : vector<5x192xf32> to vector<5x192xbf16>
    %cst = arith.constant dense<0.000000e+00> : vector<5x32xf32>
    %3 = tpu.matmul %2, %1, %cst {dimension_numbers = #tpu.dot_dimension_numbers<[1], [0], [0], [1], [0, 0, 1, 1], [], []>} : vector<5x192xbf16>, vector<192x32xbf16>, vector<5x32xf32> -> vector<5x32xf32>
    %c0_3 = arith.constant 0 : index
    %c0_4 = arith.constant 0 : index
    %4 = vector.load %arg2[%c0_3, %c0_4] : memref<5x32xf32, #tpu.memory_space<vmem>>, vector<5x32xf32>
    %5 = arith.addf %3, %4 : vector<5x32xf32>
    %c0_5 = arith.constant 0 : index
    %c0_6 = arith.constant 0 : index
    %c0_7 = arith.constant 0 : index
    %6 = vector.load %arg3[%c0_5, %c0_6, %c0_7] : memref<2x1x32xf32, #tpu.memory_space<vmem>>, vector<1x1x32xf32>
    %7 = vector.shape_cast %6 : vector<1x1x32xf32> to vector<1x32xf32>
    %c0_8 = arith.constant 0 : index
    %c0_9 = arith.constant 0 : index
    %c0_10 = arith.constant 0 : index
    %8 = vector.load %arg4[%c0_8, %c0_9, %c0_10] : memref<2x1x32xf32, #tpu.memory_space<vmem>>, vector<1x1x32xf32>
    %9 = vector.shape_cast %8 : vector<1x1x32xf32> to vector<1x32xf32>
    %cst_11 = arith.constant dense<0.000000e+00> : vector<5xf32>
    %10 = vector.multi_reduction <add>, %5, %cst_11 [1] : vector<5x32xf32> to vector<5xf32>
    %11 = vector.shape_cast %10 : vector<5xf32> to vector<5x1xf32>
    %12 = arith.mulf %5, %5 : vector<5x32xf32>
    %cst_12 = arith.constant dense<0.000000e+00> : vector<5xf32>
    %13 = vector.multi_reduction <add>, %12, %cst_12 [1] : vector<5x32xf32> to vector<5xf32>
    %14 = vector.shape_cast %13 : vector<5xf32> to vector<5x1xf32>
    %cst_13 = arith.constant 3.125000e-02 : f32
    %15 = vector.broadcast %cst_13 : f32 to vector<5x1xf32>
    %16 = arith.mulf %11, %15 : vector<5x1xf32>
    %cst_14 = arith.constant 3.125000e-02 : f32
    %17 = vector.broadcast %cst_14 : f32 to vector<5x1xf32>
    %18 = arith.mulf %14, %17 : vector<5x1xf32>
    %19 = arith.mulf %16, %16 : vector<5x1xf32>
    %20 = arith.subf %18, %19 : vector<5x1xf32>
    %21 = vector.broadcast %16 : vector<5x1xf32> to vector<5x32xf32>
    %22 = arith.subf %5, %21 : vector<5x32xf32>
    %cst_15 = arith.constant 9.99999997E-7 : f32
    %23 = vector.broadcast %cst_15 : f32 to vector<5x1xf32>
    %24 = arith.addf %20, %23 : vector<5x1xf32>
    %25 = math.rsqrt %24 : vector<5x1xf32>
    %26 = vector.broadcast %25 : vector<5x1xf32> to vector<5x32xf32>
    %27 = arith.mulf %22, %26 : vector<5x32xf32>
    %28 = vector.broadcast %7 : vector<1x32xf32> to vector<5x32xf32>
    %29 = arith.mulf %27, %28 : vector<5x32xf32>
    %30 = vector.broadcast %9 : vector<1x32xf32> to vector<5x32xf32>
    %31 = arith.addf %29, %30 : vector<5x32xf32>
    %c0_16 = arith.constant 0 : index
    %c0_17 = arith.constant 0 : index
    %c0_18 = arith.constant 0 : index
    %32 = vector.load %arg5[%c0_16, %c0_17, %c0_18] : memref<2x32x96xbf16, #tpu.memory_space<vmem>>, vector<1x32x96xbf16>
    %33 = vector.shape_cast %32 : vector<1x32x96xbf16> to vector<32x96xbf16>
    %c0_19 = arith.constant 0 : index
    %c0_20 = arith.constant 0 : index
    %c0_21 = arith.constant 0 : index
    %34 = vector.load %arg6[%c0_19, %c0_20, %c0_21] : memref<2x1x96xf32, #tpu.memory_space<vmem>>, vector<1x1x96xf32>
    %35 = vector.shape_cast %34 : vector<1x1x96xf32> to vector<1x96xf32>
    %c0_22 = arith.constant 0 : index
    %c0_23 = arith.constant 0 : index
    %c0_24 = arith.constant 0 : index
    %36 = vector.load %arg7[%c0_22, %c0_23, %c0_24] : memref<2x32x32xbf16, #tpu.memory_space<vmem>>, vector<1x32x32xbf16>
    %37 = vector.shape_cast %36 : vector<1x32x32xbf16> to vector<32x32xbf16>
    %c0_25 = arith.constant 0 : index
    %c0_26 = arith.constant 0 : index
    %c0_27 = arith.constant 0 : index
    %38 = vector.load %arg8[%c0_25, %c0_26, %c0_27] : memref<2x1x32xf32, #tpu.memory_space<vmem>>, vector<1x1x32xf32>
    %39 = vector.shape_cast %38 : vector<1x1x32xf32> to vector<1x32xf32>
    %40 = arith.truncf %31 : vector<5x32xf32> to vector<5x32xbf16>
    %cst_28 = arith.constant dense<0.000000e+00> : vector<5x96xf32>
    %41 = tpu.matmul %40, %33, %cst_28 {dimension_numbers = #tpu.dot_dimension_numbers<[1], [0], [0], [1], [0, 0, 1, 1], [], []>} : vector<5x32xbf16>, vector<32x96xbf16>, vector<5x96xf32> -> vector<5x96xf32>
    %42 = vector.broadcast %35 : vector<1x96xf32> to vector<5x96xf32>
    %43 = arith.addf %41, %42 : vector<5x96xf32>
    %44 = vector.extract_strided_slice %43 {offsets = [0, 0], sizes = [5, 8], strides = [1, 1]} : vector<5x96xf32> to vector<5x8xf32>
    %45 = vector.extract_strided_slice %43 {offsets = [0, 32], sizes = [5, 8], strides = [1, 1]} : vector<5x96xf32> to vector<5x8xf32>
    %46 = vector.extract_strided_slice %43 {offsets = [0, 64], sizes = [5, 8], strides = [1, 1]} : vector<5x96xf32> to vector<5x8xf32>
    %47 = arith.truncf %44 : vector<5x8xf32> to vector<5x8xbf16>
    %48 = arith.truncf %45 : vector<5x8xf32> to vector<5x8xbf16>
    %cst_29 = arith.constant dense<0.000000e+00> : vector<5x5xf32>
    %49 = tpu.matmul %47, %48, %cst_29 {dimension_numbers = #tpu.dot_dimension_numbers<[1], [1], [0], [0], [0, 0, 1, 0], [], []>} : vector<5x8xbf16>, vector<5x8xbf16>, vector<5x5xf32> -> vector<5x5xf32>
    %cst_30 = arith.constant 0.353553385 : f32
    %50 = vector.broadcast %cst_30 : f32 to vector<5x5xf32>
    %51 = arith.mulf %49, %50 : vector<5x5xf32>
    %cst_31 = arith.constant dense<0xFF800000> : vector<5xf32>
    %52 = vector.multi_reduction <maximumf>, %51, %cst_31 [1] : vector<5x5xf32> to vector<5xf32>
    %53 = vector.shape_cast %52 : vector<5xf32> to vector<5x1xf32>
    %54 = vector.broadcast %53 : vector<5x1xf32> to vector<5x5xf32>
    %55 = arith.subf %51, %54 : vector<5x5xf32>
    %56 = math.exp %55 : vector<5x5xf32>
    %cst_32 = arith.constant dense<0.000000e+00> : vector<5xf32>
    %57 = vector.multi_reduction <add>, %56, %cst_32 [1] : vector<5x5xf32> to vector<5xf32>
    %58 = vector.shape_cast %57 : vector<5xf32> to vector<5x1xf32>
    %59 = tpu.reciprocal %58 {approx = true} : vector<5x1xf32> -> vector<5x1xf32>
    %60 = vector.broadcast %59 : vector<5x1xf32> to vector<5x5xf32>
    %61 = arith.mulf %56, %60 : vector<5x5xf32>
    %62 = arith.truncf %61 : vector<5x5xf32> to vector<5x5xbf16>
    %63 = arith.truncf %46 : vector<5x8xf32> to vector<5x8xbf16>
    %cst_33 = arith.constant dense<0.000000e+00> : vector<5x8xf32>
    %64 = tpu.matmul %62, %63, %cst_33 {dimension_numbers = #tpu.dot_dimension_numbers<[1], [0], [0], [1], [0, 0, 1, 1], [], []>} : vector<5x5xbf16>, vector<5x8xbf16>, vector<5x8xf32> -> vector<5x8xf32>
    %65 = vector.extract_strided_slice %43 {offsets = [0, 8], sizes = [5, 8], strides = [1, 1]} : vector<5x96xf32> to vector<5x8xf32>
    %66 = vector.extract_strided_slice %43 {offsets = [0, 40], sizes = [5, 8], strides = [1, 1]} : vector<5x96xf32> to vector<5x8xf32>
    %67 = vector.extract_strided_slice %43 {offsets = [0, 72], sizes = [5, 8], strides = [1, 1]} : vector<5x96xf32> to vector<5x8xf32>
    %68 = arith.truncf %65 : vector<5x8xf32> to vector<5x8xbf16>
    %69 = arith.truncf %66 : vector<5x8xf32> to vector<5x8xbf16>
    %cst_34 = arith.constant dense<0.000000e+00> : vector<5x5xf32>
    %70 = tpu.matmul %68, %69, %cst_34 {dimension_numbers = #tpu.dot_dimension_numbers<[1], [1], [0], [0], [0, 0, 1, 0], [], []>} : vector<5x8xbf16>, vector<5x8xbf16>, vector<5x5xf32> -> vector<5x5xf32>
    %cst_35 = arith.constant 0.353553385 : f32
    %71 = vector.broadcast %cst_35 : f32 to vector<5x5xf32>
    %72 = arith.mulf %70, %71 : vector<5x5xf32>
    %cst_36 = arith.constant dense<0xFF800000> : vector<5xf32>
    %73 = vector.multi_reduction <maximumf>, %72, %cst_36 [1] : vector<5x5xf32> to vector<5xf32>
    %74 = vector.shape_cast %73 : vector<5xf32> to vector<5x1xf32>
    %75 = vector.broadcast %74 : vector<5x1xf32> to vector<5x5xf32>
    %76 = arith.subf %72, %75 : vector<5x5xf32>
    %77 = math.exp %76 : vector<5x5xf32>
    %cst_37 = arith.constant dense<0.000000e+00> : vector<5xf32>
    %78 = vector.multi_reduction <add>, %77, %cst_37 [1] : vector<5x5xf32> to vector<5xf32>
    %79 = vector.shape_cast %78 : vector<5xf32> to vector<5x1xf32>
    %80 = tpu.reciprocal %79 {approx = true} : vector<5x1xf32> -> vector<5x1xf32>
    %81 = vector.broadcast %80 : vector<5x1xf32> to vector<5x5xf32>
    %82 = arith.mulf %77, %81 : vector<5x5xf32>
    %83 = arith.truncf %82 : vector<5x5xf32> to vector<5x5xbf16>
    %84 = arith.truncf %67 : vector<5x8xf32> to vector<5x8xbf16>
    %cst_38 = arith.constant dense<0.000000e+00> : vector<5x8xf32>
    %85 = tpu.matmul %83, %84, %cst_38 {dimension_numbers = #tpu.dot_dimension_numbers<[1], [0], [0], [1], [0, 0, 1, 1], [], []>} : vector<5x5xbf16>, vector<5x8xbf16>, vector<5x8xf32> -> vector<5x8xf32>
    %86 = vector.extract_strided_slice %43 {offsets = [0, 16], sizes = [5, 8], strides = [1, 1]} : vector<5x96xf32> to vector<5x8xf32>
    %87 = vector.extract_strided_slice %43 {offsets = [0, 48], sizes = [5, 8], strides = [1, 1]} : vector<5x96xf32> to vector<5x8xf32>
    %88 = vector.extract_strided_slice %43 {offsets = [0, 80], sizes = [5, 8], strides = [1, 1]} : vector<5x96xf32> to vector<5x8xf32>
    %89 = arith.truncf %86 : vector<5x8xf32> to vector<5x8xbf16>
    %90 = arith.truncf %87 : vector<5x8xf32> to vector<5x8xbf16>
    %cst_39 = arith.constant dense<0.000000e+00> : vector<5x5xf32>
    %91 = tpu.matmul %89, %90, %cst_39 {dimension_numbers = #tpu.dot_dimension_numbers<[1], [1], [0], [0], [0, 0, 1, 0], [], []>} : vector<5x8xbf16>, vector<5x8xbf16>, vector<5x5xf32> -> vector<5x5xf32>
    %cst_40 = arith.constant 0.353553385 : f32
    %92 = vector.broadcast %cst_40 : f32 to vector<5x5xf32>
    %93 = arith.mulf %91, %92 : vector<5x5xf32>
    %cst_41 = arith.constant dense<0xFF800000> : vector<5xf32>
    %94 = vector.multi_reduction <maximumf>, %93, %cst_41 [1] : vector<5x5xf32> to vector<5xf32>
    %95 = vector.shape_cast %94 : vector<5xf32> to vector<5x1xf32>
    %96 = vector.broadcast %95 : vector<5x1xf32> to vector<5x5xf32>
    %97 = arith.subf %93, %96 : vector<5x5xf32>
    %98 = math.exp %97 : vector<5x5xf32>
    %cst_42 = arith.constant dense<0.000000e+00> : vector<5xf32>
    %99 = vector.multi_reduction <add>, %98, %cst_42 [1] : vector<5x5xf32> to vector<5xf32>
    %100 = vector.shape_cast %99 : vector<5xf32> to vector<5x1xf32>
    %101 = tpu.reciprocal %100 {approx = true} : vector<5x1xf32> -> vector<5x1xf32>
    %102 = vector.broadcast %101 : vector<5x1xf32> to vector<5x5xf32>
    %103 = arith.mulf %98, %102 : vector<5x5xf32>
    %104 = arith.truncf %103 : vector<5x5xf32> to vector<5x5xbf16>
    %105 = arith.truncf %88 : vector<5x8xf32> to vector<5x8xbf16>
    %cst_43 = arith.constant dense<0.000000e+00> : vector<5x8xf32>
    %106 = tpu.matmul %104, %105, %cst_43 {dimension_numbers = #tpu.dot_dimension_numbers<[1], [0], [0], [1], [0, 0, 1, 1], [], []>} : vector<5x5xbf16>, vector<5x8xbf16>, vector<5x8xf32> -> vector<5x8xf32>
    %107 = vector.extract_strided_slice %43 {offsets = [0, 24], sizes = [5, 8], strides = [1, 1]} : vector<5x96xf32> to vector<5x8xf32>
    %108 = vector.extract_strided_slice %43 {offsets = [0, 56], sizes = [5, 8], strides = [1, 1]} : vector<5x96xf32> to vector<5x8xf32>
    %109 = vector.extract_strided_slice %43 {offsets = [0, 88], sizes = [5, 8], strides = [1, 1]} : vector<5x96xf32> to vector<5x8xf32>
    %110 = arith.truncf %107 : vector<5x8xf32> to vector<5x8xbf16>
    %111 = arith.truncf %108 : vector<5x8xf32> to vector<5x8xbf16>
    %cst_44 = arith.constant dense<0.000000e+00> : vector<5x5xf32>
    %112 = tpu.matmul %110, %111, %cst_44 {dimension_numbers = #tpu.dot_dimension_numbers<[1], [1], [0], [0], [0, 0, 1, 0], [], []>} : vector<5x8xbf16>, vector<5x8xbf16>, vector<5x5xf32> -> vector<5x5xf32>
    %cst_45 = arith.constant 0.353553385 : f32
    %113 = vector.broadcast %cst_45 : f32 to vector<5x5xf32>
    %114 = arith.mulf %112, %113 : vector<5x5xf32>
    %cst_46 = arith.constant dense<0xFF800000> : vector<5xf32>
    %115 = vector.multi_reduction <maximumf>, %114, %cst_46 [1] : vector<5x5xf32> to vector<5xf32>
    %116 = vector.shape_cast %115 : vector<5xf32> to vector<5x1xf32>
    %117 = vector.broadcast %116 : vector<5x1xf32> to vector<5x5xf32>
    %118 = arith.subf %114, %117 : vector<5x5xf32>
    %119 = math.exp %118 : vector<5x5xf32>
    %cst_47 = arith.constant dense<0.000000e+00> : vector<5xf32>
    %120 = vector.multi_reduction <add>, %119, %cst_47 [1] : vector<5x5xf32> to vector<5xf32>
    %121 = vector.shape_cast %120 : vector<5xf32> to vector<5x1xf32>
    %122 = tpu.reciprocal %121 {approx = true} : vector<5x1xf32> -> vector<5x1xf32>
    %123 = vector.broadcast %122 : vector<5x1xf32> to vector<5x5xf32>
    %124 = arith.mulf %119, %123 : vector<5x5xf32>
    %125 = arith.truncf %124 : vector<5x5xf32> to vector<5x5xbf16>
    %126 = arith.truncf %109 : vector<5x8xf32> to vector<5x8xbf16>
    %cst_48 = arith.constant dense<0.000000e+00> : vector<5x8xf32>
    %127 = tpu.matmul %125, %126, %cst_48 {dimension_numbers = #tpu.dot_dimension_numbers<[1], [0], [0], [1], [0, 0, 1, 1], [], []>} : vector<5x5xbf16>, vector<5x8xbf16>, vector<5x8xf32> -> vector<5x8xf32>
    %128 = tpu.concatenate %64, %85, %106, %127 in 1 : vector<5x8xf32>, vector<5x8xf32>, vector<5x8xf32>, vector<5x8xf32> -> vector<5x32xf32>
    %129 = arith.truncf %128 : vector<5x32xf32> to vector<5x32xbf16>
    %cst_49 = arith.constant dense<0.000000e+00> : vector<5x32xf32>
    %130 = tpu.matmul %129, %37, %cst_49 {dimension_numbers = #tpu.dot_dimension_numbers<[1], [0], [0], [1], [0, 0, 1, 1], [], []>} : vector<5x32xbf16>, vector<32x32xbf16>, vector<5x32xf32> -> vector<5x32xf32>
    %131 = vector.broadcast %39 : vector<1x32xf32> to vector<5x32xf32>
    %132 = arith.addf %130, %131 : vector<5x32xf32>
    %133 = arith.addf %5, %132 : vector<5x32xf32>
    %c0_50 = arith.constant 0 : index
    %c0_51 = arith.constant 0 : index
    %c0_52 = arith.constant 0 : index
    %134 = vector.load %arg9[%c0_50, %c0_51, %c0_52] : memref<2x1x32xf32, #tpu.memory_space<vmem>>, vector<1x1x32xf32>
    %135 = vector.shape_cast %134 : vector<1x1x32xf32> to vector<1x32xf32>
    %c0_53 = arith.constant 0 : index
    %c0_54 = arith.constant 0 : index
    %c0_55 = arith.constant 0 : index
    %136 = vector.load %arg10[%c0_53, %c0_54, %c0_55] : memref<2x1x32xf32, #tpu.memory_space<vmem>>, vector<1x1x32xf32>
    %137 = vector.shape_cast %136 : vector<1x1x32xf32> to vector<1x32xf32>
    %cst_56 = arith.constant dense<0.000000e+00> : vector<5xf32>
    %138 = vector.multi_reduction <add>, %133, %cst_56 [1] : vector<5x32xf32> to vector<5xf32>
    %139 = vector.shape_cast %138 : vector<5xf32> to vector<5x1xf32>
    %140 = arith.mulf %133, %133 : vector<5x32xf32>
    %cst_57 = arith.constant dense<0.000000e+00> : vector<5xf32>
    %141 = vector.multi_reduction <add>, %140, %cst_57 [1] : vector<5x32xf32> to vector<5xf32>
    %142 = vector.shape_cast %141 : vector<5xf32> to vector<5x1xf32>
    %cst_58 = arith.constant 3.125000e-02 : f32
    %143 = vector.broadcast %cst_58 : f32 to vector<5x1xf32>
    %144 = arith.mulf %139, %143 : vector<5x1xf32>
    %cst_59 = arith.constant 3.125000e-02 : f32
    %145 = vector.broadcast %cst_59 : f32 to vector<5x1xf32>
    %146 = arith.mulf %142, %145 : vector<5x1xf32>
    %147 = arith.mulf %144, %144 : vector<5x1xf32>
    %148 = arith.subf %146, %147 : vector<5x1xf32>
    %149 = vector.broadcast %144 : vector<5x1xf32> to vector<5x32xf32>
    %150 = arith.subf %133, %149 : vector<5x32xf32>
    %cst_60 = arith.constant 9.99999997E-7 : f32
    %151 = vector.broadcast %cst_60 : f32 to vector<5x1xf32>
    %152 = arith.addf %148, %151 : vector<5x1xf32>
    %153 = math.rsqrt %152 : vector<5x1xf32>
    %154 = vector.broadcast %153 : vector<5x1xf32> to vector<5x32xf32>
    %155 = arith.mulf %150, %154 : vector<5x32xf32>
    %156 = vector.broadcast %135 : vector<1x32xf32> to vector<5x32xf32>
    %157 = arith.mulf %155, %156 : vector<5x32xf32>
    %158 = vector.broadcast %137 : vector<1x32xf32> to vector<5x32xf32>
    %159 = arith.addf %157, %158 : vector<5x32xf32>
    %c0_61 = arith.constant 0 : index
    %c0_62 = arith.constant 0 : index
    %c0_63 = arith.constant 0 : index
    %160 = vector.load %arg11[%c0_61, %c0_62, %c0_63] : memref<2x32x128xbf16, #tpu.memory_space<vmem>>, vector<1x32x128xbf16>
    %161 = vector.shape_cast %160 : vector<1x32x128xbf16> to vector<32x128xbf16>
    %162 = arith.truncf %159 : vector<5x32xf32> to vector<5x32xbf16>
    %cst_64 = arith.constant dense<0.000000e+00> : vector<5x128xf32>
    %163 = tpu.matmul %162, %161, %cst_64 {dimension_numbers = #tpu.dot_dimension_numbers<[1], [0], [0], [1], [0, 0, 1, 1], [], []>} : vector<5x32xbf16>, vector<32x128xbf16>, vector<5x128xf32> -> vector<5x128xf32>
    %c0_65 = arith.constant 0 : index
    %c0_66 = arith.constant 0 : index
    %c0_67 = arith.constant 0 : index
    %164 = vector.load %arg12[%c0_65, %c0_66, %c0_67] : memref<2x1x128xf32, #tpu.memory_space<vmem>>, vector<1x1x128xf32>
    %165 = vector.shape_cast %164 : vector<1x1x128xf32> to vector<1x128xf32>
    %166 = vector.broadcast %165 : vector<1x128xf32> to vector<5x128xf32>
    %167 = arith.addf %163, %166 : vector<5x128xf32>
    %168 = arith.mulf %167, %167 : vector<5x128xf32>
    %169 = arith.mulf %167, %168 : vector<5x128xf32>
    %cst_68 = arith.constant 4.471500e-02 : f32
    %170 = vector.broadcast %cst_68 : f32 to vector<5x128xf32>
    %171 = arith.mulf %170, %169 : vector<5x128xf32>
    %172 = arith.addf %167, %171 : vector<5x128xf32>
    %cst_69 = arith.constant 0.797884583 : f32
    %173 = vector.broadcast %cst_69 : f32 to vector<5x128xf32>
    %174 = arith.mulf %173, %172 : vector<5x128xf32>
    %175 = math.tanh %174 : vector<5x128xf32>
    %cst_70 = arith.constant 1.000000e+00 : f32
    %176 = vector.broadcast %cst_70 : f32 to vector<5x128xf32>
    %177 = arith.addf %176, %175 : vector<5x128xf32>
    %cst_71 = arith.constant 5.000000e-01 : f32
    %178 = vector.broadcast %cst_71 : f32 to vector<5x128xf32>
    %179 = arith.mulf %178, %177 : vector<5x128xf32>
    %180 = arith.mulf %167, %179 : vector<5x128xf32>
    %c0_72 = arith.constant 0 : index
    %c0_73 = arith.constant 0 : index
    %c0_74 = arith.constant 0 : index
    %181 = vector.load %arg13[%c0_72, %c0_73, %c0_74] : memref<2x128x32xbf16, #tpu.memory_space<vmem>>, vector<1x128x32xbf16>
    %182 = vector.shape_cast %181 : vector<1x128x32xbf16> to vector<128x32xbf16>
    %183 = arith.truncf %180 : vector<5x128xf32> to vector<5x128xbf16>
    %cst_75 = arith.constant dense<0.000000e+00> : vector<5x32xf32>
    %184 = tpu.matmul %183, %182, %cst_75 {dimension_numbers = #tpu.dot_dimension_numbers<[1], [0], [0], [1], [0, 0, 1, 1], [], []>} : vector<5x128xbf16>, vector<128x32xbf16>, vector<5x32xf32> -> vector<5x32xf32>
    %185 = arith.addf %133, %184 : vector<5x32xf32>
    %c0_76 = arith.constant 0 : index
    %c0_77 = arith.constant 0 : index
    %c0_78 = arith.constant 0 : index
    %186 = vector.load %arg14[%c0_76, %c0_77, %c0_78] : memref<2x1x32xf32, #tpu.memory_space<vmem>>, vector<1x1x32xf32>
    %187 = vector.shape_cast %186 : vector<1x1x32xf32> to vector<1x32xf32>
    %188 = vector.broadcast %187 : vector<1x32xf32> to vector<5x32xf32>
    %189 = arith.addf %185, %188 : vector<5x32xf32>
    %c1 = arith.constant 1 : index
    %c0_79 = arith.constant 0 : index
    %c0_80 = arith.constant 0 : index
    %190 = vector.load %arg3[%c1, %c0_79, %c0_80] : memref<2x1x32xf32, #tpu.memory_space<vmem>>, vector<1x1x32xf32>
    %191 = vector.shape_cast %190 : vector<1x1x32xf32> to vector<1x32xf32>
    %c1_81 = arith.constant 1 : index
    %c0_82 = arith.constant 0 : index
    %c0_83 = arith.constant 0 : index
    %192 = vector.load %arg4[%c1_81, %c0_82, %c0_83] : memref<2x1x32xf32, #tpu.memory_space<vmem>>, vector<1x1x32xf32>
    %193 = vector.shape_cast %192 : vector<1x1x32xf32> to vector<1x32xf32>
    %cst_84 = arith.constant dense<0.000000e+00> : vector<5xf32>
    %194 = vector.multi_reduction <add>, %189, %cst_84 [1] : vector<5x32xf32> to vector<5xf32>
    %195 = vector.shape_cast %194 : vector<5xf32> to vector<5x1xf32>
    %196 = arith.mulf %189, %189 : vector<5x32xf32>
    %cst_85 = arith.constant dense<0.000000e+00> : vector<5xf32>
    %197 = vector.multi_reduction <add>, %196, %cst_85 [1] : vector<5x32xf32> to vector<5xf32>
    %198 = vector.shape_cast %197 : vector<5xf32> to vector<5x1xf32>
    %cst_86 = arith.constant 3.125000e-02 : f32
    %199 = vector.broadcast %cst_86 : f32 to vector<5x1xf32>
    %200 = arith.mulf %195, %199 : vector<5x1xf32>
    %cst_87 = arith.constant 3.125000e-02 : f32
    %201 = vector.broadcast %cst_87 : f32 to vector<5x1xf32>
    %202 = arith.mulf %198, %201 : vector<5x1xf32>
    %203 = arith.mulf %200, %200 : vector<5x1xf32>
    %204 = arith.subf %202, %203 : vector<5x1xf32>
    %205 = vector.broadcast %200 : vector<5x1xf32> to vector<5x32xf32>
    %206 = arith.subf %189, %205 : vector<5x32xf32>
    %cst_88 = arith.constant 9.99999997E-7 : f32
    %207 = vector.broadcast %cst_88 : f32 to vector<5x1xf32>
    %208 = arith.addf %204, %207 : vector<5x1xf32>
    %209 = math.rsqrt %208 : vector<5x1xf32>
    %210 = vector.broadcast %209 : vector<5x1xf32> to vector<5x32xf32>
    %211 = arith.mulf %206, %210 : vector<5x32xf32>
    %212 = vector.broadcast %191 : vector<1x32xf32> to vector<5x32xf32>
    %213 = arith.mulf %211, %212 : vector<5x32xf32>
    %214 = vector.broadcast %193 : vector<1x32xf32> to vector<5x32xf32>
    %215 = arith.addf %213, %214 : vector<5x32xf32>
    %c1_89 = arith.constant 1 : index
    %c0_90 = arith.constant 0 : index
    %c0_91 = arith.constant 0 : index
    %216 = vector.load %arg5[%c1_89, %c0_90, %c0_91] : memref<2x32x96xbf16, #tpu.memory_space<vmem>>, vector<1x32x96xbf16>
    %217 = vector.shape_cast %216 : vector<1x32x96xbf16> to vector<32x96xbf16>
    %c1_92 = arith.constant 1 : index
    %c0_93 = arith.constant 0 : index
    %c0_94 = arith.constant 0 : index
    %218 = vector.load %arg6[%c1_92, %c0_93, %c0_94] : memref<2x1x96xf32, #tpu.memory_space<vmem>>, vector<1x1x96xf32>
    %219 = vector.shape_cast %218 : vector<1x1x96xf32> to vector<1x96xf32>
    %c1_95 = arith.constant 1 : index
    %c0_96 = arith.constant 0 : index
    %c0_97 = arith.constant 0 : index
    %220 = vector.load %arg7[%c1_95, %c0_96, %c0_97] : memref<2x32x32xbf16, #tpu.memory_space<vmem>>, vector<1x32x32xbf16>
    %221 = vector.shape_cast %220 : vector<1x32x32xbf16> to vector<32x32xbf16>
    %c1_98 = arith.constant 1 : index
    %c0_99 = arith.constant 0 : index
    %c0_100 = arith.constant 0 : index
    %222 = vector.load %arg8[%c1_98, %c0_99, %c0_100] : memref<2x1x32xf32, #tpu.memory_space<vmem>>, vector<1x1x32xf32>
    %223 = vector.shape_cast %222 : vector<1x1x32xf32> to vector<1x32xf32>
    %224 = arith.truncf %215 : vector<5x32xf32> to vector<5x32xbf16>
    %cst_101 = arith.constant dense<0.000000e+00> : vector<5x96xf32>
    %225 = tpu.matmul %224, %217, %cst_101 {dimension_numbers = #tpu.dot_dimension_numbers<[1], [0], [0], [1], [0, 0, 1, 1], [], []>} : vector<5x32xbf16>, vector<32x96xbf16>, vector<5x96xf32> -> vector<5x96xf32>
    %226 = vector.broadcast %219 : vector<1x96xf32> to vector<5x96xf32>
    %227 = arith.addf %225, %226 : vector<5x96xf32>
    %228 = vector.extract_strided_slice %227 {offsets = [0, 0], sizes = [5, 8], strides = [1, 1]} : vector<5x96xf32> to vector<5x8xf32>
    %229 = vector.extract_strided_slice %227 {offsets = [0, 32], sizes = [5, 8], strides = [1, 1]} : vector<5x96xf32> to vector<5x8xf32>
    %230 = vector.extract_strided_slice %227 {offsets = [0, 64], sizes = [5, 8], strides = [1, 1]} : vector<5x96xf32> to vector<5x8xf32>
    %231 = arith.truncf %228 : vector<5x8xf32> to vector<5x8xbf16>
    %232 = arith.truncf %229 : vector<5x8xf32> to vector<5x8xbf16>
    %cst_102 = arith.constant dense<0.000000e+00> : vector<5x5xf32>
    %233 = tpu.matmul %231, %232, %cst_102 {dimension_numbers = #tpu.dot_dimension_numbers<[1], [1], [0], [0], [0, 0, 1, 0], [], []>} : vector<5x8xbf16>, vector<5x8xbf16>, vector<5x5xf32> -> vector<5x5xf32>
    %cst_103 = arith.constant 0.353553385 : f32
    %234 = vector.broadcast %cst_103 : f32 to vector<5x5xf32>
    %235 = arith.mulf %233, %234 : vector<5x5xf32>
    %cst_104 = arith.constant dense<0xFF800000> : vector<5xf32>
    %236 = vector.multi_reduction <maximumf>, %235, %cst_104 [1] : vector<5x5xf32> to vector<5xf32>
    %237 = vector.shape_cast %236 : vector<5xf32> to vector<5x1xf32>
    %238 = vector.broadcast %237 : vector<5x1xf32> to vector<5x5xf32>
    %239 = arith.subf %235, %238 : vector<5x5xf32>
    %240 = math.exp %239 : vector<5x5xf32>
    %cst_105 = arith.constant dense<0.000000e+00> : vector<5xf32>
    %241 = vector.multi_reduction <add>, %240, %cst_105 [1] : vector<5x5xf32> to vector<5xf32>
    %242 = vector.shape_cast %241 : vector<5xf32> to vector<5x1xf32>
    %243 = tpu.reciprocal %242 {approx = true} : vector<5x1xf32> -> vector<5x1xf32>
    %244 = vector.broadcast %243 : vector<5x1xf32> to vector<5x5xf32>
    %245 = arith.mulf %240, %244 : vector<5x5xf32>
    %246 = arith.truncf %245 : vector<5x5xf32> to vector<5x5xbf16>
    %247 = arith.truncf %230 : vector<5x8xf32> to vector<5x8xbf16>
    %cst_106 = arith.constant dense<0.000000e+00> : vector<5x8xf32>
    %248 = tpu.matmul %246, %247, %cst_106 {dimension_numbers = #tpu.dot_dimension_numbers<[1], [0], [0], [1], [0, 0, 1, 1], [], []>} : vector<5x5xbf16>, vector<5x8xbf16>, vector<5x8xf32> -> vector<5x8xf32>
    %249 = vector.extract_strided_slice %227 {offsets = [0, 8], sizes = [5, 8], strides = [1, 1]} : vector<5x96xf32> to vector<5x8xf32>
    %250 = vector.extract_strided_slice %227 {offsets = [0, 40], sizes = [5, 8], strides = [1, 1]} : vector<5x96xf32> to vector<5x8xf32>
    %251 = vector.extract_strided_slice %227 {offsets = [0, 72], sizes = [5, 8], strides = [1, 1]} : vector<5x96xf32> to vector<5x8xf32>
    %252 = arith.truncf %249 : vector<5x8xf32> to vector<5x8xbf16>
    %253 = arith.truncf %250 : vector<5x8xf32> to vector<5x8xbf16>
    %cst_107 = arith.constant dense<0.000000e+00> : vector<5x5xf32>
    %254 = tpu.matmul %252, %253, %cst_107 {dimension_numbers = #tpu.dot_dimension_numbers<[1], [1], [0], [0], [0, 0, 1, 0], [], []>} : vector<5x8xbf16>, vector<5x8xbf16>, vector<5x5xf32> -> vector<5x5xf32>
    %cst_108 = arith.constant 0.353553385 : f32
    %255 = vector.broadcast %cst_108 : f32 to vector<5x5xf32>
    %256 = arith.mulf %254, %255 : vector<5x5xf32>
    %cst_109 = arith.constant dense<0xFF800000> : vector<5xf32>
    %257 = vector.multi_reduction <maximumf>, %256, %cst_109 [1] : vector<5x5xf32> to vector<5xf32>
    %258 = vector.shape_cast %257 : vector<5xf32> to vector<5x1xf32>
    %259 = vector.broadcast %258 : vector<5x1xf32> to vector<5x5xf32>
    %260 = arith.subf %256, %259 : vector<5x5xf32>
    %261 = math.exp %260 : vector<5x5xf32>
    %cst_110 = arith.constant dense<0.000000e+00> : vector<5xf32>
    %262 = vector.multi_reduction <add>, %261, %cst_110 [1] : vector<5x5xf32> to vector<5xf32>
    %263 = vector.shape_cast %262 : vector<5xf32> to vector<5x1xf32>
    %264 = tpu.reciprocal %263 {approx = true} : vector<5x1xf32> -> vector<5x1xf32>
    %265 = vector.broadcast %264 : vector<5x1xf32> to vector<5x5xf32>
    %266 = arith.mulf %261, %265 : vector<5x5xf32>
    %267 = arith.truncf %266 : vector<5x5xf32> to vector<5x5xbf16>
    %268 = arith.truncf %251 : vector<5x8xf32> to vector<5x8xbf16>
    %cst_111 = arith.constant dense<0.000000e+00> : vector<5x8xf32>
    %269 = tpu.matmul %267, %268, %cst_111 {dimension_numbers = #tpu.dot_dimension_numbers<[1], [0], [0], [1], [0, 0, 1, 1], [], []>} : vector<5x5xbf16>, vector<5x8xbf16>, vector<5x8xf32> -> vector<5x8xf32>
    %270 = vector.extract_strided_slice %227 {offsets = [0, 16], sizes = [5, 8], strides = [1, 1]} : vector<5x96xf32> to vector<5x8xf32>
    %271 = vector.extract_strided_slice %227 {offsets = [0, 48], sizes = [5, 8], strides = [1, 1]} : vector<5x96xf32> to vector<5x8xf32>
    %272 = vector.extract_strided_slice %227 {offsets = [0, 80], sizes = [5, 8], strides = [1, 1]} : vector<5x96xf32> to vector<5x8xf32>
    %273 = arith.truncf %270 : vector<5x8xf32> to vector<5x8xbf16>
    %274 = arith.truncf %271 : vector<5x8xf32> to vector<5x8xbf16>
    %cst_112 = arith.constant dense<0.000000e+00> : vector<5x5xf32>
    %275 = tpu.matmul %273, %274, %cst_112 {dimension_numbers = #tpu.dot_dimension_numbers<[1], [1], [0], [0], [0, 0, 1, 0], [], []>} : vector<5x8xbf16>, vector<5x8xbf16>, vector<5x5xf32> -> vector<5x5xf32>
    %cst_113 = arith.constant 0.353553385 : f32
    %276 = vector.broadcast %cst_113 : f32 to vector<5x5xf32>
    %277 = arith.mulf %275, %276 : vector<5x5xf32>
    %cst_114 = arith.constant dense<0xFF800000> : vector<5xf32>
    %278 = vector.multi_reduction <maximumf>, %277, %cst_114 [1] : vector<5x5xf32> to vector<5xf32>
    %279 = vector.shape_cast %278 : vector<5xf32> to vector<5x1xf32>
    %280 = vector.broadcast %279 : vector<5x1xf32> to vector<5x5xf32>
    %281 = arith.subf %277, %280 : vector<5x5xf32>
    %282 = math.exp %281 : vector<5x5xf32>
    %cst_115 = arith.constant dense<0.000000e+00> : vector<5xf32>
    %283 = vector.multi_reduction <add>, %282, %cst_115 [1] : vector<5x5xf32> to vector<5xf32>
    %284 = vector.shape_cast %283 : vector<5xf32> to vector<5x1xf32>
    %285 = tpu.reciprocal %284 {approx = true} : vector<5x1xf32> -> vector<5x1xf32>
    %286 = vector.broadcast %285 : vector<5x1xf32> to vector<5x5xf32>
    %287 = arith.mulf %282, %286 : vector<5x5xf32>
    %288 = arith.truncf %287 : vector<5x5xf32> to vector<5x5xbf16>
    %289 = arith.truncf %272 : vector<5x8xf32> to vector<5x8xbf16>
    %cst_116 = arith.constant dense<0.000000e+00> : vector<5x8xf32>
    %290 = tpu.matmul %288, %289, %cst_116 {dimension_numbers = #tpu.dot_dimension_numbers<[1], [0], [0], [1], [0, 0, 1, 1], [], []>} : vector<5x5xbf16>, vector<5x8xbf16>, vector<5x8xf32> -> vector<5x8xf32>
    %291 = vector.extract_strided_slice %227 {offsets = [0, 24], sizes = [5, 8], strides = [1, 1]} : vector<5x96xf32> to vector<5x8xf32>
    %292 = vector.extract_strided_slice %227 {offsets = [0, 56], sizes = [5, 8], strides = [1, 1]} : vector<5x96xf32> to vector<5x8xf32>
    %293 = vector.extract_strided_slice %227 {offsets = [0, 88], sizes = [5, 8], strides = [1, 1]} : vector<5x96xf32> to vector<5x8xf32>
    %294 = arith.truncf %291 : vector<5x8xf32> to vector<5x8xbf16>
    %295 = arith.truncf %292 : vector<5x8xf32> to vector<5x8xbf16>
    %cst_117 = arith.constant dense<0.000000e+00> : vector<5x5xf32>
    %296 = tpu.matmul %294, %295, %cst_117 {dimension_numbers = #tpu.dot_dimension_numbers<[1], [1], [0], [0], [0, 0, 1, 0], [], []>} : vector<5x8xbf16>, vector<5x8xbf16>, vector<5x5xf32> -> vector<5x5xf32>
    %cst_118 = arith.constant 0.353553385 : f32
    %297 = vector.broadcast %cst_118 : f32 to vector<5x5xf32>
    %298 = arith.mulf %296, %297 : vector<5x5xf32>
    %cst_119 = arith.constant dense<0xFF800000> : vector<5xf32>
    %299 = vector.multi_reduction <maximumf>, %298, %cst_119 [1] : vector<5x5xf32> to vector<5xf32>
    %300 = vector.shape_cast %299 : vector<5xf32> to vector<5x1xf32>
    %301 = vector.broadcast %300 : vector<5x1xf32> to vector<5x5xf32>
    %302 = arith.subf %298, %301 : vector<5x5xf32>
    %303 = math.exp %302 : vector<5x5xf32>
    %cst_120 = arith.constant dense<0.000000e+00> : vector<5xf32>
    %304 = vector.multi_reduction <add>, %303, %cst_120 [1] : vector<5x5xf32> to vector<5xf32>
    %305 = vector.shape_cast %304 : vector<5xf32> to vector<5x1xf32>
    %306 = tpu.reciprocal %305 {approx = true} : vector<5x1xf32> -> vector<5x1xf32>
    %307 = vector.broadcast %306 : vector<5x1xf32> to vector<5x5xf32>
    %308 = arith.mulf %303, %307 : vector<5x5xf32>
    %309 = arith.truncf %308 : vector<5x5xf32> to vector<5x5xbf16>
    %310 = arith.truncf %293 : vector<5x8xf32> to vector<5x8xbf16>
    %cst_121 = arith.constant dense<0.000000e+00> : vector<5x8xf32>
    %311 = tpu.matmul %309, %310, %cst_121 {dimension_numbers = #tpu.dot_dimension_numbers<[1], [0], [0], [1], [0, 0, 1, 1], [], []>} : vector<5x5xbf16>, vector<5x8xbf16>, vector<5x8xf32> -> vector<5x8xf32>
    %312 = tpu.concatenate %248, %269, %290, %311 in 1 : vector<5x8xf32>, vector<5x8xf32>, vector<5x8xf32>, vector<5x8xf32> -> vector<5x32xf32>
    %313 = arith.truncf %312 : vector<5x32xf32> to vector<5x32xbf16>
    %cst_122 = arith.constant dense<0.000000e+00> : vector<5x32xf32>
    %314 = tpu.matmul %313, %221, %cst_122 {dimension_numbers = #tpu.dot_dimension_numbers<[1], [0], [0], [1], [0, 0, 1, 1], [], []>} : vector<5x32xbf16>, vector<32x32xbf16>, vector<5x32xf32> -> vector<5x32xf32>
    %315 = vector.broadcast %223 : vector<1x32xf32> to vector<5x32xf32>
    %316 = arith.addf %314, %315 : vector<5x32xf32>
    %317 = arith.addf %189, %316 : vector<5x32xf32>
    %c1_123 = arith.constant 1 : index
    %c0_124 = arith.constant 0 : index
    %c0_125 = arith.constant 0 : index
    %318 = vector.load %arg9[%c1_123, %c0_124, %c0_125] : memref<2x1x32xf32, #tpu.memory_space<vmem>>, vector<1x1x32xf32>
    %319 = vector.shape_cast %318 : vector<1x1x32xf32> to vector<1x32xf32>
    %c1_126 = arith.constant 1 : index
    %c0_127 = arith.constant 0 : index
    %c0_128 = arith.constant 0 : index
    %320 = vector.load %arg10[%c1_126, %c0_127, %c0_128] : memref<2x1x32xf32, #tpu.memory_space<vmem>>, vector<1x1x32xf32>
    %321 = vector.shape_cast %320 : vector<1x1x32xf32> to vector<1x32xf32>
    %cst_129 = arith.constant dense<0.000000e+00> : vector<5xf32>
    %322 = vector.multi_reduction <add>, %317, %cst_129 [1] : vector<5x32xf32> to vector<5xf32>
    %323 = vector.shape_cast %322 : vector<5xf32> to vector<5x1xf32>
    %324 = arith.mulf %317, %317 : vector<5x32xf32>
    %cst_130 = arith.constant dense<0.000000e+00> : vector<5xf32>
    %325 = vector.multi_reduction <add>, %324, %cst_130 [1] : vector<5x32xf32> to vector<5xf32>
    %326 = vector.shape_cast %325 : vector<5xf32> to vector<5x1xf32>
    %cst_131 = arith.constant 3.125000e-02 : f32
    %327 = vector.broadcast %cst_131 : f32 to vector<5x1xf32>
    %328 = arith.mulf %323, %327 : vector<5x1xf32>
    %cst_132 = arith.constant 3.125000e-02 : f32
    %329 = vector.broadcast %cst_132 : f32 to vector<5x1xf32>
    %330 = arith.mulf %326, %329 : vector<5x1xf32>
    %331 = arith.mulf %328, %328 : vector<5x1xf32>
    %332 = arith.subf %330, %331 : vector<5x1xf32>
    %333 = vector.broadcast %328 : vector<5x1xf32> to vector<5x32xf32>
    %334 = arith.subf %317, %333 : vector<5x32xf32>
    %cst_133 = arith.constant 9.99999997E-7 : f32
    %335 = vector.broadcast %cst_133 : f32 to vector<5x1xf32>
    %336 = arith.addf %332, %335 : vector<5x1xf32>
    %337 = math.rsqrt %336 : vector<5x1xf32>
    %338 = vector.broadcast %337 : vector<5x1xf32> to vector<5x32xf32>
    %339 = arith.mulf %334, %338 : vector<5x32xf32>
    %340 = vector.broadcast %319 : vector<1x32xf32> to vector<5x32xf32>
    %341 = arith.mulf %339, %340 : vector<5x32xf32>
    %342 = vector.broadcast %321 : vector<1x32xf32> to vector<5x32xf32>
    %343 = arith.addf %341, %342 : vector<5x32xf32>
    %c1_134 = arith.constant 1 : index
    %c0_135 = arith.constant 0 : index
    %c0_136 = arith.constant 0 : index
    %344 = vector.load %arg11[%c1_134, %c0_135, %c0_136] : memref<2x32x128xbf16, #tpu.memory_space<vmem>>, vector<1x32x128xbf16>
    %345 = vector.shape_cast %344 : vector<1x32x128xbf16> to vector<32x128xbf16>
    %346 = arith.truncf %343 : vector<5x32xf32> to vector<5x32xbf16>
    %cst_137 = arith.constant dense<0.000000e+00> : vector<5x128xf32>
    %347 = tpu.matmul %346, %345, %cst_137 {dimension_numbers = #tpu.dot_dimension_numbers<[1], [0], [0], [1], [0, 0, 1, 1], [], []>} : vector<5x32xbf16>, vector<32x128xbf16>, vector<5x128xf32> -> vector<5x128xf32>
    %c1_138 = arith.constant 1 : index
    %c0_139 = arith.constant 0 : index
    %c0_140 = arith.constant 0 : index
    %348 = vector.load %arg12[%c1_138, %c0_139, %c0_140] : memref<2x1x128xf32, #tpu.memory_space<vmem>>, vector<1x1x128xf32>
    %349 = vector.shape_cast %348 : vector<1x1x128xf32> to vector<1x128xf32>
    %350 = vector.broadcast %349 : vector<1x128xf32> to vector<5x128xf32>
    %351 = arith.addf %347, %350 : vector<5x128xf32>
    %352 = arith.mulf %351, %351 : vector<5x128xf32>
    %353 = arith.mulf %351, %352 : vector<5x128xf32>
    %cst_141 = arith.constant 4.471500e-02 : f32
    %354 = vector.broadcast %cst_141 : f32 to vector<5x128xf32>
    %355 = arith.mulf %354, %353 : vector<5x128xf32>
    %356 = arith.addf %351, %355 : vector<5x128xf32>
    %cst_142 = arith.constant 0.797884583 : f32
    %357 = vector.broadcast %cst_142 : f32 to vector<5x128xf32>
    %358 = arith.mulf %357, %356 : vector<5x128xf32>
    %359 = math.tanh %358 : vector<5x128xf32>
    %cst_143 = arith.constant 1.000000e+00 : f32
    %360 = vector.broadcast %cst_143 : f32 to vector<5x128xf32>
    %361 = arith.addf %360, %359 : vector<5x128xf32>
    %cst_144 = arith.constant 5.000000e-01 : f32
    %362 = vector.broadcast %cst_144 : f32 to vector<5x128xf32>
    %363 = arith.mulf %362, %361 : vector<5x128xf32>
    %364 = arith.mulf %351, %363 : vector<5x128xf32>
    %c1_145 = arith.constant 1 : index
    %c0_146 = arith.constant 0 : index
    %c0_147 = arith.constant 0 : index
    %365 = vector.load %arg13[%c1_145, %c0_146, %c0_147] : memref<2x128x32xbf16, #tpu.memory_space<vmem>>, vector<1x128x32xbf16>
    %366 = vector.shape_cast %365 : vector<1x128x32xbf16> to vector<128x32xbf16>
    %367 = arith.truncf %364 : vector<5x128xf32> to vector<5x128xbf16>
    %cst_148 = arith.constant dense<0.000000e+00> : vector<5x32xf32>
    %368 = tpu.matmul %367, %366, %cst_148 {dimension_numbers = #tpu.dot_dimension_numbers<[1], [0], [0], [1], [0, 0, 1, 1], [], []>} : vector<5x128xbf16>, vector<128x32xbf16>, vector<5x32xf32> -> vector<5x32xf32>
    %369 = arith.addf %317, %368 : vector<5x32xf32>
    %c1_149 = arith.constant 1 : index
    %c0_150 = arith.constant 0 : index
    %c0_151 = arith.constant 0 : index
    %370 = vector.load %arg14[%c1_149, %c0_150, %c0_151] : memref<2x1x32xf32, #tpu.memory_space<vmem>>, vector<1x1x32xf32>
    %371 = vector.shape_cast %370 : vector<1x1x32xf32> to vector<1x32xf32>
    %372 = vector.broadcast %371 : vector<1x32xf32> to vector<5x32xf32>
    %373 = arith.addf %369, %372 : vector<5x32xf32>
    %c0_152 = arith.constant 0 : index
    %c0_153 = arith.constant 0 : index
    %374 = vector.load %arg15[%c0_152, %c0_153] : memref<1x32xf32, #tpu.memory_space<vmem>>, vector<1x32xf32>
    %c0_154 = arith.constant 0 : index
    %c0_155 = arith.constant 0 : index
    %375 = vector.load %arg16[%c0_154, %c0_155] : memref<1x32xf32, #tpu.memory_space<vmem>>, vector<1x32xf32>
    %cst_156 = arith.constant dense<0.000000e+00> : vector<5xf32>
    %376 = vector.multi_reduction <add>, %373, %cst_156 [1] : vector<5x32xf32> to vector<5xf32>
    %377 = vector.shape_cast %376 : vector<5xf32> to vector<5x1xf32>
    %378 = arith.mulf %373, %373 : vector<5x32xf32>
    %cst_157 = arith.constant dense<0.000000e+00> : vector<5xf32>
    %379 = vector.multi_reduction <add>, %378, %cst_157 [1] : vector<5x32xf32> to vector<5xf32>
    %380 = vector.shape_cast %379 : vector<5xf32> to vector<5x1xf32>
    %cst_158 = arith.constant 3.125000e-02 : f32
    %381 = vector.broadcast %cst_158 : f32 to vector<5x1xf32>
    %382 = arith.mulf %377, %381 : vector<5x1xf32>
    %cst_159 = arith.constant 3.125000e-02 : f32
    %383 = vector.broadcast %cst_159 : f32 to vector<5x1xf32>
    %384 = arith.mulf %380, %383 : vector<5x1xf32>
    %385 = arith.mulf %382, %382 : vector<5x1xf32>
    %386 = arith.subf %384, %385 : vector<5x1xf32>
    %387 = vector.broadcast %382 : vector<5x1xf32> to vector<5x32xf32>
    %388 = arith.subf %373, %387 : vector<5x32xf32>
    %cst_160 = arith.constant 9.99999997E-7 : f32
    %389 = vector.broadcast %cst_160 : f32 to vector<5x1xf32>
    %390 = arith.addf %386, %389 : vector<5x1xf32>
    %391 = math.rsqrt %390 : vector<5x1xf32>
    %392 = vector.broadcast %391 : vector<5x1xf32> to vector<5x32xf32>
    %393 = arith.mulf %388, %392 : vector<5x32xf32>
    %394 = vector.broadcast %374 : vector<1x32xf32> to vector<5x32xf32>
    %395 = arith.mulf %393, %394 : vector<5x32xf32>
    %396 = vector.broadcast %375 : vector<1x32xf32> to vector<5x32xf32>
    %397 = arith.addf %395, %396 : vector<5x32xf32>
    %c0_161 = arith.constant 0 : index
    %c0_162 = arith.constant 0 : index
    %c0_163 = arith.constant 0 : index
    %398 = vector.load %arg17[%c0_161, %c0_162, %c0_163] : memref<2x32x32xbf16, #tpu.memory_space<vmem>>, vector<1x32x32xbf16>
    %399 = vector.shape_cast %398 : vector<1x32x32xbf16> to vector<32x32xbf16>
    %400 = arith.truncf %397 : vector<5x32xf32> to vector<5x32xbf16>
    %cst_164 = arith.constant dense<0.000000e+00> : vector<5x32xf32>
    %401 = tpu.matmul %400, %399, %cst_164 {dimension_numbers = #tpu.dot_dimension_numbers<[1], [0], [0], [1], [0, 0, 1, 1], [], []>} : vector<5x32xbf16>, vector<32x32xbf16>, vector<5x32xf32> -> vector<5x32xf32>
    %c0_165 = arith.constant 0 : index
    %c0_166 = arith.constant 0 : index
    %c0_167 = arith.constant 0 : index
    %402 = vector.load %arg18[%c0_165, %c0_166, %c0_167] : memref<2x1x32xf32, #tpu.memory_space<vmem>>, vector<1x1x32xf32>
    %403 = vector.shape_cast %402 : vector<1x1x32xf32> to vector<1x32xf32>
    %404 = vector.broadcast %403 : vector<1x32xf32> to vector<5x32xf32>
    %405 = arith.addf %401, %404 : vector<5x32xf32>
    %c0_168 = arith.constant 0 : index
    %c0_169 = arith.constant 0 : index
    %c0_170 = arith.constant 0 : index
    %406 = vector.load %arg21[%c0_168, %c0_169, %c0_170] : memref<2x5x32xf32, #tpu.memory_space<vmem>>, vector<1x5x32xf32>
    %407 = vector.shape_cast %406 : vector<1x5x32xf32> to vector<5x32xf32>
    %408 = vector.shape_cast %405 : vector<5x32xf32> to vector<1x5x32xf32>
    tpu.vector_store %arg21[%c0_168, %c0_169, %c0_170], %408 {strides = array<i32>} : memref<2x5x32xf32, #tpu.memory_space<vmem>>, vector<1x5x32xf32>,
    %c0_171 = arith.constant 0 : index
    %c0_172 = arith.constant 0 : index
    %c0_173 = arith.constant 0 : index
    %409 = vector.load %arg19[%c0_171, %c0_172, %c0_173] : memref<2x32x32xbf16, #tpu.memory_space<vmem>>, vector<1x32x32xbf16>
    %410 = vector.shape_cast %409 : vector<1x32x32xbf16> to vector<32x32xbf16>
    %411 = arith.truncf %397 : vector<5x32xf32> to vector<5x32xbf16>
    %cst_174 = arith.constant dense<0.000000e+00> : vector<5x32xf32>
    %412 = tpu.matmul %411, %410, %cst_174 {dimension_numbers = #tpu.dot_dimension_numbers<[1], [0], [0], [1], [0, 0, 1, 1], [], []>} : vector<5x32xbf16>, vector<32x32xbf16>, vector<5x32xf32> -> vector<5x32xf32>
    %c0_175 = arith.constant 0 : index
    %c0_176 = arith.constant 0 : index
    %c0_177 = arith.constant 0 : index
    %413 = vector.load %arg20[%c0_175, %c0_176, %c0_177] : memref<2x1x32xf32, #tpu.memory_space<vmem>>, vector<1x1x32xf32>
    %414 = vector.shape_cast %413 : vector<1x1x32xf32> to vector<1x32xf32>
    %415 = vector.broadcast %414 : vector<1x32xf32> to vector<5x32xf32>
    %416 = arith.addf %412, %415 : vector<5x32xf32>
    %c0_178 = arith.constant 0 : index
    %c0_179 = arith.constant 0 : index
    %c0_180 = arith.constant 0 : index
    %417 = vector.load %arg22[%c0_178, %c0_179, %c0_180] : memref<2x5x32xf32, #tpu.memory_space<vmem>>, vector<1x5x32xf32>
    %418 = vector.shape_cast %417 : vector<1x5x32xf32> to vector<5x32xf32>
    %419 = vector.shape_cast %416 : vector<5x32xf32> to vector<1x5x32xf32>
    tpu.vector_store %arg22[%c0_178, %c0_179, %c0_180], %419 {strides = array<i32>} : memref<2x5x32xf32, #tpu.memory_space<vmem>>, vector<1x5x32xf32>,
    %c1_181 = arith.constant 1 : index
    %c0_182 = arith.constant 0 : index
    %c0_183 = arith.constant 0 : index
    %420 = vector.load %arg17[%c1_181, %c0_182, %c0_183] : memref<2x32x32xbf16, #tpu.memory_space<vmem>>, vector<1x32x32xbf16>
    %421 = vector.shape_cast %420 : vector<1x32x32xbf16> to vector<32x32xbf16>
    %422 = arith.truncf %397 : vector<5x32xf32> to vector<5x32xbf16>
    %cst_184 = arith.constant dense<0.000000e+00> : vector<5x32xf32>
    %423 = tpu.matmul %422, %421, %cst_184 {dimension_numbers = #tpu.dot_dimension_numbers<[1], [0], [0], [1], [0, 0, 1, 1], [], []>} : vector<5x32xbf16>, vector<32x32xbf16>, vector<5x32xf32> -> vector<5x32xf32>
    %c1_185 = arith.constant 1 : index
    %c0_186 = arith.constant 0 : index
    %c0_187 = arith.constant 0 : index
    %424 = vector.load %arg18[%c1_185, %c0_186, %c0_187] : memref<2x1x32xf32, #tpu.memory_space<vmem>>, vector<1x1x32xf32>
    %425 = vector.shape_cast %424 : vector<1x1x32xf32> to vector<1x32xf32>
    %426 = vector.broadcast %425 : vector<1x32xf32> to vector<5x32xf32>
    %427 = arith.addf %423, %426 : vector<5x32xf32>
    %c1_188 = arith.constant 1 : index
    %c0_189 = arith.constant 0 : index
    %c0_190 = arith.constant 0 : index
    %428 = vector.load %arg21[%c1_188, %c0_189, %c0_190] : memref<2x5x32xf32, #tpu.memory_space<vmem>>, vector<1x5x32xf32>
    %429 = vector.shape_cast %428 : vector<1x5x32xf32> to vector<5x32xf32>
    %430 = vector.shape_cast %427 : vector<5x32xf32> to vector<1x5x32xf32>
    tpu.vector_store %arg21[%c1_188, %c0_189, %c0_190], %430 {strides = array<i32>} : memref<2x5x32xf32, #tpu.memory_space<vmem>>, vector<1x5x32xf32>,
    %c1_191 = arith.constant 1 : index
    %c0_192 = arith.constant 0 : index
    %c0_193 = arith.constant 0 : index
    %431 = vector.load %arg19[%c1_191, %c0_192, %c0_193] : memref<2x32x32xbf16, #tpu.memory_space<vmem>>, vector<1x32x32xbf16>
    %432 = vector.shape_cast %431 : vector<1x32x32xbf16> to vector<32x32xbf16>
    %433 = arith.truncf %397 : vector<5x32xf32> to vector<5x32xbf16>
    %cst_194 = arith.constant dense<0.000000e+00> : vector<5x32xf32>
    %434 = tpu.matmul %433, %432, %cst_194 {dimension_numbers = #tpu.dot_dimension_numbers<[1], [0], [0], [1], [0, 0, 1, 1], [], []>} : vector<5x32xbf16>, vector<32x32xbf16>, vector<5x32xf32> -> vector<5x32xf32>
    %c1_195 = arith.constant 1 : index
    %c0_196 = arith.constant 0 : index
    %c0_197 = arith.constant 0 : index
    %435 = vector.load %arg20[%c1_195, %c0_196, %c0_197] : memref<2x1x32xf32, #tpu.memory_space<vmem>>, vector<1x1x32xf32>
    %436 = vector.shape_cast %435 : vector<1x1x32xf32> to vector<1x32xf32>
    %437 = vector.broadcast %436 : vector<1x32xf32> to vector<5x32xf32>
    %438 = arith.addf %434, %437 : vector<5x32xf32>
    %c1_198 = arith.constant 1 : index
    %c0_199 = arith.constant 0 : index
    %c0_200 = arith.constant 0 : index
    %439 = vector.load %arg22[%c1_198, %c0_199, %c0_200] : memref<2x5x32xf32, #tpu.memory_space<vmem>>, vector<1x5x32xf32>
    %440 = vector.shape_cast %439 : vector<1x5x32xf32> to vector<5x32xf32>
    %441 = vector.shape_cast %438 : vector<5x32xf32> to vector<1x5x32xf32>
    tpu.vector_store %arg22[%c1_198, %c0_199, %c0_200], %441 {strides = array<i32>} : memref<2x5x32xf32, #tpu.memory_space<vmem>>, vector<1x5x32xf32>,
    return
  }
}

module attributes {stable_mosaic.version = 11 : i64} {
  func.func @_bert_kernel(%arg0: i32, %arg1: memref<1xi32, #tpu.memory_space<smem>>, %arg2: memref<1x8x32xf32, #tpu.memory_space<vmem>>, %arg3: memref<1x8xf32, #tpu.memory_space<vmem>>, %arg4: memref<2x5x32xf32, #tpu.memory_space<vmem>>, %arg5: memref<2x5x32xf32, #tpu.memory_space<vmem>>, %arg6: memref<1x32xf32, #tpu.memory_space<vmem>>, %arg7: memref<1x32xf32, #tpu.memory_space<vmem>>, %arg8: memref<2x32x96xbf16, #tpu.memory_space<vmem>>, %arg9: memref<2x1x96xf32, #tpu.memory_space<vmem>>, %arg10: memref<2x32x32xbf16, #tpu.memory_space<vmem>>, %arg11: memref<2x1x32xf32, #tpu.memory_space<vmem>>, %arg12: memref<2x1x32xf32, #tpu.memory_space<vmem>>, %arg13: memref<2x1x32xf32, #tpu.memory_space<vmem>>, %arg14: memref<2x32x32xbf16, #tpu.memory_space<vmem>>, %arg15: memref<2x1x32xf32, #tpu.memory_space<vmem>>, %arg16: memref<2x32x32xbf16, #tpu.memory_space<vmem>>, %arg17: memref<2x1x32xf32, #tpu.memory_space<vmem>>, %arg18: memref<2x1x32xf32, #tpu.memory_space<vmem>>, %arg19: memref<2x1x32xf32, #tpu.memory_space<vmem>>, %arg20: memref<2x32x128xbf16, #tpu.memory_space<vmem>>, %arg21: memref<2x1x128xf32, #tpu.memory_space<vmem>>, %arg22: memref<2x128x32xbf16, #tpu.memory_space<vmem>>, %arg23: memref<2x1x32xf32, #tpu.memory_space<vmem>>, %arg24: memref<2x1x32xf32, #tpu.memory_space<vmem>>, %arg25: memref<2x1x32xf32, #tpu.memory_space<vmem>>, %arg26: memref<32x32xbf16, #tpu.memory_space<vmem>>, %arg27: memref<1x32xf32, #tpu.memory_space<vmem>>, %arg28: memref<1x32xf32, #tpu.memory_space<vmem>>, %arg29: memref<1x32xf32, #tpu.memory_space<vmem>>, %arg30: memref<32x64xbf16, #tpu.memory_space<vmem>>, %arg31: memref<1x64xf32, #tpu.memory_space<vmem>>, %arg32: memref<1x1x128xi32, #tpu.memory_space<vmem>>) attributes {dimension_semantics = [#tpu.dimension_semantics<parallel>], iteration_bounds = array<i64: 7>, scalar_prefetch = 1 : i64, scratch_operands = 0 : i64, tpu.core_type = #tpu.core_type<tc>, window_params = [{transform_indices = @transform_0, window_bounds = array<i64: 1, 8, 32>}, {pipeline_mode = #tpu.pipeline_mode<synchronous>, transform_indices = @transform_1, window_bounds = array<i64: 1, 8>}, {pipeline_mode = #tpu.pipeline_mode<synchronous>, transform_indices = @transform_2, window_bounds = array<i64: 2, 5, 32>}, {pipeline_mode = #tpu.pipeline_mode<synchronous>, transform_indices = @transform_3, window_bounds = array<i64: 2, 5, 32>}, {pipeline_mode = #tpu.pipeline_mode<synchronous>, transform_indices = @transform_4, window_bounds = array<i64: 1, 32>}, {pipeline_mode = #tpu.pipeline_mode<synchronous>, transform_indices = @transform_5, window_bounds = array<i64: 1, 32>}, {pipeline_mode = #tpu.pipeline_mode<synchronous>, transform_indices = @transform_6, window_bounds = array<i64: 2, 32, 96>}, {pipeline_mode = #tpu.pipeline_mode<synchronous>, transform_indices = @transform_7, window_bounds = array<i64: 2, 1, 96>}, {pipeline_mode = #tpu.pipeline_mode<synchronous>, transform_indices = @transform_8, window_bounds = array<i64: 2, 32, 32>}, {pipeline_mode = #tpu.pipeline_mode<synchronous>, transform_indices = @transform_9, window_bounds = array<i64: 2, 1, 32>}, {pipeline_mode = #tpu.pipeline_mode<synchronous>, transform_indices = @transform_10, window_bounds = array<i64: 2, 1, 32>}, {pipeline_mode = #tpu.pipeline_mode<synchronous>, transform_indices = @transform_11, window_bounds = array<i64: 2, 1, 32>}, {pipeline_mode = #tpu.pipeline_mode<synchronous>, transform_indices = @transform_12, window_bounds = array<i64: 2, 32, 32>}, {pipeline_mode = #tpu.pipeline_mode<synchronous>, transform_indices = @transform_13, window_bounds = array<i64: 2, 1, 32>}, {pipeline_mode = #tpu.pipeline_mode<synchronous>, transform_indices = @transform_14, window_bounds = array<i64: 2, 32, 32>}, {pipeline_mode = #tpu.pipeline_mode<synchronous>, transform_indices = @transform_15, window_bounds = array<i64: 2, 1, 32>}, {pipeline_mode = #tpu.pipeline_mode<synchronous>, transform_indices = @transform_16, window_bounds = array<i64: 2, 1, 32>}, {pipeline_mode = #tpu.pipeline_mode<synchronous>, transform_indices = @transform_17, window_bounds = array<i64: 2, 1, 32>}, {pipeline_mode = #tpu.pipeline_mode<synchronous>, transform_indices = @transform_18, window_bounds = array<i64: 2, 32, 128>}, {pipeline_mode = #tpu.pipeline_mode<synchronous>, transform_indices = @transform_19, window_bounds = array<i64: 2, 1, 128>}, {pipeline_mode = #tpu.pipeline_mode<synchronous>, transform_indices = @transform_20, window_bounds = array<i64: 2, 128, 32>}, {pipeline_mode = #tpu.pipeline_mode<synchronous>, transform_indices = @transform_21, window_bounds = array<i64: 2, 1, 32>}, {pipeline_mode = #tpu.pipeline_mode<synchronous>, transform_indices = @transform_22, window_bounds = array<i64: 2, 1, 32>}, {pipeline_mode = #tpu.pipeline_mode<synchronous>, transform_indices = @transform_23, window_bounds = array<i64: 2, 1, 32>}, {pipeline_mode = #tpu.pipeline_mode<synchronous>, transform_indices = @transform_24, window_bounds = array<i64: 32, 32>}, {pipeline_mode = #tpu.pipeline_mode<synchronous>, transform_indices = @transform_25, window_bounds = array<i64: 1, 32>}, {pipeline_mode = #tpu.pipeline_mode<synchronous>, transform_indices = @transform_26, window_bounds = array<i64: 1, 32>}, {pipeline_mode = #tpu.pipeline_mode<synchronous>, transform_indices = @transform_27, window_bounds = array<i64: 1, 32>}, {pipeline_mode = #tpu.pipeline_mode<synchronous>, transform_indices = @transform_28, window_bounds = array<i64: 32, 64>}, {pipeline_mode = #tpu.pipeline_mode<synchronous>, transform_indices = @transform_29, window_bounds = array<i64: 1, 64>}, {transform_indices = @transform_30, window_bounds = array<i64: 1, 1, 128>}]} {
    %c1_i32 = arith.constant 1 : i32
    %0 = arith.addi %arg0, %c1_i32 : i32
    %c0 = arith.constant 0 : index
    %1 = memref.load %arg1[%c0] : memref<1xi32, #tpu.memory_space<smem>>
    %2 = arith.cmpi slt, %0, %1 : i32
    %3 = arith.extui %2 : i1 to i32
    %c0_i32 = arith.constant 0 : i32
    %4 = arith.cmpi ne, %3, %c0_i32 : i32
    scf.if %4 {
      %c0_1 = arith.constant 0 : index
      %c0_2 = arith.constant 0 : index
      %c0_3 = arith.constant 0 : index
      %8 = vector.load %arg2[%c0_1, %c0_2, %c0_3] : memref<1x8x32xf32, #tpu.memory_space<vmem>>, vector<1x8x32xf32>
      %9 = vector.shape_cast %8 : vector<1x8x32xf32> to vector<8x32xf32>
      %c0_4 = arith.constant 0 : index
      %c0_5 = arith.constant 0 : index
      %10 = vector.load %arg6[%c0_4, %c0_5] : memref<1x32xf32, #tpu.memory_space<vmem>>, vector<1x32xf32>
      %c0_6 = arith.constant 0 : index
      %c0_7 = arith.constant 0 : index
      %11 = vector.load %arg7[%c0_6, %c0_7] : memref<1x32xf32, #tpu.memory_space<vmem>>, vector<1x32xf32>
      %cst = arith.constant dense<0.000000e+00> : vector<8xf32>
      %12 = vector.multi_reduction <add>, %9, %cst [1] : vector<8x32xf32> to vector<8xf32>
      %13 = vector.shape_cast %12 : vector<8xf32> to vector<8x1xf32>
      %14 = arith.mulf %9, %9 : vector<8x32xf32>
      %cst_8 = arith.constant dense<0.000000e+00> : vector<8xf32>
      %15 = vector.multi_reduction <add>, %14, %cst_8 [1] : vector<8x32xf32> to vector<8xf32>
      %16 = vector.shape_cast %15 : vector<8xf32> to vector<8x1xf32>
      %cst_9 = arith.constant 3.125000e-02 : f32
      %17 = vector.broadcast %cst_9 : f32 to vector<8x1xf32>
      %18 = arith.mulf %13, %17 : vector<8x1xf32>
      %cst_10 = arith.constant 3.125000e-02 : f32
      %19 = vector.broadcast %cst_10 : f32 to vector<8x1xf32>
      %20 = arith.mulf %16, %19 : vector<8x1xf32>
      %21 = arith.mulf %18, %18 : vector<8x1xf32>
      %22 = arith.subf %20, %21 : vector<8x1xf32>
      %23 = vector.broadcast %18 : vector<8x1xf32> to vector<8x32xf32>
      %24 = arith.subf %9, %23 : vector<8x32xf32>
      %cst_11 = arith.constant 9.99999996E-13 : f32
      %25 = vector.broadcast %cst_11 : f32 to vector<8x1xf32>
      %26 = arith.addf %22, %25 : vector<8x1xf32>
      %27 = math.rsqrt %26 : vector<8x1xf32>
      %28 = vector.broadcast %27 : vector<8x1xf32> to vector<8x32xf32>
      %29 = arith.mulf %24, %28 : vector<8x32xf32>
      %30 = vector.broadcast %10 : vector<1x32xf32> to vector<8x32xf32>
      %31 = arith.mulf %29, %30 : vector<8x32xf32>
      %32 = vector.broadcast %11 : vector<1x32xf32> to vector<8x32xf32>
      %33 = arith.addf %31, %32 : vector<8x32xf32>
      %c0_12 = arith.constant 0 : index
      %c0_13 = arith.constant 0 : index
      %34 = vector.load %arg3[%c0_12, %c0_13] : memref<1x8xf32, #tpu.memory_space<vmem>>, vector<1x8xf32>
      %c0_14 = arith.constant 0 : index
      %c0_15 = arith.constant 0 : index
      %c0_16 = arith.constant 0 : index
      %35 = vector.load %arg8[%c0_14, %c0_15, %c0_16] : memref<2x32x96xbf16, #tpu.memory_space<vmem>>, vector<1x32x96xbf16>
      %36 = vector.shape_cast %35 : vector<1x32x96xbf16> to vector<32x96xbf16>
      %c0_17 = arith.constant 0 : index
      %c0_18 = arith.constant 0 : index
      %c0_19 = arith.constant 0 : index
      %37 = vector.load %arg9[%c0_17, %c0_18, %c0_19] : memref<2x1x96xf32, #tpu.memory_space<vmem>>, vector<1x1x96xf32>
      %38 = vector.shape_cast %37 : vector<1x1x96xf32> to vector<1x96xf32>
      %c0_20 = arith.constant 0 : index
      %c0_21 = arith.constant 0 : index
      %c0_22 = arith.constant 0 : index
      %39 = vector.load %arg10[%c0_20, %c0_21, %c0_22] : memref<2x32x32xbf16, #tpu.memory_space<vmem>>, vector<1x32x32xbf16>
      %40 = vector.shape_cast %39 : vector<1x32x32xbf16> to vector<32x32xbf16>
      %c0_23 = arith.constant 0 : index
      %c0_24 = arith.constant 0 : index
      %c0_25 = arith.constant 0 : index
      %41 = vector.load %arg11[%c0_23, %c0_24, %c0_25] : memref<2x1x32xf32, #tpu.memory_space<vmem>>, vector<1x1x32xf32>
      %42 = vector.shape_cast %41 : vector<1x1x32xf32> to vector<1x32xf32>
      %43 = arith.truncf %33 : vector<8x32xf32> to vector<8x32xbf16>
      %cst_26 = arith.constant dense<0.000000e+00> : vector<8x96xf32>
      %44 = tpu.matmul %43, %36, %cst_26 {dimension_numbers = #tpu.dot_dimension_numbers<[1], [0], [0], [1], [0, 0, 1, 1], [], []>} : vector<8x32xbf16>, vector<32x96xbf16>, vector<8x96xf32> -> vector<8x96xf32>
      %45 = vector.broadcast %38 : vector<1x96xf32> to vector<8x96xf32>
      %46 = arith.addf %44, %45 : vector<8x96xf32>
      %47 = vector.extract_strided_slice %46 {offsets = [0, 0], sizes = [8, 8], strides = [1, 1]} : vector<8x96xf32> to vector<8x8xf32>
      %48 = vector.extract_strided_slice %46 {offsets = [0, 32], sizes = [8, 8], strides = [1, 1]} : vector<8x96xf32> to vector<8x8xf32>
      %49 = vector.extract_strided_slice %46 {offsets = [0, 64], sizes = [8, 8], strides = [1, 1]} : vector<8x96xf32> to vector<8x8xf32>
      %50 = arith.truncf %47 : vector<8x8xf32> to vector<8x8xbf16>
      %51 = arith.truncf %48 : vector<8x8xf32> to vector<8x8xbf16>
      %cst_27 = arith.constant dense<0.000000e+00> : vector<8x8xf32>
      %52 = tpu.matmul %50, %51, %cst_27 {dimension_numbers = #tpu.dot_dimension_numbers<[1], [1], [0], [0], [0, 0, 1, 0], [], []>} : vector<8x8xbf16>, vector<8x8xbf16>, vector<8x8xf32> -> vector<8x8xf32>
      %cst_28 = arith.constant 0.353553385 : f32
      %53 = vector.broadcast %cst_28 : f32 to vector<8x8xf32>
      %54 = arith.mulf %52, %53 : vector<8x8xf32>
      %55 = vector.broadcast %34 : vector<1x8xf32> to vector<8x8xf32>
      %56 = arith.addf %54, %55 : vector<8x8xf32>
      %cst_29 = arith.constant dense<0xFF800000> : vector<8xf32>
      %57 = vector.multi_reduction <maximumf>, %56, %cst_29 [1] : vector<8x8xf32> to vector<8xf32>
      %58 = vector.shape_cast %57 : vector<8xf32> to vector<8x1xf32>
      %59 = vector.broadcast %58 : vector<8x1xf32> to vector<8x8xf32>
      %60 = arith.subf %56, %59 : vector<8x8xf32>
      %61 = math.exp %60 : vector<8x8xf32>
      %cst_30 = arith.constant dense<0.000000e+00> : vector<8xf32>
      %62 = vector.multi_reduction <add>, %61, %cst_30 [1] : vector<8x8xf32> to vector<8xf32>
      %63 = vector.shape_cast %62 : vector<8xf32> to vector<8x1xf32>
      %64 = tpu.reciprocal %63 {approx = true} : vector<8x1xf32> -> vector<8x1xf32>
      %65 = vector.broadcast %64 : vector<8x1xf32> to vector<8x8xf32>
      %66 = arith.mulf %61, %65 : vector<8x8xf32>
      %67 = arith.truncf %66 : vector<8x8xf32> to vector<8x8xbf16>
      %68 = arith.truncf %49 : vector<8x8xf32> to vector<8x8xbf16>
      %cst_31 = arith.constant dense<0.000000e+00> : vector<8x8xf32>
      %69 = tpu.matmul %67, %68, %cst_31 {dimension_numbers = #tpu.dot_dimension_numbers<[1], [0], [0], [1], [0, 0, 1, 1], [], []>} : vector<8x8xbf16>, vector<8x8xbf16>, vector<8x8xf32> -> vector<8x8xf32>
      %70 = vector.extract_strided_slice %46 {offsets = [0, 8], sizes = [8, 8], strides = [1, 1]} : vector<8x96xf32> to vector<8x8xf32>
      %71 = vector.extract_strided_slice %46 {offsets = [0, 40], sizes = [8, 8], strides = [1, 1]} : vector<8x96xf32> to vector<8x8xf32>
      %72 = vector.extract_strided_slice %46 {offsets = [0, 72], sizes = [8, 8], strides = [1, 1]} : vector<8x96xf32> to vector<8x8xf32>
      %73 = arith.truncf %70 : vector<8x8xf32> to vector<8x8xbf16>
      %74 = arith.truncf %71 : vector<8x8xf32> to vector<8x8xbf16>
      %cst_32 = arith.constant dense<0.000000e+00> : vector<8x8xf32>
      %75 = tpu.matmul %73, %74, %cst_32 {dimension_numbers = #tpu.dot_dimension_numbers<[1], [1], [0], [0], [0, 0, 1, 0], [], []>} : vector<8x8xbf16>, vector<8x8xbf16>, vector<8x8xf32> -> vector<8x8xf32>
      %cst_33 = arith.constant 0.353553385 : f32
      %76 = vector.broadcast %cst_33 : f32 to vector<8x8xf32>
      %77 = arith.mulf %75, %76 : vector<8x8xf32>
      %78 = vector.broadcast %34 : vector<1x8xf32> to vector<8x8xf32>
      %79 = arith.addf %77, %78 : vector<8x8xf32>
      %cst_34 = arith.constant dense<0xFF800000> : vector<8xf32>
      %80 = vector.multi_reduction <maximumf>, %79, %cst_34 [1] : vector<8x8xf32> to vector<8xf32>
      %81 = vector.shape_cast %80 : vector<8xf32> to vector<8x1xf32>
      %82 = vector.broadcast %81 : vector<8x1xf32> to vector<8x8xf32>
      %83 = arith.subf %79, %82 : vector<8x8xf32>
      %84 = math.exp %83 : vector<8x8xf32>
      %cst_35 = arith.constant dense<0.000000e+00> : vector<8xf32>
      %85 = vector.multi_reduction <add>, %84, %cst_35 [1] : vector<8x8xf32> to vector<8xf32>
      %86 = vector.shape_cast %85 : vector<8xf32> to vector<8x1xf32>
      %87 = tpu.reciprocal %86 {approx = true} : vector<8x1xf32> -> vector<8x1xf32>
      %88 = vector.broadcast %87 : vector<8x1xf32> to vector<8x8xf32>
      %89 = arith.mulf %84, %88 : vector<8x8xf32>
      %90 = arith.truncf %89 : vector<8x8xf32> to vector<8x8xbf16>
      %91 = arith.truncf %72 : vector<8x8xf32> to vector<8x8xbf16>
      %cst_36 = arith.constant dense<0.000000e+00> : vector<8x8xf32>
      %92 = tpu.matmul %90, %91, %cst_36 {dimension_numbers = #tpu.dot_dimension_numbers<[1], [0], [0], [1], [0, 0, 1, 1], [], []>} : vector<8x8xbf16>, vector<8x8xbf16>, vector<8x8xf32> -> vector<8x8xf32>
      %93 = vector.extract_strided_slice %46 {offsets = [0, 16], sizes = [8, 8], strides = [1, 1]} : vector<8x96xf32> to vector<8x8xf32>
      %94 = vector.extract_strided_slice %46 {offsets = [0, 48], sizes = [8, 8], strides = [1, 1]} : vector<8x96xf32> to vector<8x8xf32>
      %95 = vector.extract_strided_slice %46 {offsets = [0, 80], sizes = [8, 8], strides = [1, 1]} : vector<8x96xf32> to vector<8x8xf32>
      %96 = arith.truncf %93 : vector<8x8xf32> to vector<8x8xbf16>
      %97 = arith.truncf %94 : vector<8x8xf32> to vector<8x8xbf16>
      %cst_37 = arith.constant dense<0.000000e+00> : vector<8x8xf32>
      %98 = tpu.matmul %96, %97, %cst_37 {dimension_numbers = #tpu.dot_dimension_numbers<[1], [1], [0], [0], [0, 0, 1, 0], [], []>} : vector<8x8xbf16>, vector<8x8xbf16>, vector<8x8xf32> -> vector<8x8xf32>
      %cst_38 = arith.constant 0.353553385 : f32
      %99 = vector.broadcast %cst_38 : f32 to vector<8x8xf32>
      %100 = arith.mulf %98, %99 : vector<8x8xf32>
      %101 = vector.broadcast %34 : vector<1x8xf32> to vector<8x8xf32>
      %102 = arith.addf %100, %101 : vector<8x8xf32>
      %cst_39 = arith.constant dense<0xFF800000> : vector<8xf32>
      %103 = vector.multi_reduction <maximumf>, %102, %cst_39 [1] : vector<8x8xf32> to vector<8xf32>
      %104 = vector.shape_cast %103 : vector<8xf32> to vector<8x1xf32>
      %105 = vector.broadcast %104 : vector<8x1xf32> to vector<8x8xf32>
      %106 = arith.subf %102, %105 : vector<8x8xf32>
      %107 = math.exp %106 : vector<8x8xf32>
      %cst_40 = arith.constant dense<0.000000e+00> : vector<8xf32>
      %108 = vector.multi_reduction <add>, %107, %cst_40 [1] : vector<8x8xf32> to vector<8xf32>
      %109 = vector.shape_cast %108 : vector<8xf32> to vector<8x1xf32>
      %110 = tpu.reciprocal %109 {approx = true} : vector<8x1xf32> -> vector<8x1xf32>
      %111 = vector.broadcast %110 : vector<8x1xf32> to vector<8x8xf32>
      %112 = arith.mulf %107, %111 : vector<8x8xf32>
      %113 = arith.truncf %112 : vector<8x8xf32> to vector<8x8xbf16>
      %114 = arith.truncf %95 : vector<8x8xf32> to vector<8x8xbf16>
      %cst_41 = arith.constant dense<0.000000e+00> : vector<8x8xf32>
      %115 = tpu.matmul %113, %114, %cst_41 {dimension_numbers = #tpu.dot_dimension_numbers<[1], [0], [0], [1], [0, 0, 1, 1], [], []>} : vector<8x8xbf16>, vector<8x8xbf16>, vector<8x8xf32> -> vector<8x8xf32>
      %116 = vector.extract_strided_slice %46 {offsets = [0, 24], sizes = [8, 8], strides = [1, 1]} : vector<8x96xf32> to vector<8x8xf32>
      %117 = vector.extract_strided_slice %46 {offsets = [0, 56], sizes = [8, 8], strides = [1, 1]} : vector<8x96xf32> to vector<8x8xf32>
      %118 = vector.extract_strided_slice %46 {offsets = [0, 88], sizes = [8, 8], strides = [1, 1]} : vector<8x96xf32> to vector<8x8xf32>
      %119 = arith.truncf %116 : vector<8x8xf32> to vector<8x8xbf16>
      %120 = arith.truncf %117 : vector<8x8xf32> to vector<8x8xbf16>
      %cst_42 = arith.constant dense<0.000000e+00> : vector<8x8xf32>
      %121 = tpu.matmul %119, %120, %cst_42 {dimension_numbers = #tpu.dot_dimension_numbers<[1], [1], [0], [0], [0, 0, 1, 0], [], []>} : vector<8x8xbf16>, vector<8x8xbf16>, vector<8x8xf32> -> vector<8x8xf32>
      %cst_43 = arith.constant 0.353553385 : f32
      %122 = vector.broadcast %cst_43 : f32 to vector<8x8xf32>
      %123 = arith.mulf %121, %122 : vector<8x8xf32>
      %124 = vector.broadcast %34 : vector<1x8xf32> to vector<8x8xf32>
      %125 = arith.addf %123, %124 : vector<8x8xf32>
      %cst_44 = arith.constant dense<0xFF800000> : vector<8xf32>
      %126 = vector.multi_reduction <maximumf>, %125, %cst_44 [1] : vector<8x8xf32> to vector<8xf32>
      %127 = vector.shape_cast %126 : vector<8xf32> to vector<8x1xf32>
      %128 = vector.broadcast %127 : vector<8x1xf32> to vector<8x8xf32>
      %129 = arith.subf %125, %128 : vector<8x8xf32>
      %130 = math.exp %129 : vector<8x8xf32>
      %cst_45 = arith.constant dense<0.000000e+00> : vector<8xf32>
      %131 = vector.multi_reduction <add>, %130, %cst_45 [1] : vector<8x8xf32> to vector<8xf32>
      %132 = vector.shape_cast %131 : vector<8xf32> to vector<8x1xf32>
      %133 = tpu.reciprocal %132 {approx = true} : vector<8x1xf32> -> vector<8x1xf32>
      %134 = vector.broadcast %133 : vector<8x1xf32> to vector<8x8xf32>
      %135 = arith.mulf %130, %134 : vector<8x8xf32>
      %136 = arith.truncf %135 : vector<8x8xf32> to vector<8x8xbf16>
      %137 = arith.truncf %118 : vector<8x8xf32> to vector<8x8xbf16>
      %cst_46 = arith.constant dense<0.000000e+00> : vector<8x8xf32>
      %138 = tpu.matmul %136, %137, %cst_46 {dimension_numbers = #tpu.dot_dimension_numbers<[1], [0], [0], [1], [0, 0, 1, 1], [], []>} : vector<8x8xbf16>, vector<8x8xbf16>, vector<8x8xf32> -> vector<8x8xf32>
      %139 = tpu.concatenate %69, %92, %115, %138 in 1 : vector<8x8xf32>, vector<8x8xf32>, vector<8x8xf32>, vector<8x8xf32> -> vector<8x32xf32>
      %140 = arith.truncf %139 : vector<8x32xf32> to vector<8x32xbf16>
      %cst_47 = arith.constant dense<0.000000e+00> : vector<8x32xf32>
      %141 = tpu.matmul %140, %40, %cst_47 {dimension_numbers = #tpu.dot_dimension_numbers<[1], [0], [0], [1], [0, 0, 1, 1], [], []>} : vector<8x32xbf16>, vector<32x32xbf16>, vector<8x32xf32> -> vector<8x32xf32>
      %142 = vector.broadcast %42 : vector<1x32xf32> to vector<8x32xf32>
      %143 = arith.addf %141, %142 : vector<8x32xf32>
      %144 = arith.addf %33, %143 : vector<8x32xf32>
      %c0_48 = arith.constant 0 : index
      %c0_49 = arith.constant 0 : index
      %c0_50 = arith.constant 0 : index
      %145 = vector.load %arg12[%c0_48, %c0_49, %c0_50] : memref<2x1x32xf32, #tpu.memory_space<vmem>>, vector<1x1x32xf32>
      %146 = vector.shape_cast %145 : vector<1x1x32xf32> to vector<1x32xf32>
      %c0_51 = arith.constant 0 : index
      %c0_52 = arith.constant 0 : index
      %c0_53 = arith.constant 0 : index
      %147 = vector.load %arg13[%c0_51, %c0_52, %c0_53] : memref<2x1x32xf32, #tpu.memory_space<vmem>>, vector<1x1x32xf32>
      %148 = vector.shape_cast %147 : vector<1x1x32xf32> to vector<1x32xf32>
      %cst_54 = arith.constant dense<0.000000e+00> : vector<8xf32>
      %149 = vector.multi_reduction <add>, %144, %cst_54 [1] : vector<8x32xf32> to vector<8xf32>
      %150 = vector.shape_cast %149 : vector<8xf32> to vector<8x1xf32>
      %151 = arith.mulf %144, %144 : vector<8x32xf32>
      %cst_55 = arith.constant dense<0.000000e+00> : vector<8xf32>
      %152 = vector.multi_reduction <add>, %151, %cst_55 [1] : vector<8x32xf32> to vector<8xf32>
      %153 = vector.shape_cast %152 : vector<8xf32> to vector<8x1xf32>
      %cst_56 = arith.constant 3.125000e-02 : f32
      %154 = vector.broadcast %cst_56 : f32 to vector<8x1xf32>
      %155 = arith.mulf %150, %154 : vector<8x1xf32>
      %cst_57 = arith.constant 3.125000e-02 : f32
      %156 = vector.broadcast %cst_57 : f32 to vector<8x1xf32>
      %157 = arith.mulf %153, %156 : vector<8x1xf32>
      %158 = arith.mulf %155, %155 : vector<8x1xf32>
      %159 = arith.subf %157, %158 : vector<8x1xf32>
      %160 = vector.broadcast %155 : vector<8x1xf32> to vector<8x32xf32>
      %161 = arith.subf %144, %160 : vector<8x32xf32>
      %cst_58 = arith.constant 9.99999996E-13 : f32
      %162 = vector.broadcast %cst_58 : f32 to vector<8x1xf32>
      %163 = arith.addf %159, %162 : vector<8x1xf32>
      %164 = math.rsqrt %163 : vector<8x1xf32>
      %165 = vector.broadcast %164 : vector<8x1xf32> to vector<8x32xf32>
      %166 = arith.mulf %161, %165 : vector<8x32xf32>
      %167 = vector.broadcast %146 : vector<1x32xf32> to vector<8x32xf32>
      %168 = arith.mulf %166, %167 : vector<8x32xf32>
      %169 = vector.broadcast %148 : vector<1x32xf32> to vector<8x32xf32>
      %170 = arith.addf %168, %169 : vector<8x32xf32>
      %c0_59 = arith.constant 0 : index
      %c0_60 = arith.constant 0 : index
      %c0_61 = arith.constant 0 : index
      %171 = vector.load %arg4[%c0_59, %c0_60, %c0_61] : memref<2x5x32xf32, #tpu.memory_space<vmem>>, vector<1x5x32xf32>
      %172 = vector.shape_cast %171 : vector<1x5x32xf32> to vector<5x32xf32>
      %c0_62 = arith.constant 0 : index
      %c0_63 = arith.constant 0 : index
      %c0_64 = arith.constant 0 : index
      %173 = vector.load %arg5[%c0_62, %c0_63, %c0_64] : memref<2x5x32xf32, #tpu.memory_space<vmem>>, vector<1x5x32xf32>
      %174 = vector.shape_cast %173 : vector<1x5x32xf32> to vector<5x32xf32>
      %c0_65 = arith.constant 0 : index
      %c0_66 = arith.constant 0 : index
      %c0_67 = arith.constant 0 : index
      %175 = vector.load %arg14[%c0_65, %c0_66, %c0_67] : memref<2x32x32xbf16, #tpu.memory_space<vmem>>, vector<1x32x32xbf16>
      %176 = vector.shape_cast %175 : vector<1x32x32xbf16> to vector<32x32xbf16>
      %c0_68 = arith.constant 0 : index
      %c0_69 = arith.constant 0 : index
      %c0_70 = arith.constant 0 : index
      %177 = vector.load %arg15[%c0_68, %c0_69, %c0_70] : memref<2x1x32xf32, #tpu.memory_space<vmem>>, vector<1x1x32xf32>
      %178 = vector.shape_cast %177 : vector<1x1x32xf32> to vector<1x32xf32>
      %c0_71 = arith.constant 0 : index
      %c0_72 = arith.constant 0 : index
      %c0_73 = arith.constant 0 : index
      %179 = vector.load %arg16[%c0_71, %c0_72, %c0_73] : memref<2x32x32xbf16, #tpu.memory_space<vmem>>, vector<1x32x32xbf16>
      %180 = vector.shape_cast %179 : vector<1x32x32xbf16> to vector<32x32xbf16>
      %c0_74 = arith.constant 0 : index
      %c0_75 = arith.constant 0 : index
      %c0_76 = arith.constant 0 : index
      %181 = vector.load %arg17[%c0_74, %c0_75, %c0_76] : memref<2x1x32xf32, #tpu.memory_space<vmem>>, vector<1x1x32xf32>
      %182 = vector.shape_cast %181 : vector<1x1x32xf32> to vector<1x32xf32>
      %183 = arith.truncf %170 : vector<8x32xf32> to vector<8x32xbf16>
      %cst_77 = arith.constant dense<0.000000e+00> : vector<8x32xf32>
      %184 = tpu.matmul %183, %176, %cst_77 {dimension_numbers = #tpu.dot_dimension_numbers<[1], [0], [0], [1], [0, 0, 1, 1], [], []>} : vector<8x32xbf16>, vector<32x32xbf16>, vector<8x32xf32> -> vector<8x32xf32>
      %185 = vector.broadcast %178 : vector<1x32xf32> to vector<8x32xf32>
      %186 = arith.addf %184, %185 : vector<8x32xf32>
      %187 = arith.truncf %172 : vector<5x32xf32> to vector<5x32xbf16>
      %188 = arith.truncf %174 : vector<5x32xf32> to vector<5x32xbf16>
      %189 = vector.extract_strided_slice %186 {offsets = [0, 0], sizes = [8, 8], strides = [1, 1]} : vector<8x32xf32> to vector<8x8xf32>
      %190 = arith.truncf %189 : vector<8x8xf32> to vector<8x8xbf16>
      %191 = vector.extract_strided_slice %187 {offsets = [0, 0], sizes = [5, 8], strides = [1, 1]} : vector<5x32xbf16> to vector<5x8xbf16>
      %192 = vector.extract_strided_slice %188 {offsets = [0, 0], sizes = [5, 8], strides = [1, 1]} : vector<5x32xbf16> to vector<5x8xbf16>
      %cst_78 = arith.constant dense<0.000000e+00> : vector<8x5xf32>
      %193 = tpu.matmul %190, %191, %cst_78 {dimension_numbers = #tpu.dot_dimension_numbers<[1], [1], [0], [0], [0, 0, 1, 0], [], []>} : vector<8x8xbf16>, vector<5x8xbf16>, vector<8x5xf32> -> vector<8x5xf32>
      %cst_79 = arith.constant 0.353553385 : f32
      %194 = vector.broadcast %cst_79 : f32 to vector<8x5xf32>
      %195 = arith.mulf %193, %194 : vector<8x5xf32>
      %cst_80 = arith.constant dense<0xFF800000> : vector<8xf32>
      %196 = vector.multi_reduction <maximumf>, %195, %cst_80 [1] : vector<8x5xf32> to vector<8xf32>
      %197 = vector.shape_cast %196 : vector<8xf32> to vector<8x1xf32>
      %198 = vector.broadcast %197 : vector<8x1xf32> to vector<8x5xf32>
      %199 = arith.subf %195, %198 : vector<8x5xf32>
      %200 = math.exp %199 : vector<8x5xf32>
      %cst_81 = arith.constant dense<0.000000e+00> : vector<8xf32>
      %201 = vector.multi_reduction <add>, %200, %cst_81 [1] : vector<8x5xf32> to vector<8xf32>
      %202 = vector.shape_cast %201 : vector<8xf32> to vector<8x1xf32>
      %203 = tpu.reciprocal %202 {approx = true} : vector<8x1xf32> -> vector<8x1xf32>
      %204 = vector.broadcast %203 : vector<8x1xf32> to vector<8x5xf32>
      %205 = arith.mulf %200, %204 : vector<8x5xf32>
      %206 = arith.truncf %205 : vector<8x5xf32> to vector<8x5xbf16>
      %cst_82 = arith.constant dense<0.000000e+00> : vector<8x8xf32>
      %207 = tpu.matmul %206, %192, %cst_82 {dimension_numbers = #tpu.dot_dimension_numbers<[1], [0], [0], [1], [0, 0, 1, 1], [], []>} : vector<8x5xbf16>, vector<5x8xbf16>, vector<8x8xf32> -> vector<8x8xf32>
      %208 = vector.extract_strided_slice %186 {offsets = [0, 8], sizes = [8, 8], strides = [1, 1]} : vector<8x32xf32> to vector<8x8xf32>
      %209 = arith.truncf %208 : vector<8x8xf32> to vector<8x8xbf16>
      %210 = vector.extract_strided_slice %187 {offsets = [0, 8], sizes = [5, 8], strides = [1, 1]} : vector<5x32xbf16> to vector<5x8xbf16>
      %211 = vector.extract_strided_slice %188 {offsets = [0, 8], sizes = [5, 8], strides = [1, 1]} : vector<5x32xbf16> to vector<5x8xbf16>
      %cst_83 = arith.constant dense<0.000000e+00> : vector<8x5xf32>
      %212 = tpu.matmul %209, %210, %cst_83 {dimension_numbers = #tpu.dot_dimension_numbers<[1], [1], [0], [0], [0, 0, 1, 0], [], []>} : vector<8x8xbf16>, vector<5x8xbf16>, vector<8x5xf32> -> vector<8x5xf32>
      %cst_84 = arith.constant 0.353553385 : f32
      %213 = vector.broadcast %cst_84 : f32 to vector<8x5xf32>
      %214 = arith.mulf %212, %213 : vector<8x5xf32>
      %cst_85 = arith.constant dense<0xFF800000> : vector<8xf32>
      %215 = vector.multi_reduction <maximumf>, %214, %cst_85 [1] : vector<8x5xf32> to vector<8xf32>
      %216 = vector.shape_cast %215 : vector<8xf32> to vector<8x1xf32>
      %217 = vector.broadcast %216 : vector<8x1xf32> to vector<8x5xf32>
      %218 = arith.subf %214, %217 : vector<8x5xf32>
      %219 = math.exp %218 : vector<8x5xf32>
      %cst_86 = arith.constant dense<0.000000e+00> : vector<8xf32>
      %220 = vector.multi_reduction <add>, %219, %cst_86 [1] : vector<8x5xf32> to vector<8xf32>
      %221 = vector.shape_cast %220 : vector<8xf32> to vector<8x1xf32>
      %222 = tpu.reciprocal %221 {approx = true} : vector<8x1xf32> -> vector<8x1xf32>
      %223 = vector.broadcast %222 : vector<8x1xf32> to vector<8x5xf32>
      %224 = arith.mulf %219, %223 : vector<8x5xf32>
      %225 = arith.truncf %224 : vector<8x5xf32> to vector<8x5xbf16>
      %cst_87 = arith.constant dense<0.000000e+00> : vector<8x8xf32>
      %226 = tpu.matmul %225, %211, %cst_87 {dimension_numbers = #tpu.dot_dimension_numbers<[1], [0], [0], [1], [0, 0, 1, 1], [], []>} : vector<8x5xbf16>, vector<5x8xbf16>, vector<8x8xf32> -> vector<8x8xf32>
      %227 = vector.extract_strided_slice %186 {offsets = [0, 16], sizes = [8, 8], strides = [1, 1]} : vector<8x32xf32> to vector<8x8xf32>
      %228 = arith.truncf %227 : vector<8x8xf32> to vector<8x8xbf16>
      %229 = vector.extract_strided_slice %187 {offsets = [0, 16], sizes = [5, 8], strides = [1, 1]} : vector<5x32xbf16> to vector<5x8xbf16>
      %230 = vector.extract_strided_slice %188 {offsets = [0, 16], sizes = [5, 8], strides = [1, 1]} : vector<5x32xbf16> to vector<5x8xbf16>
      %cst_88 = arith.constant dense<0.000000e+00> : vector<8x5xf32>
      %231 = tpu.matmul %228, %229, %cst_88 {dimension_numbers = #tpu.dot_dimension_numbers<[1], [1], [0], [0], [0, 0, 1, 0], [], []>} : vector<8x8xbf16>, vector<5x8xbf16>, vector<8x5xf32> -> vector<8x5xf32>
      %cst_89 = arith.constant 0.353553385 : f32
      %232 = vector.broadcast %cst_89 : f32 to vector<8x5xf32>
      %233 = arith.mulf %231, %232 : vector<8x5xf32>
      %cst_90 = arith.constant dense<0xFF800000> : vector<8xf32>
      %234 = vector.multi_reduction <maximumf>, %233, %cst_90 [1] : vector<8x5xf32> to vector<8xf32>
      %235 = vector.shape_cast %234 : vector<8xf32> to vector<8x1xf32>
      %236 = vector.broadcast %235 : vector<8x1xf32> to vector<8x5xf32>
      %237 = arith.subf %233, %236 : vector<8x5xf32>
      %238 = math.exp %237 : vector<8x5xf32>
      %cst_91 = arith.constant dense<0.000000e+00> : vector<8xf32>
      %239 = vector.multi_reduction <add>, %238, %cst_91 [1] : vector<8x5xf32> to vector<8xf32>
      %240 = vector.shape_cast %239 : vector<8xf32> to vector<8x1xf32>
      %241 = tpu.reciprocal %240 {approx = true} : vector<8x1xf32> -> vector<8x1xf32>
      %242 = vector.broadcast %241 : vector<8x1xf32> to vector<8x5xf32>
      %243 = arith.mulf %238, %242 : vector<8x5xf32>
      %244 = arith.truncf %243 : vector<8x5xf32> to vector<8x5xbf16>
      %cst_92 = arith.constant dense<0.000000e+00> : vector<8x8xf32>
      %245 = tpu.matmul %244, %230, %cst_92 {dimension_numbers = #tpu.dot_dimension_numbers<[1], [0], [0], [1], [0, 0, 1, 1], [], []>} : vector<8x5xbf16>, vector<5x8xbf16>, vector<8x8xf32> -> vector<8x8xf32>
      %246 = vector.extract_strided_slice %186 {offsets = [0, 24], sizes = [8, 8], strides = [1, 1]} : vector<8x32xf32> to vector<8x8xf32>
      %247 = arith.truncf %246 : vector<8x8xf32> to vector<8x8xbf16>
      %248 = vector.extract_strided_slice %187 {offsets = [0, 24], sizes = [5, 8], strides = [1, 1]} : vector<5x32xbf16> to vector<5x8xbf16>
      %249 = vector.extract_strided_slice %188 {offsets = [0, 24], sizes = [5, 8], strides = [1, 1]} : vector<5x32xbf16> to vector<5x8xbf16>
      %cst_93 = arith.constant dense<0.000000e+00> : vector<8x5xf32>
      %250 = tpu.matmul %247, %248, %cst_93 {dimension_numbers = #tpu.dot_dimension_numbers<[1], [1], [0], [0], [0, 0, 1, 0], [], []>} : vector<8x8xbf16>, vector<5x8xbf16>, vector<8x5xf32> -> vector<8x5xf32>
      %cst_94 = arith.constant 0.353553385 : f32
      %251 = vector.broadcast %cst_94 : f32 to vector<8x5xf32>
      %252 = arith.mulf %250, %251 : vector<8x5xf32>
      %cst_95 = arith.constant dense<0xFF800000> : vector<8xf32>
      %253 = vector.multi_reduction <maximumf>, %252, %cst_95 [1] : vector<8x5xf32> to vector<8xf32>
      %254 = vector.shape_cast %253 : vector<8xf32> to vector<8x1xf32>
      %255 = vector.broadcast %254 : vector<8x1xf32> to vector<8x5xf32>
      %256 = arith.subf %252, %255 : vector<8x5xf32>
      %257 = math.exp %256 : vector<8x5xf32>
      %cst_96 = arith.constant dense<0.000000e+00> : vector<8xf32>
      %258 = vector.multi_reduction <add>, %257, %cst_96 [1] : vector<8x5xf32> to vector<8xf32>
      %259 = vector.shape_cast %258 : vector<8xf32> to vector<8x1xf32>
      %260 = tpu.reciprocal %259 {approx = true} : vector<8x1xf32> -> vector<8x1xf32>
      %261 = vector.broadcast %260 : vector<8x1xf32> to vector<8x5xf32>
      %262 = arith.mulf %257, %261 : vector<8x5xf32>
      %263 = arith.truncf %262 : vector<8x5xf32> to vector<8x5xbf16>
      %cst_97 = arith.constant dense<0.000000e+00> : vector<8x8xf32>
      %264 = tpu.matmul %263, %249, %cst_97 {dimension_numbers = #tpu.dot_dimension_numbers<[1], [0], [0], [1], [0, 0, 1, 1], [], []>} : vector<8x5xbf16>, vector<5x8xbf16>, vector<8x8xf32> -> vector<8x8xf32>
      %265 = tpu.concatenate %207, %226, %245, %264 in 1 : vector<8x8xf32>, vector<8x8xf32>, vector<8x8xf32>, vector<8x8xf32> -> vector<8x32xf32>
      %266 = arith.truncf %265 : vector<8x32xf32> to vector<8x32xbf16>
      %cst_98 = arith.constant dense<0.000000e+00> : vector<8x32xf32>
      %267 = tpu.matmul %266, %180, %cst_98 {dimension_numbers = #tpu.dot_dimension_numbers<[1], [0], [0], [1], [0, 0, 1, 1], [], []>} : vector<8x32xbf16>, vector<32x32xbf16>, vector<8x32xf32> -> vector<8x32xf32>
      %268 = vector.broadcast %182 : vector<1x32xf32> to vector<8x32xf32>
      %269 = arith.addf %267, %268 : vector<8x32xf32>
      %270 = arith.addf %170, %269 : vector<8x32xf32>
      %c0_99 = arith.constant 0 : index
      %c0_100 = arith.constant 0 : index
      %c0_101 = arith.constant 0 : index
      %271 = vector.load %arg18[%c0_99, %c0_100, %c0_101] : memref<2x1x32xf32, #tpu.memory_space<vmem>>, vector<1x1x32xf32>
      %272 = vector.shape_cast %271 : vector<1x1x32xf32> to vector<1x32xf32>
      %c0_102 = arith.constant 0 : index
      %c0_103 = arith.constant 0 : index
      %c0_104 = arith.constant 0 : index
      %273 = vector.load %arg19[%c0_102, %c0_103, %c0_104] : memref<2x1x32xf32, #tpu.memory_space<vmem>>, vector<1x1x32xf32>
      %274 = vector.shape_cast %273 : vector<1x1x32xf32> to vector<1x32xf32>
      %cst_105 = arith.constant dense<0.000000e+00> : vector<8xf32>
      %275 = vector.multi_reduction <add>, %270, %cst_105 [1] : vector<8x32xf32> to vector<8xf32>
      %276 = vector.shape_cast %275 : vector<8xf32> to vector<8x1xf32>
      %277 = arith.mulf %270, %270 : vector<8x32xf32>
      %cst_106 = arith.constant dense<0.000000e+00> : vector<8xf32>
      %278 = vector.multi_reduction <add>, %277, %cst_106 [1] : vector<8x32xf32> to vector<8xf32>
      %279 = vector.shape_cast %278 : vector<8xf32> to vector<8x1xf32>
      %cst_107 = arith.constant 3.125000e-02 : f32
      %280 = vector.broadcast %cst_107 : f32 to vector<8x1xf32>
      %281 = arith.mulf %276, %280 : vector<8x1xf32>
      %cst_108 = arith.constant 3.125000e-02 : f32
      %282 = vector.broadcast %cst_108 : f32 to vector<8x1xf32>
      %283 = arith.mulf %279, %282 : vector<8x1xf32>
      %284 = arith.mulf %281, %281 : vector<8x1xf32>
      %285 = arith.subf %283, %284 : vector<8x1xf32>
      %286 = vector.broadcast %281 : vector<8x1xf32> to vector<8x32xf32>
      %287 = arith.subf %270, %286 : vector<8x32xf32>
      %cst_109 = arith.constant 9.99999996E-13 : f32
      %288 = vector.broadcast %cst_109 : f32 to vector<8x1xf32>
      %289 = arith.addf %285, %288 : vector<8x1xf32>
      %290 = math.rsqrt %289 : vector<8x1xf32>
      %291 = vector.broadcast %290 : vector<8x1xf32> to vector<8x32xf32>
      %292 = arith.mulf %287, %291 : vector<8x32xf32>
      %293 = vector.broadcast %272 : vector<1x32xf32> to vector<8x32xf32>
      %294 = arith.mulf %292, %293 : vector<8x32xf32>
      %295 = vector.broadcast %274 : vector<1x32xf32> to vector<8x32xf32>
      %296 = arith.addf %294, %295 : vector<8x32xf32>
      %c0_110 = arith.constant 0 : index
      %c0_111 = arith.constant 0 : index
      %c0_112 = arith.constant 0 : index
      %297 = vector.load %arg20[%c0_110, %c0_111, %c0_112] : memref<2x32x128xbf16, #tpu.memory_space<vmem>>, vector<1x32x128xbf16>
      %298 = vector.shape_cast %297 : vector<1x32x128xbf16> to vector<32x128xbf16>
      %299 = arith.truncf %296 : vector<8x32xf32> to vector<8x32xbf16>
      %cst_113 = arith.constant dense<0.000000e+00> : vector<8x128xf32>
      %300 = tpu.matmul %299, %298, %cst_113 {dimension_numbers = #tpu.dot_dimension_numbers<[1], [0], [0], [1], [0, 0, 1, 1], [], []>} : vector<8x32xbf16>, vector<32x128xbf16>, vector<8x128xf32> -> vector<8x128xf32>
      %c0_114 = arith.constant 0 : index
      %c0_115 = arith.constant 0 : index
      %c0_116 = arith.constant 0 : index
      %301 = vector.load %arg21[%c0_114, %c0_115, %c0_116] : memref<2x1x128xf32, #tpu.memory_space<vmem>>, vector<1x1x128xf32>
      %302 = vector.shape_cast %301 : vector<1x1x128xf32> to vector<1x128xf32>
      %303 = vector.broadcast %302 : vector<1x128xf32> to vector<8x128xf32>
      %304 = arith.addf %300, %303 : vector<8x128xf32>
      %305 = arith.mulf %304, %304 : vector<8x128xf32>
      %306 = arith.mulf %304, %305 : vector<8x128xf32>
      %cst_117 = arith.constant 4.471500e-02 : f32
      %307 = vector.broadcast %cst_117 : f32 to vector<8x128xf32>
      %308 = arith.mulf %307, %306 : vector<8x128xf32>
      %309 = arith.addf %304, %308 : vector<8x128xf32>
      %cst_118 = arith.constant 0.797884583 : f32
      %310 = vector.broadcast %cst_118 : f32 to vector<8x128xf32>
      %311 = arith.mulf %310, %309 : vector<8x128xf32>
      %312 = math.tanh %311 : vector<8x128xf32>
      %cst_119 = arith.constant 1.000000e+00 : f32
      %313 = vector.broadcast %cst_119 : f32 to vector<8x128xf32>
      %314 = arith.addf %313, %312 : vector<8x128xf32>
      %cst_120 = arith.constant 5.000000e-01 : f32
      %315 = vector.broadcast %cst_120 : f32 to vector<8x128xf32>
      %316 = arith.mulf %315, %314 : vector<8x128xf32>
      %317 = arith.mulf %304, %316 : vector<8x128xf32>
      %c0_121 = arith.constant 0 : index
      %c0_122 = arith.constant 0 : index
      %c0_123 = arith.constant 0 : index
      %318 = vector.load %arg22[%c0_121, %c0_122, %c0_123] : memref<2x128x32xbf16, #tpu.memory_space<vmem>>, vector<1x128x32xbf16>
      %319 = vector.shape_cast %318 : vector<1x128x32xbf16> to vector<128x32xbf16>
      %320 = arith.truncf %317 : vector<8x128xf32> to vector<8x128xbf16>
      %cst_124 = arith.constant dense<0.000000e+00> : vector<8x32xf32>
      %321 = tpu.matmul %320, %319, %cst_124 {dimension_numbers = #tpu.dot_dimension_numbers<[1], [0], [0], [1], [0, 0, 1, 1], [], []>} : vector<8x128xbf16>, vector<128x32xbf16>, vector<8x32xf32> -> vector<8x32xf32>
      %c0_125 = arith.constant 0 : index
      %c0_126 = arith.constant 0 : index
      %c0_127 = arith.constant 0 : index
      %322 = vector.load %arg23[%c0_125, %c0_126, %c0_127] : memref<2x1x32xf32, #tpu.memory_space<vmem>>, vector<1x1x32xf32>
      %323 = vector.shape_cast %322 : vector<1x1x32xf32> to vector<1x32xf32>
      %324 = vector.broadcast %323 : vector<1x32xf32> to vector<8x32xf32>
      %325 = arith.addf %321, %324 : vector<8x32xf32>
      %326 = arith.addf %296, %325 : vector<8x32xf32>
      %c0_128 = arith.constant 0 : index
      %c0_129 = arith.constant 0 : index
      %c0_130 = arith.constant 0 : index
      %327 = vector.load %arg24[%c0_128, %c0_129, %c0_130] : memref<2x1x32xf32, #tpu.memory_space<vmem>>, vector<1x1x32xf32>
      %328 = vector.shape_cast %327 : vector<1x1x32xf32> to vector<1x32xf32>
      %c0_131 = arith.constant 0 : index
      %c0_132 = arith.constant 0 : index
      %c0_133 = arith.constant 0 : index
      %329 = vector.load %arg25[%c0_131, %c0_132, %c0_133] : memref<2x1x32xf32, #tpu.memory_space<vmem>>, vector<1x1x32xf32>
      %330 = vector.shape_cast %329 : vector<1x1x32xf32> to vector<1x32xf32>
      %cst_134 = arith.constant dense<0.000000e+00> : vector<8xf32>
      %331 = vector.multi_reduction <add>, %326, %cst_134 [1] : vector<8x32xf32> to vector<8xf32>
      %332 = vector.shape_cast %331 : vector<8xf32> to vector<8x1xf32>
      %333 = arith.mulf %326, %326 : vector<8x32xf32>
      %cst_135 = arith.constant dense<0.000000e+00> : vector<8xf32>
      %334 = vector.multi_reduction <add>, %333, %cst_135 [1] : vector<8x32xf32> to vector<8xf32>
      %335 = vector.shape_cast %334 : vector<8xf32> to vector<8x1xf32>
      %cst_136 = arith.constant 3.125000e-02 : f32
      %336 = vector.broadcast %cst_136 : f32 to vector<8x1xf32>
      %337 = arith.mulf %332, %336 : vector<8x1xf32>
      %cst_137 = arith.constant 3.125000e-02 : f32
      %338 = vector.broadcast %cst_137 : f32 to vector<8x1xf32>
      %339 = arith.mulf %335, %338 : vector<8x1xf32>
      %340 = arith.mulf %337, %337 : vector<8x1xf32>
      %341 = arith.subf %339, %340 : vector<8x1xf32>
      %342 = vector.broadcast %337 : vector<8x1xf32> to vector<8x32xf32>
      %343 = arith.subf %326, %342 : vector<8x32xf32>
      %cst_138 = arith.constant 9.99999996E-13 : f32
      %344 = vector.broadcast %cst_138 : f32 to vector<8x1xf32>
      %345 = arith.addf %341, %344 : vector<8x1xf32>
      %346 = math.rsqrt %345 : vector<8x1xf32>
      %347 = vector.broadcast %346 : vector<8x1xf32> to vector<8x32xf32>
      %348 = arith.mulf %343, %347 : vector<8x32xf32>
      %349 = vector.broadcast %328 : vector<1x32xf32> to vector<8x32xf32>
      %350 = arith.mulf %348, %349 : vector<8x32xf32>
      %351 = vector.broadcast %330 : vector<1x32xf32> to vector<8x32xf32>
      %352 = arith.addf %350, %351 : vector<8x32xf32>
      %c1 = arith.constant 1 : index
      %c0_139 = arith.constant 0 : index
      %c0_140 = arith.constant 0 : index
      %353 = vector.load %arg8[%c1, %c0_139, %c0_140] : memref<2x32x96xbf16, #tpu.memory_space<vmem>>, vector<1x32x96xbf16>
      %354 = vector.shape_cast %353 : vector<1x32x96xbf16> to vector<32x96xbf16>
      %c1_141 = arith.constant 1 : index
      %c0_142 = arith.constant 0 : index
      %c0_143 = arith.constant 0 : index
      %355 = vector.load %arg9[%c1_141, %c0_142, %c0_143] : memref<2x1x96xf32, #tpu.memory_space<vmem>>, vector<1x1x96xf32>
      %356 = vector.shape_cast %355 : vector<1x1x96xf32> to vector<1x96xf32>
      %c1_144 = arith.constant 1 : index
      %c0_145 = arith.constant 0 : index
      %c0_146 = arith.constant 0 : index
      %357 = vector.load %arg10[%c1_144, %c0_145, %c0_146] : memref<2x32x32xbf16, #tpu.memory_space<vmem>>, vector<1x32x32xbf16>
      %358 = vector.shape_cast %357 : vector<1x32x32xbf16> to vector<32x32xbf16>
      %c1_147 = arith.constant 1 : index
      %c0_148 = arith.constant 0 : index
      %c0_149 = arith.constant 0 : index
      %359 = vector.load %arg11[%c1_147, %c0_148, %c0_149] : memref<2x1x32xf32, #tpu.memory_space<vmem>>, vector<1x1x32xf32>
      %360 = vector.shape_cast %359 : vector<1x1x32xf32> to vector<1x32xf32>
      %361 = arith.truncf %352 : vector<8x32xf32> to vector<8x32xbf16>
      %cst_150 = arith.constant dense<0.000000e+00> : vector<8x96xf32>
      %362 = tpu.matmul %361, %354, %cst_150 {dimension_numbers = #tpu.dot_dimension_numbers<[1], [0], [0], [1], [0, 0, 1, 1], [], []>} : vector<8x32xbf16>, vector<32x96xbf16>, vector<8x96xf32> -> vector<8x96xf32>
      %363 = vector.broadcast %356 : vector<1x96xf32> to vector<8x96xf32>
      %364 = arith.addf %362, %363 : vector<8x96xf32>
      %365 = vector.extract_strided_slice %364 {offsets = [0, 0], sizes = [8, 8], strides = [1, 1]} : vector<8x96xf32> to vector<8x8xf32>
      %366 = vector.extract_strided_slice %364 {offsets = [0, 32], sizes = [8, 8], strides = [1, 1]} : vector<8x96xf32> to vector<8x8xf32>
      %367 = vector.extract_strided_slice %364 {offsets = [0, 64], sizes = [8, 8], strides = [1, 1]} : vector<8x96xf32> to vector<8x8xf32>
      %368 = arith.truncf %365 : vector<8x8xf32> to vector<8x8xbf16>
      %369 = arith.truncf %366 : vector<8x8xf32> to vector<8x8xbf16>
      %cst_151 = arith.constant dense<0.000000e+00> : vector<8x8xf32>
      %370 = tpu.matmul %368, %369, %cst_151 {dimension_numbers = #tpu.dot_dimension_numbers<[1], [1], [0], [0], [0, 0, 1, 0], [], []>} : vector<8x8xbf16>, vector<8x8xbf16>, vector<8x8xf32> -> vector<8x8xf32>
      %cst_152 = arith.constant 0.353553385 : f32
      %371 = vector.broadcast %cst_152 : f32 to vector<8x8xf32>
      %372 = arith.mulf %370, %371 : vector<8x8xf32>
      %373 = vector.broadcast %34 : vector<1x8xf32> to vector<8x8xf32>
      %374 = arith.addf %372, %373 : vector<8x8xf32>
      %cst_153 = arith.constant dense<0xFF800000> : vector<8xf32>
      %375 = vector.multi_reduction <maximumf>, %374, %cst_153 [1] : vector<8x8xf32> to vector<8xf32>
      %376 = vector.shape_cast %375 : vector<8xf32> to vector<8x1xf32>
      %377 = vector.broadcast %376 : vector<8x1xf32> to vector<8x8xf32>
      %378 = arith.subf %374, %377 : vector<8x8xf32>
      %379 = math.exp %378 : vector<8x8xf32>
      %cst_154 = arith.constant dense<0.000000e+00> : vector<8xf32>
      %380 = vector.multi_reduction <add>, %379, %cst_154 [1] : vector<8x8xf32> to vector<8xf32>
      %381 = vector.shape_cast %380 : vector<8xf32> to vector<8x1xf32>
      %382 = tpu.reciprocal %381 {approx = true} : vector<8x1xf32> -> vector<8x1xf32>
      %383 = vector.broadcast %382 : vector<8x1xf32> to vector<8x8xf32>
      %384 = arith.mulf %379, %383 : vector<8x8xf32>
      %385 = arith.truncf %384 : vector<8x8xf32> to vector<8x8xbf16>
      %386 = arith.truncf %367 : vector<8x8xf32> to vector<8x8xbf16>
      %cst_155 = arith.constant dense<0.000000e+00> : vector<8x8xf32>
      %387 = tpu.matmul %385, %386, %cst_155 {dimension_numbers = #tpu.dot_dimension_numbers<[1], [0], [0], [1], [0, 0, 1, 1], [], []>} : vector<8x8xbf16>, vector<8x8xbf16>, vector<8x8xf32> -> vector<8x8xf32>
      %388 = vector.extract_strided_slice %364 {offsets = [0, 8], sizes = [8, 8], strides = [1, 1]} : vector<8x96xf32> to vector<8x8xf32>
      %389 = vector.extract_strided_slice %364 {offsets = [0, 40], sizes = [8, 8], strides = [1, 1]} : vector<8x96xf32> to vector<8x8xf32>
      %390 = vector.extract_strided_slice %364 {offsets = [0, 72], sizes = [8, 8], strides = [1, 1]} : vector<8x96xf32> to vector<8x8xf32>
      %391 = arith.truncf %388 : vector<8x8xf32> to vector<8x8xbf16>
      %392 = arith.truncf %389 : vector<8x8xf32> to vector<8x8xbf16>
      %cst_156 = arith.constant dense<0.000000e+00> : vector<8x8xf32>
      %393 = tpu.matmul %391, %392, %cst_156 {dimension_numbers = #tpu.dot_dimension_numbers<[1], [1], [0], [0], [0, 0, 1, 0], [], []>} : vector<8x8xbf16>, vector<8x8xbf16>, vector<8x8xf32> -> vector<8x8xf32>
      %cst_157 = arith.constant 0.353553385 : f32
      %394 = vector.broadcast %cst_157 : f32 to vector<8x8xf32>
      %395 = arith.mulf %393, %394 : vector<8x8xf32>
      %396 = vector.broadcast %34 : vector<1x8xf32> to vector<8x8xf32>
      %397 = arith.addf %395, %396 : vector<8x8xf32>
      %cst_158 = arith.constant dense<0xFF800000> : vector<8xf32>
      %398 = vector.multi_reduction <maximumf>, %397, %cst_158 [1] : vector<8x8xf32> to vector<8xf32>
      %399 = vector.shape_cast %398 : vector<8xf32> to vector<8x1xf32>
      %400 = vector.broadcast %399 : vector<8x1xf32> to vector<8x8xf32>
      %401 = arith.subf %397, %400 : vector<8x8xf32>
      %402 = math.exp %401 : vector<8x8xf32>
      %cst_159 = arith.constant dense<0.000000e+00> : vector<8xf32>
      %403 = vector.multi_reduction <add>, %402, %cst_159 [1] : vector<8x8xf32> to vector<8xf32>
      %404 = vector.shape_cast %403 : vector<8xf32> to vector<8x1xf32>
      %405 = tpu.reciprocal %404 {approx = true} : vector<8x1xf32> -> vector<8x1xf32>
      %406 = vector.broadcast %405 : vector<8x1xf32> to vector<8x8xf32>
      %407 = arith.mulf %402, %406 : vector<8x8xf32>
      %408 = arith.truncf %407 : vector<8x8xf32> to vector<8x8xbf16>
      %409 = arith.truncf %390 : vector<8x8xf32> to vector<8x8xbf16>
      %cst_160 = arith.constant dense<0.000000e+00> : vector<8x8xf32>
      %410 = tpu.matmul %408, %409, %cst_160 {dimension_numbers = #tpu.dot_dimension_numbers<[1], [0], [0], [1], [0, 0, 1, 1], [], []>} : vector<8x8xbf16>, vector<8x8xbf16>, vector<8x8xf32> -> vector<8x8xf32>
      %411 = vector.extract_strided_slice %364 {offsets = [0, 16], sizes = [8, 8], strides = [1, 1]} : vector<8x96xf32> to vector<8x8xf32>
      %412 = vector.extract_strided_slice %364 {offsets = [0, 48], sizes = [8, 8], strides = [1, 1]} : vector<8x96xf32> to vector<8x8xf32>
      %413 = vector.extract_strided_slice %364 {offsets = [0, 80], sizes = [8, 8], strides = [1, 1]} : vector<8x96xf32> to vector<8x8xf32>
      %414 = arith.truncf %411 : vector<8x8xf32> to vector<8x8xbf16>
      %415 = arith.truncf %412 : vector<8x8xf32> to vector<8x8xbf16>
      %cst_161 = arith.constant dense<0.000000e+00> : vector<8x8xf32>
      %416 = tpu.matmul %414, %415, %cst_161 {dimension_numbers = #tpu.dot_dimension_numbers<[1], [1], [0], [0], [0, 0, 1, 0], [], []>} : vector<8x8xbf16>, vector<8x8xbf16>, vector<8x8xf32> -> vector<8x8xf32>
      %cst_162 = arith.constant 0.353553385 : f32
      %417 = vector.broadcast %cst_162 : f32 to vector<8x8xf32>
      %418 = arith.mulf %416, %417 : vector<8x8xf32>
      %419 = vector.broadcast %34 : vector<1x8xf32> to vector<8x8xf32>
      %420 = arith.addf %418, %419 : vector<8x8xf32>
      %cst_163 = arith.constant dense<0xFF800000> : vector<8xf32>
      %421 = vector.multi_reduction <maximumf>, %420, %cst_163 [1] : vector<8x8xf32> to vector<8xf32>
      %422 = vector.shape_cast %421 : vector<8xf32> to vector<8x1xf32>
      %423 = vector.broadcast %422 : vector<8x1xf32> to vector<8x8xf32>
      %424 = arith.subf %420, %423 : vector<8x8xf32>
      %425 = math.exp %424 : vector<8x8xf32>
      %cst_164 = arith.constant dense<0.000000e+00> : vector<8xf32>
      %426 = vector.multi_reduction <add>, %425, %cst_164 [1] : vector<8x8xf32> to vector<8xf32>
      %427 = vector.shape_cast %426 : vector<8xf32> to vector<8x1xf32>
      %428 = tpu.reciprocal %427 {approx = true} : vector<8x1xf32> -> vector<8x1xf32>
      %429 = vector.broadcast %428 : vector<8x1xf32> to vector<8x8xf32>
      %430 = arith.mulf %425, %429 : vector<8x8xf32>
      %431 = arith.truncf %430 : vector<8x8xf32> to vector<8x8xbf16>
      %432 = arith.truncf %413 : vector<8x8xf32> to vector<8x8xbf16>
      %cst_165 = arith.constant dense<0.000000e+00> : vector<8x8xf32>
      %433 = tpu.matmul %431, %432, %cst_165 {dimension_numbers = #tpu.dot_dimension_numbers<[1], [0], [0], [1], [0, 0, 1, 1], [], []>} : vector<8x8xbf16>, vector<8x8xbf16>, vector<8x8xf32> -> vector<8x8xf32>
      %434 = vector.extract_strided_slice %364 {offsets = [0, 24], sizes = [8, 8], strides = [1, 1]} : vector<8x96xf32> to vector<8x8xf32>
      %435 = vector.extract_strided_slice %364 {offsets = [0, 56], sizes = [8, 8], strides = [1, 1]} : vector<8x96xf32> to vector<8x8xf32>
      %436 = vector.extract_strided_slice %364 {offsets = [0, 88], sizes = [8, 8], strides = [1, 1]} : vector<8x96xf32> to vector<8x8xf32>
      %437 = arith.truncf %434 : vector<8x8xf32> to vector<8x8xbf16>
      %438 = arith.truncf %435 : vector<8x8xf32> to vector<8x8xbf16>
      %cst_166 = arith.constant dense<0.000000e+00> : vector<8x8xf32>
      %439 = tpu.matmul %437, %438, %cst_166 {dimension_numbers = #tpu.dot_dimension_numbers<[1], [1], [0], [0], [0, 0, 1, 0], [], []>} : vector<8x8xbf16>, vector<8x8xbf16>, vector<8x8xf32> -> vector<8x8xf32>
      %cst_167 = arith.constant 0.353553385 : f32
      %440 = vector.broadcast %cst_167 : f32 to vector<8x8xf32>
      %441 = arith.mulf %439, %440 : vector<8x8xf32>
      %442 = vector.broadcast %34 : vector<1x8xf32> to vector<8x8xf32>
      %443 = arith.addf %441, %442 : vector<8x8xf32>
      %cst_168 = arith.constant dense<0xFF800000> : vector<8xf32>
      %444 = vector.multi_reduction <maximumf>, %443, %cst_168 [1] : vector<8x8xf32> to vector<8xf32>
      %445 = vector.shape_cast %444 : vector<8xf32> to vector<8x1xf32>
      %446 = vector.broadcast %445 : vector<8x1xf32> to vector<8x8xf32>
      %447 = arith.subf %443, %446 : vector<8x8xf32>
      %448 = math.exp %447 : vector<8x8xf32>
      %cst_169 = arith.constant dense<0.000000e+00> : vector<8xf32>
      %449 = vector.multi_reduction <add>, %448, %cst_169 [1] : vector<8x8xf32> to vector<8xf32>
      %450 = vector.shape_cast %449 : vector<8xf32> to vector<8x1xf32>
      %451 = tpu.reciprocal %450 {approx = true} : vector<8x1xf32> -> vector<8x1xf32>
      %452 = vector.broadcast %451 : vector<8x1xf32> to vector<8x8xf32>
      %453 = arith.mulf %448, %452 : vector<8x8xf32>
      %454 = arith.truncf %453 : vector<8x8xf32> to vector<8x8xbf16>
      %455 = arith.truncf %436 : vector<8x8xf32> to vector<8x8xbf16>
      %cst_170 = arith.constant dense<0.000000e+00> : vector<8x8xf32>
      %456 = tpu.matmul %454, %455, %cst_170 {dimension_numbers = #tpu.dot_dimension_numbers<[1], [0], [0], [1], [0, 0, 1, 1], [], []>} : vector<8x8xbf16>, vector<8x8xbf16>, vector<8x8xf32> -> vector<8x8xf32>
      %457 = tpu.concatenate %387, %410, %433, %456 in 1 : vector<8x8xf32>, vector<8x8xf32>, vector<8x8xf32>, vector<8x8xf32> -> vector<8x32xf32>
      %458 = arith.truncf %457 : vector<8x32xf32> to vector<8x32xbf16>
      %cst_171 = arith.constant dense<0.000000e+00> : vector<8x32xf32>
      %459 = tpu.matmul %458, %358, %cst_171 {dimension_numbers = #tpu.dot_dimension_numbers<[1], [0], [0], [1], [0, 0, 1, 1], [], []>} : vector<8x32xbf16>, vector<32x32xbf16>, vector<8x32xf32> -> vector<8x32xf32>
      %460 = vector.broadcast %360 : vector<1x32xf32> to vector<8x32xf32>
      %461 = arith.addf %459, %460 : vector<8x32xf32>
      %462 = arith.addf %352, %461 : vector<8x32xf32>
      %c1_172 = arith.constant 1 : index
      %c0_173 = arith.constant 0 : index
      %c0_174 = arith.constant 0 : index
      %463 = vector.load %arg12[%c1_172, %c0_173, %c0_174] : memref<2x1x32xf32, #tpu.memory_space<vmem>>, vector<1x1x32xf32>
      %464 = vector.shape_cast %463 : vector<1x1x32xf32> to vector<1x32xf32>
      %c1_175 = arith.constant 1 : index
      %c0_176 = arith.constant 0 : index
      %c0_177 = arith.constant 0 : index
      %465 = vector.load %arg13[%c1_175, %c0_176, %c0_177] : memref<2x1x32xf32, #tpu.memory_space<vmem>>, vector<1x1x32xf32>
      %466 = vector.shape_cast %465 : vector<1x1x32xf32> to vector<1x32xf32>
      %cst_178 = arith.constant dense<0.000000e+00> : vector<8xf32>
      %467 = vector.multi_reduction <add>, %462, %cst_178 [1] : vector<8x32xf32> to vector<8xf32>
      %468 = vector.shape_cast %467 : vector<8xf32> to vector<8x1xf32>
      %469 = arith.mulf %462, %462 : vector<8x32xf32>
      %cst_179 = arith.constant dense<0.000000e+00> : vector<8xf32>
      %470 = vector.multi_reduction <add>, %469, %cst_179 [1] : vector<8x32xf32> to vector<8xf32>
      %471 = vector.shape_cast %470 : vector<8xf32> to vector<8x1xf32>
      %cst_180 = arith.constant 3.125000e-02 : f32
      %472 = vector.broadcast %cst_180 : f32 to vector<8x1xf32>
      %473 = arith.mulf %468, %472 : vector<8x1xf32>
      %cst_181 = arith.constant 3.125000e-02 : f32
      %474 = vector.broadcast %cst_181 : f32 to vector<8x1xf32>
      %475 = arith.mulf %471, %474 : vector<8x1xf32>
      %476 = arith.mulf %473, %473 : vector<8x1xf32>
      %477 = arith.subf %475, %476 : vector<8x1xf32>
      %478 = vector.broadcast %473 : vector<8x1xf32> to vector<8x32xf32>
      %479 = arith.subf %462, %478 : vector<8x32xf32>
      %cst_182 = arith.constant 9.99999996E-13 : f32
      %480 = vector.broadcast %cst_182 : f32 to vector<8x1xf32>
      %481 = arith.addf %477, %480 : vector<8x1xf32>
      %482 = math.rsqrt %481 : vector<8x1xf32>
      %483 = vector.broadcast %482 : vector<8x1xf32> to vector<8x32xf32>
      %484 = arith.mulf %479, %483 : vector<8x32xf32>
      %485 = vector.broadcast %464 : vector<1x32xf32> to vector<8x32xf32>
      %486 = arith.mulf %484, %485 : vector<8x32xf32>
      %487 = vector.broadcast %466 : vector<1x32xf32> to vector<8x32xf32>
      %488 = arith.addf %486, %487 : vector<8x32xf32>
      %c1_183 = arith.constant 1 : index
      %c0_184 = arith.constant 0 : index
      %c0_185 = arith.constant 0 : index
      %489 = vector.load %arg4[%c1_183, %c0_184, %c0_185] : memref<2x5x32xf32, #tpu.memory_space<vmem>>, vector<1x5x32xf32>
      %490 = vector.shape_cast %489 : vector<1x5x32xf32> to vector<5x32xf32>
      %c1_186 = arith.constant 1 : index
      %c0_187 = arith.constant 0 : index
      %c0_188 = arith.constant 0 : index
      %491 = vector.load %arg5[%c1_186, %c0_187, %c0_188] : memref<2x5x32xf32, #tpu.memory_space<vmem>>, vector<1x5x32xf32>
      %492 = vector.shape_cast %491 : vector<1x5x32xf32> to vector<5x32xf32>
      %c1_189 = arith.constant 1 : index
      %c0_190 = arith.constant 0 : index
      %c0_191 = arith.constant 0 : index
      %493 = vector.load %arg14[%c1_189, %c0_190, %c0_191] : memref<2x32x32xbf16, #tpu.memory_space<vmem>>, vector<1x32x32xbf16>
      %494 = vector.shape_cast %493 : vector<1x32x32xbf16> to vector<32x32xbf16>
      %c1_192 = arith.constant 1 : index
      %c0_193 = arith.constant 0 : index
      %c0_194 = arith.constant 0 : index
      %495 = vector.load %arg15[%c1_192, %c0_193, %c0_194] : memref<2x1x32xf32, #tpu.memory_space<vmem>>, vector<1x1x32xf32>
      %496 = vector.shape_cast %495 : vector<1x1x32xf32> to vector<1x32xf32>
      %c1_195 = arith.constant 1 : index
      %c0_196 = arith.constant 0 : index
      %c0_197 = arith.constant 0 : index
      %497 = vector.load %arg16[%c1_195, %c0_196, %c0_197] : memref<2x32x32xbf16, #tpu.memory_space<vmem>>, vector<1x32x32xbf16>
      %498 = vector.shape_cast %497 : vector<1x32x32xbf16> to vector<32x32xbf16>
      %c1_198 = arith.constant 1 : index
      %c0_199 = arith.constant 0 : index
      %c0_200 = arith.constant 0 : index
      %499 = vector.load %arg17[%c1_198, %c0_199, %c0_200] : memref<2x1x32xf32, #tpu.memory_space<vmem>>, vector<1x1x32xf32>
      %500 = vector.shape_cast %499 : vector<1x1x32xf32> to vector<1x32xf32>
      %501 = arith.truncf %488 : vector<8x32xf32> to vector<8x32xbf16>
      %cst_201 = arith.constant dense<0.000000e+00> : vector<8x32xf32>
      %502 = tpu.matmul %501, %494, %cst_201 {dimension_numbers = #tpu.dot_dimension_numbers<[1], [0], [0], [1], [0, 0, 1, 1], [], []>} : vector<8x32xbf16>, vector<32x32xbf16>, vector<8x32xf32> -> vector<8x32xf32>
      %503 = vector.broadcast %496 : vector<1x32xf32> to vector<8x32xf32>
      %504 = arith.addf %502, %503 : vector<8x32xf32>
      %505 = arith.truncf %490 : vector<5x32xf32> to vector<5x32xbf16>
      %506 = arith.truncf %492 : vector<5x32xf32> to vector<5x32xbf16>
      %507 = vector.extract_strided_slice %504 {offsets = [0, 0], sizes = [8, 8], strides = [1, 1]} : vector<8x32xf32> to vector<8x8xf32>
      %508 = arith.truncf %507 : vector<8x8xf32> to vector<8x8xbf16>
      %509 = vector.extract_strided_slice %505 {offsets = [0, 0], sizes = [5, 8], strides = [1, 1]} : vector<5x32xbf16> to vector<5x8xbf16>
      %510 = vector.extract_strided_slice %506 {offsets = [0, 0], sizes = [5, 8], strides = [1, 1]} : vector<5x32xbf16> to vector<5x8xbf16>
      %cst_202 = arith.constant dense<0.000000e+00> : vector<8x5xf32>
      %511 = tpu.matmul %508, %509, %cst_202 {dimension_numbers = #tpu.dot_dimension_numbers<[1], [1], [0], [0], [0, 0, 1, 0], [], []>} : vector<8x8xbf16>, vector<5x8xbf16>, vector<8x5xf32> -> vector<8x5xf32>
      %cst_203 = arith.constant 0.353553385 : f32
      %512 = vector.broadcast %cst_203 : f32 to vector<8x5xf32>
      %513 = arith.mulf %511, %512 : vector<8x5xf32>
      %cst_204 = arith.constant dense<0xFF800000> : vector<8xf32>
      %514 = vector.multi_reduction <maximumf>, %513, %cst_204 [1] : vector<8x5xf32> to vector<8xf32>
      %515 = vector.shape_cast %514 : vector<8xf32> to vector<8x1xf32>
      %516 = vector.broadcast %515 : vector<8x1xf32> to vector<8x5xf32>
      %517 = arith.subf %513, %516 : vector<8x5xf32>
      %518 = math.exp %517 : vector<8x5xf32>
      %cst_205 = arith.constant dense<0.000000e+00> : vector<8xf32>
      %519 = vector.multi_reduction <add>, %518, %cst_205 [1] : vector<8x5xf32> to vector<8xf32>
      %520 = vector.shape_cast %519 : vector<8xf32> to vector<8x1xf32>
      %521 = tpu.reciprocal %520 {approx = true} : vector<8x1xf32> -> vector<8x1xf32>
      %522 = vector.broadcast %521 : vector<8x1xf32> to vector<8x5xf32>
      %523 = arith.mulf %518, %522 : vector<8x5xf32>
      %524 = arith.truncf %523 : vector<8x5xf32> to vector<8x5xbf16>
      %cst_206 = arith.constant dense<0.000000e+00> : vector<8x8xf32>
      %525 = tpu.matmul %524, %510, %cst_206 {dimension_numbers = #tpu.dot_dimension_numbers<[1], [0], [0], [1], [0, 0, 1, 1], [], []>} : vector<8x5xbf16>, vector<5x8xbf16>, vector<8x8xf32> -> vector<8x8xf32>
      %526 = vector.extract_strided_slice %504 {offsets = [0, 8], sizes = [8, 8], strides = [1, 1]} : vector<8x32xf32> to vector<8x8xf32>
      %527 = arith.truncf %526 : vector<8x8xf32> to vector<8x8xbf16>
      %528 = vector.extract_strided_slice %505 {offsets = [0, 8], sizes = [5, 8], strides = [1, 1]} : vector<5x32xbf16> to vector<5x8xbf16>
      %529 = vector.extract_strided_slice %506 {offsets = [0, 8], sizes = [5, 8], strides = [1, 1]} : vector<5x32xbf16> to vector<5x8xbf16>
      %cst_207 = arith.constant dense<0.000000e+00> : vector<8x5xf32>
      %530 = tpu.matmul %527, %528, %cst_207 {dimension_numbers = #tpu.dot_dimension_numbers<[1], [1], [0], [0], [0, 0, 1, 0], [], []>} : vector<8x8xbf16>, vector<5x8xbf16>, vector<8x5xf32> -> vector<8x5xf32>
      %cst_208 = arith.constant 0.353553385 : f32
      %531 = vector.broadcast %cst_208 : f32 to vector<8x5xf32>
      %532 = arith.mulf %530, %531 : vector<8x5xf32>
      %cst_209 = arith.constant dense<0xFF800000> : vector<8xf32>
      %533 = vector.multi_reduction <maximumf>, %532, %cst_209 [1] : vector<8x5xf32> to vector<8xf32>
      %534 = vector.shape_cast %533 : vector<8xf32> to vector<8x1xf32>
      %535 = vector.broadcast %534 : vector<8x1xf32> to vector<8x5xf32>
      %536 = arith.subf %532, %535 : vector<8x5xf32>
      %537 = math.exp %536 : vector<8x5xf32>
      %cst_210 = arith.constant dense<0.000000e+00> : vector<8xf32>
      %538 = vector.multi_reduction <add>, %537, %cst_210 [1] : vector<8x5xf32> to vector<8xf32>
      %539 = vector.shape_cast %538 : vector<8xf32> to vector<8x1xf32>
      %540 = tpu.reciprocal %539 {approx = true} : vector<8x1xf32> -> vector<8x1xf32>
      %541 = vector.broadcast %540 : vector<8x1xf32> to vector<8x5xf32>
      %542 = arith.mulf %537, %541 : vector<8x5xf32>
      %543 = arith.truncf %542 : vector<8x5xf32> to vector<8x5xbf16>
      %cst_211 = arith.constant dense<0.000000e+00> : vector<8x8xf32>
      %544 = tpu.matmul %543, %529, %cst_211 {dimension_numbers = #tpu.dot_dimension_numbers<[1], [0], [0], [1], [0, 0, 1, 1], [], []>} : vector<8x5xbf16>, vector<5x8xbf16>, vector<8x8xf32> -> vector<8x8xf32>
      %545 = vector.extract_strided_slice %504 {offsets = [0, 16], sizes = [8, 8], strides = [1, 1]} : vector<8x32xf32> to vector<8x8xf32>
      %546 = arith.truncf %545 : vector<8x8xf32> to vector<8x8xbf16>
      %547 = vector.extract_strided_slice %505 {offsets = [0, 16], sizes = [5, 8], strides = [1, 1]} : vector<5x32xbf16> to vector<5x8xbf16>
      %548 = vector.extract_strided_slice %506 {offsets = [0, 16], sizes = [5, 8], strides = [1, 1]} : vector<5x32xbf16> to vector<5x8xbf16>
      %cst_212 = arith.constant dense<0.000000e+00> : vector<8x5xf32>
      %549 = tpu.matmul %546, %547, %cst_212 {dimension_numbers = #tpu.dot_dimension_numbers<[1], [1], [0], [0], [0, 0, 1, 0], [], []>} : vector<8x8xbf16>, vector<5x8xbf16>, vector<8x5xf32> -> vector<8x5xf32>
      %cst_213 = arith.constant 0.353553385 : f32
      %550 = vector.broadcast %cst_213 : f32 to vector<8x5xf32>
      %551 = arith.mulf %549, %550 : vector<8x5xf32>
      %cst_214 = arith.constant dense<0xFF800000> : vector<8xf32>
      %552 = vector.multi_reduction <maximumf>, %551, %cst_214 [1] : vector<8x5xf32> to vector<8xf32>
      %553 = vector.shape_cast %552 : vector<8xf32> to vector<8x1xf32>
      %554 = vector.broadcast %553 : vector<8x1xf32> to vector<8x5xf32>
      %555 = arith.subf %551, %554 : vector<8x5xf32>
      %556 = math.exp %555 : vector<8x5xf32>
      %cst_215 = arith.constant dense<0.000000e+00> : vector<8xf32>
      %557 = vector.multi_reduction <add>, %556, %cst_215 [1] : vector<8x5xf32> to vector<8xf32>
      %558 = vector.shape_cast %557 : vector<8xf32> to vector<8x1xf32>
      %559 = tpu.reciprocal %558 {approx = true} : vector<8x1xf32> -> vector<8x1xf32>
      %560 = vector.broadcast %559 : vector<8x1xf32> to vector<8x5xf32>
      %561 = arith.mulf %556, %560 : vector<8x5xf32>
      %562 = arith.truncf %561 : vector<8x5xf32> to vector<8x5xbf16>
      %cst_216 = arith.constant dense<0.000000e+00> : vector<8x8xf32>
      %563 = tpu.matmul %562, %548, %cst_216 {dimension_numbers = #tpu.dot_dimension_numbers<[1], [0], [0], [1], [0, 0, 1, 1], [], []>} : vector<8x5xbf16>, vector<5x8xbf16>, vector<8x8xf32> -> vector<8x8xf32>
      %564 = vector.extract_strided_slice %504 {offsets = [0, 24], sizes = [8, 8], strides = [1, 1]} : vector<8x32xf32> to vector<8x8xf32>
      %565 = arith.truncf %564 : vector<8x8xf32> to vector<8x8xbf16>
      %566 = vector.extract_strided_slice %505 {offsets = [0, 24], sizes = [5, 8], strides = [1, 1]} : vector<5x32xbf16> to vector<5x8xbf16>
      %567 = vector.extract_strided_slice %506 {offsets = [0, 24], sizes = [5, 8], strides = [1, 1]} : vector<5x32xbf16> to vector<5x8xbf16>
      %cst_217 = arith.constant dense<0.000000e+00> : vector<8x5xf32>
      %568 = tpu.matmul %565, %566, %cst_217 {dimension_numbers = #tpu.dot_dimension_numbers<[1], [1], [0], [0], [0, 0, 1, 0], [], []>} : vector<8x8xbf16>, vector<5x8xbf16>, vector<8x5xf32> -> vector<8x5xf32>
      %cst_218 = arith.constant 0.353553385 : f32
      %569 = vector.broadcast %cst_218 : f32 to vector<8x5xf32>
      %570 = arith.mulf %568, %569 : vector<8x5xf32>
      %cst_219 = arith.constant dense<0xFF800000> : vector<8xf32>
      %571 = vector.multi_reduction <maximumf>, %570, %cst_219 [1] : vector<8x5xf32> to vector<8xf32>
      %572 = vector.shape_cast %571 : vector<8xf32> to vector<8x1xf32>
      %573 = vector.broadcast %572 : vector<8x1xf32> to vector<8x5xf32>
      %574 = arith.subf %570, %573 : vector<8x5xf32>
      %575 = math.exp %574 : vector<8x5xf32>
      %cst_220 = arith.constant dense<0.000000e+00> : vector<8xf32>
      %576 = vector.multi_reduction <add>, %575, %cst_220 [1] : vector<8x5xf32> to vector<8xf32>
      %577 = vector.shape_cast %576 : vector<8xf32> to vector<8x1xf32>
      %578 = tpu.reciprocal %577 {approx = true} : vector<8x1xf32> -> vector<8x1xf32>
      %579 = vector.broadcast %578 : vector<8x1xf32> to vector<8x5xf32>
      %580 = arith.mulf %575, %579 : vector<8x5xf32>
      %581 = arith.truncf %580 : vector<8x5xf32> to vector<8x5xbf16>
      %cst_221 = arith.constant dense<0.000000e+00> : vector<8x8xf32>
      %582 = tpu.matmul %581, %567, %cst_221 {dimension_numbers = #tpu.dot_dimension_numbers<[1], [0], [0], [1], [0, 0, 1, 1], [], []>} : vector<8x5xbf16>, vector<5x8xbf16>, vector<8x8xf32> -> vector<8x8xf32>
      %583 = tpu.concatenate %525, %544, %563, %582 in 1 : vector<8x8xf32>, vector<8x8xf32>, vector<8x8xf32>, vector<8x8xf32> -> vector<8x32xf32>
      %584 = arith.truncf %583 : vector<8x32xf32> to vector<8x32xbf16>
      %cst_222 = arith.constant dense<0.000000e+00> : vector<8x32xf32>
      %585 = tpu.matmul %584, %498, %cst_222 {dimension_numbers = #tpu.dot_dimension_numbers<[1], [0], [0], [1], [0, 0, 1, 1], [], []>} : vector<8x32xbf16>, vector<32x32xbf16>, vector<8x32xf32> -> vector<8x32xf32>
      %586 = vector.broadcast %500 : vector<1x32xf32> to vector<8x32xf32>
      %587 = arith.addf %585, %586 : vector<8x32xf32>
      %588 = arith.addf %488, %587 : vector<8x32xf32>
      %c1_223 = arith.constant 1 : index
      %c0_224 = arith.constant 0 : index
      %c0_225 = arith.constant 0 : index
      %589 = vector.load %arg18[%c1_223, %c0_224, %c0_225] : memref<2x1x32xf32, #tpu.memory_space<vmem>>, vector<1x1x32xf32>
      %590 = vector.shape_cast %589 : vector<1x1x32xf32> to vector<1x32xf32>
      %c1_226 = arith.constant 1 : index
      %c0_227 = arith.constant 0 : index
      %c0_228 = arith.constant 0 : index
      %591 = vector.load %arg19[%c1_226, %c0_227, %c0_228] : memref<2x1x32xf32, #tpu.memory_space<vmem>>, vector<1x1x32xf32>
      %592 = vector.shape_cast %591 : vector<1x1x32xf32> to vector<1x32xf32>
      %cst_229 = arith.constant dense<0.000000e+00> : vector<8xf32>
      %593 = vector.multi_reduction <add>, %588, %cst_229 [1] : vector<8x32xf32> to vector<8xf32>
      %594 = vector.shape_cast %593 : vector<8xf32> to vector<8x1xf32>
      %595 = arith.mulf %588, %588 : vector<8x32xf32>
      %cst_230 = arith.constant dense<0.000000e+00> : vector<8xf32>
      %596 = vector.multi_reduction <add>, %595, %cst_230 [1] : vector<8x32xf32> to vector<8xf32>
      %597 = vector.shape_cast %596 : vector<8xf32> to vector<8x1xf32>
      %cst_231 = arith.constant 3.125000e-02 : f32
      %598 = vector.broadcast %cst_231 : f32 to vector<8x1xf32>
      %599 = arith.mulf %594, %598 : vector<8x1xf32>
      %cst_232 = arith.constant 3.125000e-02 : f32
      %600 = vector.broadcast %cst_232 : f32 to vector<8x1xf32>
      %601 = arith.mulf %597, %600 : vector<8x1xf32>
      %602 = arith.mulf %599, %599 : vector<8x1xf32>
      %603 = arith.subf %601, %602 : vector<8x1xf32>
      %604 = vector.broadcast %599 : vector<8x1xf32> to vector<8x32xf32>
      %605 = arith.subf %588, %604 : vector<8x32xf32>
      %cst_233 = arith.constant 9.99999996E-13 : f32
      %606 = vector.broadcast %cst_233 : f32 to vector<8x1xf32>
      %607 = arith.addf %603, %606 : vector<8x1xf32>
      %608 = math.rsqrt %607 : vector<8x1xf32>
      %609 = vector.broadcast %608 : vector<8x1xf32> to vector<8x32xf32>
      %610 = arith.mulf %605, %609 : vector<8x32xf32>
      %611 = vector.broadcast %590 : vector<1x32xf32> to vector<8x32xf32>
      %612 = arith.mulf %610, %611 : vector<8x32xf32>
      %613 = vector.broadcast %592 : vector<1x32xf32> to vector<8x32xf32>
      %614 = arith.addf %612, %613 : vector<8x32xf32>
      %c1_234 = arith.constant 1 : index
      %c0_235 = arith.constant 0 : index
      %c0_236 = arith.constant 0 : index
      %615 = vector.load %arg20[%c1_234, %c0_235, %c0_236] : memref<2x32x128xbf16, #tpu.memory_space<vmem>>, vector<1x32x128xbf16>
      %616 = vector.shape_cast %615 : vector<1x32x128xbf16> to vector<32x128xbf16>
      %617 = arith.truncf %614 : vector<8x32xf32> to vector<8x32xbf16>
      %cst_237 = arith.constant dense<0.000000e+00> : vector<8x128xf32>
      %618 = tpu.matmul %617, %616, %cst_237 {dimension_numbers = #tpu.dot_dimension_numbers<[1], [0], [0], [1], [0, 0, 1, 1], [], []>} : vector<8x32xbf16>, vector<32x128xbf16>, vector<8x128xf32> -> vector<8x128xf32>
      %c1_238 = arith.constant 1 : index
      %c0_239 = arith.constant 0 : index
      %c0_240 = arith.constant 0 : index
      %619 = vector.load %arg21[%c1_238, %c0_239, %c0_240] : memref<2x1x128xf32, #tpu.memory_space<vmem>>, vector<1x1x128xf32>
      %620 = vector.shape_cast %619 : vector<1x1x128xf32> to vector<1x128xf32>
      %621 = vector.broadcast %620 : vector<1x128xf32> to vector<8x128xf32>
      %622 = arith.addf %618, %621 : vector<8x128xf32>
      %623 = arith.mulf %622, %622 : vector<8x128xf32>
      %624 = arith.mulf %622, %623 : vector<8x128xf32>
      %cst_241 = arith.constant 4.471500e-02 : f32
      %625 = vector.broadcast %cst_241 : f32 to vector<8x128xf32>
      %626 = arith.mulf %625, %624 : vector<8x128xf32>
      %627 = arith.addf %622, %626 : vector<8x128xf32>
      %cst_242 = arith.constant 0.797884583 : f32
      %628 = vector.broadcast %cst_242 : f32 to vector<8x128xf32>
      %629 = arith.mulf %628, %627 : vector<8x128xf32>
      %630 = math.tanh %629 : vector<8x128xf32>
      %cst_243 = arith.constant 1.000000e+00 : f32
      %631 = vector.broadcast %cst_243 : f32 to vector<8x128xf32>
      %632 = arith.addf %631, %630 : vector<8x128xf32>
      %cst_244 = arith.constant 5.000000e-01 : f32
      %633 = vector.broadcast %cst_244 : f32 to vector<8x128xf32>
      %634 = arith.mulf %633, %632 : vector<8x128xf32>
      %635 = arith.mulf %622, %634 : vector<8x128xf32>
      %c1_245 = arith.constant 1 : index
      %c0_246 = arith.constant 0 : index
      %c0_247 = arith.constant 0 : index
      %636 = vector.load %arg22[%c1_245, %c0_246, %c0_247] : memref<2x128x32xbf16, #tpu.memory_space<vmem>>, vector<1x128x32xbf16>
      %637 = vector.shape_cast %636 : vector<1x128x32xbf16> to vector<128x32xbf16>
      %638 = arith.truncf %635 : vector<8x128xf32> to vector<8x128xbf16>
      %cst_248 = arith.constant dense<0.000000e+00> : vector<8x32xf32>
      %639 = tpu.matmul %638, %637, %cst_248 {dimension_numbers = #tpu.dot_dimension_numbers<[1], [0], [0], [1], [0, 0, 1, 1], [], []>} : vector<8x128xbf16>, vector<128x32xbf16>, vector<8x32xf32> -> vector<8x32xf32>
      %c1_249 = arith.constant 1 : index
      %c0_250 = arith.constant 0 : index
      %c0_251 = arith.constant 0 : index
      %640 = vector.load %arg23[%c1_249, %c0_250, %c0_251] : memref<2x1x32xf32, #tpu.memory_space<vmem>>, vector<1x1x32xf32>
      %641 = vector.shape_cast %640 : vector<1x1x32xf32> to vector<1x32xf32>
      %642 = vector.broadcast %641 : vector<1x32xf32> to vector<8x32xf32>
      %643 = arith.addf %639, %642 : vector<8x32xf32>
      %644 = arith.addf %614, %643 : vector<8x32xf32>
      %c1_252 = arith.constant 1 : index
      %c0_253 = arith.constant 0 : index
      %c0_254 = arith.constant 0 : index
      %645 = vector.load %arg24[%c1_252, %c0_253, %c0_254] : memref<2x1x32xf32, #tpu.memory_space<vmem>>, vector<1x1x32xf32>
      %646 = vector.shape_cast %645 : vector<1x1x32xf32> to vector<1x32xf32>
      %c1_255 = arith.constant 1 : index
      %c0_256 = arith.constant 0 : index
      %c0_257 = arith.constant 0 : index
      %647 = vector.load %arg25[%c1_255, %c0_256, %c0_257] : memref<2x1x32xf32, #tpu.memory_space<vmem>>, vector<1x1x32xf32>
      %648 = vector.shape_cast %647 : vector<1x1x32xf32> to vector<1x32xf32>
      %cst_258 = arith.constant dense<0.000000e+00> : vector<8xf32>
      %649 = vector.multi_reduction <add>, %644, %cst_258 [1] : vector<8x32xf32> to vector<8xf32>
      %650 = vector.shape_cast %649 : vector<8xf32> to vector<8x1xf32>
      %651 = arith.mulf %644, %644 : vector<8x32xf32>
      %cst_259 = arith.constant dense<0.000000e+00> : vector<8xf32>
      %652 = vector.multi_reduction <add>, %651, %cst_259 [1] : vector<8x32xf32> to vector<8xf32>
      %653 = vector.shape_cast %652 : vector<8xf32> to vector<8x1xf32>
      %cst_260 = arith.constant 3.125000e-02 : f32
      %654 = vector.broadcast %cst_260 : f32 to vector<8x1xf32>
      %655 = arith.mulf %650, %654 : vector<8x1xf32>
      %cst_261 = arith.constant 3.125000e-02 : f32
      %656 = vector.broadcast %cst_261 : f32 to vector<8x1xf32>
      %657 = arith.mulf %653, %656 : vector<8x1xf32>
      %658 = arith.mulf %655, %655 : vector<8x1xf32>
      %659 = arith.subf %657, %658 : vector<8x1xf32>
      %660 = vector.broadcast %655 : vector<8x1xf32> to vector<8x32xf32>
      %661 = arith.subf %644, %660 : vector<8x32xf32>
      %cst_262 = arith.constant 9.99999996E-13 : f32
      %662 = vector.broadcast %cst_262 : f32 to vector<8x1xf32>
      %663 = arith.addf %659, %662 : vector<8x1xf32>
      %664 = math.rsqrt %663 : vector<8x1xf32>
      %665 = vector.broadcast %664 : vector<8x1xf32> to vector<8x32xf32>
      %666 = arith.mulf %661, %665 : vector<8x32xf32>
      %667 = vector.broadcast %646 : vector<1x32xf32> to vector<8x32xf32>
      %668 = arith.mulf %666, %667 : vector<8x32xf32>
      %669 = vector.broadcast %648 : vector<1x32xf32> to vector<8x32xf32>
      %670 = arith.addf %668, %669 : vector<8x32xf32>
      %c1_i32_263 = arith.constant 1 : i32
      %671 = arith.addi %arg0, %c1_i32_263 : i32
      %672 = tpu.iota {dimensions = array<i32: 0>} : vector<8x32xi32>
      %673 = vector.broadcast %671 : i32 to vector<8x32xi32>
      %674 = arith.cmpi eq, %672, %673 : vector<8x32xi32>
      %675 = arith.extui %674 : vector<8x32xi1> to vector<8x32xi32>
      %676 = arith.sitofp %675 : vector<8x32xi32> to vector<8x32xf32>
      %677 = arith.mulf %670, %676 : vector<8x32xf32>
      %cst_264 = arith.constant dense<0.000000e+00> : vector<32xf32>
      %678 = vector.multi_reduction <add>, %677, %cst_264 [0] : vector<8x32xf32> to vector<32xf32>
      %679 = vector.shape_cast %678 : vector<32xf32> to vector<1x32xf32>
      %c0_265 = arith.constant 0 : index
      %c0_266 = arith.constant 0 : index
      %680 = vector.load %arg26[%c0_265, %c0_266] : memref<32x32xbf16, #tpu.memory_space<vmem>>, vector<32x32xbf16>
      %681 = arith.truncf %679 : vector<1x32xf32> to vector<1x32xbf16>
      %cst_267 = arith.constant dense<0.000000e+00> : vector<1x32xf32>
      %682 = tpu.matmul %681, %680, %cst_267 {dimension_numbers = #tpu.dot_dimension_numbers<[1], [0], [0], [1], [0, 0, 1, 1], [], []>} : vector<1x32xbf16>, vector<32x32xbf16>, vector<1x32xf32> -> vector<1x32xf32>
      %c0_268 = arith.constant 0 : index
      %c0_269 = arith.constant 0 : index
      %683 = vector.load %arg27[%c0_268, %c0_269] : memref<1x32xf32, #tpu.memory_space<vmem>>, vector<1x32xf32>
      %684 = arith.addf %682, %683 : vector<1x32xf32>
      %685 = arith.mulf %684, %684 : vector<1x32xf32>
      %686 = arith.mulf %684, %685 : vector<1x32xf32>
      %cst_270 = arith.constant 4.471500e-02 : f32
      %687 = vector.broadcast %cst_270 : f32 to vector<1x32xf32>
      %688 = arith.mulf %687, %686 : vector<1x32xf32>
      %689 = arith.addf %684, %688 : vector<1x32xf32>
      %cst_271 = arith.constant 0.797884583 : f32
      %690 = vector.broadcast %cst_271 : f32 to vector<1x32xf32>
      %691 = arith.mulf %690, %689 : vector<1x32xf32>
      %692 = math.tanh %691 : vector<1x32xf32>
      %cst_272 = arith.constant 1.000000e+00 : f32
      %693 = vector.broadcast %cst_272 : f32 to vector<1x32xf32>
      %694 = arith.addf %693, %692 : vector<1x32xf32>
      %cst_273 = arith.constant 5.000000e-01 : f32
      %695 = vector.broadcast %cst_273 : f32 to vector<1x32xf32>
      %696 = arith.mulf %695, %694 : vector<1x32xf32>
      %697 = arith.mulf %684, %696 : vector<1x32xf32>
      %c0_274 = arith.constant 0 : index
      %c0_275 = arith.constant 0 : index
      %698 = vector.load %arg28[%c0_274, %c0_275] : memref<1x32xf32, #tpu.memory_space<vmem>>, vector<1x32xf32>
      %c0_276 = arith.constant 0 : index
      %c0_277 = arith.constant 0 : index
      %699 = vector.load %arg29[%c0_276, %c0_277] : memref<1x32xf32, #tpu.memory_space<vmem>>, vector<1x32xf32>
      %cst_278 = arith.constant dense<0.000000e+00> : vector<1xf32>
      %700 = vector.multi_reduction <add>, %697, %cst_278 [1] : vector<1x32xf32> to vector<1xf32>
      %701 = vector.shape_cast %700 : vector<1xf32> to vector<1x1xf32>
      %702 = arith.mulf %697, %697 : vector<1x32xf32>
      %cst_279 = arith.constant dense<0.000000e+00> : vector<1xf32>
      %703 = vector.multi_reduction <add>, %702, %cst_279 [1] : vector<1x32xf32> to vector<1xf32>
      %704 = vector.shape_cast %703 : vector<1xf32> to vector<1x1xf32>
      %cst_280 = arith.constant 3.125000e-02 : f32
      %705 = vector.broadcast %cst_280 : f32 to vector<1x1xf32>
      %706 = arith.mulf %701, %705 : vector<1x1xf32>
      %cst_281 = arith.constant 3.125000e-02 : f32
      %707 = vector.broadcast %cst_281 : f32 to vector<1x1xf32>
      %708 = arith.mulf %704, %707 : vector<1x1xf32>
      %709 = arith.mulf %706, %706 : vector<1x1xf32>
      %710 = arith.subf %708, %709 : vector<1x1xf32>
      %711 = vector.broadcast %706 : vector<1x1xf32> to vector<1x32xf32>
      %712 = arith.subf %697, %711 : vector<1x32xf32>
      %cst_282 = arith.constant 9.99999996E-13 : f32
      %713 = vector.broadcast %cst_282 : f32 to vector<1x1xf32>
      %714 = arith.addf %710, %713 : vector<1x1xf32>
      %715 = math.rsqrt %714 : vector<1x1xf32>
      %716 = vector.broadcast %715 : vector<1x1xf32> to vector<1x32xf32>
      %717 = arith.mulf %712, %716 : vector<1x32xf32>
      %718 = arith.mulf %717, %698 : vector<1x32xf32>
      %719 = arith.addf %718, %699 : vector<1x32xf32>
      %c0_283 = arith.constant 0 : index
      %c0_284 = arith.constant 0 : index
      %720 = vector.load %arg30[%c0_283, %c0_284] : memref<32x64xbf16, #tpu.memory_space<vmem>>, vector<32x64xbf16>
      %721 = arith.truncf %719 : vector<1x32xf32> to vector<1x32xbf16>
      %cst_285 = arith.constant dense<0.000000e+00> : vector<1x64xf32>
      %722 = tpu.matmul %721, %720, %cst_285 {dimension_numbers = #tpu.dot_dimension_numbers<[1], [0], [0], [1], [0, 0, 1, 1], [], []>} : vector<1x32xbf16>, vector<32x64xbf16>, vector<1x64xf32> -> vector<1x64xf32>
      %c0_286 = arith.constant 0 : index
      %c0_287 = arith.constant 0 : index
      %723 = vector.load %arg31[%c0_286, %c0_287] : memref<1x64xf32, #tpu.memory_space<vmem>>, vector<1x64xf32>
      %724 = arith.addf %722, %723 : vector<1x64xf32>
      %cst_288 = arith.constant dense<0xFF800000> : vector<1xf32>
      %725 = vector.multi_reduction <maximumf>, %724, %cst_288 [1] : vector<1x64xf32> to vector<1xf32>
      %726 = vector.shape_cast %725 : vector<1xf32> to vector<1x1xf32>
      %727 = tpu.iota {dimensions = array<i32: 1>} : vector<1x64xi32>
      %728 = vector.broadcast %726 : vector<1x1xf32> to vector<1x64xf32>
      %729 = arith.cmpf oge, %724, %728 : vector<1x64xf32>
      %c64_i32 = arith.constant 64 : i32
      %730 = vector.broadcast %c64_i32 : i32 to vector<1x64xi32>
      %731 = arith.select %729, %727, %730 : vector<1x64xi1>, vector<1x64xi32>
      %cst_289 = arith.constant dense<2147483647> : vector<1xi32>
      %732 = vector.multi_reduction <minsi>, %731, %cst_289 [1] : vector<1x64xi32> to vector<1xi32>
      %733 = vector.shape_cast %732 : vector<1xi32> to vector<1x1xi32>
      %734 = vector.shape_cast %733 : vector<1x1xi32> to vector<1x1x1xi32>
      %735 = vector.shape_cast %734 : vector<1x1x1xi32> to vector<1x1x1xi32>
      %736 = vector.broadcast %735 : vector<1x1x1xi32> to vector<1x1x128xi32>
      %c0_290 = arith.constant 0 : index
      %c0_291 = arith.constant 0 : index
      %c0_292 = arith.constant 0 : index
      %737 = vector.load %arg32[%c0_290, %c0_291, %c0_292] : memref<1x1x128xi32, #tpu.memory_space<vmem>>, vector<1x1x128xi32>
      tpu.vector_store %arg32[%c0_290, %c0_291, %c0_292], %736 {strides = array<i32>} : memref<1x1x128xi32, #tpu.memory_space<vmem>>, vector<1x1x128xi32>,
    } else {
    }
    %true = arith.constant true
    %5 = arith.xori %2, %true : i1
    %6 = arith.extui %5 : i1 to i32
    %c0_i32_0 = arith.constant 0 : i32
    %7 = arith.cmpi ne, %6, %c0_i32_0 : i32
    scf.if %7 {
      %c0_i32_1 = arith.constant 0 : i32
      %8 = vector.broadcast %c0_i32_1 : i32 to vector<1x1x128xi32>
      %c0_2 = arith.constant 0 : index
      %c0_3 = arith.constant 0 : index
      %c0_4 = arith.constant 0 : index
      %9 = vector.load %arg32[%c0_2, %c0_3, %c0_4] : memref<1x1x128xi32, #tpu.memory_space<vmem>>, vector<1x1x128xi32>
      tpu.vector_store %arg32[%c0_2, %c0_3, %c0_4], %8 {strides = array<i32>} : memref<1x1x128xi32, #tpu.memory_space<vmem>>, vector<1x1x128xi32>,
    } else {
    }
    return
  }
  func.func @transform_0(%arg0: i32, %arg1: memref<1xi32, #tpu.memory_space<smem>>) -> (i32, i32, i32) {
    %c0_i32 = arith.constant 0 : i32
    %c0_i32_0 = arith.constant 0 : i32
    %c0_i32_1 = arith.constant 0 : i32
    return %arg0, %c0_i32, %c0_i32_0 : i32, i32, i32
  }
  func.func @transform_1(%arg0: i32, %arg1: memref<1xi32, #tpu.memory_space<smem>>) -> (i32, i32) {
    %c0_i32 = arith.constant 0 : i32
    %c0_i32_0 = arith.constant 0 : i32
    %c0_i32_1 = arith.constant 0 : i32
    return %c0_i32, %c0_i32_0 : i32, i32
  }
  func.func @transform_2(%arg0: i32, %arg1: memref<1xi32, #tpu.memory_space<smem>>) -> (i32, i32, i32) {
    %c0_i32 = arith.constant 0 : i32
    %c0_i32_0 = arith.constant 0 : i32
    %c0_i32_1 = arith.constant 0 : i32
    %c0_i32_2 = arith.constant 0 : i32
    return %c0_i32, %c0_i32_0, %c0_i32_1 : i32, i32, i32
  }
  func.func @transform_3(%arg0: i32, %arg1: memref<1xi32, #tpu.memory_space<smem>>) -> (i32, i32, i32) {
    %c0_i32 = arith.constant 0 : i32
    %c0_i32_0 = arith.constant 0 : i32
    %c0_i32_1 = arith.constant 0 : i32
    %c0_i32_2 = arith.constant 0 : i32
    return %c0_i32, %c0_i32_0, %c0_i32_1 : i32, i32, i32
  }
  func.func @transform_4(%arg0: i32, %arg1: memref<1xi32, #tpu.memory_space<smem>>) -> (i32, i32) {
    %c0_i32 = arith.constant 0 : i32
    %c0_i32_0 = arith.constant 0 : i32
    %c0_i32_1 = arith.constant 0 : i32
    return %c0_i32, %c0_i32_0 : i32, i32
  }
  func.func @transform_5(%arg0: i32, %arg1: memref<1xi32, #tpu.memory_space<smem>>) -> (i32, i32) {
    %c0_i32 = arith.constant 0 : i32
    %c0_i32_0 = arith.constant 0 : i32
    %c0_i32_1 = arith.constant 0 : i32
    return %c0_i32, %c0_i32_0 : i32, i32
  }
  func.func @transform_6(%arg0: i32, %arg1: memref<1xi32, #tpu.memory_space<smem>>) -> (i32, i32, i32) {
    %c0_i32 = arith.constant 0 : i32
    %c0_i32_0 = arith.constant 0 : i32
    %c0_i32_1 = arith.constant 0 : i32
    %c0_i32_2 = arith.constant 0 : i32
    return %c0_i32, %c0_i32_0, %c0_i32_1 : i32, i32, i32
  }
  func.func @transform_7(%arg0: i32, %arg1: memref<1xi32, #tpu.memory_space<smem>>) -> (i32, i32, i32) {
    %c0_i32 = arith.constant 0 : i32
    %c0_i32_0 = arith.constant 0 : i32
    %c0_i32_1 = arith.constant 0 : i32
    %c0_i32_2 = arith.constant 0 : i32
    return %c0_i32, %c0_i32_0, %c0_i32_1 : i32, i32, i32
  }
  func.func @transform_8(%arg0: i32, %arg1: memref<1xi32, #tpu.memory_space<smem>>) -> (i32, i32, i32) {
    %c0_i32 = arith.constant 0 : i32
    %c0_i32_0 = arith.constant 0 : i32
    %c0_i32_1 = arith.constant 0 : i32
    %c0_i32_2 = arith.constant 0 : i32
    return %c0_i32, %c0_i32_0, %c0_i32_1 : i32, i32, i32
  }
  func.func @transform_9(%arg0: i32, %arg1: memref<1xi32, #tpu.memory_space<smem>>) -> (i32, i32, i32) {
    %c0_i32 = arith.constant 0 : i32
    %c0_i32_0 = arith.constant 0 : i32
    %c0_i32_1 = arith.constant 0 : i32
    %c0_i32_2 = arith.constant 0 : i32
    return %c0_i32, %c0_i32_0, %c0_i32_1 : i32, i32, i32
  }
  func.func @transform_10(%arg0: i32, %arg1: memref<1xi32, #tpu.memory_space<smem>>) -> (i32, i32, i32) {
    %c0_i32 = arith.constant 0 : i32
    %c0_i32_0 = arith.constant 0 : i32
    %c0_i32_1 = arith.constant 0 : i32
    %c0_i32_2 = arith.constant 0 : i32
    return %c0_i32, %c0_i32_0, %c0_i32_1 : i32, i32, i32
  }
  func.func @transform_11(%arg0: i32, %arg1: memref<1xi32, #tpu.memory_space<smem>>) -> (i32, i32, i32) {
    %c0_i32 = arith.constant 0 : i32
    %c0_i32_0 = arith.constant 0 : i32
    %c0_i32_1 = arith.constant 0 : i32
    %c0_i32_2 = arith.constant 0 : i32
    return %c0_i32, %c0_i32_0, %c0_i32_1 : i32, i32, i32
  }
  func.func @transform_12(%arg0: i32, %arg1: memref<1xi32, #tpu.memory_space<smem>>) -> (i32, i32, i32) {
    %c0_i32 = arith.constant 0 : i32
    %c0_i32_0 = arith.constant 0 : i32
    %c0_i32_1 = arith.constant 0 : i32
    %c0_i32_2 = arith.constant 0 : i32
    return %c0_i32, %c0_i32_0, %c0_i32_1 : i32, i32, i32
  }
  func.func @transform_13(%arg0: i32, %arg1: memref<1xi32, #tpu.memory_space<smem>>) -> (i32, i32, i32) {
    %c0_i32 = arith.constant 0 : i32
    %c0_i32_0 = arith.constant 0 : i32
    %c0_i32_1 = arith.constant 0 : i32
    %c0_i32_2 = arith.constant 0 : i32
    return %c0_i32, %c0_i32_0, %c0_i32_1 : i32, i32, i32
  }
  func.func @transform_14(%arg0: i32, %arg1: memref<1xi32, #tpu.memory_space<smem>>) -> (i32, i32, i32) {
    %c0_i32 = arith.constant 0 : i32
    %c0_i32_0 = arith.constant 0 : i32
    %c0_i32_1 = arith.constant 0 : i32
    %c0_i32_2 = arith.constant 0 : i32
    return %c0_i32, %c0_i32_0, %c0_i32_1 : i32, i32, i32
  }
  func.func @transform_15(%arg0: i32, %arg1: memref<1xi32, #tpu.memory_space<smem>>) -> (i32, i32, i32) {
    %c0_i32 = arith.constant 0 : i32
    %c0_i32_0 = arith.constant 0 : i32
    %c0_i32_1 = arith.constant 0 : i32
    %c0_i32_2 = arith.constant 0 : i32
    return %c0_i32, %c0_i32_0, %c0_i32_1 : i32, i32, i32
  }
  func.func @transform_16(%arg0: i32, %arg1: memref<1xi32, #tpu.memory_space<smem>>) -> (i32, i32, i32) {
    %c0_i32 = arith.constant 0 : i32
    %c0_i32_0 = arith.constant 0 : i32
    %c0_i32_1 = arith.constant 0 : i32
    %c0_i32_2 = arith.constant 0 : i32
    return %c0_i32, %c0_i32_0, %c0_i32_1 : i32, i32, i32
  }
  func.func @transform_17(%arg0: i32, %arg1: memref<1xi32, #tpu.memory_space<smem>>) -> (i32, i32, i32) {
    %c0_i32 = arith.constant 0 : i32
    %c0_i32_0 = arith.constant 0 : i32
    %c0_i32_1 = arith.constant 0 : i32
    %c0_i32_2 = arith.constant 0 : i32
    return %c0_i32, %c0_i32_0, %c0_i32_1 : i32, i32, i32
  }
  func.func @transform_18(%arg0: i32, %arg1: memref<1xi32, #tpu.memory_space<smem>>) -> (i32, i32, i32) {
    %c0_i32 = arith.constant 0 : i32
    %c0_i32_0 = arith.constant 0 : i32
    %c0_i32_1 = arith.constant 0 : i32
    %c0_i32_2 = arith.constant 0 : i32
    return %c0_i32, %c0_i32_0, %c0_i32_1 : i32, i32, i32
  }
  func.func @transform_19(%arg0: i32, %arg1: memref<1xi32, #tpu.memory_space<smem>>) -> (i32, i32, i32) {
    %c0_i32 = arith.constant 0 : i32
    %c0_i32_0 = arith.constant 0 : i32
    %c0_i32_1 = arith.constant 0 : i32
    %c0_i32_2 = arith.constant 0 : i32
    return %c0_i32, %c0_i32_0, %c0_i32_1 : i32, i32, i32
  }
  func.func @transform_20(%arg0: i32, %arg1: memref<1xi32, #tpu.memory_space<smem>>) -> (i32, i32, i32) {
    %c0_i32 = arith.constant 0 : i32
    %c0_i32_0 = arith.constant 0 : i32
    %c0_i32_1 = arith.constant 0 : i32
    %c0_i32_2 = arith.constant 0 : i32
    return %c0_i32, %c0_i32_0, %c0_i32_1 : i32, i32, i32
  }
  func.func @transform_21(%arg0: i32, %arg1: memref<1xi32, #tpu.memory_space<smem>>) -> (i32, i32, i32) {
    %c0_i32 = arith.constant 0 : i32
    %c0_i32_0 = arith.constant 0 : i32
    %c0_i32_1 = arith.constant 0 : i32
    %c0_i32_2 = arith.constant 0 : i32
    return %c0_i32, %c0_i32_0, %c0_i32_1 : i32, i32, i32
  }
  func.func @transform_22(%arg0: i32, %arg1: memref<1xi32, #tpu.memory_space<smem>>) -> (i32, i32, i32) {
    %c0_i32 = arith.constant 0 : i32
    %c0_i32_0 = arith.constant 0 : i32
    %c0_i32_1 = arith.constant 0 : i32
    %c0_i32_2 = arith.constant 0 : i32
    return %c0_i32, %c0_i32_0, %c0_i32_1 : i32, i32, i32
  }
  func.func @transform_23(%arg0: i32, %arg1: memref<1xi32, #tpu.memory_space<smem>>) -> (i32, i32, i32) {
    %c0_i32 = arith.constant 0 : i32
    %c0_i32_0 = arith.constant 0 : i32
    %c0_i32_1 = arith.constant 0 : i32
    %c0_i32_2 = arith.constant 0 : i32
    return %c0_i32, %c0_i32_0, %c0_i32_1 : i32, i32, i32
  }
  func.func @transform_24(%arg0: i32, %arg1: memref<1xi32, #tpu.memory_space<smem>>) -> (i32, i32) {
    %c0_i32 = arith.constant 0 : i32
    %c0_i32_0 = arith.constant 0 : i32
    %c0_i32_1 = arith.constant 0 : i32
    return %c0_i32, %c0_i32_0 : i32, i32
  }
  func.func @transform_25(%arg0: i32, %arg1: memref<1xi32, #tpu.memory_space<smem>>) -> (i32, i32) {
    %c0_i32 = arith.constant 0 : i32
    %c0_i32_0 = arith.constant 0 : i32
    %c0_i32_1 = arith.constant 0 : i32
    return %c0_i32, %c0_i32_0 : i32, i32
  }
  func.func @transform_26(%arg0: i32, %arg1: memref<1xi32, #tpu.memory_space<smem>>) -> (i32, i32) {
    %c0_i32 = arith.constant 0 : i32
    %c0_i32_0 = arith.constant 0 : i32
    %c0_i32_1 = arith.constant 0 : i32
    return %c0_i32, %c0_i32_0 : i32, i32
  }
  func.func @transform_27(%arg0: i32, %arg1: memref<1xi32, #tpu.memory_space<smem>>) -> (i32, i32) {
    %c0_i32 = arith.constant 0 : i32
    %c0_i32_0 = arith.constant 0 : i32
    %c0_i32_1 = arith.constant 0 : i32
    return %c0_i32, %c0_i32_0 : i32, i32
  }
  func.func @transform_28(%arg0: i32, %arg1: memref<1xi32, #tpu.memory_space<smem>>) -> (i32, i32) {
    %c0_i32 = arith.constant 0 : i32
    %c0_i32_0 = arith.constant 0 : i32
    %c0_i32_1 = arith.constant 0 : i32
    return %c0_i32, %c0_i32_0 : i32, i32
  }
  func.func @transform_29(%arg0: i32, %arg1: memref<1xi32, #tpu.memory_space<smem>>) -> (i32, i32) {
    %c0_i32 = arith.constant 0 : i32
    %c0_i32_0 = arith.constant 0 : i32
    %c0_i32_1 = arith.constant 0 : i32
    return %c0_i32, %c0_i32_0 : i32, i32
  }
  func.func @transform_30(%arg0: i32, %arg1: memref<1xi32, #tpu.memory_space<smem>>) -> (i32, i32, i32) {
    %c0_i32 = arith.constant 0 : i32
    %c0_i32_0 = arith.constant 0 : i32
    %c0_i32_1 = arith.constant 0 : i32
    return %arg0, %c0_i32, %c0_i32_0 : i32, i32, i32
  }
}

</mosaic_0001>

<llo_original>
// kernel: _albef_device.2
$region0: #{_albef_device.2}
  #allocation0 [shape = 'u32[]', space=smem, size = 0x4, offset = 0x4, fixed_abs, tag = 'smem constant byte address 0x4 - core index']
  #allocation1 [shape = 'u32[144,128]{1,0:T(1,128)}', space=vmem, size = 0x12000, scoped, tag = 'internal scratch']
  %s0 = inlined_call_operand.vmem [shape: f32[5,192], index: 0, kind: input, shape index: {}]
  %s1 = inlined_call_operand.vmem [shape: bf16[192,32], index: 1, kind: input, shape index: {}]
  %s2 = inlined_call_operand.vmem [shape: f32[5,32], index: 2, kind: input, shape index: {}]
  %s3 = inlined_call_operand.vmem [shape: f32[2,1,32], index: 3, kind: input, shape index: {}]
  %s4 = inlined_call_operand.vmem [shape: f32[2,1,32], index: 4, kind: input, shape index: {}]
  %s5 = inlined_call_operand.vmem [shape: bf16[2,32,96], index: 5, kind: input, shape index: {}]
  %s6 = inlined_call_operand.vmem [shape: f32[2,1,96], index: 6, kind: input, shape index: {}]
  %s7 = inlined_call_operand.vmem [shape: bf16[2,32,32], index: 7, kind: input, shape index: {}]
  %s8 = inlined_call_operand.vmem [shape: f32[2,1,32], index: 8, kind: input, shape index: {}]
  %s9 = inlined_call_operand.vmem [shape: f32[2,1,32], index: 9, kind: input, shape index: {}]
  %s10 = inlined_call_operand.vmem [shape: f32[2,1,32], index: 10, kind: input, shape index: {}]
  %s11 = inlined_call_operand.vmem [shape: bf16[2,32,128], index: 11, kind: input, shape index: {}]
  %s12 = inlined_call_operand.vmem [shape: f32[2,1,128], index: 12, kind: input, shape index: {}]
  %s13 = inlined_call_operand.vmem [shape: bf16[2,128,32], index: 13, kind: input, shape index: {}]
  %s14 = inlined_call_operand.vmem [shape: f32[2,1,32], index: 14, kind: input, shape index: {}]
  %s15 = inlined_call_operand.vmem [shape: f32[1,32], index: 15, kind: input, shape index: {}]
  %s16 = inlined_call_operand.vmem [shape: f32[1,32], index: 16, kind: input, shape index: {}]
  %s17 = inlined_call_operand.vmem [shape: bf16[2,32,32], index: 17, kind: input, shape index: {}]
  %s18 = inlined_call_operand.vmem [shape: f32[2,1,32], index: 18, kind: input, shape index: {}]
  %s19 = inlined_call_operand.vmem [shape: bf16[2,32,32], index: 19, kind: input, shape index: {}]
  %s20 = inlined_call_operand.vmem [shape: f32[2,1,32], index: 20, kind: input, shape index: {}]
  %s21 = inlined_call_operand.vmem [shape: f32[2,5,32], index: 21, kind: output, shape index: {0}]
  %s22 = inlined_call_operand.vmem [shape: f32[2,5,32], index: 22, kind: output, shape index: {1}]
  %23 = xla_tuple %s21, %s22
  %s24 = sld [smem:[#allocation0]]
  $region102: #{_albef_device.2} parent=0
    _
  %s26 = ssub.s32 1, %s24
  %s27 = scalar_select 0, %s26, %s24
  // Predicated region
  $region2: #{_albef_device.2} parent=0 // pred_check
    _
  $region3: #{_albef_device.2} parent=0 // pred_check_branch
    %29 = sbr.rel (0) target = $region5
  $region4: #{_albef_device.2} parent=0 // pred_region
    _
  $region5: #{_albef_device.2} parent=0 // pred_fallthru
    _
  // Predicated region
  $region6: #{_albef_device.2} parent=0 // pred_check
    _
  $region7: #{_albef_device.2} parent=0 // pred_check_branch
    %31 = sbr.rel (0) target = $region9
  $region8: #{_albef_device.2} parent=0 // pred_region
    _
  $region9: #{_albef_device.2} parent=0 // pred_fallthru
    _
  // Predicated region
  $region10: #{_albef_device.2} parent=0 // pred_check
    _
  $region11: #{_albef_device.2} parent=0 // pred_check_branch
    %33 = sbr.rel (0) target = $region13
  $region12: #{_albef_device.2} parent=0 // pred_region
    _
  $region13: #{_albef_device.2} parent=0 // pred_fallthru
    _
  // Predicated region
  $region14: #{_albef_device.2} parent=0 // pred_check
    _
  $region15: #{_albef_device.2} parent=0 // pred_check_branch
    %35 = sbr.rel (0) target = $region17
  $region16: #{_albef_device.2} parent=0 // pred_region
    _
  $region17: #{_albef_device.2} parent=0 // pred_fallthru
    _
  // Predicated region
  $region18: #{_albef_device.2} parent=0 // pred_check
    _
  $region19: #{_albef_device.2} parent=0 // pred_check_branch
    %37 = sbr.rel (0) target = $region21
  $region20: #{_albef_device.2} parent=0 // pred_region
    _
  $region21: #{_albef_device.2} parent=0 // pred_fallthru
    _
  // Predicated region
  $region22: #{_albef_device.2} parent=0 // pred_check
    _
  $region23: #{_albef_device.2} parent=0 // pred_check_branch
    %39 = sbr.rel (0) target = $region25
  $region24: #{_albef_device.2} parent=0 // pred_region
    _
  $region25: #{_albef_device.2} parent=0 // pred_fallthru
    _
  // Predicated region
  $region26: #{_albef_device.2} parent=0 // pred_check
    _
  $region27: #{_albef_device.2} parent=0 // pred_check_branch
    %41 = sbr.rel (0) target = $region29
  $region28: #{_albef_device.2} parent=0 // pred_region
    _
  $region29: #{_albef_device.2} parent=0 // pred_fallthru
    _
  // Predicated region
  $region30: #{_albef_device.2} parent=0 // pred_check
    _
  $region31: #{_albef_device.2} parent=0 // pred_check_branch
    %43 = sbr.rel (0) target = $region33
  $region32: #{_albef_device.2} parent=0 // pred_region
    _
  $region33: #{_albef_device.2} parent=0 // pred_fallthru
    _
  // Predicated region
  $region34: #{_albef_device.2} parent=0 // pred_check
    _
  $region35: #{_albef_device.2} parent=0 // pred_check_branch
    %45 = sbr.rel (0) target = $region37
  $region36: #{_albef_device.2} parent=0 // pred_region
    _
  $region37: #{_albef_device.2} parent=0 // pred_fallthru
    _
  // Predicated region
  $region38: #{_albef_device.2} parent=0 // pred_check
    _
  $region39: #{_albef_device.2} parent=0 // pred_check_branch
    %47 = sbr.rel (0) target = $region41
  $region40: #{_albef_device.2} parent=0 // pred_region
    _
  $region41: #{_albef_device.2} parent=0 // pred_fallthru
    _
  // Predicated region
  $region42: #{_albef_device.2} parent=0 // pred_check
    _
  $region43: #{_albef_device.2} parent=0 // pred_check_branch
    %49 = sbr.rel (0) target = $region45
  $region44: #{_albef_device.2} parent=0 // pred_region
    _
  $region45: #{_albef_device.2} parent=0 // pred_fallthru
    _
  // Predicated region
  $region46: #{_albef_device.2} parent=0 // pred_check
    _
  $region47: #{_albef_device.2} parent=0 // pred_check_branch
    %51 = sbr.rel (0) target = $region49
  $region48: #{_albef_device.2} parent=0 // pred_region
    _
  $region49: #{_albef_device.2} parent=0 // pred_fallthru
    _
  // Predicated region
  $region50: #{_albef_device.2} parent=0 // pred_check
    _
  $region51: #{_albef_device.2} parent=0 // pred_check_branch
    %53 = sbr.rel (0) target = $region53
  $region52: #{_albef_device.2} parent=0 // pred_region
    _
  $region53: #{_albef_device.2} parent=0 // pred_fallthru
    _
  // Predicated region
  $region54: #{_albef_device.2} parent=0 // pred_check
    _
  $region55: #{_albef_device.2} parent=0 // pred_check_branch
    %55 = sbr.rel (0) target = $region57
  $region56: #{_albef_device.2} parent=0 // pred_region
    _
  $region57: #{_albef_device.2} parent=0 // pred_fallthru
    _
  // Predicated region
  $region58: #{_albef_device.2} parent=0 // pred_check
    _
  $region59: #{_albef_device.2} parent=0 // pred_check_branch
    %57 = sbr.rel (0) target = $region61
  $region60: #{_albef_device.2} parent=0 // pred_region
    _
  $region61: #{_albef_device.2} parent=0 // pred_fallthru
    _
  // Predicated region
  $region62: #{_albef_device.2} parent=0 // pred_check
    _
  $region63: #{_albef_device.2} parent=0 // pred_check_branch
    %59 = sbr.rel (0) target = $region65
  $region64: #{_albef_device.2} parent=0 // pred_region
    _
  $region65: #{_albef_device.2} parent=0 // pred_fallthru
    _
  // Predicated region
  $region66: #{_albef_device.2} parent=0 // pred_check
    _
  $region67: #{_albef_device.2} parent=0 // pred_check_branch
    %61 = sbr.rel (0) target = $region69
  $region68: #{_albef_device.2} parent=0 // pred_region
    _
  $region69: #{_albef_device.2} parent=0 // pred_fallthru
    _
  // Predicated region
  $region70: #{_albef_device.2} parent=0 // pred_check
    _
  $region71: #{_albef_device.2} parent=0 // pred_check_branch
    %63 = sbr.rel (0) target = $region73
  $region72: #{_albef_device.2} parent=0 // pred_region
    _
  $region73: #{_albef_device.2} parent=0 // pred_fallthru
    _
  // Predicated region
  $region74: #{_albef_device.2} parent=0 // pred_check
    _
  $region75: #{_albef_device.2} parent=0 // pred_check_branch
    %65 = sbr.rel (0) target = $region77
  $region76: #{_albef_device.2} parent=0 // pred_region
    _
  $region77: #{_albef_device.2} parent=0 // pred_fallthru
    _
  // Predicated region
  $region78: #{_albef_device.2} parent=0 // pred_check
    _
  $region79: #{_albef_device.2} parent=0 // pred_check_branch
    %67 = sbr.rel (0) target = $region81
  $region80: #{_albef_device.2} parent=0 // pred_region
    _
  $region81: #{_albef_device.2} parent=0 // pred_fallthru
    _
  // Predicated region
  $region82: #{_albef_device.2} parent=0 // pred_check
    _
  $region83: #{_albef_device.2} parent=0 // pred_check_branch
    %69 = sbr.rel (0) target = $region85
  $region84: #{_albef_device.2} parent=0 // pred_region
    _
  $region85: #{_albef_device.2} parent=0 // pred_fallthru
    _
  %v71 = vld [vmem:[%s0] sm:$0x1f]
  %v72 = vld [vmem:[%s0 + $0x8] sm:$0x1f]
  %v73 = vld [vmem:[%s1] sm:$0xf]
  %v74 = vld [vmem:[%s1 + $0x4] sm:$0xf]
  %v75 = vld [vmem:[%s1 + $0x8] sm:$0xf]
  %v76 = vld [vmem:[%s1 + $0xc] sm:$0xf]
  %v77 = vld [vmem:[%s1 + $0x10] sm:$0xf]
  %v78 = vld [vmem:[%s1 + $0x14] sm:$0xf]
  %v79 = vld [vmem:[%s1 + $0x18] sm:$0xf]
  %v80 = vld [vmem:[%s1 + $0x1c] sm:$0xf]
  %v81 = vld [vmem:[%s1 + $0x20] sm:$0xf]
  %v82 = vld [vmem:[%s1 + $0x24] sm:$0xf]
  %v83 = vld [vmem:[%s1 + $0x28] sm:$0xf]
  %v84 = vld [vmem:[%s1 + $0x2c] sm:$0xf]
  %v85 = vld [vmem:[%s1 + $0x30] sm:$0xf]
  %v86 = vld [vmem:[%s1 + $0x34] sm:$0xf]
  %v87 = vld [vmem:[%s1 + $0x38] sm:$0xf]
  %v88 = vld [vmem:[%s1 + $0x3c] sm:$0xf]
  %v89 = vld [vmem:[%s1 + $0x40] sm:$0xf]
  %v90 = vld [vmem:[%s1 + $0x44] sm:$0xf]
  %v91 = vld [vmem:[%s1 + $0x48] sm:$0xf]
  %v92 = vld [vmem:[%s1 + $0x4c] sm:$0xf]
  %v93 = vld [vmem:[%s1 + $0x50] sm:$0xf]
  %v94 = vld [vmem:[%s1 + $0x54] sm:$0xf]
  %v95 = vld [vmem:[%s1 + $0x58] sm:$0xf]
  %v96 = vld [vmem:[%s1 + $0x5c] sm:$0xf]
  %v97 = vpack.c.bf16 %v71, %v71
  %v98 = vpack.c.bf16 %v72, %v72
  %v99 = vld [vmem:[%s2] sm:$0x1f]
  %v124 = vunpack.c.l.b16 %v73
  %v125 = vunpack.c.l.b16 %v74
  %v126 = vunpack.c.l.b16 %v75
  %v127 = vunpack.c.l.b16 %v76
  %v128 = vunpack.c.l.b16 %v77
  %v129 = vunpack.c.l.b16 %v78
  %v130 = vunpack.c.l.b16 %v79
  %v131 = vunpack.c.l.b16 %v80
  %v132 = vunpack.c.l.b16 %v81
  %v133 = vunpack.c.l.b16 %v82
  %v134 = vunpack.c.l.b16 %v83
  %v135 = vunpack.c.l.b16 %v84
  %v136 = vunpack.c.l.b16 %v85
  %v137 = vunpack.c.l.b16 %v86
  %v138 = vunpack.c.l.b16 %v87
  %v139 = vunpack.c.l.b16 %v88
  %v140 = vunpack.c.l.b16 %v89
  %v141 = vunpack.c.l.b16 %v90
  %v142 = vunpack.c.l.b16 %v91
  %v143 = vunpack.c.l.b16 %v92
  %v144 = vunpack.c.l.b16 %v93
  %v145 = vunpack.c.l.b16 %v94
  %v146 = vunpack.c.l.b16 %v95
  %v147 = vunpack.c.l.b16 %v96
  %v148 = vpack.c.b16 %v125, %v124
  %v149 = vpack.c.b16 %v127, %v126
  %v150 = vpack.c.b16 %v129, %v128
  %v151 = vpack.c.b16 %v131, %v130
  %v152 = vpack.c.b16 %v133, %v132
  %v153 = vpack.c.b16 %v135, %v134
  %v154 = vpack.c.b16 %v137, %v136
  %v155 = vpack.c.b16 %v139, %v138
  %v156 = vpack.c.b16 %v141, %v140
  %v157 = vpack.c.b16 %v143, %v142
  %v158 = vpack.c.b16 %v145, %v144
  %v159 = vpack.c.b16 %v147, %v146
  %vm172 = vcmask 523264
  %v174 = vsel %vm172, %v98, 0
  %176 = vmatprep.subr.bf16.mxu0 0
  %177 = vmatpush1.bf16.msra.mxu0 %v148
  %178 = vmatprep.subr.bf16.mxu0 0
  %179 = vmatpush1.bf16.msra.mxu0 %v149
  %180 = vmatprep.subr.bf16.mxu0 0
  %181 = vmatpush1.bf16.msra.mxu0 %v150
  %182 = vmatprep.subr.bf16.mxu0 0
  %183 = vmatpush1.bf16.msra.mxu0 %v151
  %184 = vmatprep.subr.bf16.mxu0 0
  %185 = vmatpush1.bf16.msra.mxu0 %v152
  %186 = vmatprep.subr.bf16.mxu0 0
  %187 = vmatpush1.bf16.msra.mxu0 %v153
  %188 = vmatprep.subr.bf16.mxu0 0
  %189 = vmatpush1.bf16.msra.mxu0 %v154
  %190 = vmatprep.subr.bf16.mxu0 0
  %191 = vmatpush1.bf16.msra.mxu0 %v155
  %192 = vmatprep.subr.bf16.mxu0 0
  %193 = vmatpush1.bf16.msra.mxu0 %v156
  %194 = vmatprep.subr.bf16.mxu0 0
  %195 = vmatpush1.bf16.msra.mxu0 %v157
  %196 = vmatprep.subr.bf16.mxu0 0
  %197 = vmatpush1.bf16.msra.mxu0 %v158
  %198 = vmatprep.subr.bf16.mxu0 0
  %199 = vmatpush1.bf16.msra.mxu0 %v159
  %200 = vmatprep.subr.bf16.mxu0 0
  %201 = vmatpush1.bf16.msra.mxu0 0
  %202 = vmatprep.subr.bf16.mxu0 0
  %203 = vmatpush1.bf16.msra.mxu0 0
  %204 = vmatprep.subr.bf16.mxu0 0
  %205 = vmatpush1.bf16.msra.mxu0 0
  %206 = vmatprep.subr.bf16.mxu0 0
  %207 = vmatpush1.bf16.msra.mxu0 0
  %208 = vmatprep.mubr.bf16.mxu0 %v174
  %209 = vmatmul.mubr.bf16.gmra.mrb[0].mxu0 %v97
  %v210 = vpop.f32.mrb[0].mxu0
  %v211 = vadd.f32 %v99, %v210
  %v212 = vpop.f32.mrb[0].mxu0
  %v213 = vpop.f32.mrb[0].mxu0
  %v214 = vpop.f32.mrb[0].mxu0
  %215 = vdwg.mxu0
  %v216 = vld [vmem:[%s3] sm:$0x1]
  %v217 = vld [vmem:[%s4] sm:$0x1]
  %vm218 = vcmask 258048
  %v219 = vsel %vm218, %v211, 0.0
  %220 = vadd.xlane.f32.xlu0 %v219
  %v221 = vpop.xlane.xlu0 %220
  %v222 = vmul.f32 %v211, %v211
  %v223 = vsel %vm218, %v222, 0.0
  %224 = vadd.xlane.f32.xlu0 %v223
  %v225 = vpop.xlane.xlu0 %224
  %v226 = vmul.f32 %v221, 0.03125
  %v227 = vmul.f32 %v225, 0.03125
  %v228 = vmul.f32 %v226, %v226
  %v229 = vsub.f32 %v227, %v228
  %v230 = vsub.f32 %v211, %v226
  %v231 = vadd.f32 %v229, 1e-06
  %v232 = vrsqrt.pop %v231
  %v233 = vmul.f32 %v230, %v232
  %v235 = vlaneseq
  %v236 = vshrl.u32 %v235, 7
  %v237 = vsub.s32 0, %v236
  %v238 = vrot.slane %v216, %v237
  %v240 = vmul.f32 %v233, %v238
  %v242 = vlaneseq
  %v243 = vshrl.u32 %v242, 7
  %v244 = vsub.s32 0, %v243
  %v245 = vrot.slane %v217, %v244
  %v247 = vadd.f32 %v240, %v245
  %v248 = vld [vmem:[%s5] sm:$0xf]
  %v249 = vld [vmem:[%s5 + $0x4] sm:$0xf]
  %v250 = vld [vmem:[%s5 + $0x8] sm:$0xf]
  %v251 = vld [vmem:[%s5 + $0xc] sm:$0xf]
  %v252 = vld [vmem:[%s6] sm:$0x1]
  %v253 = vld [vmem:[%s7] sm:$0xf]
  %v254 = vld [vmem:[%s7 + $0x4] sm:$0xf]
  %v255 = vld [vmem:[%s7 + $0x8] sm:$0xf]
  %v256 = vld [vmem:[%s7 + $0xc] sm:$0xf]
  %v257 = vld [vmem:[%s8] sm:$0x1]
  %v258 = vpack.c.bf16 %v247, %v247
  %v260 = vlaneseq
  %v261 = vshrl.u32 %v260, 7
  %v262 = vsub.s32 0, %v261
  %v263 = vrot.slane %v252, %v262
  %v269 = vunpack.c.l.b16 %v248
  %v270 = vunpack.c.l.b16 %v249
  %v271 = vunpack.c.l.b16 %v250
  %v272 = vunpack.c.l.b16 %v251
  %v273 = vpack.c.b16 %v270, %v269
  %v274 = vpack.c.b16 %v272, %v271
  %vm277 = vcmask 261120
  %v279 = vsel %vm277, %v258, 0
  %281 = vmatprep.subr.bf16.mxu0 0
  %282 = vmatpush1.bf16.msra.mxu0 %v273
  %283 = vmatprep.subr.bf16.mxu0 0
  %284 = vmatpush1.bf16.msra.mxu0 %v274
  %285 = vmatprep.subr.bf16.mxu0 0
  %286 = vmatpush1.bf16.msra.mxu0 0
  %287 = vmatprep.subr.bf16.mxu0 0
  %288 = vmatpush1.bf16.msra.mxu0 0
  %289 = vmatprep.subr.bf16.mxu0 0
  %290 = vmatpush1.bf16.msra.mxu0 0
  %291 = vmatprep.subr.bf16.mxu0 0
  %292 = vmatpush1.bf16.msra.mxu0 0
  %293 = vmatprep.subr.bf16.mxu0 0
  %294 = vmatpush1.bf16.msra.mxu0 0
  %295 = vmatprep.subr.bf16.mxu0 0
  %296 = vmatpush1.bf16.msra.mxu0 0
  %297 = vmatprep.subr.bf16.mxu0 0
  %298 = vmatpush1.bf16.msra.mxu0 0
  %299 = vmatprep.subr.bf16.mxu0 0
  %300 = vmatpush1.bf16.msra.mxu0 0
  %301 = vmatprep.subr.bf16.mxu0 0
  %302 = vmatpush1.bf16.msra.mxu0 0
  %303 = vmatprep.subr.bf16.mxu0 0
  %304 = vmatpush1.bf16.msra.mxu0 0
  %305 = vmatprep.subr.bf16.mxu0 0
  %306 = vmatpush1.bf16.msra.mxu0 0
  %307 = vmatprep.subr.bf16.mxu0 0
  %308 = vmatpush1.bf16.msra.mxu0 0
  %309 = vmatprep.subr.bf16.mxu0 0
  %310 = vmatpush1.bf16.msra.mxu0 0
  %311 = vmatprep.subr.bf16.mxu0 0
  %312 = vmatpush1.bf16.msra.mxu0 0
  %313 = vmatprep.mubr.bf16.mxu0 0
  %314 = vmatmul.mubr.bf16.gmra.mrb[0].mxu0 %v279
  %v315 = vpop.f32.mrb[0].mxu0
  %v316 = vadd.f32 %v263, %v315
  %v317 = vpop.f32.mrb[0].mxu0
  %v318 = vpop.f32.mrb[0].mxu0
  %v319 = vpop.f32.mrb[0].mxu0
  %320 = vdwg.mxu0
  %v321 = vpack.c.bf16 %v316, %v316
  %323 = vrot.lane.b32.xlu0 %v321, 96
  %v324 = vpop.permute.xlu0 %323
  %vm325 = vcmask 64512
  %v327 = vsel %vm325, %v321, 0
  %v330 = vsel %vm325, %v324, 0
  %332 = vmatprep.subr.bf16.mxu0 0
  %333 = vmatpush1.bf16.xpose.msra.mxu0 %v330
  %334 = vmatprep.subr.bf16.mxu0 0
  %335 = vmatpush1.bf16.xpose.msra.mxu0 0
  %336 = vmatprep.subr.bf16.mxu0 0
  %337 = vmatpush1.bf16.xpose.msra.mxu0 0
  %338 = vmatprep.subr.bf16.mxu0 0
  %339 = vmatpush1.bf16.xpose.msra.mxu0 0
  %340 = vmatprep.subr.bf16.mxu0 0
  %341 = vmatpush1.bf16.xpose.msra.mxu0 0
  %342 = vmatprep.subr.bf16.mxu0 0
  %343 = vmatpush1.bf16.xpose.msra.mxu0 0
  %344 = vmatprep.subr.bf16.mxu0 0
  %345 = vmatpush1.bf16.xpose.msra.mxu0 0
  %346 = vmatprep.subr.bf16.mxu0 0
  %347 = vmatpush1.bf16.xpose.msra.mxu0 0
  %348 = vmatprep.subr.bf16.mxu0 0
  %349 = vmatpush1.bf16.xpose.msra.mxu0 0
  %350 = vmatprep.subr.bf16.mxu0 0
  %351 = vmatpush1.bf16.xpose.msra.mxu0 0
  %352 = vmatprep.subr.bf16.mxu0 0
  %353 = vmatpush1.bf16.xpose.msra.mxu0 0
  %354 = vmatprep.subr.bf16.mxu0 0
  %355 = vmatpush1.bf16.xpose.msra.mxu0 0
  %356 = vmatprep.subr.bf16.mxu0 0
  %357 = vmatpush1.bf16.xpose.msra.mxu0 0
  %358 = vmatprep.subr.bf16.mxu0 0
  %359 = vmatpush1.bf16.xpose.msra.mxu0 0
  %360 = vmatprep.subr.bf16.mxu0 0
  %361 = vmatpush1.bf16.xpose.msra.mxu0 0
  %362 = vmatprep.subr.bf16.mxu0 0
  %363 = vmatpush1.bf16.xpose.msra.mxu0 0
  %364 = vmatprep.mubr.bf16.mxu0 0
  %365 = vmatmul.mubr.bf16.gmra.mrb[0].mxu0 %v327
  %v366 = vpop.f32.mrb[0].mxu0
  %v367 = vadd.f32 0.0, %v366
  %v368 = vpop.f32.mrb[0].mxu0
  %v369 = vpop.f32.mrb[0].mxu0
  %v370 = vpop.f32.mrb[0].mxu0
  %371 = vdwg.mxu0
  %v372 = vmul.f32 %v367, 0.35355338
  %vm373 = vcmask 36864
  %v374 = vsel %vm373, %v372, -inf
  %375 = vmax.xlane.f32.xlu0 %v374
  %v376 = vpop.xlane.xlu0 %375
  %v377 = vsub.f32 %v372, %v376
  %v378 = vmul.f32 %v377, 1.442695
  %v379 = vpow.pop %v378
  %v380 = vsel %vm373, %v379, 0.0
  %381 = vadd.xlane.f32.xlu0 %v380
  %v382 = vpop.xlane.xlu0 %381
  %v383 = vrcp.pop %v382
  %v384 = vmul.f32 %v379, %v383
  %v385 = vpack.c.bf16 %v384, %v384
  %386 = vrot.lane.b32.xlu0 %v321, 64
  %v387 = vpop.permute.xlu0 %386
  %vm388 = vcmask 39936
  %v390 = vsel %vm388, %v385, 0
  %vm392 = vcmask 1041408
  %vm393 = vcmask 1042432
  %v394 = vsel %vm392, 4294967295, 65535
  %v395 = vsel %vm393, %v394, 0
  %v397 = vand.u32 %v387, %v395
  %399 = vmatprep.subr.bf16.mxu0 0
  %400 = vmatpush1.bf16.msra.mxu0 %v397
  %401 = vmatprep.subr.bf16.mxu0 0
  %402 = vmatpush1.bf16.msra.mxu0 0
  %403 = vmatprep.subr.bf16.mxu0 0
  %404 = vmatpush1.bf16.msra.mxu0 0
  %405 = vmatprep.subr.bf16.mxu0 0
  %406 = vmatpush1.bf16.msra.mxu0 0
  %407 = vmatprep.subr.bf16.mxu0 0
  %408 = vmatpush1.bf16.msra.mxu0 0
  %409 = vmatprep.subr.bf16.mxu0 0
  %410 = vmatpush1.bf16.msra.mxu0 0
  %411 = vmatprep.subr.bf16.mxu0 0
  %412 = vmatpush1.bf16.msra.mxu0 0
  %413 = vmatprep.subr.bf16.mxu0 0
  %414 = vmatpush1.bf16.msra.mxu0 0
  %415 = vmatprep.subr.bf16.mxu0 0
  %416 = vmatpush1.bf16.msra.mxu0 0
  %417 = vmatprep.subr.bf16.mxu0 0
  %418 = vmatpush1.bf16.msra.mxu0 0
  %419 = vmatprep.subr.bf16.mxu0 0
  %420 = vmatpush1.bf16.msra.mxu0 0
  %421 = vmatprep.subr.bf16.mxu0 0
  %422 = vmatpush1.bf16.msra.mxu0 0
  %423 = vmatprep.subr.bf16.mxu0 0
  %424 = vmatpush1.bf16.msra.mxu0 0
  %425 = vmatprep.subr.bf16.mxu0 0
  %426 = vmatpush1.bf16.msra.mxu0 0
  %427 = vmatprep.subr.bf16.mxu0 0
  %428 = vmatpush1.bf16.msra.mxu0 0
  %429 = vmatprep.subr.bf16.mxu0 0
  %430 = vmatpush1.bf16.msra.mxu0 0
  %431 = vmatprep.mubr.bf16.mxu0 0
  %432 = vmatmul.mubr.bf16.gmra.mrb[0].mxu0 %v390
  %v433 = vpop.f32.mrb[0].mxu0
  %v434 = vadd.f32 0.0, %v433
  %v435 = vpop.f32.mrb[0].mxu0
  %v436 = vpop.f32.mrb[0].mxu0
  %v437 = vpop.f32.mrb[0].mxu0
  %438 = vdwg.mxu0
  %439 = vrot.lane.b32.xlu0 %v321, 120
  %v440 = vpop.permute.xlu0 %439
  %441 = vrot.lane.b32.xlu0 %v321, 88
  %v442 = vpop.permute.xlu0 %441
  %v444 = vsel %vm325, %v440, 0
  %v447 = vsel %vm325, %v442, 0
  %449 = vmatprep.subr.bf16.mxu0 0
  %450 = vmatpush1.bf16.xpose.msra.mxu0 %v447
  %451 = vmatprep.subr.bf16.mxu0 0
  %452 = vmatpush1.bf16.xpose.msra.mxu0 0
  %453 = vmatprep.subr.bf16.mxu0 0
  %454 = vmatpush1.bf16.xpose.msra.mxu0 0
  %455 = vmatprep.subr.bf16.mxu0 0
  %456 = vmatpush1.bf16.xpose.msra.mxu0 0
  %457 = vmatprep.subr.bf16.mxu0 0
  %458 = vmatpush1.bf16.xpose.msra.mxu0 0
  %459 = vmatprep.subr.bf16.mxu0 0
  %460 = vmatpush1.bf16.xpose.msra.mxu0 0
  %461 = vmatprep.subr.bf16.mxu0 0
  %462 = vmatpush1.bf16.xpose.msra.mxu0 0
  %463 = vmatprep.subr.bf16.mxu0 0
  %464 = vmatpush1.bf16.xpose.msra.mxu0 0
  %465 = vmatprep.subr.bf16.mxu0 0
  %466 = vmatpush1.bf16.xpose.msra.mxu0 0
  %467 = vmatprep.subr.bf16.mxu0 0
  %468 = vmatpush1.bf16.xpose.msra.mxu0 0
  %469 = vmatprep.subr.bf16.mxu0 0
  %470 = vmatpush1.bf16.xpose.msra.mxu0 0
  %471 = vmatprep.subr.bf16.mxu0 0
  %472 = vmatpush1.bf16.xpose.msra.mxu0 0
  %473 = vmatprep.subr.bf16.mxu0 0
  %474 = vmatpush1.bf16.xpose.msra.mxu0 0
  %475 = vmatprep.subr.bf16.mxu0 0
  %476 = vmatpush1.bf16.xpose.msra.mxu0 0
  %477 = vmatprep.subr.bf16.mxu0 0
  %478 = vmatpush1.bf16.xpose.msra.mxu0 0
  %479 = vmatprep.subr.bf16.mxu0 0
  %480 = vmatpush1.bf16.xpose.msra.mxu0 0
  %481 = vmatprep.mubr.bf16.mxu0 0
  %482 = vmatmul.mubr.bf16.gmra.mrb[0].mxu0 %v444
  %v483 = vpop.f32.mrb[0].mxu0
  %v484 = vadd.f32 0.0, %v483
  %v485 = vpop.f32.mrb[0].mxu0
  %v486 = vpop.f32.mrb[0].mxu0
  %v487 = vpop.f32.mrb[0].mxu0
  %488 = vdwg.mxu0
  %v489 = vmul.f32 %v484, 0.35355338
  %v490 = vsel %vm373, %v489, -inf
  %491 = vmax.xlane.f32.xlu0 %v490
  %v492 = vpop.xlane.xlu0 %491
  %v493 = vsub.f32 %v489, %v492
  %v494 = vmul.f32 %v493, 1.442695
  %v495 = vpow.pop %v494
  %v496 = vsel %vm373, %v495, 0.0
  %497 = vadd.xlane.f32.xlu0 %v496
  %v498 = vpop.xlane.xlu0 %497
  %v499 = vrcp.pop %v498
  %v500 = vmul.f32 %v495, %v499
  %v501 = vpack.c.bf16 %v500, %v500
  %502 = vrot.lane.b32.xlu0 %v321, 56
  %v503 = vpop.permute.xlu0 %502
  %v505 = vsel %vm388, %v501, 0
  %v508 = vand.u32 %v503, %v395
  %510 = vmatprep.subr.bf16.mxu0 0
  %511 = vmatpush1.bf16.msra.mxu0 %v508
  %512 = vmatprep.subr.bf16.mxu0 0
  %513 = vmatpush1.bf16.msra.mxu0 0
  %514 = vmatprep.subr.bf16.mxu0 0
  %515 = vmatpush1.bf16.msra.mxu0 0
  %516 = vmatprep.subr.bf16.mxu0 0
  %517 = vmatpush1.bf16.msra.mxu0 0
  %518 = vmatprep.subr.bf16.mxu0 0
  %519 = vmatpush1.bf16.msra.mxu0 0
  %520 = vmatprep.subr.bf16.mxu0 0
  %521 = vmatpush1.bf16.msra.mxu0 0
  %522 = vmatprep.subr.bf16.mxu0 0
  %523 = vmatpush1.bf16.msra.mxu0 0
  %524 = vmatprep.subr.bf16.mxu0 0
  %525 = vmatpush1.bf16.msra.mxu0 0
  %526 = vmatprep.subr.bf16.mxu0 0
  %527 = vmatpush1.bf16.msra.mxu0 0
  %528 = vmatprep.subr.bf16.mxu0 0
  %529 = vmatpush1.bf16.msra.mxu0 0
  %530 = vmatprep.subr.bf16.mxu0 0
  %531 = vmatpush1.bf16.msra.mxu0 0
  %532 = vmatprep.subr.bf16.mxu0 0
  %533 = vmatpush1.bf16.msra.mxu0 0
  %534 = vmatprep.subr.bf16.mxu0 0
  %535 = vmatpush1.bf16.msra.mxu0 0
  %536 = vmatprep.subr.bf16.mxu0 0
  %537 = vmatpush1.bf16.msra.mxu0 0
  %538 = vmatprep.subr.bf16.mxu0 0
  %539 = vmatpush1.bf16.msra.mxu0 0
  %540 = vmatprep.subr.bf16.mxu0 0
  %541 = vmatpush1.bf16.msra.mxu0 0
  %542 = vmatprep.mubr.bf16.mxu0 0
  %543 = vmatmul.mubr.bf16.gmra.mrb[0].mxu0 %v505
  %v544 = vpop.f32.mrb[0].mxu0
  %v545 = vadd.f32 0.0, %v544
  %v546 = vpop.f32.mrb[0].mxu0
  %v547 = vpop.f32.mrb[0].mxu0
  %v548 = vpop.f32.mrb[0].mxu0
  %549 = vdwg.mxu0
  %550 = vrot.lane.b32.xlu0 %v321, 112
  %v551 = vpop.permute.xlu0 %550
  %552 = vrot.lane.b32.xlu0 %v321, 80
  %v553 = vpop.permute.xlu0 %552
  %v555 = vsel %vm325, %v551, 0
  %v558 = vsel %vm325, %v553, 0
  %560 = vmatprep.subr.bf16.mxu0 0
  %561 = vmatpush1.bf16.xpose.msra.mxu0 %v558
  %562 = vmatprep.subr.bf16.mxu0 0
  %563 = vmatpush1.bf16.xpose.msra.mxu0 0
  %564 = vmatprep.subr.bf16.mxu0 0
  %565 = vmatpush1.bf16.xpose.msra.mxu0 0
  %566 = vmatprep.subr.bf16.mxu0 0
  %567 = vmatpush1.bf16.xpose.msra.mxu0 0
  %568 = vmatprep.subr.bf16.mxu0 0
  %569 = vmatpush1.bf16.xpose.msra.mxu0 0
  %570 = vmatprep.subr.bf16.mxu0 0
  %571 = vmatpush1.bf16.xpose.msra.mxu0 0
  %572 = vmatprep.subr.bf16.mxu0 0
  %573 = vmatpush1.bf16.xpose.msra.mxu0 0
  %574 = vmatprep.subr.bf16.mxu0 0
  %575 = vmatpush1.bf16.xpose.msra.mxu0 0
  %576 = vmatprep.subr.bf16.mxu0 0
  %577 = vmatpush1.bf16.xpose.msra.mxu0 0
  %578 = vmatprep.subr.bf16.mxu0 0
  %579 = vmatpush1.bf16.xpose.msra.mxu0 0
  %580 = vmatprep.subr.bf16.mxu0 0
  %581 = vmatpush1.bf16.xpose.msra.mxu0 0
  %582 = vmatprep.subr.bf16.mxu0 0
  %583 = vmatpush1.bf16.xpose.msra.mxu0 0
  %584 = vmatprep.subr.bf16.mxu0 0
  %585 = vmatpush1.bf16.xpose.msra.mxu0 0
  %586 = vmatprep.subr.bf16.mxu0 0
  %587 = vmatpush1.bf16.xpose.msra.mxu0 0
  %588 = vmatprep.subr.bf16.mxu0 0
  %589 = vmatpush1.bf16.xpose.msra.mxu0 0
  %590 = vmatprep.subr.bf16.mxu0 0
  %591 = vmatpush1.bf16.xpose.msra.mxu0 0
  %592 = vmatprep.mubr.bf16.mxu0 0
  %593 = vmatmul.mubr.bf16.gmra.mrb[0].mxu0 %v555
  %v594 = vpop.f32.mrb[0].mxu0
  %v595 = vadd.f32 0.0, %v594
  %v596 = vpop.f32.mrb[0].mxu0
  %v597 = vpop.f32.mrb[0].mxu0
  %v598 = vpop.f32.mrb[0].mxu0
  %599 = vdwg.mxu0
  %v600 = vmul.f32 %v595, 0.35355338
  %v601 = vsel %vm373, %v600, -inf
  %602 = vmax.xlane.f32.xlu0 %v601
  %v603 = vpop.xlane.xlu0 %602
  %v604 = vsub.f32 %v600, %v603
  %v605 = vmul.f32 %v604, 1.442695
  %v606 = vpow.pop %v605
  %v607 = vsel %vm373, %v606, 0.0
  %608 = vadd.xlane.f32.xlu0 %v607
  %v609 = vpop.xlane.xlu0 %608
  %v610 = vrcp.pop %v609
  %v611 = vmul.f32 %v606, %v610
  %v612 = vpack.c.bf16 %v611, %v611
  %613 = vrot.lane.b32.xlu0 %v321, 48
  %v614 = vpop.permute.xlu0 %613
  %v616 = vsel %vm388, %v612, 0
  %v619 = vand.u32 %v614, %v395
  %621 = vmatprep.subr.bf16.mxu0 0
  %622 = vmatpush1.bf16.msra.mxu0 %v619
  %623 = vmatprep.subr.bf16.mxu0 0
  %624 = vmatpush1.bf16.msra.mxu0 0
  %625 = vmatprep.subr.bf16.mxu0 0
  %626 = vmatpush1.bf16.msra.mxu0 0
  %627 = vmatprep.subr.bf16.mxu0 0
  %628 = vmatpush1.bf16.msra.mxu0 0
  %629 = vmatprep.subr.bf16.mxu0 0
  %630 = vmatpush1.bf16.msra.mxu0 0
  %631 = vmatprep.subr.bf16.mxu0 0
  %632 = vmatpush1.bf16.msra.mxu0 0
  %633 = vmatprep.subr.bf16.mxu0 0
  %634 = vmatpush1.bf16.msra.mxu0 0
  %635 = vmatprep.subr.bf16.mxu0 0
  %636 = vmatpush1.bf16.msra.mxu0 0
  %637 = vmatprep.subr.bf16.mxu0 0
  %638 = vmatpush1.bf16.msra.mxu0 0
  %639 = vmatprep.subr.bf16.mxu0 0
  %640 = vmatpush1.bf16.msra.mxu0 0
  %641 = vmatprep.subr.bf16.mxu0 0
  %642 = vmatpush1.bf16.msra.mxu0 0
  %643 = vmatprep.subr.bf16.mxu0 0
  %644 = vmatpush1.bf16.msra.mxu0 0
  %645 = vmatprep.subr.bf16.mxu0 0
  %646 = vmatpush1.bf16.msra.mxu0 0
  %647 = vmatprep.subr.bf16.mxu0 0
  %648 = vmatpush1.bf16.msra.mxu0 0
  %649 = vmatprep.subr.bf16.mxu0 0
  %650 = vmatpush1.bf16.msra.mxu0 0
  %651 = vmatprep.subr.bf16.mxu0 0
  %652 = vmatpush1.bf16.msra.mxu0 0
  %653 = vmatprep.mubr.bf16.mxu0 0
  %654 = vmatmul.mubr.bf16.gmra.mrb[0].mxu0 %v616
  %v655 = vpop.f32.mrb[0].mxu0
  %v656 = vadd.f32 0.0, %v655
  %v657 = vpop.f32.mrb[0].mxu0
  %v658 = vpop.f32.mrb[0].mxu0
  %v659 = vpop.f32.mrb[0].mxu0
  %660 = vdwg.mxu0
  %661 = vrot.lane.b32.xlu0 %v321, 104
  %v662 = vpop.permute.xlu0 %661
  %663 = vrot.lane.b32.xlu0 %v321, 72
  %v664 = vpop.permute.xlu0 %663
  %v666 = vsel %vm325, %v662, 0
  %v669 = vsel %vm325, %v664, 0
  %671 = vmatprep.subr.bf16.mxu0 0
  %672 = vmatpush1.bf16.xpose.msra.mxu0 %v669
  %673 = vmatprep.subr.bf16.mxu0 0
  %674 = vmatpush1.bf16.xpose.msra.mxu0 0
  %675 = vmatprep.subr.bf16.mxu0 0
  %676 = vmatpush1.bf16.xpose.msra.mxu0 0
  %677 = vmatprep.subr.bf16.mxu0 0
  %678 = vmatpush1.bf16.xpose.msra.mxu0 0
  %679 = vmatprep.subr.bf16.mxu0 0
  %680 = vmatpush1.bf16.xpose.msra.mxu0 0
  %681 = vmatprep.subr.bf16.mxu0 0
  %682 = vmatpush1.bf16.xpose.msra.mxu0 0
  %683 = vmatprep.subr.bf16.mxu0 0
  %684 = vmatpush1.bf16.xpose.msra.mxu0 0
  %685 = vmatprep.subr.bf16.mxu0 0
  %686 = vmatpush1.bf16.xpose.msra.mxu0 0
  %687 = vmatprep.subr.bf16.mxu0 0
  %688 = vmatpush1.bf16.xpose.msra.mxu0 0
  %689 = vmatprep.subr.bf16.mxu0 0
  %690 = vmatpush1.bf16.xpose.msra.mxu0 0
  %691 = vmatprep.subr.bf16.mxu0 0
  %692 = vmatpush1.bf16.xpose.msra.mxu0 0
  %693 = vmatprep.subr.bf16.mxu0 0
  %694 = vmatpush1.bf16.xpose.msra.mxu0 0
  %695 = vmatprep.subr.bf16.mxu0 0
  %696 = vmatpush1.bf16.xpose.msra.mxu0 0
  %697 = vmatprep.subr.bf16.mxu0 0
  %698 = vmatpush1.bf16.xpose.msra.mxu0 0
  %699 = vmatprep.subr.bf16.mxu0 0
  %700 = vmatpush1.bf16.xpose.msra.mxu0 0
  %701 = vmatprep.subr.bf16.mxu0 0
  %702 = vmatpush1.bf16.xpose.msra.mxu0 0
  %703 = vmatprep.mubr.bf16.mxu0 0
  %704 = vmatmul.mubr.bf16.gmra.mrb[0].mxu0 %v666
  %v705 = vpop.f32.mrb[0].mxu0
  %v706 = vadd.f32 0.0, %v705
  %v707 = vpop.f32.mrb[0].mxu0
  %v708 = vpop.f32.mrb[0].mxu0
  %v709 = vpop.f32.mrb[0].mxu0
  %710 = vdwg.mxu0
  %v711 = vmul.f32 %v706, 0.35355338
  %v712 = vsel %vm373, %v711, -inf
  %713 = vmax.xlane.f32.xlu0 %v712
  %v714 = vpop.xlane.xlu0 %713
  %v715 = vsub.f32 %v711, %v714
  %v716 = vmul.f32 %v715, 1.442695
  %v717 = vpow.pop %v716
  %v718 = vsel %vm373, %v717, 0.0
  %719 = vadd.xlane.f32.xlu0 %v718
  %v720 = vpop.xlane.xlu0 %719
  %v721 = vrcp.pop %v720
  %v722 = vmul.f32 %v717, %v721
  %v723 = vpack.c.bf16 %v722, %v722
  %724 = vrot.lane.b32.xlu0 %v321, 40
  %v725 = vpop.permute.xlu0 %724
  %v727 = vsel %vm388, %v723, 0
  %v730 = vand.u32 %v725, %v395
  %732 = vmatprep.subr.bf16.mxu0 0
  %733 = vmatpush1.bf16.msra.mxu0 %v730
  %734 = vmatprep.subr.bf16.mxu0 0
  %735 = vmatpush1.bf16.msra.mxu0 0
  %736 = vmatprep.subr.bf16.mxu0 0
  %737 = vmatpush1.bf16.msra.mxu0 0
  %738 = vmatprep.subr.bf16.mxu0 0
  %739 = vmatpush1.bf16.msra.mxu0 0
  %740 = vmatprep.subr.bf16.mxu0 0
  %741 = vmatpush1.bf16.msra.mxu0 0
  %742 = vmatprep.subr.bf16.mxu0 0
  %743 = vmatpush1.bf16.msra.mxu0 0
  %744 = vmatprep.subr.bf16.mxu0 0
  %745 = vmatpush1.bf16.msra.mxu0 0
  %746 = vmatprep.subr.bf16.mxu0 0
  %747 = vmatpush1.bf16.msra.mxu0 0
  %748 = vmatprep.subr.bf16.mxu0 0
  %749 = vmatpush1.bf16.msra.mxu0 0
  %750 = vmatprep.subr.bf16.mxu0 0
  %751 = vmatpush1.bf16.msra.mxu0 0
  %752 = vmatprep.subr.bf16.mxu0 0
  %753 = vmatpush1.bf16.msra.mxu0 0
  %754 = vmatprep.subr.bf16.mxu0 0
  %755 = vmatpush1.bf16.msra.mxu0 0
  %756 = vmatprep.subr.bf16.mxu0 0
  %757 = vmatpush1.bf16.msra.mxu0 0
  %758 = vmatprep.subr.bf16.mxu0 0
  %759 = vmatpush1.bf16.msra.mxu0 0
  %760 = vmatprep.subr.bf16.mxu0 0
  %761 = vmatpush1.bf16.msra.mxu0 0
  %762 = vmatprep.subr.bf16.mxu0 0
  %763 = vmatpush1.bf16.msra.mxu0 0
  %764 = vmatprep.mubr.bf16.mxu0 0
  %765 = vmatmul.mubr.bf16.gmra.mrb[0].mxu0 %v727
  %v766 = vpop.f32.mrb[0].mxu0
  %v767 = vadd.f32 0.0, %v766
  %v768 = vpop.f32.mrb[0].mxu0
  %v769 = vpop.f32.mrb[0].mxu0
  %v770 = vpop.f32.mrb[0].mxu0
  %771 = vdwg.mxu0
  %773 = vrot.lane.b32.xlu0 %v545, 8
  %v774 = vpop.permute.xlu0 %773
  %777 = vrot.lane.b32.xlu0 %v656, 16
  %v778 = vpop.permute.xlu0 %777
  %781 = vrot.lane.b32.xlu0 %v767, 24
  %v782 = vpop.permute.xlu0 %781
  %v784 = vsel %vm325, %v434, %v774
  %vm785 = vcmask 130048
  %v786 = vsel %vm785, %v784, %v778
  %vm787 = vcmask 195584
  %v788 = vsel %vm787, %v786, %v782
  %v789 = vpack.c.bf16 %v788, %v788
  %v791 = vlaneseq
  %v792 = vshrl.u32 %v791, 7
  %v793 = vsub.s32 0, %v792
  %v794 = vrot.slane %v257, %v793
  %v800 = vunpack.c.l.b16 %v253
  %v801 = vunpack.c.l.b16 %v254
  %v802 = vunpack.c.l.b16 %v255
  %v803 = vunpack.c.l.b16 %v256
  %v804 = vpack.c.b16 %v801, %v800
  %v805 = vpack.c.b16 %v803, %v802
  %v809 = vsel %vm277, %v789, 0
  %811 = vmatprep.subr.bf16.mxu0 0
  %812 = vmatpush1.bf16.msra.mxu0 %v804
  %813 = vmatprep.subr.bf16.mxu0 0
  %814 = vmatpush1.bf16.msra.mxu0 %v805
  %815 = vmatprep.subr.bf16.mxu0 0
  %816 = vmatpush1.bf16.msra.mxu0 0
  %817 = vmatprep.subr.bf16.mxu0 0
  %818 = vmatpush1.bf16.msra.mxu0 0
  %819 = vmatprep.subr.bf16.mxu0 0
  %820 = vmatpush1.bf16.msra.mxu0 0
  %821 = vmatprep.subr.bf16.mxu0 0
  %822 = vmatpush1.bf16.msra.mxu0 0
  %823 = vmatprep.subr.bf16.mxu0 0
  %824 = vmatpush1.bf16.msra.mxu0 0
  %825 = vmatprep.subr.bf16.mxu0 0
  %826 = vmatpush1.bf16.msra.mxu0 0
  %827 = vmatprep.subr.bf16.mxu0 0
  %828 = vmatpush1.bf16.msra.mxu0 0
  %829 = vmatprep.subr.bf16.mxu0 0
  %830 = vmatpush1.bf16.msra.mxu0 0
  %831 = vmatprep.subr.bf16.mxu0 0
  %832 = vmatpush1.bf16.msra.mxu0 0
  %833 = vmatprep.subr.bf16.mxu0 0
  %834 = vmatpush1.bf16.msra.mxu0 0
  %835 = vmatprep.subr.bf16.mxu0 0
  %836 = vmatpush1.bf16.msra.mxu0 0
  %837 = vmatprep.subr.bf16.mxu0 0
  %838 = vmatpush1.bf16.msra.mxu0 0
  %839 = vmatprep.subr.bf16.mxu0 0
  %840 = vmatpush1.bf16.msra.mxu0 0
  %841 = vmatprep.subr.bf16.mxu0 0
  %842 = vmatpush1.bf16.msra.mxu0 0
  %843 = vmatprep.mubr.bf16.mxu0 0
  %844 = vmatmul.mubr.bf16.gmra.mrb[0].mxu0 %v809
  %v845 = vpop.f32.mrb[0].mxu0
  %v846 = vadd.f32 %v794, %v845
  %v847 = vpop.f32.mrb[0].mxu0
  %v848 = vpop.f32.mrb[0].mxu0
  %v849 = vpop.f32.mrb[0].mxu0
  %850 = vdwg.mxu0
  %v851 = vadd.f32 %v211, %v846
  %v852 = vld [vmem:[%s9] sm:$0x1]
  %v853 = vld [vmem:[%s10] sm:$0x1]
  %v854 = vsel %vm218, %v851, 0.0
  %855 = vadd.xlane.f32.xlu0 %v854
  %v856 = vpop.xlane.xlu0 %855
  %v857 = vmul.f32 %v851, %v851
  %v858 = vsel %vm218, %v857, 0.0
  %859 = vadd.xlane.f32.xlu0 %v858
  %v860 = vpop.xlane.xlu0 %859
  %v861 = vmul.f32 %v856, 0.03125
  %v862 = vmul.f32 %v860, 0.03125
  %v863 = vmul.f32 %v861, %v861
  %v864 = vsub.f32 %v862, %v863
  %v865 = vsub.f32 %v851, %v861
  %v866 = vadd.f32 %v864, 1e-06
  %v867 = vrsqrt.pop %v866
  %v868 = vmul.f32 %v865, %v867
  %v870 = vlaneseq
  %v871 = vshrl.u32 %v870, 7
  %v872 = vsub.s32 0, %v871
  %v873 = vrot.slane %v852, %v872
  %v875 = vmul.f32 %v868, %v873
  %v877 = vlaneseq
  %v878 = vshrl.u32 %v877, 7
  %v879 = vsub.s32 0, %v878
  %v880 = vrot.slane %v853, %v879
  %v882 = vadd.f32 %v875, %v880
  %v883 = vld [vmem:[%s11] sm:$0xf]
  %v884 = vld [vmem:[%s11 + $0x4] sm:$0xf]
  %v885 = vld [vmem:[%s11 + $0x8] sm:$0xf]
  %v886 = vld [vmem:[%s11 + $0xc] sm:$0xf]
  %v887 = vpack.c.bf16 %v882, %v882
  %v888 = vld [vmem:[%s12] sm:$0x1]
  %v890 = vlaneseq
  %v891 = vshrl.u32 %v890, 7
  %v892 = vsub.s32 0, %v891
  %v893 = vrot.slane %v888, %v892
  %v899 = vunpack.c.l.b16 %v883
  %v900 = vunpack.c.l.b16 %v884
  %v901 = vunpack.c.l.b16 %v885
  %v902 = vunpack.c.l.b16 %v886
  %v903 = vpack.c.b16 %v900, %v899
  %v904 = vpack.c.b16 %v902, %v901
  %v908 = vsel %vm277, %v887, 0
  %910 = vmatprep.subr.bf16.mxu0 0
  %911 = vmatpush1.bf16.msra.mxu0 %v903
  %912 = vmatprep.subr.bf16.mxu0 0
  %913 = vmatpush1.bf16.msra.mxu0 %v904
  %914 = vmatprep.subr.bf16.mxu0 0
  %915 = vmatpush1.bf16.msra.mxu0 0
  %916 = vmatprep.subr.bf16.mxu0 0
  %917 = vmatpush1.bf16.msra.mxu0 0
  %918 = vmatprep.subr.bf16.mxu0 0
  %919 = vmatpush1.bf16.msra.mxu0 0
  %920 = vmatprep.subr.bf16.mxu0 0
  %921 = vmatpush1.bf16.msra.mxu0 0
  %922 = vmatprep.subr.bf16.mxu0 0
  %923 = vmatpush1.bf16.msra.mxu0 0
  %924 = vmatprep.subr.bf16.mxu0 0
  %925 = vmatpush1.bf16.msra.mxu0 0
  %926 = vmatprep.subr.bf16.mxu0 0
  %927 = vmatpush1.bf16.msra.mxu0 0
  %928 = vmatprep.subr.bf16.mxu0 0
  %929 = vmatpush1.bf16.msra.mxu0 0
  %930 = vmatprep.subr.bf16.mxu0 0
  %931 = vmatpush1.bf16.msra.mxu0 0
  %932 = vmatprep.subr.bf16.mxu0 0
  %933 = vmatpush1.bf16.msra.mxu0 0
  %934 = vmatprep.subr.bf16.mxu0 0
  %935 = vmatpush1.bf16.msra.mxu0 0
  %936 = vmatprep.subr.bf16.mxu0 0
  %937 = vmatpush1.bf16.msra.mxu0 0
  %938 = vmatprep.subr.bf16.mxu0 0
  %939 = vmatpush1.bf16.msra.mxu0 0
  %940 = vmatprep.subr.bf16.mxu0 0
  %941 = vmatpush1.bf16.msra.mxu0 0
  %942 = vmatprep.mubr.bf16.mxu0 0
  %943 = vmatmul.mubr.bf16.gmra.mrb[0].mxu0 %v908
  %v944 = vpop.f32.mrb[0].mxu0
  %v945 = vadd.f32 %v893, %v944
  %v946 = vpop.f32.mrb[0].mxu0
  %v947 = vpop.f32.mrb[0].mxu0
  %v948 = vpop.f32.mrb[0].mxu0
  %949 = vdwg.mxu0
  %v950 = vmul.f32 %v945, %v945
  %v951 = vmul.f32 %v945, %v950
  %v952 = vmul.f32 %v951, 0.044715
  %v953 = vadd.f32 %v945, %v952
  %v954 = vmul.f32 %v953, 0.7978846
  %v955 = vtanh.pop %v954
  %v956 = vadd.f32 %v955, 1.0
  %v957 = vmul.f32 %v956, 0.5
  %v958 = vmul.f32 %v945, %v957
  %v959 = vld [vmem:[%s13] sm:$0xf]
  %v960 = vld [vmem:[%s13 + $0x4] sm:$0xf]
  %v961 = vld [vmem:[%s13 + $0x8] sm:$0xf]
  %v962 = vld [vmem:[%s13 + $0xc] sm:$0xf]
  %v963 = vld [vmem:[%s13 + $0x10] sm:$0xf]
  %v964 = vld [vmem:[%s13 + $0x14] sm:$0xf]
  %v965 = vld [vmem:[%s13 + $0x18] sm:$0xf]
  %v966 = vld [vmem:[%s13 + $0x1c] sm:$0xf]
  %v967 = vld [vmem:[%s13 + $0x20] sm:$0xf]
  %v968 = vld [vmem:[%s13 + $0x24] sm:$0xf]
  %v969 = vld [vmem:[%s13 + $0x28] sm:$0xf]
  %v970 = vld [vmem:[%s13 + $0x2c] sm:$0xf]
  %v971 = vld [vmem:[%s13 + $0x30] sm:$0xf]
  %v972 = vld [vmem:[%s13 + $0x34] sm:$0xf]
  %v973 = vld [vmem:[%s13 + $0x38] sm:$0xf]
  %v974 = vld [vmem:[%s13 + $0x3c] sm:$0xf]
  %v975 = vpack.c.bf16 %v958, %v958
  %v992 = vunpack.c.l.b16 %v959
  %v993 = vunpack.c.l.b16 %v960
  %v994 = vunpack.c.l.b16 %v961
  %v995 = vunpack.c.l.b16 %v962
  %v996 = vunpack.c.l.b16 %v963
  %v997 = vunpack.c.l.b16 %v964
  %v998 = vunpack.c.l.b16 %v965
  %v999 = vunpack.c.l.b16 %v966
  %v1000 = vunpack.c.l.b16 %v967
  %v1001 = vunpack.c.l.b16 %v968
  %v1002 = vunpack.c.l.b16 %v969
  %v1003 = vunpack.c.l.b16 %v970
  %v1004 = vunpack.c.l.b16 %v971
  %v1005 = vunpack.c.l.b16 %v972
  %v1006 = vunpack.c.l.b16 %v973
  %v1007 = vunpack.c.l.b16 %v974
  %v1008 = vpack.c.b16 %v993, %v992
  %v1009 = vpack.c.b16 %v995, %v994
  %v1010 = vpack.c.b16 %v997, %v996
  %v1011 = vpack.c.b16 %v999, %v998
  %v1012 = vpack.c.b16 %v1001, %v1000
  %v1013 = vpack.c.b16 %v1003, %v1002
  %v1014 = vpack.c.b16 %v1005, %v1004
  %v1015 = vpack.c.b16 %v1007, %v1006
  %1024 = vmatprep.subr.bf16.mxu0 0
  %1025 = vmatpush1.bf16.msra.mxu0 %v1008
  %1026 = vmatprep.subr.bf16.mxu0 0
  %1027 = vmatpush1.bf16.msra.mxu0 %v1009
  %1028 = vmatprep.subr.bf16.mxu0 0
  %1029 = vmatpush1.bf16.msra.mxu0 %v1010
  %1030 = vmatprep.subr.bf16.mxu0 0
  %1031 = vmatpush1.bf16.msra.mxu0 %v1011
  %1032 = vmatprep.subr.bf16.mxu0 0
  %1033 = vmatpush1.bf16.msra.mxu0 %v1012
  %1034 = vmatprep.subr.bf16.mxu0 0
  %1035 = vmatpush1.bf16.msra.mxu0 %v1013
  %1036 = vmatprep.subr.bf16.mxu0 0
  %1037 = vmatpush1.bf16.msra.mxu0 %v1014
  %1038 = vmatprep.subr.bf16.mxu0 0
  %1039 = vmatpush1.bf16.msra.mxu0 %v1015
  %1040 = vmatprep.subr.bf16.mxu0 0
  %1041 = vmatpush1.bf16.msra.mxu0 0
  %1042 = vmatprep.subr.bf16.mxu0 0
  %1043 = vmatpush1.bf16.msra.mxu0 0
  %1044 = vmatprep.subr.bf16.mxu0 0
  %1045 = vmatpush1.bf16.msra.mxu0 0
  %1046 = vmatprep.subr.bf16.mxu0 0
  %1047 = vmatpush1.bf16.msra.mxu0 0
  %1048 = vmatprep.subr.bf16.mxu0 0
  %1049 = vmatpush1.bf16.msra.mxu0 0
  %1050 = vmatprep.subr.bf16.mxu0 0
  %1051 = vmatpush1.bf16.msra.mxu0 0
  %1052 = vmatprep.subr.bf16.mxu0 0
  %1053 = vmatpush1.bf16.msra.mxu0 0
  %1054 = vmatprep.subr.bf16.mxu0 0
  %1055 = vmatpush1.bf16.msra.mxu0 0
  %1056 = vmatprep.mubr.bf16.mxu0 0
  %1057 = vmatmul.mubr.bf16.gmra.mrb[0].mxu0 %v975
  %v1058 = vpop.f32.mrb[0].mxu0
  %v1059 = vadd.f32 0.0, %v1058
  %v1060 = vpop.f32.mrb[0].mxu0
  %v1061 = vpop.f32.mrb[0].mxu0
  %v1062 = vpop.f32.mrb[0].mxu0
  %1063 = vdwg.mxu0
  %v1064 = vadd.f32 %v851, %v1059
  %v1065 = vld [vmem:[%s14] sm:$0x1]
  %v1067 = vlaneseq
  %v1068 = vshrl.u32 %v1067, 7
  %v1069 = vsub.s32 0, %v1068
  %v1070 = vrot.slane %v1065, %v1069
  %v1072 = vadd.f32 %v1064, %v1070
  %s1073 = scalar_lea.vmem %s3, 1
  %v1074 = vld [vmem:[%s1073] sm:$0x1]
  %s1075 = scalar_lea.vmem %s4, 1
  %v1076 = vld [vmem:[%s1075] sm:$0x1]
  %v1077 = vsel %vm218, %v1072, 0.0
  %1078 = vadd.xlane.f32.xlu0 %v1077
  %v1079 = vpop.xlane.xlu0 %1078
  %v1080 = vmul.f32 %v1072, %v1072
  %v1081 = vsel %vm218, %v1080, 0.0
  %1082 = vadd.xlane.f32.xlu0 %v1081
  %v1083 = vpop.xlane.xlu0 %1082
  %v1084 = vmul.f32 %v1079, 0.03125
  %v1085 = vmul.f32 %v1083, 0.03125
  %v1086 = vmul.f32 %v1084, %v1084
  %v1087 = vsub.f32 %v1085, %v1086
  %v1088 = vsub.f32 %v1072, %v1084
  %v1089 = vadd.f32 %v1087, 1e-06
  %v1090 = vrsqrt.pop %v1089
  %v1091 = vmul.f32 %v1088, %v1090
  %v1093 = vlaneseq
  %v1094 = vshrl.u32 %v1093, 7
  %v1095 = vsub.s32 0, %v1094
  %v1096 = vrot.slane %v1074, %v1095
  %v1098 = vmul.f32 %v1091, %v1096
  %v1100 = vlaneseq
  %v1101 = vshrl.u32 %v1100, 7
  %v1102 = vsub.s32 0, %v1101
  %v1103 = vrot.slane %v1076, %v1102
  %v1105 = vadd.f32 %v1098, %v1103
  %s1106 = scalar_lea.vmem %s5, 16
  %v1107 = vld [vmem:[%s1106] sm:$0xf]
  %v1108 = vld [vmem:[%s1106 + $0x4] sm:$0xf]
  %v1109 = vld [vmem:[%s1106 + $0x8] sm:$0xf]
  %v1110 = vld [vmem:[%s1106 + $0xc] sm:$0xf]
  %s1111 = scalar_lea.vmem %s6, 1
  %v1112 = vld [vmem:[%s1111] sm:$0x1]
  %s1113 = scalar_lea.vmem %s7, 16
  %v1114 = vld [vmem:[%s1113] sm:$0xf]
  %v1115 = vld [vmem:[%s1113 + $0x4] sm:$0xf]
  %v1116 = vld [vmem:[%s1113 + $0x8] sm:$0xf]
  %v1117 = vld [vmem:[%s1113 + $0xc] sm:$0xf]
  %s1118 = scalar_lea.vmem %s8, 1
  %v1119 = vld [vmem:[%s1118] sm:$0x1]
  %v1120 = vpack.c.bf16 %v1105, %v1105
  %v1122 = vlaneseq
  %v1123 = vshrl.u32 %v1122, 7
  %v1124 = vsub.s32 0, %v1123
  %v1125 = vrot.slane %v1112, %v1124
  %v1131 = vunpack.c.l.b16 %v1107
  %v1132 = vunpack.c.l.b16 %v1108
  %v1133 = vunpack.c.l.b16 %v1109
  %v1134 = vunpack.c.l.b16 %v1110
  %v1135 = vpack.c.b16 %v1132, %v1131
  %v1136 = vpack.c.b16 %v1134, %v1133
  %v1140 = vsel %vm277, %v1120, 0
  %1142 = vmatprep.subr.bf16.mxu0 0
  %1143 = vmatpush1.bf16.msra.mxu0 %v1135
  %1144 = vmatprep.subr.bf16.mxu0 0
  %1145 = vmatpush1.bf16.msra.mxu0 %v1136
  %1146 = vmatprep.subr.bf16.mxu0 0
  %1147 = vmatpush1.bf16.msra.mxu0 0
  %1148 = vmatprep.subr.bf16.mxu0 0
  %1149 = vmatpush1.bf16.msra.mxu0 0
  %1150 = vmatprep.subr.bf16.mxu0 0
  %1151 = vmatpush1.bf16.msra.mxu0 0
  %1152 = vmatprep.subr.bf16.mxu0 0
  %1153 = vmatpush1.bf16.msra.mxu0 0
  %1154 = vmatprep.subr.bf16.mxu0 0
  %1155 = vmatpush1.bf16.msra.mxu0 0
  %1156 = vmatprep.subr.bf16.mxu0 0
  %1157 = vmatpush1.bf16.msra.mxu0 0
  %1158 = vmatprep.subr.bf16.mxu0 0
  %1159 = vmatpush1.bf16.msra.mxu0 0
  %1160 = vmatprep.subr.bf16.mxu0 0
  %1161 = vmatpush1.bf16.msra.mxu0 0
  %1162 = vmatprep.subr.bf16.mxu0 0
  %1163 = vmatpush1.bf16.msra.mxu0 0
  %1164 = vmatprep.subr.bf16.mxu0 0
  %1165 = vmatpush1.bf16.msra.mxu0 0
  %1166 = vmatprep.subr.bf16.mxu0 0
  %1167 = vmatpush1.bf16.msra.mxu0 0
  %1168 = vmatprep.subr.bf16.mxu0 0
  %1169 = vmatpush1.bf16.msra.mxu0 0
  %1170 = vmatprep.subr.bf16.mxu0 0
  %1171 = vmatpush1.bf16.msra.mxu0 0
  %1172 = vmatprep.subr.bf16.mxu0 0
  %1173 = vmatpush1.bf16.msra.mxu0 0
  %1174 = vmatprep.mubr.bf16.mxu0 0
  %1175 = vmatmul.mubr.bf16.gmra.mrb[0].mxu0 %v1140
  %v1176 = vpop.f32.mrb[0].mxu0
  %v1177 = vadd.f32 %v1125, %v1176
  %v1178 = vpop.f32.mrb[0].mxu0
  %v1179 = vpop.f32.mrb[0].mxu0
  %v1180 = vpop.f32.mrb[0].mxu0
  %1181 = vdwg.mxu0
  %v1182 = vpack.c.bf16 %v1177, %v1177
  %1184 = vrot.lane.b32.xlu0 %v1182, 96
  %v1185 = vpop.permute.xlu0 %1184
  %v1187 = vsel %vm325, %v1182, 0
  %v1190 = vsel %vm325, %v1185, 0
  %1192 = vmatprep.subr.bf16.mxu0 0
  %1193 = vmatpush1.bf16.xpose.msra.mxu0 %v1190
  %1194 = vmatprep.subr.bf16.mxu0 0
  %1195 = vmatpush1.bf16.xpose.msra.mxu0 0
  %1196 = vmatprep.subr.bf16.mxu0 0
  %1197 = vmatpush1.bf16.xpose.msra.mxu0 0
  %1198 = vmatprep.subr.bf16.mxu0 0
  %1199 = vmatpush1.bf16.xpose.msra.mxu0 0
  %1200 = vmatprep.subr.bf16.mxu0 0
  %1201 = vmatpush1.bf16.xpose.msra.mxu0 0
  %1202 = vmatprep.subr.bf16.mxu0 0
  %1203 = vmatpush1.bf16.xpose.msra.mxu0 0
  %1204 = vmatprep.subr.bf16.mxu0 0
  %1205 = vmatpush1.bf16.xpose.msra.mxu0 0
  %1206 = vmatprep.subr.bf16.mxu0 0
  %1207 = vmatpush1.bf16.xpose.msra.mxu0 0
  %1208 = vmatprep.subr.bf16.mxu0 0
  %1209 = vmatpush1.bf16.xpose.msra.mxu0 0
  %1210 = vmatprep.subr.bf16.mxu0 0
  %1211 = vmatpush1.bf16.xpose.msra.mxu0 0
  %1212 = vmatprep.subr.bf16.mxu0 0
  %1213 = vmatpush1.bf16.xpose.msra.mxu0 0
  %1214 = vmatprep.subr.bf16.mxu0 0
  %1215 = vmatpush1.bf16.xpose.msra.mxu0 0
  %1216 = vmatprep.subr.bf16.mxu0 0
  %1217 = vmatpush1.bf16.xpose.msra.mxu0 0
  %1218 = vmatprep.subr.bf16.mxu0 0
  %1219 = vmatpush1.bf16.xpose.msra.mxu0 0
  %1220 = vmatprep.subr.bf16.mxu0 0
  %1221 = vmatpush1.bf16.xpose.msra.mxu0 0
  %1222 = vmatprep.subr.bf16.mxu0 0
  %1223 = vmatpush1.bf16.xpose.msra.mxu0 0
  %1224 = vmatprep.mubr.bf16.mxu0 0
  %1225 = vmatmul.mubr.bf16.gmra.mrb[0].mxu0 %v1187
  %v1226 = vpop.f32.mrb[0].mxu0
  %v1227 = vadd.f32 0.0, %v1226
  %v1228 = vpop.f32.mrb[0].mxu0
  %v1229 = vpop.f32.mrb[0].mxu0
  %v1230 = vpop.f32.mrb[0].mxu0
  %1231 = vdwg.mxu0
  %v1232 = vmul.f32 %v1227, 0.35355338
  %v1233 = vsel %vm373, %v1232, -inf
  %1234 = vmax.xlane.f32.xlu0 %v1233
  %v1235 = vpop.xlane.xlu0 %1234
  %v1236 = vsub.f32 %v1232, %v1235
  %v1237 = vmul.f32 %v1236, 1.442695
  %v1238 = vpow.pop %v1237
  %v1239 = vsel %vm373, %v1238, 0.0
  %1240 = vadd.xlane.f32.xlu0 %v1239
  %v1241 = vpop.xlane.xlu0 %1240
  %v1242 = vrcp.pop %v1241
  %v1243 = vmul.f32 %v1238, %v1242
  %v1244 = vpack.c.bf16 %v1243, %v1243
  %1245 = vrot.lane.b32.xlu0 %v1182, 64
  %v1246 = vpop.permute.xlu0 %1245
  %v1248 = vsel %vm388, %v1244, 0
  %v1251 = vand.u32 %v1246, %v395
  %1253 = vmatprep.subr.bf16.mxu0 0
  %1254 = vmatpush1.bf16.msra.mxu0 %v1251
  %1255 = vmatprep.subr.bf16.mxu0 0
  %1256 = vmatpush1.bf16.msra.mxu0 0
  %1257 = vmatprep.subr.bf16.mxu0 0
  %1258 = vmatpush1.bf16.msra.mxu0 0
  %1259 = vmatprep.subr.bf16.mxu0 0
  %1260 = vmatpush1.bf16.msra.mxu0 0
  %1261 = vmatprep.subr.bf16.mxu0 0
  %1262 = vmatpush1.bf16.msra.mxu0 0
  %1263 = vmatprep.subr.bf16.mxu0 0
  %1264 = vmatpush1.bf16.msra.mxu0 0
  %1265 = vmatprep.subr.bf16.mxu0 0
  %1266 = vmatpush1.bf16.msra.mxu0 0
  %1267 = vmatprep.subr.bf16.mxu0 0
  %1268 = vmatpush1.bf16.msra.mxu0 0
  %1269 = vmatprep.subr.bf16.mxu0 0
  %1270 = vmatpush1.bf16.msra.mxu0 0
  %1271 = vmatprep.subr.bf16.mxu0 0
  %1272 = vmatpush1.bf16.msra.mxu0 0
  %1273 = vmatprep.subr.bf16.mxu0 0
  %1274 = vmatpush1.bf16.msra.mxu0 0
  %1275 = vmatprep.subr.bf16.mxu0 0
  %1276 = vmatpush1.bf16.msra.mxu0 0
  %1277 = vmatprep.subr.bf16.mxu0 0
  %1278 = vmatpush1.bf16.msra.mxu0 0
  %1279 = vmatprep.subr.bf16.mxu0 0
  %1280 = vmatpush1.bf16.msra.mxu0 0
  %1281 = vmatprep.subr.bf16.mxu0 0
  %1282 = vmatpush1.bf16.msra.mxu0 0
  %1283 = vmatprep.subr.bf16.mxu0 0
  %1284 = vmatpush1.bf16.msra.mxu0 0
  %1285 = vmatprep.mubr.bf16.mxu0 0
  %1286 = vmatmul.mubr.bf16.gmra.mrb[0].mxu0 %v1248
  %v1287 = vpop.f32.mrb[0].mxu0
  %v1288 = vadd.f32 0.0, %v1287
  %v1289 = vpop.f32.mrb[0].mxu0
  %v1290 = vpop.f32.mrb[0].mxu0
  %v1291 = vpop.f32.mrb[0].mxu0
  %1292 = vdwg.mxu0
  %1293 = vrot.lane.b32.xlu0 %v1182, 120
  %v1294 = vpop.permute.xlu0 %1293
  %1295 = vrot.lane.b32.xlu0 %v1182, 88
  %v1296 = vpop.permute.xlu0 %1295
  %v1298 = vsel %vm325, %v1294, 0
  %v1301 = vsel %vm325, %v1296, 0
  %1303 = vmatprep.subr.bf16.mxu0 0
  %1304 = vmatpush1.bf16.xpose.msra.mxu0 %v1301
  %1305 = vmatprep.subr.bf16.mxu0 0
  %1306 = vmatpush1.bf16.xpose.msra.mxu0 0
  %1307 = vmatprep.subr.bf16.mxu0 0
  %1308 = vmatpush1.bf16.xpose.msra.mxu0 0
  %1309 = vmatprep.subr.bf16.mxu0 0
  %1310 = vmatpush1.bf16.xpose.msra.mxu0 0
  %1311 = vmatprep.subr.bf16.mxu0 0
  %1312 = vmatpush1.bf16.xpose.msra.mxu0 0
  %1313 = vmatprep.subr.bf16.mxu0 0
  %1314 = vmatpush1.bf16.xpose.msra.mxu0 0
  %1315 = vmatprep.subr.bf16.mxu0 0
  %1316 = vmatpush1.bf16.xpose.msra.mxu0 0
  %1317 = vmatprep.subr.bf16.mxu0 0
  %1318 = vmatpush1.bf16.xpose.msra.mxu0 0
  %1319 = vmatprep.subr.bf16.mxu0 0
  %1320 = vmatpush1.bf16.xpose.msra.mxu0 0
  %1321 = vmatprep.subr.bf16.mxu0 0
  %1322 = vmatpush1.bf16.xpose.msra.mxu0 0
  %1323 = vmatprep.subr.bf16.mxu0 0
  %1324 = vmatpush1.bf16.xpose.msra.mxu0 0
  %1325 = vmatprep.subr.bf16.mxu0 0
  %1326 = vmatpush1.bf16.xpose.msra.mxu0 0
  %1327 = vmatprep.subr.bf16.mxu0 0
  %1328 = vmatpush1.bf16.xpose.msra.mxu0 0
  %1329 = vmatprep.subr.bf16.mxu0 0
  %1330 = vmatpush1.bf16.xpose.msra.mxu0 0
  %1331 = vmatprep.subr.bf16.mxu0 0
  %1332 = vmatpush1.bf16.xpose.msra.mxu0 0
  %1333 = vmatprep.subr.bf16.mxu0 0
  %1334 = vmatpush1.bf16.xpose.msra.mxu0 0
  %1335 = vmatprep.mubr.bf16.mxu0 0
  %1336 = vmatmul.mubr.bf16.gmra.mrb[0].mxu0 %v1298
  %v1337 = vpop.f32.mrb[0].mxu0
  %v1338 = vadd.f32 0.0, %v1337
  %v1339 = vpop.f32.mrb[0].mxu0
  %v1340 = vpop.f32.mrb[0].mxu0
  %v1341 = vpop.f32.mrb[0].mxu0
  %1342 = vdwg.mxu0
  %v1343 = vmul.f32 %v1338, 0.35355338
  %v1344 = vsel %vm373, %v1343, -inf
  %1345 = vmax.xlane.f32.xlu0 %v1344
  %v1346 = vpop.xlane.xlu0 %1345
  %v1347 = vsub.f32 %v1343, %v1346
  %v1348 = vmul.f32 %v1347, 1.442695
  %v1349 = vpow.pop %v1348
  %v1350 = vsel %vm373, %v1349, 0.0
  %1351 = vadd.xlane.f32.xlu0 %v1350
  %v1352 = vpop.xlane.xlu0 %1351
  %v1353 = vrcp.pop %v1352
  %v1354 = vmul.f32 %v1349, %v1353
  %v1355 = vpack.c.bf16 %v1354, %v1354
  %1356 = vrot.lane.b32.xlu0 %v1182, 56
  %v1357 = vpop.permute.xlu0 %1356
  %v1359 = vsel %vm388, %v1355, 0
  %v1362 = vand.u32 %v1357, %v395
  %1364 = vmatprep.subr.bf16.mxu0 0
  %1365 = vmatpush1.bf16.msra.mxu0 %v1362
  %1366 = vmatprep.subr.bf16.mxu0 0
  %1367 = vmatpush1.bf16.msra.mxu0 0
  %1368 = vmatprep.subr.bf16.mxu0 0
  %1369 = vmatpush1.bf16.msra.mxu0 0
  %1370 = vmatprep.subr.bf16.mxu0 0
  %1371 = vmatpush1.bf16.msra.mxu0 0
  %1372 = vmatprep.subr.bf16.mxu0 0
  %1373 = vmatpush1.bf16.msra.mxu0 0
  %1374 = vmatprep.subr.bf16.mxu0 0
  %1375 = vmatpush1.bf16.msra.mxu0 0
  %1376 = vmatprep.subr.bf16.mxu0 0
  %1377 = vmatpush1.bf16.msra.mxu0 0
  %1378 = vmatprep.subr.bf16.mxu0 0
  %1379 = vmatpush1.bf16.msra.mxu0 0
  %1380 = vmatprep.subr.bf16.mxu0 0
  %1381 = vmatpush1.bf16.msra.mxu0 0
  %1382 = vmatprep.subr.bf16.mxu0 0
  %1383 = vmatpush1.bf16.msra.mxu0 0
  %1384 = vmatprep.subr.bf16.mxu0 0
  %1385 = vmatpush1.bf16.msra.mxu0 0
  %1386 = vmatprep.subr.bf16.mxu0 0
  %1387 = vmatpush1.bf16.msra.mxu0 0
  %1388 = vmatprep.subr.bf16.mxu0 0
  %1389 = vmatpush1.bf16.msra.mxu0 0
  %1390 = vmatprep.subr.bf16.mxu0 0
  %1391 = vmatpush1.bf16.msra.mxu0 0
  %1392 = vmatprep.subr.bf16.mxu0 0
  %1393 = vmatpush1.bf16.msra.mxu0 0
  %1394 = vmatprep.subr.bf16.mxu0 0
  %1395 = vmatpush1.bf16.msra.mxu0 0
  %1396 = vmatprep.mubr.bf16.mxu0 0
  %1397 = vmatmul.mubr.bf16.gmra.mrb[0].mxu0 %v1359
  %v1398 = vpop.f32.mrb[0].mxu0
  %v1399 = vadd.f32 0.0, %v1398
  %v1400 = vpop.f32.mrb[0].mxu0
  %v1401 = vpop.f32.mrb[0].mxu0
  %v1402 = vpop.f32.mrb[0].mxu0
  %1403 = vdwg.mxu0
  %1404 = vrot.lane.b32.xlu0 %v1182, 112
  %v1405 = vpop.permute.xlu0 %1404
  %1406 = vrot.lane.b32.xlu0 %v1182, 80
  %v1407 = vpop.permute.xlu0 %1406
  %v1409 = vsel %vm325, %v1405, 0
  %v1412 = vsel %vm325, %v1407, 0
  %1414 = vmatprep.subr.bf16.mxu0 0
  %1415 = vmatpush1.bf16.xpose.msra.mxu0 %v1412
  %1416 = vmatprep.subr.bf16.mxu0 0
  %1417 = vmatpush1.bf16.xpose.msra.mxu0 0
  %1418 = vmatprep.subr.bf16.mxu0 0
  %1419 = vmatpush1.bf16.xpose.msra.mxu0 0
  %1420 = vmatprep.subr.bf16.mxu0 0
  %1421 = vmatpush1.bf16.xpose.msra.mxu0 0
  %1422 = vmatprep.subr.bf16.mxu0 0
  %1423 = vmatpush1.bf16.xpose.msra.mxu0 0
  %1424 = vmatprep.subr.bf16.mxu0 0
  %1425 = vmatpush1.bf16.xpose.msra.mxu0 0
  %1426 = vmatprep.subr.bf16.mxu0 0
  %1427 = vmatpush1.bf16.xpose.msra.mxu0 0
  %1428 = vmatprep.subr.bf16.mxu0 0
  %1429 = vmatpush1.bf16.xpose.msra.mxu0 0
  %1430 = vmatprep.subr.bf16.mxu0 0
  %1431 = vmatpush1.bf16.xpose.msra.mxu0 0
  %1432 = vmatprep.subr.bf16.mxu0 0
  %1433 = vmatpush1.bf16.xpose.msra.mxu0 0
  %1434 = vmatprep.subr.bf16.mxu0 0
  %1435 = vmatpush1.bf16.xpose.msra.mxu0 0
  %1436 = vmatprep.subr.bf16.mxu0 0
  %1437 = vmatpush1.bf16.xpose.msra.mxu0 0
  %1438 = vmatprep.subr.bf16.mxu0 0
  %1439 = vmatpush1.bf16.xpose.msra.mxu0 0
  %1440 = vmatprep.subr.bf16.mxu0 0
  %1441 = vmatpush1.bf16.xpose.msra.mxu0 0
  %1442 = vmatprep.subr.bf16.mxu0 0
  %1443 = vmatpush1.bf16.xpose.msra.mxu0 0
  %1444 = vmatprep.subr.bf16.mxu0 0
  %1445 = vmatpush1.bf16.xpose.msra.mxu0 0
  %1446 = vmatprep.mubr.bf16.mxu0 0
  %1447 = vmatmul.mubr.bf16.gmra.mrb[0].mxu0 %v1409
  %v1448 = vpop.f32.mrb[0].mxu0
  %v1449 = vadd.f32 0.0, %v1448
  %v1450 = vpop.f32.mrb[0].mxu0
  %v1451 = vpop.f32.mrb[0].mxu0
  %v1452 = vpop.f32.mrb[0].mxu0
  %1453 = vdwg.mxu0
  %v1454 = vmul.f32 %v1449, 0.35355338
  %v1455 = vsel %vm373, %v1454, -inf
  %1456 = vmax.xlane.f32.xlu0 %v1455
  %v1457 = vpop.xlane.xlu0 %1456
  %v1458 = vsub.f32 %v1454, %v1457
  %v1459 = vmul.f32 %v1458, 1.442695
  %v1460 = vpow.pop %v1459
  %v1461 = vsel %vm373, %v1460, 0.0
  %1462 = vadd.xlane.f32.xlu0 %v1461
  %v1463 = vpop.xlane.xlu0 %1462
  %v1464 = vrcp.pop %v1463
  %v1465 = vmul.f32 %v1460, %v1464
  %v1466 = vpack.c.bf16 %v1465, %v1465
  %1467 = vrot.lane.b32.xlu0 %v1182, 48
  %v1468 = vpop.permute.xlu0 %1467
  %v1470 = vsel %vm388, %v1466, 0
  %v1473 = vand.u32 %v1468, %v395
  %1475 = vmatprep.subr.bf16.mxu0 0
  %1476 = vmatpush1.bf16.msra.mxu0 %v1473
  %1477 = vmatprep.subr.bf16.mxu0 0
  %1478 = vmatpush1.bf16.msra.mxu0 0
  %1479 = vmatprep.subr.bf16.mxu0 0
  %1480 = vmatpush1.bf16.msra.mxu0 0
  %1481 = vmatprep.subr.bf16.mxu0 0
  %1482 = vmatpush1.bf16.msra.mxu0 0
  %1483 = vmatprep.subr.bf16.mxu0 0
  %1484 = vmatpush1.bf16.msra.mxu0 0
  %1485 = vmatprep.subr.bf16.mxu0 0
  %1486 = vmatpush1.bf16.msra.mxu0 0
  %1487 = vmatprep.subr.bf16.mxu0 0
  %1488 = vmatpush1.bf16.msra.mxu0 0
  %1489 = vmatprep.subr.bf16.mxu0 0
  %1490 = vmatpush1.bf16.msra.mxu0 0
  %1491 = vmatprep.subr.bf16.mxu0 0
  %1492 = vmatpush1.bf16.msra.mxu0 0
  %1493 = vmatprep.subr.bf16.mxu0 0
  %1494 = vmatpush1.bf16.msra.mxu0 0
  %1495 = vmatprep.subr.bf16.mxu0 0
  %1496 = vmatpush1.bf16.msra.mxu0 0
  %1497 = vmatprep.subr.bf16.mxu0 0
  %1498 = vmatpush1.bf16.msra.mxu0 0
  %1499 = vmatprep.subr.bf16.mxu0 0
  %1500 = vmatpush1.bf16.msra.mxu0 0
  %1501 = vmatprep.subr.bf16.mxu0 0
  %1502 = vmatpush1.bf16.msra.mxu0 0
  %1503 = vmatprep.subr.bf16.mxu0 0
  %1504 = vmatpush1.bf16.msra.mxu0 0
  %1505 = vmatprep.subr.bf16.mxu0 0
  %1506 = vmatpush1.bf16.msra.mxu0 0
  %1507 = vmatprep.mubr.bf16.mxu0 0
  %1508 = vmatmul.mubr.bf16.gmra.mrb[0].mxu0 %v1470
  %v1509 = vpop.f32.mrb[0].mxu0
  %v1510 = vadd.f32 0.0, %v1509
  %v1511 = vpop.f32.mrb[0].mxu0
  %v1512 = vpop.f32.mrb[0].mxu0
  %v1513 = vpop.f32.mrb[0].mxu0
  %1514 = vdwg.mxu0
  %1515 = vrot.lane.b32.xlu0 %v1182, 104
  %v1516 = vpop.permute.xlu0 %1515
  %1517 = vrot.lane.b32.xlu0 %v1182, 72
  %v1518 = vpop.permute.xlu0 %1517
  %v1520 = vsel %vm325, %v1516, 0
  %v1523 = vsel %vm325, %v1518, 0
  %1525 = vmatprep.subr.bf16.mxu0 0
  %1526 = vmatpush1.bf16.xpose.msra.mxu0 %v1523
  %1527 = vmatprep.subr.bf16.mxu0 0
  %1528 = vmatpush1.bf16.xpose.msra.mxu0 0
  %1529 = vmatprep.subr.bf16.mxu0 0
  %1530 = vmatpush1.bf16.xpose.msra.mxu0 0
  %1531 = vmatprep.subr.bf16.mxu0 0
  %1532 = vmatpush1.bf16.xpose.msra.mxu0 0
  %1533 = vmatprep.subr.bf16.mxu0 0
  %1534 = vmatpush1.bf16.xpose.msra.mxu0 0
  %1535 = vmatprep.subr.bf16.mxu0 0
  %1536 = vmatpush1.bf16.xpose.msra.mxu0 0
  %1537 = vmatprep.subr.bf16.mxu0 0
  %1538 = vmatpush1.bf16.xpose.msra.mxu0 0
  %1539 = vmatprep.subr.bf16.mxu0 0
  %1540 = vmatpush1.bf16.xpose.msra.mxu0 0
  %1541 = vmatprep.subr.bf16.mxu0 0
  %1542 = vmatpush1.bf16.xpose.msra.mxu0 0
  %1543 = vmatprep.subr.bf16.mxu0 0
  %1544 = vmatpush1.bf16.xpose.msra.mxu0 0
  %1545 = vmatprep.subr.bf16.mxu0 0
  %1546 = vmatpush1.bf16.xpose.msra.mxu0 0
  %1547 = vmatprep.subr.bf16.mxu0 0
  %1548 = vmatpush1.bf16.xpose.msra.mxu0 0
  %1549 = vmatprep.subr.bf16.mxu0 0
  %1550 = vmatpush1.bf16.xpose.msra.mxu0 0
  %1551 = vmatprep.subr.bf16.mxu0 0
  %1552 = vmatpush1.bf16.xpose.msra.mxu0 0
  %1553 = vmatprep.subr.bf16.mxu0 0
  %1554 = vmatpush1.bf16.xpose.msra.mxu0 0
  %1555 = vmatprep.subr.bf16.mxu0 0
  %1556 = vmatpush1.bf16.xpose.msra.mxu0 0
  %1557 = vmatprep.mubr.bf16.mxu0 0
  %1558 = vmatmul.mubr.bf16.gmra.mrb[0].mxu0 %v1520
  %v1559 = vpop.f32.mrb[0].mxu0
  %v1560 = vadd.f32 0.0, %v1559
  %v1561 = vpop.f32.mrb[0].mxu0
  %v1562 = vpop.f32.mrb[0].mxu0
  %v1563 = vpop.f32.mrb[0].mxu0
  %1564 = vdwg.mxu0
  %v1565 = vmul.f32 %v1560, 0.35355338
  %v1566 = vsel %vm373, %v1565, -inf
  %1567 = vmax.xlane.f32.xlu0 %v1566
  %v1568 = vpop.xlane.xlu0 %1567
  %v1569 = vsub.f32 %v1565, %v1568
  %v1570 = vmul.f32 %v1569, 1.442695
  %v1571 = vpow.pop %v1570
  %v1572 = vsel %vm373, %v1571, 0.0
  %1573 = vadd.xlane.f32.xlu0 %v1572
  %v1574 = vpop.xlane.xlu0 %1573
  %v1575 = vrcp.pop %v1574
  %v1576 = vmul.f32 %v1571, %v1575
  %v1577 = vpack.c.bf16 %v1576, %v1576
  %1578 = vrot.lane.b32.xlu0 %v1182, 40
  %v1579 = vpop.permute.xlu0 %1578
  %v1581 = vsel %vm388, %v1577, 0
  %v1584 = vand.u32 %v1579, %v395
  %1586 = vmatprep.subr.bf16.mxu0 0
  %1587 = vmatpush1.bf16.msra.mxu0 %v1584
  %1588 = vmatprep.subr.bf16.mxu0 0
  %1589 = vmatpush1.bf16.msra.mxu0 0
  %1590 = vmatprep.subr.bf16.mxu0 0
  %1591 = vmatpush1.bf16.msra.mxu0 0
  %1592 = vmatprep.subr.bf16.mxu0 0
  %1593 = vmatpush1.bf16.msra.mxu0 0
  %1594 = vmatprep.subr.bf16.mxu0 0
  %1595 = vmatpush1.bf16.msra.mxu0 0
  %1596 = vmatprep.subr.bf16.mxu0 0
  %1597 = vmatpush1.bf16.msra.mxu0 0
  %1598 = vmatprep.subr.bf16.mxu0 0
  %1599 = vmatpush1.bf16.msra.mxu0 0
  %1600 = vmatprep.subr.bf16.mxu0 0
  %1601 = vmatpush1.bf16.msra.mxu0 0
  %1602 = vmatprep.subr.bf16.mxu0 0
  %1603 = vmatpush1.bf16.msra.mxu0 0
  %1604 = vmatprep.subr.bf16.mxu0 0
  %1605 = vmatpush1.bf16.msra.mxu0 0
  %1606 = vmatprep.subr.bf16.mxu0 0
  %1607 = vmatpush1.bf16.msra.mxu0 0
  %1608 = vmatprep.subr.bf16.mxu0 0
  %1609 = vmatpush1.bf16.msra.mxu0 0
  %1610 = vmatprep.subr.bf16.mxu0 0
  %1611 = vmatpush1.bf16.msra.mxu0 0
  %1612 = vmatprep.subr.bf16.mxu0 0
  %1613 = vmatpush1.bf16.msra.mxu0 0
  %1614 = vmatprep.subr.bf16.mxu0 0
  %1615 = vmatpush1.bf16.msra.mxu0 0
  %1616 = vmatprep.subr.bf16.mxu0 0
  %1617 = vmatpush1.bf16.msra.mxu0 0
  %1618 = vmatprep.mubr.bf16.mxu0 0
  %1619 = vmatmul.mubr.bf16.gmra.mrb[0].mxu0 %v1581
  %v1620 = vpop.f32.mrb[0].mxu0
  %v1621 = vadd.f32 0.0, %v1620
  %v1622 = vpop.f32.mrb[0].mxu0
  %v1623 = vpop.f32.mrb[0].mxu0
  %v1624 = vpop.f32.mrb[0].mxu0
  %1625 = vdwg.mxu0
  %1627 = vrot.lane.b32.xlu0 %v1399, 8
  %v1628 = vpop.permute.xlu0 %1627
  %1631 = vrot.lane.b32.xlu0 %v1510, 16
  %v1632 = vpop.permute.xlu0 %1631
  %1635 = vrot.lane.b32.xlu0 %v1621, 24
  %v1636 = vpop.permute.xlu0 %1635
  %v1638 = vsel %vm325, %v1288, %v1628
  %v1639 = vsel %vm785, %v1638, %v1632
  %v1640 = vsel %vm787, %v1639, %v1636
  %v1641 = vpack.c.bf16 %v1640, %v1640
  %v1643 = vlaneseq
  %v1644 = vshrl.u32 %v1643, 7
  %v1645 = vsub.s32 0, %v1644
  %v1646 = vrot.slane %v1119, %v1645
  %v1652 = vunpack.c.l.b16 %v1114
  %v1653 = vunpack.c.l.b16 %v1115
  %v1654 = vunpack.c.l.b16 %v1116
  %v1655 = vunpack.c.l.b16 %v1117
  %v1656 = vpack.c.b16 %v1653, %v1652
  %v1657 = vpack.c.b16 %v1655, %v1654
  %v1661 = vsel %vm277, %v1641, 0
  %1663 = vmatprep.subr.bf16.mxu0 0
  %1664 = vmatpush1.bf16.msra.mxu0 %v1656
  %1665 = vmatprep.subr.bf16.mxu0 0
  %1666 = vmatpush1.bf16.msra.mxu0 %v1657
  %1667 = vmatprep.subr.bf16.mxu0 0
  %1668 = vmatpush1.bf16.msra.mxu0 0
  %1669 = vmatprep.subr.bf16.mxu0 0
  %1670 = vmatpush1.bf16.msra.mxu0 0
  %1671 = vmatprep.subr.bf16.mxu0 0
  %1672 = vmatpush1.bf16.msra.mxu0 0
  %1673 = vmatprep.subr.bf16.mxu0 0
  %1674 = vmatpush1.bf16.msra.mxu0 0
  %1675 = vmatprep.subr.bf16.mxu0 0
  %1676 = vmatpush1.bf16.msra.mxu0 0
  %1677 = vmatprep.subr.bf16.mxu0 0
  %1678 = vmatpush1.bf16.msra.mxu0 0
  %1679 = vmatprep.subr.bf16.mxu0 0
  %1680 = vmatpush1.bf16.msra.mxu0 0
  %1681 = vmatprep.subr.bf16.mxu0 0
  %1682 = vmatpush1.bf16.msra.mxu0 0
  %1683 = vmatprep.subr.bf16.mxu0 0
  %1684 = vmatpush1.bf16.msra.mxu0 0
  %1685 = vmatprep.subr.bf16.mxu0 0
  %1686 = vmatpush1.bf16.msra.mxu0 0
  %1687 = vmatprep.subr.bf16.mxu0 0
  %1688 = vmatpush1.bf16.msra.mxu0 0
  %1689 = vmatprep.subr.bf16.mxu0 0
  %1690 = vmatpush1.bf16.msra.mxu0 0
  %1691 = vmatprep.subr.bf16.mxu0 0
  %1692 = vmatpush1.bf16.msra.mxu0 0
  %1693 = vmatprep.subr.bf16.mxu0 0
  %1694 = vmatpush1.bf16.msra.mxu0 0
  %1695 = vmatprep.mubr.bf16.mxu0 0
  %1696 = vmatmul.mubr.bf16.gmra.mrb[0].mxu0 %v1661
  %v1697 = vpop.f32.mrb[0].mxu0
  %v1698 = vadd.f32 %v1646, %v1697
  %v1699 = vpop.f32.mrb[0].mxu0
  %v1700 = vpop.f32.mrb[0].mxu0
  %v1701 = vpop.f32.mrb[0].mxu0
  %1702 = vdwg.mxu0
  %v1703 = vadd.f32 %v1072, %v1698
  %s1704 = scalar_lea.vmem %s9, 1
  %v1705 = vld [vmem:[%s1704] sm:$0x1]
  %s1706 = scalar_lea.vmem %s10, 1
  %v1707 = vld [vmem:[%s1706] sm:$0x1]
  %v1708 = vsel %vm218, %v1703, 0.0
  %1709 = vadd.xlane.f32.xlu0 %v1708
  %v1710 = vpop.xlane.xlu0 %1709
  %v1711 = vmul.f32 %v1703, %v1703
  %v1712 = vsel %vm218, %v1711, 0.0
  %1713 = vadd.xlane.f32.xlu0 %v1712
  %v1714 = vpop.xlane.xlu0 %1713
  %v1715 = vmul.f32 %v1710, 0.03125
  %v1716 = vmul.f32 %v1714, 0.03125
  %v1717 = vmul.f32 %v1715, %v1715
  %v1718 = vsub.f32 %v1716, %v1717
  %v1719 = vsub.f32 %v1703, %v1715
  %v1720 = vadd.f32 %v1718, 1e-06
  %v1721 = vrsqrt.pop %v1720
  %v1722 = vmul.f32 %v1719, %v1721
  %v1724 = vlaneseq
  %v1725 = vshrl.u32 %v1724, 7
  %v1726 = vsub.s32 0, %v1725
  %v1727 = vrot.slane %v1705, %v1726
  %v1729 = vmul.f32 %v1722, %v1727
  %v1731 = vlaneseq
  %v1732 = vshrl.u32 %v1731, 7
  %v1733 = vsub.s32 0, %v1732
  %v1734 = vrot.slane %v1707, %v1733
  %v1736 = vadd.f32 %v1729, %v1734
  %s1737 = scalar_lea.vmem %s11, 16
  %v1738 = vld [vmem:[%s1737] sm:$0xf]
  %v1739 = vld [vmem:[%s1737 + $0x4] sm:$0xf]
  %v1740 = vld [vmem:[%s1737 + $0x8] sm:$0xf]
  %v1741 = vld [vmem:[%s1737 + $0xc] sm:$0xf]
  %v1742 = vpack.c.bf16 %v1736, %v1736
  %s1743 = scalar_lea.vmem %s12, 1
  %v1744 = vld [vmem:[%s1743] sm:$0x1]
  %v1746 = vlaneseq
  %v1747 = vshrl.u32 %v1746, 7
  %v1748 = vsub.s32 0, %v1747
  %v1749 = vrot.slane %v1744, %v1748
  %v1755 = vunpack.c.l.b16 %v1738
  %v1756 = vunpack.c.l.b16 %v1739
  %v1757 = vunpack.c.l.b16 %v1740
  %v1758 = vunpack.c.l.b16 %v1741
  %v1759 = vpack.c.b16 %v1756, %v1755
  %v1760 = vpack.c.b16 %v1758, %v1757
  %v1764 = vsel %vm277, %v1742, 0
  %1766 = vmatprep.subr.bf16.mxu0 0
  %1767 = vmatpush1.bf16.msra.mxu0 %v1759
  %1768 = vmatprep.subr.bf16.mxu0 0
  %1769 = vmatpush1.bf16.msra.mxu0 %v1760
  %1770 = vmatprep.subr.bf16.mxu0 0
  %1771 = vmatpush1.bf16.msra.mxu0 0
  %1772 = vmatprep.subr.bf16.mxu0 0
  %1773 = vmatpush1.bf16.msra.mxu0 0
  %1774 = vmatprep.subr.bf16.mxu0 0
  %1775 = vmatpush1.bf16.msra.mxu0 0
  %1776 = vmatprep.subr.bf16.mxu0 0
  %1777 = vmatpush1.bf16.msra.mxu0 0
  %1778 = vmatprep.subr.bf16.mxu0 0
  %1779 = vmatpush1.bf16.msra.mxu0 0
  %1780 = vmatprep.subr.bf16.mxu0 0
  %1781 = vmatpush1.bf16.msra.mxu0 0
  %1782 = vmatprep.subr.bf16.mxu0 0
  %1783 = vmatpush1.bf16.msra.mxu0 0
  %1784 = vmatprep.subr.bf16.mxu0 0
  %1785 = vmatpush1.bf16.msra.mxu0 0
  %1786 = vmatprep.subr.bf16.mxu0 0
  %1787 = vmatpush1.bf16.msra.mxu0 0
  %1788 = vmatprep.subr.bf16.mxu0 0
  %1789 = vmatpush1.bf16.msra.mxu0 0
  %1790 = vmatprep.subr.bf16.mxu0 0
  %1791 = vmatpush1.bf16.msra.mxu0 0
  %1792 = vmatprep.subr.bf16.mxu0 0
  %1793 = vmatpush1.bf16.msra.mxu0 0
  %1794 = vmatprep.subr.bf16.mxu0 0
  %1795 = vmatpush1.bf16.msra.mxu0 0
  %1796 = vmatprep.subr.bf16.mxu0 0
  %1797 = vmatpush1.bf16.msra.mxu0 0
  %1798 = vmatprep.mubr.bf16.mxu0 0
  %1799 = vmatmul.mubr.bf16.gmra.mrb[0].mxu0 %v1764
  %v1800 = vpop.f32.mrb[0].mxu0
  %v1801 = vadd.f32 %v1749, %v1800
  %v1802 = vpop.f32.mrb[0].mxu0
  %v1803 = vpop.f32.mrb[0].mxu0
  %v1804 = vpop.f32.mrb[0].mxu0
  %1805 = vdwg.mxu0
  %v1806 = vmul.f32 %v1801, %v1801
  %v1807 = vmul.f32 %v1801, %v1806
  %v1808 = vmul.f32 %v1807, 0.044715
  %v1809 = vadd.f32 %v1801, %v1808
  %v1810 = vmul.f32 %v1809, 0.7978846
  %v1811 = vtanh.pop %v1810
  %v1812 = vadd.f32 %v1811, 1.0
  %v1813 = vmul.f32 %v1812, 0.5
  %v1814 = vmul.f32 %v1801, %v1813
  %s1815 = scalar_lea.vmem %s13, 64
  %v1816 = vld [vmem:[%s1815] sm:$0xf]
  %v1817 = vld [vmem:[%s1815 + $0x4] sm:$0xf]
  %v1818 = vld [vmem:[%s1815 + $0x8] sm:$0xf]
  %v1819 = vld [vmem:[%s1815 + $0xc] sm:$0xf]
  %v1820 = vld [vmem:[%s1815 + $0x10] sm:$0xf]
  %v1821 = vld [vmem:[%s1815 + $0x14] sm:$0xf]
  %v1822 = vld [vmem:[%s1815 + $0x18] sm:$0xf]
  %v1823 = vld [vmem:[%s1815 + $0x1c] sm:$0xf]
  %v1824 = vld [vmem:[%s1815 + $0x20] sm:$0xf]
  %v1825 = vld [vmem:[%s1815 + $0x24] sm:$0xf]
  %v1826 = vld [vmem:[%s1815 + $0x28] sm:$0xf]
  %v1827 = vld [vmem:[%s1815 + $0x2c] sm:$0xf]
  %v1828 = vld [vmem:[%s1815 + $0x30] sm:$0xf]
  %v1829 = vld [vmem:[%s1815 + $0x34] sm:$0xf]
  %v1830 = vld [vmem:[%s1815 + $0x38] sm:$0xf]
  %v1831 = vld [vmem:[%s1815 + $0x3c] sm:$0xf]
  %v1832 = vpack.c.bf16 %v1814, %v1814
  %v1849 = vunpack.c.l.b16 %v1816
  %v1850 = vunpack.c.l.b16 %v1817
  %v1851 = vunpack.c.l.b16 %v1818
  %v1852 = vunpack.c.l.b16 %v1819
  %v1853 = vunpack.c.l.b16 %v1820
  %v1854 = vunpack.c.l.b16 %v1821
  %v1855 = vunpack.c.l.b16 %v1822
  %v1856 = vunpack.c.l.b16 %v1823
  %v1857 = vunpack.c.l.b16 %v1824
  %v1858 = vunpack.c.l.b16 %v1825
  %v1859 = vunpack.c.l.b16 %v1826
  %v1860 = vunpack.c.l.b16 %v1827
  %v1861 = vunpack.c.l.b16 %v1828
  %v1862 = vunpack.c.l.b16 %v1829
  %v1863 = vunpack.c.l.b16 %v1830
  %v1864 = vunpack.c.l.b16 %v1831
  %v1865 = vpack.c.b16 %v1850, %v1849
  %v1866 = vpack.c.b16 %v1852, %v1851
  %v1867 = vpack.c.b16 %v1854, %v1853
  %v1868 = vpack.c.b16 %v1856, %v1855
  %v1869 = vpack.c.b16 %v1858, %v1857
  %v1870 = vpack.c.b16 %v1860, %v1859
  %v1871 = vpack.c.b16 %v1862, %v1861
  %v1872 = vpack.c.b16 %v1864, %v1863
  %1881 = vmatprep.subr.bf16.mxu0 0
  %1882 = vmatpush1.bf16.msra.mxu0 %v1865
  %1883 = vmatprep.subr.bf16.mxu0 0
  %1884 = vmatpush1.bf16.msra.mxu0 %v1866
  %1885 = vmatprep.subr.bf16.mxu0 0
  %1886 = vmatpush1.bf16.msra.mxu0 %v1867
  %1887 = vmatprep.subr.bf16.mxu0 0
  %1888 = vmatpush1.bf16.msra.mxu0 %v1868
  %1889 = vmatprep.subr.bf16.mxu0 0
  %1890 = vmatpush1.bf16.msra.mxu0 %v1869
  %1891 = vmatprep.subr.bf16.mxu0 0
  %1892 = vmatpush1.bf16.msra.mxu0 %v1870
  %1893 = vmatprep.subr.bf16.mxu0 0
  %1894 = vmatpush1.bf16.msra.mxu0 %v1871
  %1895 = vmatprep.subr.bf16.mxu0 0
  %1896 = vmatpush1.bf16.msra.mxu0 %v1872
  %1897 = vmatprep.subr.bf16.mxu0 0
  %1898 = vmatpush1.bf16.msra.mxu0 0
  %1899 = vmatprep.subr.bf16.mxu0 0
  %1900 = vmatpush1.bf16.msra.mxu0 0
  %1901 = vmatprep.subr.bf16.mxu0 0
  %1902 = vmatpush1.bf16.msra.mxu0 0
  %1903 = vmatprep.subr.bf16.mxu0 0
  %1904 = vmatpush1.bf16.msra.mxu0 0
  %1905 = vmatprep.subr.bf16.mxu0 0
  %1906 = vmatpush1.bf16.msra.mxu0 0
  %1907 = vmatprep.subr.bf16.mxu0 0
  %1908 = vmatpush1.bf16.msra.mxu0 0
  %1909 = vmatprep.subr.bf16.mxu0 0
  %1910 = vmatpush1.bf16.msra.mxu0 0
  %1911 = vmatprep.subr.bf16.mxu0 0
  %1912 = vmatpush1.bf16.msra.mxu0 0
  %1913 = vmatprep.mubr.bf16.mxu0 0
  %1914 = vmatmul.mubr.bf16.gmra.mrb[0].mxu0 %v1832
  %v1915 = vpop.f32.mrb[0].mxu0
  %v1916 = vadd.f32 0.0, %v1915
  %v1917 = vpop.f32.mrb[0].mxu0
  %v1918 = vpop.f32.mrb[0].mxu0
  %v1919 = vpop.f32.mrb[0].mxu0
  %1920 = vdwg.mxu0
  %v1921 = vadd.f32 %v1703, %v1916
  %s1922 = scalar_lea.vmem %s14, 1
  %v1923 = vld [vmem:[%s1922] sm:$0x1]
  %v1925 = vlaneseq
  %v1926 = vshrl.u32 %v1925, 7
  %v1927 = vsub.s32 0, %v1926
  %v1928 = vrot.slane %v1923, %v1927
  %v1930 = vadd.f32 %v1921, %v1928
  %v1931 = vld [vmem:[%s15] sm:$0x1]
  %v1932 = vld [vmem:[%s16] sm:$0x1]
  %v1933 = vsel %vm218, %v1930, 0.0
  %1934 = vadd.xlane.f32.xlu0 %v1933
  %v1935 = vpop.xlane.xlu0 %1934
  %v1936 = vmul.f32 %v1930, %v1930
  %v1937 = vsel %vm218, %v1936, 0.0
  %1938 = vadd.xlane.f32.xlu0 %v1937
  %v1939 = vpop.xlane.xlu0 %1938
  %v1940 = vmul.f32 %v1935, 0.03125
  %v1941 = vmul.f32 %v1939, 0.03125
  %v1942 = vmul.f32 %v1940, %v1940
  %v1943 = vsub.f32 %v1941, %v1942
  %v1944 = vsub.f32 %v1930, %v1940
  %v1945 = vadd.f32 %v1943, 1e-06
  %v1946 = vrsqrt.pop %v1945
  %v1947 = vmul.f32 %v1944, %v1946
  %v1949 = vlaneseq
  %v1950 = vshrl.u32 %v1949, 7
  %v1951 = vsub.s32 0, %v1950
  %v1952 = vrot.slane %v1931, %v1951
  %v1954 = vmul.f32 %v1947, %v1952
  %v1956 = vlaneseq
  %v1957 = vshrl.u32 %v1956, 7
  %v1958 = vsub.s32 0, %v1957
  %v1959 = vrot.slane %v1932, %v1958
  %v1961 = vadd.f32 %v1954, %v1959
  %v1962 = vld [vmem:[%s17] sm:$0xf]
  %v1963 = vld [vmem:[%s17 + $0x4] sm:$0xf]
  %v1964 = vld [vmem:[%s17 + $0x8] sm:$0xf]
  %v1965 = vld [vmem:[%s17 + $0xc] sm:$0xf]
  %v1966 = vpack.c.bf16 %v1961, %v1961
  %v1967 = vld [vmem:[%s18] sm:$0x1]
  %v1969 = vlaneseq
  %v1970 = vshrl.u32 %v1969, 7
  %v1971 = vsub.s32 0, %v1970
  %v1972 = vrot.slane %v1967, %v1971
  %v1978 = vunpack.c.l.b16 %v1962
  %v1979 = vunpack.c.l.b16 %v1963
  %v1980 = vunpack.c.l.b16 %v1964
  %v1981 = vunpack.c.l.b16 %v1965
  %v1982 = vpack.c.b16 %v1979, %v1978
  %v1983 = vpack.c.b16 %v1981, %v1980
  %v1987 = vsel %vm277, %v1966, 0
  %1989 = vmatprep.subr.bf16.mxu0 0
  %1990 = vmatpush1.bf16.msra.mxu0 %v1982
  %1991 = vmatprep.subr.bf16.mxu0 0
  %1992 = vmatpush1.bf16.msra.mxu0 %v1983
  %1993 = vmatprep.subr.bf16.mxu0 0
  %1994 = vmatpush1.bf16.msra.mxu0 0
  %1995 = vmatprep.subr.bf16.mxu0 0
  %1996 = vmatpush1.bf16.msra.mxu0 0
  %1997 = vmatprep.subr.bf16.mxu0 0
  %1998 = vmatpush1.bf16.msra.mxu0 0
  %1999 = vmatprep.subr.bf16.mxu0 0
  %2000 = vmatpush1.bf16.msra.mxu0 0
  %2001 = vmatprep.subr.bf16.mxu0 0
  %2002 = vmatpush1.bf16.msra.mxu0 0
  %2003 = vmatprep.subr.bf16.mxu0 0
  %2004 = vmatpush1.bf16.msra.mxu0 0
  %2005 = vmatprep.subr.bf16.mxu0 0
  %2006 = vmatpush1.bf16.msra.mxu0 0
  %2007 = vmatprep.subr.bf16.mxu0 0
  %2008 = vmatpush1.bf16.msra.mxu0 0
  %2009 = vmatprep.subr.bf16.mxu0 0
  %2010 = vmatpush1.bf16.msra.mxu0 0
  %2011 = vmatprep.subr.bf16.mxu0 0
  %2012 = vmatpush1.bf16.msra.mxu0 0
  %2013 = vmatprep.subr.bf16.mxu0 0
  %2014 = vmatpush1.bf16.msra.mxu0 0
  %2015 = vmatprep.subr.bf16.mxu0 0
  %2016 = vmatpush1.bf16.msra.mxu0 0
  %2017 = vmatprep.subr.bf16.mxu0 0
  %2018 = vmatpush1.bf16.msra.mxu0 0
  %2019 = vmatprep.subr.bf16.mxu0 0
  %2020 = vmatpush1.bf16.msra.mxu0 0
  %2021 = vmatprep.mubr.bf16.mxu0 0
  %2022 = vmatmul.mubr.bf16.gmra.mrb[0].mxu0 %v1987
  %v2023 = vpop.f32.mrb[0].mxu0
  %v2024 = vadd.f32 %v1972, %v2023
  %v2025 = vpop.f32.mrb[0].mxu0
  %v2026 = vpop.f32.mrb[0].mxu0
  %v2027 = vpop.f32.mrb[0].mxu0
  %2028 = vdwg.mxu0
  %2029 = vst.msk [vmem:[%s21] sm:$0x1f] %vm218, %v2024
  %v2030 = vld [vmem:[%s19] sm:$0xf]
  %v2031 = vld [vmem:[%s19 + $0x4] sm:$0xf]
  %v2032 = vld [vmem:[%s19 + $0x8] sm:$0xf]
  %v2033 = vld [vmem:[%s19 + $0xc] sm:$0xf]
  %v2034 = vld [vmem:[%s20] sm:$0x1]
  %v2036 = vlaneseq
  %v2037 = vshrl.u32 %v2036, 7
  %v2038 = vsub.s32 0, %v2037
  %v2039 = vrot.slane %v2034, %v2038
  %v2045 = vunpack.c.l.b16 %v2030
  %v2046 = vunpack.c.l.b16 %v2031
  %v2047 = vunpack.c.l.b16 %v2032
  %v2048 = vunpack.c.l.b16 %v2033
  %v2049 = vpack.c.b16 %v2046, %v2045
  %v2050 = vpack.c.b16 %v2048, %v2047
  %2053 = vmatprep.subr.bf16.mxu0 0
  %2054 = vmatpush1.bf16.msra.mxu0 %v2049
  %2055 = vmatprep.subr.bf16.mxu0 0
  %2056 = vmatpush1.bf16.msra.mxu0 %v2050
  %2057 = vmatprep.subr.bf16.mxu0 0
  %2058 = vmatpush1.bf16.msra.mxu0 0
  %2059 = vmatprep.subr.bf16.mxu0 0
  %2060 = vmatpush1.bf16.msra.mxu0 0
  %2061 = vmatprep.subr.bf16.mxu0 0
  %2062 = vmatpush1.bf16.msra.mxu0 0
  %2063 = vmatprep.subr.bf16.mxu0 0
  %2064 = vmatpush1.bf16.msra.mxu0 0
  %2065 = vmatprep.subr.bf16.mxu0 0
  %2066 = vmatpush1.bf16.msra.mxu0 0
  %2067 = vmatprep.subr.bf16.mxu0 0
  %2068 = vmatpush1.bf16.msra.mxu0 0
  %2069 = vmatprep.subr.bf16.mxu0 0
  %2070 = vmatpush1.bf16.msra.mxu0 0
  %2071 = vmatprep.subr.bf16.mxu0 0
  %2072 = vmatpush1.bf16.msra.mxu0 0
  %2073 = vmatprep.subr.bf16.mxu0 0
  %2074 = vmatpush1.bf16.msra.mxu0 0
  %2075 = vmatprep.subr.bf16.mxu0 0
  %2076 = vmatpush1.bf16.msra.mxu0 0
  %2077 = vmatprep.subr.bf16.mxu0 0
  %2078 = vmatpush1.bf16.msra.mxu0 0
  %2079 = vmatprep.subr.bf16.mxu0 0
  %2080 = vmatpush1.bf16.msra.mxu0 0
  %2081 = vmatprep.subr.bf16.mxu0 0
  %2082 = vmatpush1.bf16.msra.mxu0 0
  %2083 = vmatprep.subr.bf16.mxu0 0
  %2084 = vmatpush1.bf16.msra.mxu0 0
  %2085 = vmatprep.mubr.bf16.mxu0 0
  %2086 = vmatmul.mubr.bf16.gmra.mrb[0].mxu0 %v1987
  %v2087 = vpop.f32.mrb[0].mxu0
  %v2088 = vadd.f32 %v2039, %v2087
  %v2089 = vpop.f32.mrb[0].mxu0
  %v2090 = vpop.f32.mrb[0].mxu0
  %v2091 = vpop.f32.mrb[0].mxu0
  %2092 = vdwg.mxu0
  %2093 = vst.msk [vmem:[%s22] sm:$0x1f] %vm218, %v2088
  %s2094 = scalar_lea.vmem %s17, 16
  %v2095 = vld [vmem:[%s2094] sm:$0xf]
  %v2096 = vld [vmem:[%s2094 + $0x4] sm:$0xf]
  %v2097 = vld [vmem:[%s2094 + $0x8] sm:$0xf]
  %v2098 = vld [vmem:[%s2094 + $0xc] sm:$0xf]
  %s2099 = scalar_lea.vmem %s18, 1
  %v2100 = vld [vmem:[%s2099] sm:$0x1]
  %v2102 = vlaneseq
  %v2103 = vshrl.u32 %v2102, 7
  %v2104 = vsub.s32 0, %v2103
  %v2105 = vrot.slane %v2100, %v2104
  %v2111 = vunpack.c.l.b16 %v2095
  %v2112 = vunpack.c.l.b16 %v2096
  %v2113 = vunpack.c.l.b16 %v2097
  %v2114 = vunpack.c.l.b16 %v2098
  %v2115 = vpack.c.b16 %v2112, %v2111
  %v2116 = vpack.c.b16 %v2114, %v2113
  %2119 = vmatprep.subr.bf16.mxu0 0
  %2120 = vmatpush1.bf16.msra.mxu0 %v2115
  %2121 = vmatprep.subr.bf16.mxu0 0
  %2122 = vmatpush1.bf16.msra.mxu0 %v2116
  %2123 = vmatprep.subr.bf16.mxu0 0
  %2124 = vmatpush1.bf16.msra.mxu0 0
  %2125 = vmatprep.subr.bf16.mxu0 0
  %2126 = vmatpush1.bf16.msra.mxu0 0
  %2127 = vmatprep.subr.bf16.mxu0 0
  %2128 = vmatpush1.bf16.msra.mxu0 0
  %2129 = vmatprep.subr.bf16.mxu0 0
  %2130 = vmatpush1.bf16.msra.mxu0 0
  %2131 = vmatprep.subr.bf16.mxu0 0
  %2132 = vmatpush1.bf16.msra.mxu0 0
  %2133 = vmatprep.subr.bf16.mxu0 0
  %2134 = vmatpush1.bf16.msra.mxu0 0
  %2135 = vmatprep.subr.bf16.mxu0 0
  %2136 = vmatpush1.bf16.msra.mxu0 0
  %2137 = vmatprep.subr.bf16.mxu0 0
  %2138 = vmatpush1.bf16.msra.mxu0 0
  %2139 = vmatprep.subr.bf16.mxu0 0
  %2140 = vmatpush1.bf16.msra.mxu0 0
  %2141 = vmatprep.subr.bf16.mxu0 0
  %2142 = vmatpush1.bf16.msra.mxu0 0
  %2143 = vmatprep.subr.bf16.mxu0 0
  %2144 = vmatpush1.bf16.msra.mxu0 0
  %2145 = vmatprep.subr.bf16.mxu0 0
  %2146 = vmatpush1.bf16.msra.mxu0 0
  %2147 = vmatprep.subr.bf16.mxu0 0
  %2148 = vmatpush1.bf16.msra.mxu0 0
  %2149 = vmatprep.subr.bf16.mxu0 0
  %2150 = vmatpush1.bf16.msra.mxu0 0
  %2151 = vmatprep.mubr.bf16.mxu0 0
  %2152 = vmatmul.mubr.bf16.gmra.mrb[0].mxu0 %v1987
  %v2153 = vpop.f32.mrb[0].mxu0
  %v2154 = vadd.f32 %v2105, %v2153
  %v2155 = vpop.f32.mrb[0].mxu0
  %v2156 = vpop.f32.mrb[0].mxu0
  %v2157 = vpop.f32.mrb[0].mxu0
  %2158 = vdwg.mxu0
  %s2159 = scalar_lea.vmem %s21, 8
  %2160 = vst.msk [vmem:[%s2159] sm:$0x1f] %vm218, %v2154
  %s2161 = scalar_lea.vmem %s19, 16
  %v2162 = vld [vmem:[%s2161] sm:$0xf]
  %v2163 = vld [vmem:[%s2161 + $0x4] sm:$0xf]
  %v2164 = vld [vmem:[%s2161 + $0x8] sm:$0xf]
  %v2165 = vld [vmem:[%s2161 + $0xc] sm:$0xf]
  %s2166 = scalar_lea.vmem %s20, 1
  %v2167 = vld [vmem:[%s2166] sm:$0x1]
  %v2169 = vlaneseq
  %v2170 = vshrl.u32 %v2169, 7
  %v2171 = vsub.s32 0, %v2170
  %v2172 = vrot.slane %v2167, %v2171
  %v2178 = vunpack.c.l.b16 %v2162
  %v2179 = vunpack.c.l.b16 %v2163
  %v2180 = vunpack.c.l.b16 %v2164
  %v2181 = vunpack.c.l.b16 %v2165
  %v2182 = vpack.c.b16 %v2179, %v2178
  %v2183 = vpack.c.b16 %v2181, %v2180
  %2186 = vmatprep.subr.bf16.mxu0 0
  %2187 = vmatpush1.bf16.msra.mxu0 %v2182
  %2188 = vmatprep.subr.bf16.mxu0 0
  %2189 = vmatpush1.bf16.msra.mxu0 %v2183
  %2190 = vmatprep.subr.bf16.mxu0 0
  %2191 = vmatpush1.bf16.msra.mxu0 0
  %2192 = vmatprep.subr.bf16.mxu0 0
  %2193 = vmatpush1.bf16.msra.mxu0 0
  %2194 = vmatprep.subr.bf16.mxu0 0
  %2195 = vmatpush1.bf16.msra.mxu0 0
  %2196 = vmatprep.subr.bf16.mxu0 0
  %2197 = vmatpush1.bf16.msra.mxu0 0
  %2198 = vmatprep.subr.bf16.mxu0 0
  %2199 = vmatpush1.bf16.msra.mxu0 0
  %2200 = vmatprep.subr.bf16.mxu0 0
  %2201 = vmatpush1.bf16.msra.mxu0 0
  %2202 = vmatprep.subr.bf16.mxu0 0
  %2203 = vmatpush1.bf16.msra.mxu0 0
  %2204 = vmatprep.subr.bf16.mxu0 0
  %2205 = vmatpush1.bf16.msra.mxu0 0
  %2206 = vmatprep.subr.bf16.mxu0 0
  %2207 = vmatpush1.bf16.msra.mxu0 0
  %2208 = vmatprep.subr.bf16.mxu0 0
  %2209 = vmatpush1.bf16.msra.mxu0 0
  %2210 = vmatprep.subr.bf16.mxu0 0
  %2211 = vmatpush1.bf16.msra.mxu0 0
  %2212 = vmatprep.subr.bf16.mxu0 0
  %2213 = vmatpush1.bf16.msra.mxu0 0
  %2214 = vmatprep.subr.bf16.mxu0 0
  %2215 = vmatpush1.bf16.msra.mxu0 0
  %2216 = vmatprep.subr.bf16.mxu0 0
  %2217 = vmatpush1.bf16.msra.mxu0 0
  %2218 = vmatprep.mubr.bf16.mxu0 0
  %2219 = vmatmul.mubr.bf16.gmra.mrb[0].mxu0 %v1987
  %v2220 = vpop.f32.mrb[0].mxu0
  %v2221 = vadd.f32 %v2172, %v2220
  %v2222 = vpop.f32.mrb[0].mxu0
  %v2223 = vpop.f32.mrb[0].mxu0
  %v2224 = vpop.f32.mrb[0].mxu0
  %2225 = vdwg.mxu0
  %s2226 = scalar_lea.vmem %s22, 8
  %2227 = vst.msk [vmem:[%s2226] sm:$0x1f] %vm218, %v2221
  // Predicated region
  $region86: #{_albef_device.2} parent=0 // pred_check
    _
  $region87: #{_albef_device.2} parent=0 // pred_check_branch
    %2229 = sbr.rel (0) target = $region89
  $region88: #{_albef_device.2} parent=0 // pred_region
    _
  $region89: #{_albef_device.2} parent=0 // pred_fallthru
    _
  // Predicated region
  $region90: #{_albef_device.2} parent=0 // pred_check
    _
  $region91: #{_albef_device.2} parent=0 // pred_check_branch
    %2231 = sbr.rel (0) target = $region93
  $region92: #{_albef_device.2} parent=0 // pred_region
    _
  $region93: #{_albef_device.2} parent=0 // pred_fallthru
    _
  // Predicated region
  $region94: #{_albef_device.2} parent=0 // pred_check
    _
  $region95: #{_albef_device.2} parent=0 // pred_check_branch
    %2233 = sbr.rel (0) target = $region97
  $region96: #{_albef_device.2} parent=0 // pred_region
    _
  $region97: #{_albef_device.2} parent=0 // pred_fallthru
    _
  // Predicated region
  $region98: #{_albef_device.2} parent=0 // pred_check
    _
  $region99: #{_albef_device.2} parent=0 // pred_check_branch
    %2235 = sbr.rel (0) target = $region101
  $region100: #{_albef_device.2} parent=0 // pred_region
    _
  $region101: #{_albef_device.2} parent=0 // pred_fallthru
    _

// kernel: _albef_device.3
$region0: #{_albef_device.3}
  #allocation0 [shape = 'u32[]', space=smem, size = 0x4, offset = 0x4, fixed_abs, tag = 'smem constant byte address 0x4 - core index']
  #allocation1 [shape = 'u32[144,128]{1,0:T(1,128)}', space=vmem, size = 0x12000, scoped, tag = 'internal scratch']
  #allocation2 [shape = 's32[1]{0}', space=sflag, size = 0x4, scoped, tag = 'scoped memory for _albef_device.3']
  #allocation3 [shape = 's32[1]{0:T(128)S(6)}', space=smem, size = 0x200, scoped, tag = 'prefetched SMEM operand 0']
  %s0 = inlined_call_operand.smem [shape: u32[32], index: -1, kind: input, shape index: {}]
  %s1 = sld [smem:[%s0]]
  %s2 = scalar_lea.smem %s0, 1
  %s3 = sld [smem:[%s2]]
  %s4 = scalar_lea.smem %s0, 2
  %s5 = sld [smem:[%s4]]
  %s6 = scalar_lea.smem %s0, 3
  %s7 = sld [smem:[%s6]]
  %s8 = scalar_lea.smem %s0, 4
  %s9 = sld [smem:[%s8]]
  %s10 = scalar_lea.smem %s0, 5
  %s11 = sld [smem:[%s10]]
  %s12 = scalar_lea.smem %s0, 6
  %s13 = sld [smem:[%s12]]
  %s14 = scalar_lea.smem %s0, 7
  %s15 = sld [smem:[%s14]]
  %s16 = scalar_lea.smem %s0, 8
  %s17 = sld [smem:[%s16]]
  %s18 = scalar_lea.smem %s0, 9
  %s19 = sld [smem:[%s18]]
  %s20 = scalar_lea.smem %s0, 10
  %s21 = sld [smem:[%s20]]
  %s22 = scalar_lea.smem %s0, 11
  %s23 = sld [smem:[%s22]]
  %s24 = scalar_lea.smem %s0, 12
  %s25 = sld [smem:[%s24]]
  %s26 = scalar_lea.smem %s0, 13
  %s27 = sld [smem:[%s26]]
  %s28 = scalar_lea.smem %s0, 14
  %s29 = sld [smem:[%s28]]
  %s30 = scalar_lea.smem %s0, 15
  %s31 = sld [smem:[%s30]]
  %s32 = scalar_lea.smem %s0, 16
  %s33 = sld [smem:[%s32]]
  %s34 = scalar_lea.smem %s0, 17
  %s35 = sld [smem:[%s34]]
  %s36 = scalar_lea.smem %s0, 18
  %s37 = sld [smem:[%s36]]
  %s38 = scalar_lea.smem %s0, 19
  %s39 = sld [smem:[%s38]]
  %s40 = scalar_lea.smem %s0, 20
  %s41 = sld [smem:[%s40]]
  %s42 = scalar_lea.smem %s0, 21
  %s43 = sld [smem:[%s42]]
  %s44 = scalar_lea.smem %s0, 22
  %s45 = sld [smem:[%s44]]
  %s46 = scalar_lea.smem %s0, 23
  %s47 = sld [smem:[%s46]]
  %s48 = scalar_lea.smem %s0, 24
  %s49 = sld [smem:[%s48]]
  %s50 = scalar_lea.smem %s0, 25
  %s51 = sld [smem:[%s50]]
  %s52 = scalar_lea.smem %s0, 26
  %s53 = sld [smem:[%s52]]
  %s54 = scalar_lea.smem %s0, 27
  %s55 = sld [smem:[%s54]]
  %s56 = scalar_lea.smem %s0, 28
  %s57 = sld [smem:[%s56]]
  %s58 = scalar_lea.smem %s0, 29
  %s59 = sld [smem:[%s58]]
  %s60 = scalar_lea.smem %s0, 30
  %s61 = sld [smem:[%s60]]
  %s62 = scalar_lea.smem %s0, 31
  %s63 = sld [smem:[%s62]]
  %s64 = sld [smem:[#allocation0]]
  $region161: #{_albef_device.3} parent=0
    _
  %s66 = ssub.s32 1, %s64
  %s67 = scalar_select 0, %s66, %s64
  %68 = sst [smem:[#allocation3]] %s1
  loop: start=0, step=1, limit=9
  $region2: #{_albef_device.3} parent=0 // loop_pre_header
    _
  $region3: #{_albef_device.3} parent=0 // loop_header
    %s70 = sphi 0, %s74
    %p71 = scmp.ge.s32.totalorder %s70, 9
    %s80 = sphi 0, %s82
    %s83 = sphi 0, %s80
    %s84 = sphi 0, %s83
    %s100 = sphi 0, %s84
    %s104 = sphi 0, %s104
    %s106 = sphi 0, %s104
    %s107 = sphi 0, %s106
    %s121 = sphi 0, %s107
    %s125 = sphi 0, %s125
    %s127 = sphi 0, %s125
    %s128 = sphi 0, %s127
    %s142 = sphi 0, %s128
    %s146 = sphi 0, %s146
    %s148 = sphi 0, %s146
    %s149 = sphi 0, %s148
    %s163 = sphi 0, %s149
    %s167 = sphi 0, %s167
    %s169 = sphi 0, %s167
    %s170 = sphi 0, %s169
    %s184 = sphi 0, %s170
    %s188 = sphi 0, %s188
    %s190 = sphi 0, %s188
    %s191 = sphi 0, %s190
    %s205 = sphi 0, %s191
    %s209 = sphi 0, %s209
    %s211 = sphi 0, %s209
    %s212 = sphi 0, %s211
    %s226 = sphi 0, %s212
    %s230 = sphi 0, %s230
    %s232 = sphi 0, %s230
    %s233 = sphi 0, %s232
    %s247 = sphi 0, %s233
    %s251 = sphi 0, %s251
    %s253 = sphi 0, %s251
    %s254 = sphi 0, %s253
    %s268 = sphi 0, %s254
    %s272 = sphi 0, %s272
    %s274 = sphi 0, %s272
    %s275 = sphi 0, %s274
    %s289 = sphi 0, %s275
    %s293 = sphi 0, %s293
    %s295 = sphi 0, %s293
    %s296 = sphi 0, %s295
    %s310 = sphi 0, %s296
    %s314 = sphi 0, %s314
    %s316 = sphi 0, %s314
    %s317 = sphi 0, %s316
    %s331 = sphi 0, %s317
    %s335 = sphi 0, %s335
    %s337 = sphi 0, %s335
    %s338 = sphi 0, %s337
    %s352 = sphi 0, %s338
    %s356 = sphi 0, %s356
    %s358 = sphi 0, %s356
    %s359 = sphi 0, %s358
    %s373 = sphi 0, %s359
    %s377 = sphi 0, %s377
    %s379 = sphi 0, %s377
    %s380 = sphi 0, %s379
    %s394 = sphi 0, %s380
    %s398 = sphi 0, %s398
    %s400 = sphi 0, %s398
    %s401 = sphi 0, %s400
    %s415 = sphi 0, %s401
    %s419 = sphi 0, %s419
    %s421 = sphi 0, %s419
    %s422 = sphi 0, %s421
    %s436 = sphi 0, %s422
    %s440 = sphi 0, %s440
    %s442 = sphi 0, %s440
    %s443 = sphi 0, %s442
    %s457 = sphi 0, %s443
    %s461 = sphi 0, %s461
    %s463 = sphi 0, %s461
    %s464 = sphi 0, %s463
    %s478 = sphi 0, %s464
    %s482 = sphi 0, %s482
    %s484 = sphi 0, %s482
    %s485 = sphi 0, %s484
    %s499 = sphi 0, %s485
    %s503 = sphi 0, %s503
    %s505 = sphi 0, %s503
    %s506 = sphi 0, %s505
    %s520 = sphi 0, %s506
    %s524 = sphi 0, %s524
    %s526 = sphi 0, %s524
    %s527 = sphi 0, %s526
    %s541 = sphi 0, %s527
    %s545 = sphi 0, %s545
    %s547 = sphi 0, %s545
    %s548 = sphi 0, %s547
    %s562 = sphi 0, %s548
    %s566 = sphi 0, %s566
    %s568 = sphi 0, %s566
    %s569 = sphi 0, %s568
    %s583 = sphi 0, %s569
    %s587 = sphi 0, %s587
    %s589 = sphi 0, %s587
    %s590 = sphi 0, %s589
    %s604 = sphi 0, %s590
    %s608 = sphi 0, %s608
    %s610 = sphi 0, %s608
    %s611 = sphi 0, %s610
    %s625 = sphi 0, %s611
    %s629 = sphi 0, %s629
    %s631 = sphi 0, %s629
    %s632 = sphi 0, %s631
    %s646 = sphi 0, %s632
    %s650 = sphi 0, %s650
    %s652 = sphi 0, %s650
    %s653 = sphi 0, %s652
    %s667 = sphi 0, %s653
    %s671 = sphi 0, %s671
    %s673 = sphi 0, %s671
    %s674 = sphi 0, %s673
    %s688 = sphi 0, %s674
    %s692 = sphi 0, %s692
    %s694 = sphi 0, %s692
    %s695 = sphi 0, %s694
    %s709 = sphi 0, %s695
    %s715 = sphi 0, %s717
    %s718 = sphi 0, %s715
    %s719 = sphi 0, %s718
    %s735 = sphi 0, %s719
  $region4: #{_albef_device.3} parent=0 // loop_header_branch
    %73 = sbr.rel (%p71) target = $region8
  $region5: #{_albef_device.3} parent=0 // loop_body
    %s75 = ssub.s32 %s70, 1
    %s76 = ssub.s32 %s70, 2
    %s77 = sadd.s32 %s70, 1
    %s78 = ssub.s32 %s70, %s77
    %p79 = scmp.eq.s32.totalorder %s78, 0
    %s81 = sadd.s32 %s80, 1
    %s82 = scalar_select %p79, %s80, %s81
    %p85 = pneg %p79
    %p86 = scmp.eq.s32.totalorder %s70, 6
    %p87 = por %p85, %p86
    %p88 = scmp.ne.s32.totalorder %s80, %s83
    %p89 = scmp.eq.s32.totalorder %s70, 0
    %p90 = por %p88, %p89
    %p91 = scmp.ne.s32.totalorder %s80, %s83
    %p92 = scmp.eq.s32.totalorder %s75, 6
    %p93 = por %p91, %p92
    %p94 = scmp.ne.s32.totalorder %s83, %s84
    %p95 = scmp.eq.s32.totalorder %s75, 0
    %p96 = por %p94, %p95
    %p97 = scmp.ne.s32.totalorder %s83, %s84
    %p98 = scmp.eq.s32.totalorder %s76, 6
    %p99 = por %p97, %p98
    %p101 = scmp.ne.s32.totalorder %s84, %s100
    %p102 = scmp.eq.s32.totalorder %s76, 0
    %p103 = por %p101, %p102
    %s105 = sadd.s32 %s104, 1
    %p108 = scmp.eq.s32.totalorder %s70, 6
    %p109 = scmp.ne.s32.totalorder %s104, %s106
    %p110 = scmp.eq.s32.totalorder %s70, 0
    %p111 = por %p109, %p110
    %p112 = scmp.ne.s32.totalorder %s104, %s106
    %p113 = scmp.eq.s32.totalorder %s75, 6
    %p114 = por %p112, %p113
    %p115 = scmp.ne.s32.totalorder %s106, %s107
    %p116 = scmp.eq.s32.totalorder %s75, 0
    %p117 = por %p115, %p116
    %p118 = scmp.ne.s32.totalorder %s106, %s107
    %p119 = scmp.eq.s32.totalorder %s76, 6
    %p120 = por %p118, %p119
    %p122 = scmp.ne.s32.totalorder %s107, %s121
    %p123 = scmp.eq.s32.totalorder %s76, 0
    %p124 = por %p122, %p123
    %s126 = sadd.s32 %s125, 1
    %p129 = scmp.eq.s32.totalorder %s70, 6
    %p130 = scmp.ne.s32.totalorder %s125, %s127
    %p131 = scmp.eq.s32.totalorder %s70, 0
    %p132 = por %p130, %p131
    %p133 = scmp.ne.s32.totalorder %s125, %s127
    %p134 = scmp.eq.s32.totalorder %s75, 6
    %p135 = por %p133, %p134
    %p136 = scmp.ne.s32.totalorder %s127, %s128
    %p137 = scmp.eq.s32.totalorder %s75, 0
    %p138 = por %p136, %p137
    %p139 = scmp.ne.s32.totalorder %s127, %s128
    %p140 = scmp.eq.s32.totalorder %s76, 6
    %p141 = por %p139, %p140
    %p143 = scmp.ne.s32.totalorder %s128, %s142
    %p144 = scmp.eq.s32.totalorder %s76, 0
    %p145 = por %p143, %p144
    %s147 = sadd.s32 %s146, 1
    %p150 = scmp.eq.s32.totalorder %s70, 6
    %p151 = scmp.ne.s32.totalorder %s146, %s148
    %p152 = scmp.eq.s32.totalorder %s70, 0
    %p153 = por %p151, %p152
    %p154 = scmp.ne.s32.totalorder %s146, %s148
    %p155 = scmp.eq.s32.totalorder %s75, 6
    %p156 = por %p154, %p155
    %p157 = scmp.ne.s32.totalorder %s148, %s149
    %p158 = scmp.eq.s32.totalorder %s75, 0
    %p159 = por %p157, %p158
    %p160 = scmp.ne.s32.totalorder %s148, %s149
    %p161 = scmp.eq.s32.totalorder %s76, 6
    %p162 = por %p160, %p161
    %p164 = scmp.ne.s32.totalorder %s149, %s163
    %p165 = scmp.eq.s32.totalorder %s76, 0
    %p166 = por %p164, %p165
    %s168 = sadd.s32 %s167, 1
    %p171 = scmp.eq.s32.totalorder %s70, 6
    %p172 = scmp.ne.s32.totalorder %s167, %s169
    %p173 = scmp.eq.s32.totalorder %s70, 0
    %p174 = por %p172, %p173
    %p175 = scmp.ne.s32.totalorder %s167, %s169
    %p176 = scmp.eq.s32.totalorder %s75, 6
    %p177 = por %p175, %p176
    %p178 = scmp.ne.s32.totalorder %s169, %s170
    %p179 = scmp.eq.s32.totalorder %s75, 0
    %p180 = por %p178, %p179
    %p181 = scmp.ne.s32.totalorder %s169, %s170
    %p182 = scmp.eq.s32.totalorder %s76, 6
    %p183 = por %p181, %p182
    %p185 = scmp.ne.s32.totalorder %s170, %s184
    %p186 = scmp.eq.s32.totalorder %s76, 0
    %p187 = por %p185, %p186
    %s189 = sadd.s32 %s188, 1
    %p192 = scmp.eq.s32.totalorder %s70, 6
    %p193 = scmp.ne.s32.totalorder %s188, %s190
    %p194 = scmp.eq.s32.totalorder %s70, 0
    %p195 = por %p193, %p194
    %p196 = scmp.ne.s32.totalorder %s188, %s190
    %p197 = scmp.eq.s32.totalorder %s75, 6
    %p198 = por %p196, %p197
    %p199 = scmp.ne.s32.totalorder %s190, %s191
    %p200 = scmp.eq.s32.totalorder %s75, 0
    %p201 = por %p199, %p200
    %p202 = scmp.ne.s32.totalorder %s190, %s191
    %p203 = scmp.eq.s32.totalorder %s76, 6
    %p204 = por %p202, %p203
    %p206 = scmp.ne.s32.totalorder %s191, %s205
    %p207 = scmp.eq.s32.totalorder %s76, 0
    %p208 = por %p206, %p207
    %s210 = sadd.s32 %s209, 1
    %p213 = scmp.eq.s32.totalorder %s70, 6
    %p214 = scmp.ne.s32.totalorder %s209, %s211
    %p215 = scmp.eq.s32.totalorder %s70, 0
    %p216 = por %p214, %p215
    %p217 = scmp.ne.s32.totalorder %s209, %s211
    %p218 = scmp.eq.s32.totalorder %s75, 6
    %p219 = por %p217, %p218
    %p220 = scmp.ne.s32.totalorder %s211, %s212
    %p221 = scmp.eq.s32.totalorder %s75, 0
    %p222 = por %p220, %p221
    %p223 = scmp.ne.s32.totalorder %s211, %s212
    %p224 = scmp.eq.s32.totalorder %s76, 6
    %p225 = por %p223, %p224
    %p227 = scmp.ne.s32.totalorder %s212, %s226
    %p228 = scmp.eq.s32.totalorder %s76, 0
    %p229 = por %p227, %p228
    %s231 = sadd.s32 %s230, 1
    %p234 = scmp.eq.s32.totalorder %s70, 6
    %p235 = scmp.ne.s32.totalorder %s230, %s232
    %p236 = scmp.eq.s32.totalorder %s70, 0
    %p237 = por %p235, %p236
    %p238 = scmp.ne.s32.totalorder %s230, %s232
    %p239 = scmp.eq.s32.totalorder %s75, 6
    %p240 = por %p238, %p239
    %p241 = scmp.ne.s32.totalorder %s232, %s233
    %p242 = scmp.eq.s32.totalorder %s75, 0
    %p243 = por %p241, %p242
    %p244 = scmp.ne.s32.totalorder %s232, %s233
    %p245 = scmp.eq.s32.totalorder %s76, 6
    %p246 = por %p244, %p245
    %p248 = scmp.ne.s32.totalorder %s233, %s247
    %p249 = scmp.eq.s32.totalorder %s76, 0
    %p250 = por %p248, %p249
    %s252 = sadd.s32 %s251, 1
    %p255 = scmp.eq.s32.totalorder %s70, 6
    %p256 = scmp.ne.s32.totalorder %s251, %s253
    %p257 = scmp.eq.s32.totalorder %s70, 0
    %p258 = por %p256, %p257
    %p259 = scmp.ne.s32.totalorder %s251, %s253
    %p260 = scmp.eq.s32.totalorder %s75, 6
    %p261 = por %p259, %p260
    %p262 = scmp.ne.s32.totalorder %s253, %s254
    %p263 = scmp.eq.s32.totalorder %s75, 0
    %p264 = por %p262, %p263
    %p265 = scmp.ne.s32.totalorder %s253, %s254
    %p266 = scmp.eq.s32.totalorder %s76, 6
    %p267 = por %p265, %p266
    %p269 = scmp.ne.s32.totalorder %s254, %s268
    %p270 = scmp.eq.s32.totalorder %s76, 0
    %p271 = por %p269, %p270
    %s273 = sadd.s32 %s272, 1
    %p276 = scmp.eq.s32.totalorder %s70, 6
    %p277 = scmp.ne.s32.totalorder %s272, %s274
    %p278 = scmp.eq.s32.totalorder %s70, 0
    %p279 = por %p277, %p278
    %p280 = scmp.ne.s32.totalorder %s272, %s274
    %p281 = scmp.eq.s32.totalorder %s75, 6
    %p282 = por %p280, %p281
    %p283 = scmp.ne.s32.totalorder %s274, %s275
    %p284 = scmp.eq.s32.totalorder %s75, 0
    %p285 = por %p283, %p284
    %p286 = scmp.ne.s32.totalorder %s274, %s275
    %p287 = scmp.eq.s32.totalorder %s76, 6
    %p288 = por %p286, %p287
    %p290 = scmp.ne.s32.totalorder %s275, %s289
    %p291 = scmp.eq.s32.totalorder %s76, 0
    %p292 = por %p290, %p291
    %s294 = sadd.s32 %s293, 1
    %p297 = scmp.eq.s32.totalorder %s70, 6
    %p298 = scmp.ne.s32.totalorder %s293, %s295
    %p299 = scmp.eq.s32.totalorder %s70, 0
    %p300 = por %p298, %p299
    %p301 = scmp.ne.s32.totalorder %s293, %s295
    %p302 = scmp.eq.s32.totalorder %s75, 6
    %p303 = por %p301, %p302
    %p304 = scmp.ne.s32.totalorder %s295, %s296
    %p305 = scmp.eq.s32.totalorder %s75, 0
    %p306 = por %p304, %p305
    %p307 = scmp.ne.s32.totalorder %s295, %s296
    %p308 = scmp.eq.s32.totalorder %s76, 6
    %p309 = por %p307, %p308
    %p311 = scmp.ne.s32.totalorder %s296, %s310
    %p312 = scmp.eq.s32.totalorder %s76, 0
    %p313 = por %p311, %p312
    %s315 = sadd.s32 %s314, 1
    %p318 = scmp.eq.s32.totalorder %s70, 6
    %p319 = scmp.ne.s32.totalorder %s314, %s316
    %p320 = scmp.eq.s32.totalorder %s70, 0
    %p321 = por %p319, %p320
    %p322 = scmp.ne.s32.totalorder %s314, %s316
    %p323 = scmp.eq.s32.totalorder %s75, 6
    %p324 = por %p322, %p323
    %p325 = scmp.ne.s32.totalorder %s316, %s317
    %p326 = scmp.eq.s32.totalorder %s75, 0
    %p327 = por %p325, %p326
    %p328 = scmp.ne.s32.totalorder %s316, %s317
    %p329 = scmp.eq.s32.totalorder %s76, 6
    %p330 = por %p328, %p329
    %p332 = scmp.ne.s32.totalorder %s317, %s331
    %p333 = scmp.eq.s32.totalorder %s76, 0
    %p334 = por %p332, %p333
    %s336 = sadd.s32 %s335, 1
    %p339 = scmp.eq.s32.totalorder %s70, 6
    %p340 = scmp.ne.s32.totalorder %s335, %s337
    %p341 = scmp.eq.s32.totalorder %s70, 0
    %p342 = por %p340, %p341
    %p343 = scmp.ne.s32.totalorder %s335, %s337
    %p344 = scmp.eq.s32.totalorder %s75, 6
    %p345 = por %p343, %p344
    %p346 = scmp.ne.s32.totalorder %s337, %s338
    %p347 = scmp.eq.s32.totalorder %s75, 0
    %p348 = por %p346, %p347
    %p349 = scmp.ne.s32.totalorder %s337, %s338
    %p350 = scmp.eq.s32.totalorder %s76, 6
    %p351 = por %p349, %p350
    %p353 = scmp.ne.s32.totalorder %s338, %s352
    %p354 = scmp.eq.s32.totalorder %s76, 0
    %p355 = por %p353, %p354
    %s357 = sadd.s32 %s356, 1
    %p360 = scmp.eq.s32.totalorder %s70, 6
    %p361 = scmp.ne.s32.totalorder %s356, %s358
    %p362 = scmp.eq.s32.totalorder %s70, 0
    %p363 = por %p361, %p362
    %p364 = scmp.ne.s32.totalorder %s356, %s358
    %p365 = scmp.eq.s32.totalorder %s75, 6
    %p366 = por %p364, %p365
    %p367 = scmp.ne.s32.totalorder %s358, %s359
    %p368 = scmp.eq.s32.totalorder %s75, 0
    %p369 = por %p367, %p368
    %p370 = scmp.ne.s32.totalorder %s358, %s359
    %p371 = scmp.eq.s32.totalorder %s76, 6
    %p372 = por %p370, %p371
    %p374 = scmp.ne.s32.totalorder %s359, %s373
    %p375 = scmp.eq.s32.totalorder %s76, 0
    %p376 = por %p374, %p375
    %s378 = sadd.s32 %s377, 1
    %p381 = scmp.eq.s32.totalorder %s70, 6
    %p382 = scmp.ne.s32.totalorder %s377, %s379
    %p383 = scmp.eq.s32.totalorder %s70, 0
    %p384 = por %p382, %p383
    %p385 = scmp.ne.s32.totalorder %s377, %s379
    %p386 = scmp.eq.s32.totalorder %s75, 6
    %p387 = por %p385, %p386
    %p388 = scmp.ne.s32.totalorder %s379, %s380
    %p389 = scmp.eq.s32.totalorder %s75, 0
    %p390 = por %p388, %p389
    %p391 = scmp.ne.s32.totalorder %s379, %s380
    %p392 = scmp.eq.s32.totalorder %s76, 6
    %p393 = por %p391, %p392
    %p395 = scmp.ne.s32.totalorder %s380, %s394
    %p396 = scmp.eq.s32.totalorder %s76, 0
    %p397 = por %p395, %p396
    %s399 = sadd.s32 %s398, 1
    %p402 = scmp.eq.s32.totalorder %s70, 6
    %p403 = scmp.ne.s32.totalorder %s398, %s400
    %p404 = scmp.eq.s32.totalorder %s70, 0
    %p405 = por %p403, %p404
    %p406 = scmp.ne.s32.totalorder %s398, %s400
    %p407 = scmp.eq.s32.totalorder %s75, 6
    %p408 = por %p406, %p407
    %p409 = scmp.ne.s32.totalorder %s400, %s401
    %p410 = scmp.eq.s32.totalorder %s75, 0
    %p411 = por %p409, %p410
    %p412 = scmp.ne.s32.totalorder %s400, %s401
    %p413 = scmp.eq.s32.totalorder %s76, 6
    %p414 = por %p412, %p413
    %p416 = scmp.ne.s32.totalorder %s401, %s415
    %p417 = scmp.eq.s32.totalorder %s76, 0
    %p418 = por %p416, %p417
    %s420 = sadd.s32 %s419, 1
    %p423 = scmp.eq.s32.totalorder %s70, 6
    %p424 = scmp.ne.s32.totalorder %s419, %s421
    %p425 = scmp.eq.s32.totalorder %s70, 0
    %p426 = por %p424, %p425
    %p427 = scmp.ne.s32.totalorder %s419, %s421
    %p428 = scmp.eq.s32.totalorder %s75, 6
    %p429 = por %p427, %p428
    %p430 = scmp.ne.s32.totalorder %s421, %s422
    %p431 = scmp.eq.s32.totalorder %s75, 0
    %p432 = por %p430, %p431
    %p433 = scmp.ne.s32.totalorder %s421, %s422
    %p434 = scmp.eq.s32.totalorder %s76, 6
    %p435 = por %p433, %p434
    %p437 = scmp.ne.s32.totalorder %s422, %s436
    %p438 = scmp.eq.s32.totalorder %s76, 0
    %p439 = por %p437, %p438
    %s441 = sadd.s32 %s440, 1
    %p444 = scmp.eq.s32.totalorder %s70, 6
    %p445 = scmp.ne.s32.totalorder %s440, %s442
    %p446 = scmp.eq.s32.totalorder %s70, 0
    %p447 = por %p445, %p446
    %p448 = scmp.ne.s32.totalorder %s440, %s442
    %p449 = scmp.eq.s32.totalorder %s75, 6
    %p450 = por %p448, %p449
    %p451 = scmp.ne.s32.totalorder %s442, %s443
    %p452 = scmp.eq.s32.totalorder %s75, 0
    %p453 = por %p451, %p452
    %p454 = scmp.ne.s32.totalorder %s442, %s443
    %p455 = scmp.eq.s32.totalorder %s76, 6
    %p456 = por %p454, %p455
    %p458 = scmp.ne.s32.totalorder %s443, %s457
    %p459 = scmp.eq.s32.totalorder %s76, 0
    %p460 = por %p458, %p459
    %s462 = sadd.s32 %s461, 1
    %p465 = scmp.eq.s32.totalorder %s70, 6
    %p466 = scmp.ne.s32.totalorder %s461, %s463
    %p467 = scmp.eq.s32.totalorder %s70, 0
    %p468 = por %p466, %p467
    %p469 = scmp.ne.s32.totalorder %s461, %s463
    %p470 = scmp.eq.s32.totalorder %s75, 6
    %p471 = por %p469, %p470
    %p472 = scmp.ne.s32.totalorder %s463, %s464
    %p473 = scmp.eq.s32.totalorder %s75, 0
    %p474 = por %p472, %p473
    %p475 = scmp.ne.s32.totalorder %s463, %s464
    %p476 = scmp.eq.s32.totalorder %s76, 6
    %p477 = por %p475, %p476
    %p479 = scmp.ne.s32.totalorder %s464, %s478
    %p480 = scmp.eq.s32.totalorder %s76, 0
    %p481 = por %p479, %p480
    %s483 = sadd.s32 %s482, 1
    %p486 = scmp.eq.s32.totalorder %s70, 6
    %p487 = scmp.ne.s32.totalorder %s482, %s484
    %p488 = scmp.eq.s32.totalorder %s70, 0
    %p489 = por %p487, %p488
    %p490 = scmp.ne.s32.totalorder %s482, %s484
    %p491 = scmp.eq.s32.totalorder %s75, 6
    %p492 = por %p490, %p491
    %p493 = scmp.ne.s32.totalorder %s484, %s485
    %p494 = scmp.eq.s32.totalorder %s75, 0
    %p495 = por %p493, %p494
    %p496 = scmp.ne.s32.totalorder %s484, %s485
    %p497 = scmp.eq.s32.totalorder %s76, 6
    %p498 = por %p496, %p497
    %p500 = scmp.ne.s32.totalorder %s485, %s499
    %p501 = scmp.eq.s32.totalorder %s76, 0
    %p502 = por %p500, %p501
    %s504 = sadd.s32 %s503, 1
    %p507 = scmp.eq.s32.totalorder %s70, 6
    %p508 = scmp.ne.s32.totalorder %s503, %s505
    %p509 = scmp.eq.s32.totalorder %s70, 0
    %p510 = por %p508, %p509
    %p511 = scmp.ne.s32.totalorder %s503, %s505
    %p512 = scmp.eq.s32.totalorder %s75, 6
    %p513 = por %p511, %p512
    %p514 = scmp.ne.s32.totalorder %s505, %s506
    %p515 = scmp.eq.s32.totalorder %s75, 0
    %p516 = por %p514, %p515
    %p517 = scmp.ne.s32.totalorder %s505, %s506
    %p518 = scmp.eq.s32.totalorder %s76, 6
    %p519 = por %p517, %p518
    %p521 = scmp.ne.s32.totalorder %s506, %s520
    %p522 = scmp.eq.s32.totalorder %s76, 0
    %p523 = por %p521, %p522
    %s525 = sadd.s32 %s524, 1
    %p528 = scmp.eq.s32.totalorder %s70, 6
    %p529 = scmp.ne.s32.totalorder %s524, %s526
    %p530 = scmp.eq.s32.totalorder %s70, 0
    %p531 = por %p529, %p530
    %p532 = scmp.ne.s32.totalorder %s524, %s526
    %p533 = scmp.eq.s32.totalorder %s75, 6
    %p534 = por %p532, %p533
    %p535 = scmp.ne.s32.totalorder %s526, %s527
    %p536 = scmp.eq.s32.totalorder %s75, 0
    %p537 = por %p535, %p536
    %p538 = scmp.ne.s32.totalorder %s526, %s527
    %p539 = scmp.eq.s32.totalorder %s76, 6
    %p540 = por %p538, %p539
    %p542 = scmp.ne.s32.totalorder %s527, %s541
    %p543 = scmp.eq.s32.totalorder %s76, 0
    %p544 = por %p542, %p543
    %s546 = sadd.s32 %s545, 1
    %p549 = scmp.eq.s32.totalorder %s70, 6
    %p550 = scmp.ne.s32.totalorder %s545, %s547
    %p551 = scmp.eq.s32.totalorder %s70, 0
    %p552 = por %p550, %p551
    %p553 = scmp.ne.s32.totalorder %s545, %s547
    %p554 = scmp.eq.s32.totalorder %s75, 6
    %p555 = por %p553, %p554
    %p556 = scmp.ne.s32.totalorder %s547, %s548
    %p557 = scmp.eq.s32.totalorder %s75, 0
    %p558 = por %p556, %p557
    %p559 = scmp.ne.s32.totalorder %s547, %s548
    %p560 = scmp.eq.s32.totalorder %s76, 6
    %p561 = por %p559, %p560
    %p563 = scmp.ne.s32.totalorder %s548, %s562
    %p564 = scmp.eq.s32.totalorder %s76, 0
    %p565 = por %p563, %p564
    %s567 = sadd.s32 %s566, 1
    %p570 = scmp.eq.s32.totalorder %s70, 6
    %p571 = scmp.ne.s32.totalorder %s566, %s568
    %p572 = scmp.eq.s32.totalorder %s70, 0
    %p573 = por %p571, %p572
    %p574 = scmp.ne.s32.totalorder %s566, %s568
    %p575 = scmp.eq.s32.totalorder %s75, 6
    %p576 = por %p574, %p575
    %p577 = scmp.ne.s32.totalorder %s568, %s569
    %p578 = scmp.eq.s32.totalorder %s75, 0
    %p579 = por %p577, %p578
    %p580 = scmp.ne.s32.totalorder %s568, %s569
    %p581 = scmp.eq.s32.totalorder %s76, 6
    %p582 = por %p580, %p581
    %p584 = scmp.ne.s32.totalorder %s569, %s583
    %p585 = scmp.eq.s32.totalorder %s76, 0
    %p586 = por %p584, %p585
    %s588 = sadd.s32 %s587, 1
    %p591 = scmp.eq.s32.totalorder %s70, 6
    %p592 = scmp.ne.s32.totalorder %s587, %s589
    %p593 = scmp.eq.s32.totalorder %s70, 0
    %p594 = por %p592, %p593
    %p595 = scmp.ne.s32.totalorder %s587, %s589
    %p596 = scmp.eq.s32.totalorder %s75, 6
    %p597 = por %p595, %p596
    %p598 = scmp.ne.s32.totalorder %s589, %s590
    %p599 = scmp.eq.s32.totalorder %s75, 0
    %p600 = por %p598, %p599
    %p601 = scmp.ne.s32.totalorder %s589, %s590
    %p602 = scmp.eq.s32.totalorder %s76, 6
    %p603 = por %p601, %p602
    %p605 = scmp.ne.s32.totalorder %s590, %s604
    %p606 = scmp.eq.s32.totalorder %s76, 0
    %p607 = por %p605, %p606
    %s609 = sadd.s32 %s608, 1
    %p612 = scmp.eq.s32.totalorder %s70, 6
    %p613 = scmp.ne.s32.totalorder %s608, %s610
    %p614 = scmp.eq.s32.totalorder %s70, 0
    %p615 = por %p613, %p614
    %p616 = scmp.ne.s32.totalorder %s608, %s610
    %p617 = scmp.eq.s32.totalorder %s75, 6
    %p618 = por %p616, %p617
    %p619 = scmp.ne.s32.totalorder %s610, %s611
    %p620 = scmp.eq.s32.totalorder %s75, 0
    %p621 = por %p619, %p620
    %p622 = scmp.ne.s32.totalorder %s610, %s611
    %p623 = scmp.eq.s32.totalorder %s76, 6
    %p624 = por %p622, %p623
    %p626 = scmp.ne.s32.totalorder %s611, %s625
    %p627 = scmp.eq.s32.totalorder %s76, 0
    %p628 = por %p626, %p627
    %s630 = sadd.s32 %s629, 1
    %p633 = scmp.eq.s32.totalorder %s70, 6
    %p634 = scmp.ne.s32.totalorder %s629, %s631
    %p635 = scmp.eq.s32.totalorder %s70, 0
    %p636 = por %p634, %p635
    %p637 = scmp.ne.s32.totalorder %s629, %s631
    %p638 = scmp.eq.s32.totalorder %s75, 6
    %p639 = por %p637, %p638
    %p640 = scmp.ne.s32.totalorder %s631, %s632
    %p641 = scmp.eq.s32.totalorder %s75, 0
    %p642 = por %p640, %p641
    %p643 = scmp.ne.s32.totalorder %s631, %s632
    %p644 = scmp.eq.s32.totalorder %s76, 6
    %p645 = por %p643, %p644
    %p647 = scmp.ne.s32.totalorder %s632, %s646
    %p648 = scmp.eq.s32.totalorder %s76, 0
    %p649 = por %p647, %p648
    %s651 = sadd.s32 %s650, 1
    %p654 = scmp.eq.s32.totalorder %s70, 6
    %p655 = scmp.ne.s32.totalorder %s650, %s652
    %p656 = scmp.eq.s32.totalorder %s70, 0
    %p657 = por %p655, %p656
    %p658 = scmp.ne.s32.totalorder %s650, %s652
    %p659 = scmp.eq.s32.totalorder %s75, 6
    %p660 = por %p658, %p659
    %p661 = scmp.ne.s32.totalorder %s652, %s653
    %p662 = scmp.eq.s32.totalorder %s75, 0
    %p663 = por %p661, %p662
    %p664 = scmp.ne.s32.totalorder %s652, %s653
    %p665 = scmp.eq.s32.totalorder %s76, 6
    %p666 = por %p664, %p665
    %p668 = scmp.ne.s32.totalorder %s653, %s667
    %p669 = scmp.eq.s32.totalorder %s76, 0
    %p670 = por %p668, %p669
    %s672 = sadd.s32 %s671, 1
    %p675 = scmp.eq.s32.totalorder %s70, 6
    %p676 = scmp.ne.s32.totalorder %s671, %s673
    %p677 = scmp.eq.s32.totalorder %s70, 0
    %p678 = por %p676, %p677
    %p679 = scmp.ne.s32.totalorder %s671, %s673
    %p680 = scmp.eq.s32.totalorder %s75, 6
    %p681 = por %p679, %p680
    %p682 = scmp.ne.s32.totalorder %s673, %s674
    %p683 = scmp.eq.s32.totalorder %s75, 0
    %p684 = por %p682, %p683
    %p685 = scmp.ne.s32.totalorder %s673, %s674
    %p686 = scmp.eq.s32.totalorder %s76, 6
    %p687 = por %p685, %p686
    %p689 = scmp.ne.s32.totalorder %s674, %s688
    %p690 = scmp.eq.s32.totalorder %s76, 0
    %p691 = por %p689, %p690
    %s693 = sadd.s32 %s692, 1
    %p696 = scmp.eq.s32.totalorder %s70, 6
    %p697 = scmp.ne.s32.totalorder %s692, %s694
    %p698 = scmp.eq.s32.totalorder %s70, 0
    %p699 = por %p697, %p698
    %p700 = scmp.ne.s32.totalorder %s692, %s694
    %p701 = scmp.eq.s32.totalorder %s75, 6
    %p702 = por %p700, %p701
    %p703 = scmp.ne.s32.totalorder %s694, %s695
    %p704 = scmp.eq.s32.totalorder %s75, 0
    %p705 = por %p703, %p704
    %p706 = scmp.ne.s32.totalorder %s694, %s695
    %p707 = scmp.eq.s32.totalorder %s76, 6
    %p708 = por %p706, %p707
    %p710 = scmp.ne.s32.totalorder %s695, %s709
    %p711 = scmp.eq.s32.totalorder %s76, 0
    %p712 = por %p710, %p711
    %s713 = ssub.s32 %s70, %s77
    %p714 = scmp.eq.s32.totalorder %s713, 0
    %s716 = sadd.s32 %s715, 1
    %s717 = scalar_select %p714, %s715, %s716
    %p720 = pneg %p714
    %p721 = scmp.eq.s32.totalorder %s70, 6
    %p722 = por %p720, %p721
    %p723 = scmp.ne.s32.totalorder %s715, %s718
    %p724 = scmp.eq.s32.totalorder %s70, 0
    %p725 = por %p723, %p724
    %p726 = scmp.ne.s32.totalorder %s715, %s718
    %p727 = scmp.eq.s32.totalorder %s75, 6
    %p728 = por %p726, %p727
    %p729 = scmp.ne.s32.totalorder %s718, %s719
    %p730 = scmp.eq.s32.totalorder %s75, 0
    %p731 = por %p729, %p730
    %p732 = scmp.ne.s32.totalorder %s718, %s719
    %p733 = scmp.eq.s32.totalorder %s76, 6
    %p734 = por %p732, %p733
    %p736 = scmp.ne.s32.totalorder %s719, %s735
    %p737 = scmp.eq.s32.totalorder %s76, 0
    %p738 = por %p736, %p737
    %p739 = scmp.le.s32.totalorder 1, %s70
    %p740 = scmp.lt.s32.totalorder %s70, 8
    %p741 = pnand %p739, %p740
    %p742 = pneg %p741
    // Predicated region
    $region9: #{_albef_device.3} parent=5 // pred_check
      _
    $region10: #{_albef_device.3} parent=5 // pred_check_branch
      %744 = sbr.rel (%p741) target = $region12
    $region11: #{_albef_device.3} parent=5 // pred_region
      %s745 = ssub.s32 %s70, 1
      // Predicated region
      $region13: #{_albef_device.3} parent=11 // pred_check
        %p746 = pneg %p117
      $region14: #{_albef_device.3} parent=11 // pred_check_branch
        %748 = sbr.rel (%p746) target = $region16
      $region15: #{_albef_device.3} parent=11 // pred_region
        _
      $region16: #{_albef_device.3} parent=11 // pred_fallthru
        _
      // Predicated region
      $region17: #{_albef_device.3} parent=11 // pred_check
        %p749 = pneg %p138
      $region18: #{_albef_device.3} parent=11 // pred_check_branch
        %751 = sbr.rel (%p749) target = $region20
      $region19: #{_albef_device.3} parent=11 // pred_region
        _
      $region20: #{_albef_device.3} parent=11 // pred_fallthru
        _
      // Predicated region
      $region21: #{_albef_device.3} parent=11 // pred_check
        %p752 = pneg %p159
      $region22: #{_albef_device.3} parent=11 // pred_check_branch
        %754 = sbr.rel (%p752) target = $region24
      $region23: #{_albef_device.3} parent=11 // pred_region
        _
      $region24: #{_albef_device.3} parent=11 // pred_fallthru
        _
      // Predicated region
      $region25: #{_albef_device.3} parent=11 // pred_check
        %p755 = pneg %p180
      $region26: #{_albef_device.3} parent=11 // pred_check_branch
        %757 = sbr.rel (%p755) target = $region28
      $region27: #{_albef_device.3} parent=11 // pred_region
        _
      $region28: #{_albef_device.3} parent=11 // pred_fallthru
        _
      // Predicated region
      $region29: #{_albef_device.3} parent=11 // pred_check
        %p758 = pneg %p201
      $region30: #{_albef_device.3} parent=11 // pred_check_branch
        %760 = sbr.rel (%p758) target = $region32
      $region31: #{_albef_device.3} parent=11 // pred_region
        _
      $region32: #{_albef_device.3} parent=11 // pred_fallthru
        _
      // Predicated region
      $region33: #{_albef_device.3} parent=11 // pred_check
        %p761 = pneg %p222
      $region34: #{_albef_device.3} parent=11 // pred_check_branch
        %763 = sbr.rel (%p761) target = $region36
      $region35: #{_albef_device.3} parent=11 // pred_region
        _
      $region36: #{_albef_device.3} parent=11 // pred_fallthru
        _
      // Predicated region
      $region37: #{_albef_device.3} parent=11 // pred_check
        %p764 = pneg %p243
      $region38: #{_albef_device.3} parent=11 // pred_check_branch
        %766 = sbr.rel (%p764) target = $region40
      $region39: #{_albef_device.3} parent=11 // pred_region
        _
      $region40: #{_albef_device.3} parent=11 // pred_fallthru
        _
      // Predicated region
      $region41: #{_albef_device.3} parent=11 // pred_check
        %p767 = pneg %p264
      $region42: #{_albef_device.3} parent=11 // pred_check_branch
        %769 = sbr.rel (%p767) target = $region44
      $region43: #{_albef_device.3} parent=11 // pred_region
        _
      $region44: #{_albef_device.3} parent=11 // pred_fallthru
        _
      // Predicated region
      $region45: #{_albef_device.3} parent=11 // pred_check
        %p770 = pneg %p285
      $region46: #{_albef_device.3} parent=11 // pred_check_branch
        %772 = sbr.rel (%p770) target = $region48
      $region47: #{_albef_device.3} parent=11 // pred_region
        _
      $region48: #{_albef_device.3} parent=11 // pred_fallthru
        _
      // Predicated region
      $region49: #{_albef_device.3} parent=11 // pred_check
        %p773 = pneg %p306
      $region50: #{_albef_device.3} parent=11 // pred_check_branch
        %775 = sbr.rel (%p773) target = $region52
      $region51: #{_albef_device.3} parent=11 // pred_region
        _
      $region52: #{_albef_device.3} parent=11 // pred_fallthru
        _
      // Predicated region
      $region53: #{_albef_device.3} parent=11 // pred_check
        %p776 = pneg %p327
      $region54: #{_albef_device.3} parent=11 // pred_check_branch
        %778 = sbr.rel (%p776) target = $region56
      $region55: #{_albef_device.3} parent=11 // pred_region
        _
      $region56: #{_albef_device.3} parent=11 // pred_fallthru
        _
      // Predicated region
      $region57: #{_albef_device.3} parent=11 // pred_check
        %p779 = pneg %p348
      $region58: #{_albef_device.3} parent=11 // pred_check_branch
        %781 = sbr.rel (%p779) target = $region60
      $region59: #{_albef_device.3} parent=11 // pred_region
        _
      $region60: #{_albef_device.3} parent=11 // pred_fallthru
        _
      // Predicated region
      $region61: #{_albef_device.3} parent=11 // pred_check
        %p782 = pneg %p369
      $region62: #{_albef_device.3} parent=11 // pred_check_branch
        %784 = sbr.rel (%p782) target = $region64
      $region63: #{_albef_device.3} parent=11 // pred_region
        _
      $region64: #{_albef_device.3} parent=11 // pred_fallthru
        _
      // Predicated region
      $region65: #{_albef_device.3} parent=11 // pred_check
        %p785 = pneg %p390
      $region66: #{_albef_device.3} parent=11 // pred_check_branch
        %787 = sbr.rel (%p785) target = $region68
      $region67: #{_albef_device.3} parent=11 // pred_region
        _
      $region68: #{_albef_device.3} parent=11 // pred_fallthru
        _
      // Predicated region
      $region69: #{_albef_device.3} parent=11 // pred_check
        %p788 = pneg %p411
      $region70: #{_albef_device.3} parent=11 // pred_check_branch
        %790 = sbr.rel (%p788) target = $region72
      $region71: #{_albef_device.3} parent=11 // pred_region
        _
      $region72: #{_albef_device.3} parent=11 // pred_fallthru
        _
      // Predicated region
      $region73: #{_albef_device.3} parent=11 // pred_check
        %p791 = pneg %p432
      $region74: #{_albef_device.3} parent=11 // pred_check_branch
        %793 = sbr.rel (%p791) target = $region76
      $region75: #{_albef_device.3} parent=11 // pred_region
        _
      $region76: #{_albef_device.3} parent=11 // pred_fallthru
        _
      // Predicated region
      $region77: #{_albef_device.3} parent=11 // pred_check
        %p794 = pneg %p453
      $region78: #{_albef_device.3} parent=11 // pred_check_branch
        %796 = sbr.rel (%p794) target = $region80
      $region79: #{_albef_device.3} parent=11 // pred_region
        _
      $region80: #{_albef_device.3} parent=11 // pred_fallthru
        _
      // Predicated region
      $region81: #{_albef_device.3} parent=11 // pred_check
        %p797 = pneg %p474
      $region82: #{_albef_device.3} parent=11 // pred_check_branch
        %799 = sbr.rel (%p797) target = $region84
      $region83: #{_albef_device.3} parent=11 // pred_region
        _
      $region84: #{_albef_device.3} parent=11 // pred_fallthru
        _
      // Predicated region
      $region85: #{_albef_device.3} parent=11 // pred_check
        %p800 = pneg %p495
      $region86: #{_albef_device.3} parent=11 // pred_check_branch
        %802 = sbr.rel (%p800) target = $region88
      $region87: #{_albef_device.3} parent=11 // pred_region
        _
      $region88: #{_albef_device.3} parent=11 // pred_fallthru
        _
      // Predicated region
      $region89: #{_albef_device.3} parent=11 // pred_check
        %p803 = pneg %p516
      $region90: #{_albef_device.3} parent=11 // pred_check_branch
        %805 = sbr.rel (%p803) target = $region92
      $region91: #{_albef_device.3} parent=11 // pred_region
        _
      $region92: #{_albef_device.3} parent=11 // pred_fallthru
        _
      // Predicated region
      $region93: #{_albef_device.3} parent=11 // pred_check
        %p806 = pneg %p537
      $region94: #{_albef_device.3} parent=11 // pred_check_branch
        %808 = sbr.rel (%p806) target = $region96
      $region95: #{_albef_device.3} parent=11 // pred_region
        _
      $region96: #{_albef_device.3} parent=11 // pred_fallthru
        _
      // Predicated region
      $region97: #{_albef_device.3} parent=11 // pred_check
        %p809 = pneg %p558
      $region98: #{_albef_device.3} parent=11 // pred_check_branch
        %811 = sbr.rel (%p809) target = $region100
      $region99: #{_albef_device.3} parent=11 // pred_region
        _
      $region100: #{_albef_device.3} parent=11 // pred_fallthru
        _
      // Predicated region
      $region101: #{_albef_device.3} parent=11 // pred_check
        %p812 = pneg %p579
      $region102: #{_albef_device.3} parent=11 // pred_check_branch
        %814 = sbr.rel (%p812) target = $region104
      $region103: #{_albef_device.3} parent=11 // pred_region
        _
      $region104: #{_albef_device.3} parent=11 // pred_fallthru
        _
      // Predicated region
      $region105: #{_albef_device.3} parent=11 // pred_check
        %p815 = pneg %p600
      $region106: #{_albef_device.3} parent=11 // pred_check_branch
        %817 = sbr.rel (%p815) target = $region108
      $region107: #{_albef_device.3} parent=11 // pred_region
        _
      $region108: #{_albef_device.3} parent=11 // pred_fallthru
        _
      // Predicated region
      $region109: #{_albef_device.3} parent=11 // pred_check
        %p818 = pneg %p621
      $region110: #{_albef_device.3} parent=11 // pred_check_branch
        %820 = sbr.rel (%p818) target = $region112
      $region111: #{_albef_device.3} parent=11 // pred_region
        _
      $region112: #{_albef_device.3} parent=11 // pred_fallthru
        _
      // Predicated region
      $region113: #{_albef_device.3} parent=11 // pred_check
        %p821 = pneg %p642
      $region114: #{_albef_device.3} parent=11 // pred_check_branch
        %823 = sbr.rel (%p821) target = $region116
      $region115: #{_albef_device.3} parent=11 // pred_region
        _
      $region116: #{_albef_device.3} parent=11 // pred_fallthru
        _
      // Predicated region
      $region117: #{_albef_device.3} parent=11 // pred_check
        %p824 = pneg %p663
      $region118: #{_albef_device.3} parent=11 // pred_check_branch
        %826 = sbr.rel (%p824) target = $region120
      $region119: #{_albef_device.3} parent=11 // pred_region
        _
      $region120: #{_albef_device.3} parent=11 // pred_fallthru
        _
      // Predicated region
      $region121: #{_albef_device.3} parent=11 // pred_check
        %p827 = pneg %p684
      $region122: #{_albef_device.3} parent=11 // pred_check_branch
        %829 = sbr.rel (%p827) target = $region124
      $region123: #{_albef_device.3} parent=11 // pred_region
        _
      $region124: #{_albef_device.3} parent=11 // pred_fallthru
        _
      // Predicated region
      $region125: #{_albef_device.3} parent=11 // pred_check
        %p830 = pneg %p705
      $region126: #{_albef_device.3} parent=11 // pred_check_branch
        %832 = sbr.rel (%p830) target = $region128
      $region127: #{_albef_device.3} parent=11 // pred_region
        _
      $region128: #{_albef_device.3} parent=11 // pred_fallthru
        _
    $region12: #{_albef_device.3} parent=5 // pred_fallthru
      _
    %p833 = scmp.lt.s32.totalorder %s70, 7
    // Predicated region
    $region129: #{_albef_device.3} parent=5 // pred_check
      %p834 = pneg %p833
    $region130: #{_albef_device.3} parent=5 // pred_check_branch
      %836 = sbr.rel (%p834) target = $region132
    $region131: #{_albef_device.3} parent=5 // pred_region
      // Predicated region
      $region133: #{_albef_device.3} parent=131 // pred_check
        %p837 = pneg %p90
      $region134: #{_albef_device.3} parent=131 // pred_check_branch
        %839 = sbr.rel (%p837) target = $region136
      $region135: #{_albef_device.3} parent=131 // pred_region
        %p840 = scmp.lt.s32.totalorder %s70, 6
        %s841 = scalar_select %p840, %s70, 6
        %s842 = smul.addr %s841, 8
        %s843 = scalar_lea.vmem %s3, %s842
      $region136: #{_albef_device.3} parent=131 // pred_fallthru
        _
    $region132: #{_albef_device.3} parent=5 // pred_fallthru
      _
    %p844 = scmp.le.s32.totalorder 1, %s70
    %p845 = scmp.lt.s32.totalorder %s70, 8
    %p846 = pnand %p844, %p845
    %p847 = pneg %p846
    // Predicated region
    $region137: #{_albef_device.3} parent=5 // pred_check
      _
    $region138: #{_albef_device.3} parent=5 // pred_check_branch
      %849 = sbr.rel (%p846) target = $region140
    $region139: #{_albef_device.3} parent=5 // pred_region
      %s850 = ssub.s32 %s70, 1
      %p851 = scmp.lt.s32.totalorder %s75, 6
      %s852 = scalar_select %p851, %s75, 6
      %s853 = smul.addr %s852, 8
      %s854 = scalar_lea.vmem %s3, %s853
      %p855 = pneg %p96
      %p856 = pneg %p93
      %p857 = pneg %p117
      %p858 = pneg %p114
      %p859 = pneg %p138
      %p860 = pneg %p135
      %p861 = pneg %p159
      %p862 = pneg %p156
      %p863 = pneg %p180
      %p864 = pneg %p177
      %p865 = pneg %p201
      %p866 = pneg %p198
      %p867 = pneg %p222
      %p868 = pneg %p219
      %p869 = pneg %p243
      %p870 = pneg %p240
      %p871 = pneg %p264
      %p872 = pneg %p261
      %p873 = pneg %p285
      %p874 = pneg %p282
      %p875 = pneg %p306
      %p876 = pneg %p303
      %p877 = pneg %p327
      %p878 = pneg %p324
      %p879 = pneg %p348
      %p880 = pneg %p345
      %p881 = pneg %p369
      %p882 = pneg %p366
      %p883 = pneg %p390
      %p884 = pneg %p387
      %p885 = pneg %p411
      %p886 = pneg %p408
      %p887 = pneg %p432
      %p888 = pneg %p429
      %p889 = pneg %p453
      %p890 = pneg %p450
      %p891 = pneg %p474
      %p892 = pneg %p471
      %p893 = pneg %p495
      %p894 = pneg %p492
      %p895 = pneg %p516
      %p896 = pneg %p513
      %p897 = pneg %p537
      %p898 = pneg %p534
      %p899 = pneg %p558
      %p900 = pneg %p555
      %p901 = pneg %p579
      %p902 = pneg %p576
      %p903 = pneg %p600
      %p904 = pneg %p597
      %p905 = pneg %p621
      %p906 = pneg %p618
      %p907 = pneg %p642
      %p908 = pneg %p639
      %p909 = pneg %p663
      %p910 = pneg %p660
      %p911 = pneg %p684
      %p912 = pneg %p681
      %p913 = pneg %p705
      %p914 = pneg %p702
      %p915 = pneg %p731
      %p916 = pneg %p728
      %p917 = scmp.lt.s32.totalorder %s75, 6
      %s918 = scalar_select %p917, %s75, 6
      %s919 = scalar_lea.vmem %s63, %s918
      %p920 = scmp.lt.s32.totalorder %s75, 6
      %s921 = scalar_select %p920, %s75, 6
      %s922 = smul.addr %s921, 8
      %s923 = scalar_lea.vmem %s3, %s922
      %p924 = scmp.lt.s32.totalorder %s75, 6
      %s925 = scalar_select %p924, %s75, 6
      %s926 = scalar_lea.vmem %s63, %s925
      %s928 = sadd.s32 %s75, 1
      %s929 = sld [smem:[#allocation3]]
      %p930 = scmp.lt.s32.totalorder %s928, %s929
      // Predicated region
      $region141: #{_albef_device.3} parent=139 // pred_check
        %p931 = pneg %p930
      $region142: #{_albef_device.3} parent=139 // pred_check_branch
        %933 = sbr.rel (%p931) target = $region144
      $region143: #{_albef_device.3} parent=139 // pred_region
        %v934 = vld [vmem:[%s923] sm:$0xff]
        %v935 = vld [vmem:[%s11] sm:$0x1]
        %v936 = vld [vmem:[%s13] sm:$0x1]
        %vm937 = vcmask 261120
        %v938 = vsel %vm937, %v934, 0.0
        %939 = vadd.xlane.f32.xlu0 %v938
        %v940 = vpop.xlane.xlu0 %939
        %v941 = vmul.f32 %v934, %v934
        %v942 = vsel %vm937, %v941, 0.0
        %943 = vadd.xlane.f32.xlu0 %v942
        %v944 = vpop.xlane.xlu0 %943
        %v945 = vmul.f32 %v940, 0.03125
        %v946 = vmul.f32 %v944, 0.03125
        %v947 = vmul.f32 %v945, %v945
        %v948 = vsub.f32 %v946, %v947
        %v949 = vsub.f32 %v934, %v945
        %v950 = vadd.f32 %v948, 1e-12
        %v951 = vrsqrt.pop %v950
        %v952 = vmul.f32 %v949, %v951
        %v954 = vlaneseq
        %v955 = vshrl.u32 %v954, 7
        %v956 = vsub.s32 0, %v955
        %v957 = vrot.slane %v935, %v956
        %v959 = vmul.f32 %v952, %v957
        %v961 = vlaneseq
        %v962 = vshrl.u32 %v961, 7
        %v963 = vsub.s32 0, %v962
        %v964 = vrot.slane %v936, %v963
        %v966 = vadd.f32 %v959, %v964
        %v967 = vld [vmem:[%s5] sm:$0x1]
        %v968 = vld [vmem:[%s15] sm:$0xf]
        %v969 = vld [vmem:[%s15 + $0x4] sm:$0xf]
        %v970 = vld [vmem:[%s15 + $0x8] sm:$0xf]
        %v971 = vld [vmem:[%s15 + $0xc] sm:$0xf]
        %v972 = vld [vmem:[%s17] sm:$0x1]
        %v973 = vld [vmem:[%s19] sm:$0xf]
        %v974 = vld [vmem:[%s19 + $0x4] sm:$0xf]
        %v975 = vld [vmem:[%s19 + $0x8] sm:$0xf]
        %v976 = vld [vmem:[%s19 + $0xc] sm:$0xf]
        %v977 = vld [vmem:[%s21] sm:$0x1]
        %v978 = vpack.c.bf16 %v966, %v966
        %v980 = vlaneseq
        %v981 = vshrl.u32 %v980, 7
        %v982 = vsub.s32 0, %v981
        %v983 = vrot.slane %v972, %v982
        %v989 = vunpack.c.l.b16 %v968
        %v990 = vunpack.c.l.b16 %v969
        %v991 = vunpack.c.l.b16 %v970
        %v992 = vunpack.c.l.b16 %v971
        %v993 = vpack.c.b16 %v990, %v989
        %v994 = vpack.c.b16 %v992, %v991
        %v998 = vsel %vm937, %v978, 0
        %1000 = vmatprep.subr.bf16.mxu0 0
        %1001 = vmatpush1.bf16.msra.mxu0 %v993
        %1002 = vmatprep.subr.bf16.mxu0 0
        %1003 = vmatpush1.bf16.msra.mxu0 %v994
        %1004 = vmatprep.subr.bf16.mxu0 0
        %1005 = vmatpush1.bf16.msra.mxu0 0
        %1006 = vmatprep.subr.bf16.mxu0 0
        %1007 = vmatpush1.bf16.msra.mxu0 0
        %1008 = vmatprep.subr.bf16.mxu0 0
        %1009 = vmatpush1.bf16.msra.mxu0 0
        %1010 = vmatprep.subr.bf16.mxu0 0
        %1011 = vmatpush1.bf16.msra.mxu0 0
        %1012 = vmatprep.subr.bf16.mxu0 0
        %1013 = vmatpush1.bf16.msra.mxu0 0
        %1014 = vmatprep.subr.bf16.mxu0 0
        %1015 = vmatpush1.bf16.msra.mxu0 0
        %1016 = vmatprep.subr.bf16.mxu0 0
        %1017 = vmatpush1.bf16.msra.mxu0 0
        %1018 = vmatprep.subr.bf16.mxu0 0
        %1019 = vmatpush1.bf16.msra.mxu0 0
        %1020 = vmatprep.subr.bf16.mxu0 0
        %1021 = vmatpush1.bf16.msra.mxu0 0
        %1022 = vmatprep.subr.bf16.mxu0 0
        %1023 = vmatpush1.bf16.msra.mxu0 0
        %1024 = vmatprep.subr.bf16.mxu0 0
        %1025 = vmatpush1.bf16.msra.mxu0 0
        %1026 = vmatprep.subr.bf16.mxu0 0
        %1027 = vmatpush1.bf16.msra.mxu0 0
        %1028 = vmatprep.subr.bf16.mxu0 0
        %1029 = vmatpush1.bf16.msra.mxu0 0
        %1030 = vmatprep.subr.bf16.mxu0 0
        %1031 = vmatpush1.bf16.msra.mxu0 0
        %1032 = vmatprep.mubr.bf16.mxu0 0
        %1033 = vmatmul.mubr.bf16.gmra.mrb[0].mxu0 %v998
        %v1034 = vpop.f32.mrb[0].mxu0
        %v1035 = vadd.f32 %v983, %v1034
        %v1036 = vpop.f32.mrb[0].mxu0
        %v1037 = vpop.f32.mrb[0].mxu0
        %v1038 = vpop.f32.mrb[0].mxu0
        %1039 = vdwg.mxu0
        %v1040 = vpack.c.bf16 %v1035, %v1035
        %1042 = vrot.lane.b32.xlu0 %v1040, 96
        %v1043 = vpop.permute.xlu0 %1042
        %vm1044 = vcmask 64512
        %v1046 = vsel %vm1044, %v1040, 0
        %v1049 = vsel %vm1044, %v1043, 0
        %1051 = vmatprep.subr.bf16.mxu0 0
        %1052 = vmatpush1.bf16.xpose.msra.mxu0 %v1049
        %1053 = vmatprep.subr.bf16.mxu0 0
        %1054 = vmatpush1.bf16.xpose.msra.mxu0 0
        %1055 = vmatprep.subr.bf16.mxu0 0
        %1056 = vmatpush1.bf16.xpose.msra.mxu0 0
        %1057 = vmatprep.subr.bf16.mxu0 0
        %1058 = vmatpush1.bf16.xpose.msra.mxu0 0
        %1059 = vmatprep.subr.bf16.mxu0 0
        %1060 = vmatpush1.bf16.xpose.msra.mxu0 0
        %1061 = vmatprep.subr.bf16.mxu0 0
        %1062 = vmatpush1.bf16.xpose.msra.mxu0 0
        %1063 = vmatprep.subr.bf16.mxu0 0
        %1064 = vmatpush1.bf16.xpose.msra.mxu0 0
        %1065 = vmatprep.subr.bf16.mxu0 0
        %1066 = vmatpush1.bf16.xpose.msra.mxu0 0
        %1067 = vmatprep.subr.bf16.mxu0 0
        %1068 = vmatpush1.bf16.xpose.msra.mxu0 0
        %1069 = vmatprep.subr.bf16.mxu0 0
        %1070 = vmatpush1.bf16.xpose.msra.mxu0 0
        %1071 = vmatprep.subr.bf16.mxu0 0
        %1072 = vmatpush1.bf16.xpose.msra.mxu0 0
        %1073 = vmatprep.subr.bf16.mxu0 0
        %1074 = vmatpush1.bf16.xpose.msra.mxu0 0
        %1075 = vmatprep.subr.bf16.mxu0 0
        %1076 = vmatpush1.bf16.xpose.msra.mxu0 0
        %1077 = vmatprep.subr.bf16.mxu0 0
        %1078 = vmatpush1.bf16.xpose.msra.mxu0 0
        %1079 = vmatprep.subr.bf16.mxu0 0
        %1080 = vmatpush1.bf16.xpose.msra.mxu0 0
        %1081 = vmatprep.subr.bf16.mxu0 0
        %1082 = vmatpush1.bf16.xpose.msra.mxu0 0
        %1083 = vmatprep.mubr.bf16.mxu0 0
        %1084 = vmatmul.mubr.bf16.gmra.mrb[0].mxu0 %v1046
        %v1085 = vpop.f32.mrb[0].mxu0
        %v1086 = vadd.f32 0.0, %v1085
        %v1087 = vpop.f32.mrb[0].mxu0
        %v1088 = vpop.f32.mrb[0].mxu0
        %v1089 = vpop.f32.mrb[0].mxu0
        %1090 = vdwg.mxu0
        %v1091 = vmul.f32 %v1086, 0.35355338
        %v1093 = vlaneseq
        %v1094 = vshrl.u32 %v1093, 7
        %v1095 = vsub.s32 0, %v1094
        %v1096 = vrot.slane %v967, %v1095
        %v1098 = vadd.f32 %v1091, %v1096
        %v1099 = vsel %vm1044, %v1098, -inf
        %1100 = vmax.xlane.f32.xlu0 %v1099
        %v1101 = vpop.xlane.xlu0 %1100
        %v1102 = vsub.f32 %v1098, %v1101
        %v1103 = vmul.f32 %v1102, 1.442695
        %v1104 = vpow.pop %v1103
        %v1105 = vsel %vm1044, %v1104, 0.0
        %1106 = vadd.xlane.f32.xlu0 %v1105
        %v1107 = vpop.xlane.xlu0 %1106
        %v1108 = vrcp.pop %v1107
        %v1109 = vmul.f32 %v1104, %v1108
        %v1110 = vpack.c.bf16 %v1109, %v1109
        %1111 = vrot.lane.b32.xlu0 %v1040, 64
        %v1112 = vpop.permute.xlu0 %1111
        %v1114 = vsel %vm1044, %v1110, 0
        %vm1116 = vcmask 1043456
        %v1118 = vsel %vm1116, %v1112, 0
        %1120 = vmatprep.subr.bf16.mxu0 0
        %1121 = vmatpush1.bf16.msra.mxu0 %v1118
        %1122 = vmatprep.subr.bf16.mxu0 0
        %1123 = vmatpush1.bf16.msra.mxu0 0
        %1124 = vmatprep.subr.bf16.mxu0 0
        %1125 = vmatpush1.bf16.msra.mxu0 0
        %1126 = vmatprep.subr.bf16.mxu0 0
        %1127 = vmatpush1.bf16.msra.mxu0 0
        %1128 = vmatprep.subr.bf16.mxu0 0
        %1129 = vmatpush1.bf16.msra.mxu0 0
        %1130 = vmatprep.subr.bf16.mxu0 0
        %1131 = vmatpush1.bf16.msra.mxu0 0
        %1132 = vmatprep.subr.bf16.mxu0 0
        %1133 = vmatpush1.bf16.msra.mxu0 0
        %1134 = vmatprep.subr.bf16.mxu0 0
        %1135 = vmatpush1.bf16.msra.mxu0 0
        %1136 = vmatprep.subr.bf16.mxu0 0
        %1137 = vmatpush1.bf16.msra.mxu0 0
        %1138 = vmatprep.subr.bf16.mxu0 0
        %1139 = vmatpush1.bf16.msra.mxu0 0
        %1140 = vmatprep.subr.bf16.mxu0 0
        %1141 = vmatpush1.bf16.msra.mxu0 0
        %1142 = vmatprep.subr.bf16.mxu0 0
        %1143 = vmatpush1.bf16.msra.mxu0 0
        %1144 = vmatprep.subr.bf16.mxu0 0
        %1145 = vmatpush1.bf16.msra.mxu0 0
        %1146 = vmatprep.subr.bf16.mxu0 0
        %1147 = vmatpush1.bf16.msra.mxu0 0
        %1148 = vmatprep.subr.bf16.mxu0 0
        %1149 = vmatpush1.bf16.msra.mxu0 0
        %1150 = vmatprep.subr.bf16.mxu0 0
        %1151 = vmatpush1.bf16.msra.mxu0 0
        %1152 = vmatprep.mubr.bf16.mxu0 0
        %1153 = vmatmul.mubr.bf16.gmra.mrb[0].mxu0 %v1114
        %v1154 = vpop.f32.mrb[0].mxu0
        %v1155 = vadd.f32 0.0, %v1154
        %v1156 = vpop.f32.mrb[0].mxu0
        %v1157 = vpop.f32.mrb[0].mxu0
        %v1158 = vpop.f32.mrb[0].mxu0
        %1159 = vdwg.mxu0
        %1160 = vrot.lane.b32.xlu0 %v1040, 120
        %v1161 = vpop.permute.xlu0 %1160
        %1162 = vrot.lane.b32.xlu0 %v1040, 88
        %v1163 = vpop.permute.xlu0 %1162
        %v1165 = vsel %vm1044, %v1161, 0
        %v1168 = vsel %vm1044, %v1163, 0
        %1170 = vmatprep.subr.bf16.mxu0 0
        %1171 = vmatpush1.bf16.xpose.msra.mxu0 %v1168
        %1172 = vmatprep.subr.bf16.mxu0 0
        %1173 = vmatpush1.bf16.xpose.msra.mxu0 0
        %1174 = vmatprep.subr.bf16.mxu0 0
        %1175 = vmatpush1.bf16.xpose.msra.mxu0 0
        %1176 = vmatprep.subr.bf16.mxu0 0
        %1177 = vmatpush1.bf16.xpose.msra.mxu0 0
        %1178 = vmatprep.subr.bf16.mxu0 0
        %1179 = vmatpush1.bf16.xpose.msra.mxu0 0
        %1180 = vmatprep.subr.bf16.mxu0 0
        %1181 = vmatpush1.bf16.xpose.msra.mxu0 0
        %1182 = vmatprep.subr.bf16.mxu0 0
        %1183 = vmatpush1.bf16.xpose.msra.mxu0 0
        %1184 = vmatprep.subr.bf16.mxu0 0
        %1185 = vmatpush1.bf16.xpose.msra.mxu0 0
        %1186 = vmatprep.subr.bf16.mxu0 0
        %1187 = vmatpush1.bf16.xpose.msra.mxu0 0
        %1188 = vmatprep.subr.bf16.mxu0 0
        %1189 = vmatpush1.bf16.xpose.msra.mxu0 0
        %1190 = vmatprep.subr.bf16.mxu0 0
        %1191 = vmatpush1.bf16.xpose.msra.mxu0 0
        %1192 = vmatprep.subr.bf16.mxu0 0
        %1193 = vmatpush1.bf16.xpose.msra.mxu0 0
        %1194 = vmatprep.subr.bf16.mxu0 0
        %1195 = vmatpush1.bf16.xpose.msra.mxu0 0
        %1196 = vmatprep.subr.bf16.mxu0 0
        %1197 = vmatpush1.bf16.xpose.msra.mxu0 0
        %1198 = vmatprep.subr.bf16.mxu0 0
        %1199 = vmatpush1.bf16.xpose.msra.mxu0 0
        %1200 = vmatprep.subr.bf16.mxu0 0
        %1201 = vmatpush1.bf16.xpose.msra.mxu0 0
        %1202 = vmatprep.mubr.bf16.mxu0 0
        %1203 = vmatmul.mubr.bf16.gmra.mrb[0].mxu0 %v1165
        %v1204 = vpop.f32.mrb[0].mxu0
        %v1205 = vadd.f32 0.0, %v1204
        %v1206 = vpop.f32.mrb[0].mxu0
        %v1207 = vpop.f32.mrb[0].mxu0
        %v1208 = vpop.f32.mrb[0].mxu0
        %1209 = vdwg.mxu0
        %v1210 = vmul.f32 %v1205, 0.35355338
        %v1211 = vadd.f32 %v1210, %v1096
        %v1212 = vsel %vm1044, %v1211, -inf
        %1213 = vmax.xlane.f32.xlu0 %v1212
        %v1214 = vpop.xlane.xlu0 %1213
        %v1215 = vsub.f32 %v1211, %v1214
        %v1216 = vmul.f32 %v1215, 1.442695
        %v1217 = vpow.pop %v1216
        %v1218 = vsel %vm1044, %v1217, 0.0
        %1219 = vadd.xlane.f32.xlu0 %v1218
        %v1220 = vpop.xlane.xlu0 %1219
        %v1221 = vrcp.pop %v1220
        %v1222 = vmul.f32 %v1217, %v1221
        %v1223 = vpack.c.bf16 %v1222, %v1222
        %1224 = vrot.lane.b32.xlu0 %v1040, 56
        %v1225 = vpop.permute.xlu0 %1224
        %v1227 = vsel %vm1044, %v1223, 0
        %v1230 = vsel %vm1116, %v1225, 0
        %1232 = vmatprep.subr.bf16.mxu0 0
        %1233 = vmatpush1.bf16.msra.mxu0 %v1230
        %1234 = vmatprep.subr.bf16.mxu0 0
        %1235 = vmatpush1.bf16.msra.mxu0 0
        %1236 = vmatprep.subr.bf16.mxu0 0
        %1237 = vmatpush1.bf16.msra.mxu0 0
        %1238 = vmatprep.subr.bf16.mxu0 0
        %1239 = vmatpush1.bf16.msra.mxu0 0
        %1240 = vmatprep.subr.bf16.mxu0 0
        %1241 = vmatpush1.bf16.msra.mxu0 0
        %1242 = vmatprep.subr.bf16.mxu0 0
        %1243 = vmatpush1.bf16.msra.mxu0 0
        %1244 = vmatprep.subr.bf16.mxu0 0
        %1245 = vmatpush1.bf16.msra.mxu0 0
        %1246 = vmatprep.subr.bf16.mxu0 0
        %1247 = vmatpush1.bf16.msra.mxu0 0
        %1248 = vmatprep.subr.bf16.mxu0 0
        %1249 = vmatpush1.bf16.msra.mxu0 0
        %1250 = vmatprep.subr.bf16.mxu0 0
        %1251 = vmatpush1.bf16.msra.mxu0 0
        %1252 = vmatprep.subr.bf16.mxu0 0
        %1253 = vmatpush1.bf16.msra.mxu0 0
        %1254 = vmatprep.subr.bf16.mxu0 0
        %1255 = vmatpush1.bf16.msra.mxu0 0
        %1256 = vmatprep.subr.bf16.mxu0 0
        %1257 = vmatpush1.bf16.msra.mxu0 0
        %1258 = vmatprep.subr.bf16.mxu0 0
        %1259 = vmatpush1.bf16.msra.mxu0 0
        %1260 = vmatprep.subr.bf16.mxu0 0
        %1261 = vmatpush1.bf16.msra.mxu0 0
        %1262 = vmatprep.subr.bf16.mxu0 0
        %1263 = vmatpush1.bf16.msra.mxu0 0
        %1264 = vmatprep.mubr.bf16.mxu0 0
        %1265 = vmatmul.mubr.bf16.gmra.mrb[0].mxu0 %v1227
        %v1266 = vpop.f32.mrb[0].mxu0
        %v1267 = vadd.f32 0.0, %v1266
        %v1268 = vpop.f32.mrb[0].mxu0
        %v1269 = vpop.f32.mrb[0].mxu0
        %v1270 = vpop.f32.mrb[0].mxu0
        %1271 = vdwg.mxu0
        %1272 = vrot.lane.b32.xlu0 %v1040, 112
        %v1273 = vpop.permute.xlu0 %1272
        %1274 = vrot.lane.b32.xlu0 %v1040, 80
        %v1275 = vpop.permute.xlu0 %1274
        %v1277 = vsel %vm1044, %v1273, 0
        %v1280 = vsel %vm1044, %v1275, 0
        %1282 = vmatprep.subr.bf16.mxu0 0
        %1283 = vmatpush1.bf16.xpose.msra.mxu0 %v1280
        %1284 = vmatprep.subr.bf16.mxu0 0
        %1285 = vmatpush1.bf16.xpose.msra.mxu0 0
        %1286 = vmatprep.subr.bf16.mxu0 0
        %1287 = vmatpush1.bf16.xpose.msra.mxu0 0
        %1288 = vmatprep.subr.bf16.mxu0 0
        %1289 = vmatpush1.bf16.xpose.msra.mxu0 0
        %1290 = vmatprep.subr.bf16.mxu0 0
        %1291 = vmatpush1.bf16.xpose.msra.mxu0 0
        %1292 = vmatprep.subr.bf16.mxu0 0
        %1293 = vmatpush1.bf16.xpose.msra.mxu0 0
        %1294 = vmatprep.subr.bf16.mxu0 0
        %1295 = vmatpush1.bf16.xpose.msra.mxu0 0
        %1296 = vmatprep.subr.bf16.mxu0 0
        %1297 = vmatpush1.bf16.xpose.msra.mxu0 0
        %1298 = vmatprep.subr.bf16.mxu0 0
        %1299 = vmatpush1.bf16.xpose.msra.mxu0 0
        %1300 = vmatprep.subr.bf16.mxu0 0
        %1301 = vmatpush1.bf16.xpose.msra.mxu0 0
        %1302 = vmatprep.subr.bf16.mxu0 0
        %1303 = vmatpush1.bf16.xpose.msra.mxu0 0
        %1304 = vmatprep.subr.bf16.mxu0 0
        %1305 = vmatpush1.bf16.xpose.msra.mxu0 0
        %1306 = vmatprep.subr.bf16.mxu0 0
        %1307 = vmatpush1.bf16.xpose.msra.mxu0 0
        %1308 = vmatprep.subr.bf16.mxu0 0
        %1309 = vmatpush1.bf16.xpose.msra.mxu0 0
        %1310 = vmatprep.subr.bf16.mxu0 0
        %1311 = vmatpush1.bf16.xpose.msra.mxu0 0
        %1312 = vmatprep.subr.bf16.mxu0 0
        %1313 = vmatpush1.bf16.xpose.msra.mxu0 0
        %1314 = vmatprep.mubr.bf16.mxu0 0
        %1315 = vmatmul.mubr.bf16.gmra.mrb[0].mxu0 %v1277
        %v1316 = vpop.f32.mrb[0].mxu0
        %v1317 = vadd.f32 0.0, %v1316
        %v1318 = vpop.f32.mrb[0].mxu0
        %v1319 = vpop.f32.mrb[0].mxu0
        %v1320 = vpop.f32.mrb[0].mxu0
        %1321 = vdwg.mxu0
        %v1322 = vmul.f32 %v1317, 0.35355338
        %v1323 = vadd.f32 %v1322, %v1096
        %v1324 = vsel %vm1044, %v1323, -inf
        %1325 = vmax.xlane.f32.xlu0 %v1324
        %v1326 = vpop.xlane.xlu0 %1325
        %v1327 = vsub.f32 %v1323, %v1326
        %v1328 = vmul.f32 %v1327, 1.442695
        %v1329 = vpow.pop %v1328
        %v1330 = vsel %vm1044, %v1329, 0.0
        %1331 = vadd.xlane.f32.xlu0 %v1330
        %v1332 = vpop.xlane.xlu0 %1331
        %v1333 = vrcp.pop %v1332
        %v1334 = vmul.f32 %v1329, %v1333
        %v1335 = vpack.c.bf16 %v1334, %v1334
        %1336 = vrot.lane.b32.xlu0 %v1040, 48
        %v1337 = vpop.permute.xlu0 %1336
        %v1339 = vsel %vm1044, %v1335, 0
        %v1342 = vsel %vm1116, %v1337, 0
        %1344 = vmatprep.subr.bf16.mxu0 0
        %1345 = vmatpush1.bf16.msra.mxu0 %v1342
        %1346 = vmatprep.subr.bf16.mxu0 0
        %1347 = vmatpush1.bf16.msra.mxu0 0
        %1348 = vmatprep.subr.bf16.mxu0 0
        %1349 = vmatpush1.bf16.msra.mxu0 0
        %1350 = vmatprep.subr.bf16.mxu0 0
        %1351 = vmatpush1.bf16.msra.mxu0 0
        %1352 = vmatprep.subr.bf16.mxu0 0
        %1353 = vmatpush1.bf16.msra.mxu0 0
        %1354 = vmatprep.subr.bf16.mxu0 0
        %1355 = vmatpush1.bf16.msra.mxu0 0
        %1356 = vmatprep.subr.bf16.mxu0 0
        %1357 = vmatpush1.bf16.msra.mxu0 0
        %1358 = vmatprep.subr.bf16.mxu0 0
        %1359 = vmatpush1.bf16.msra.mxu0 0
        %1360 = vmatprep.subr.bf16.mxu0 0
        %1361 = vmatpush1.bf16.msra.mxu0 0
        %1362 = vmatprep.subr.bf16.mxu0 0
        %1363 = vmatpush1.bf16.msra.mxu0 0
        %1364 = vmatprep.subr.bf16.mxu0 0
        %1365 = vmatpush1.bf16.msra.mxu0 0
        %1366 = vmatprep.subr.bf16.mxu0 0
        %1367 = vmatpush1.bf16.msra.mxu0 0
        %1368 = vmatprep.subr.bf16.mxu0 0
        %1369 = vmatpush1.bf16.msra.mxu0 0
        %1370 = vmatprep.subr.bf16.mxu0 0
        %1371 = vmatpush1.bf16.msra.mxu0 0
        %1372 = vmatprep.subr.bf16.mxu0 0
        %1373 = vmatpush1.bf16.msra.mxu0 0
        %1374 = vmatprep.subr.bf16.mxu0 0
        %1375 = vmatpush1.bf16.msra.mxu0 0
        %1376 = vmatprep.mubr.bf16.mxu0 0
        %1377 = vmatmul.mubr.bf16.gmra.mrb[0].mxu0 %v1339
        %v1378 = vpop.f32.mrb[0].mxu0
        %v1379 = vadd.f32 0.0, %v1378
        %v1380 = vpop.f32.mrb[0].mxu0
        %v1381 = vpop.f32.mrb[0].mxu0
        %v1382 = vpop.f32.mrb[0].mxu0
        %1383 = vdwg.mxu0
        %1384 = vrot.lane.b32.xlu0 %v1040, 104
        %v1385 = vpop.permute.xlu0 %1384
        %1386 = vrot.lane.b32.xlu0 %v1040, 72
        %v1387 = vpop.permute.xlu0 %1386
        %v1389 = vsel %vm1044, %v1385, 0
        %v1392 = vsel %vm1044, %v1387, 0
        %1394 = vmatprep.subr.bf16.mxu0 0
        %1395 = vmatpush1.bf16.xpose.msra.mxu0 %v1392
        %1396 = vmatprep.subr.bf16.mxu0 0
        %1397 = vmatpush1.bf16.xpose.msra.mxu0 0
        %1398 = vmatprep.subr.bf16.mxu0 0
        %1399 = vmatpush1.bf16.xpose.msra.mxu0 0
        %1400 = vmatprep.subr.bf16.mxu0 0
        %1401 = vmatpush1.bf16.xpose.msra.mxu0 0
        %1402 = vmatprep.subr.bf16.mxu0 0
        %1403 = vmatpush1.bf16.xpose.msra.mxu0 0
        %1404 = vmatprep.subr.bf16.mxu0 0
        %1405 = vmatpush1.bf16.xpose.msra.mxu0 0
        %1406 = vmatprep.subr.bf16.mxu0 0
        %1407 = vmatpush1.bf16.xpose.msra.mxu0 0
        %1408 = vmatprep.subr.bf16.mxu0 0
        %1409 = vmatpush1.bf16.xpose.msra.mxu0 0
        %1410 = vmatprep.subr.bf16.mxu0 0
        %1411 = vmatpush1.bf16.xpose.msra.mxu0 0
        %1412 = vmatprep.subr.bf16.mxu0 0
        %1413 = vmatpush1.bf16.xpose.msra.mxu0 0
        %1414 = vmatprep.subr.bf16.mxu0 0
        %1415 = vmatpush1.bf16.xpose.msra.mxu0 0
        %1416 = vmatprep.subr.bf16.mxu0 0
        %1417 = vmatpush1.bf16.xpose.msra.mxu0 0
        %1418 = vmatprep.subr.bf16.mxu0 0
        %1419 = vmatpush1.bf16.xpose.msra.mxu0 0
        %1420 = vmatprep.subr.bf16.mxu0 0
        %1421 = vmatpush1.bf16.xpose.msra.mxu0 0
        %1422 = vmatprep.subr.bf16.mxu0 0
        %1423 = vmatpush1.bf16.xpose.msra.mxu0 0
        %1424 = vmatprep.subr.bf16.mxu0 0
        %1425 = vmatpush1.bf16.xpose.msra.mxu0 0
        %1426 = vmatprep.mubr.bf16.mxu0 0
        %1427 = vmatmul.mubr.bf16.gmra.mrb[0].mxu0 %v1389
        %v1428 = vpop.f32.mrb[0].mxu0
        %v1429 = vadd.f32 0.0, %v1428
        %v1430 = vpop.f32.mrb[0].mxu0
        %v1431 = vpop.f32.mrb[0].mxu0
        %v1432 = vpop.f32.mrb[0].mxu0
        %1433 = vdwg.mxu0
        %v1434 = vmul.f32 %v1429, 0.35355338
        %v1435 = vadd.f32 %v1434, %v1096
        %v1436 = vsel %vm1044, %v1435, -inf
        %1437 = vmax.xlane.f32.xlu0 %v1436
        %v1438 = vpop.xlane.xlu0 %1437
        %v1439 = vsub.f32 %v1435, %v1438
        %v1440 = vmul.f32 %v1439, 1.442695
        %v1441 = vpow.pop %v1440
        %v1442 = vsel %vm1044, %v1441, 0.0
        %1443 = vadd.xlane.f32.xlu0 %v1442
        %v1444 = vpop.xlane.xlu0 %1443
        %v1445 = vrcp.pop %v1444
        %v1446 = vmul.f32 %v1441, %v1445
        %v1447 = vpack.c.bf16 %v1446, %v1446
        %1448 = vrot.lane.b32.xlu0 %v1040, 40
        %v1449 = vpop.permute.xlu0 %1448
        %v1451 = vsel %vm1044, %v1447, 0
        %v1454 = vsel %vm1116, %v1449, 0
        %1456 = vmatprep.subr.bf16.mxu0 0
        %1457 = vmatpush1.bf16.msra.mxu0 %v1454
        %1458 = vmatprep.subr.bf16.mxu0 0
        %1459 = vmatpush1.bf16.msra.mxu0 0
        %1460 = vmatprep.subr.bf16.mxu0 0
        %1461 = vmatpush1.bf16.msra.mxu0 0
        %1462 = vmatprep.subr.bf16.mxu0 0
        %1463 = vmatpush1.bf16.msra.mxu0 0
        %1464 = vmatprep.subr.bf16.mxu0 0
        %1465 = vmatpush1.bf16.msra.mxu0 0
        %1466 = vmatprep.subr.bf16.mxu0 0
        %1467 = vmatpush1.bf16.msra.mxu0 0
        %1468 = vmatprep.subr.bf16.mxu0 0
        %1469 = vmatpush1.bf16.msra.mxu0 0
        %1470 = vmatprep.subr.bf16.mxu0 0
        %1471 = vmatpush1.bf16.msra.mxu0 0
        %1472 = vmatprep.subr.bf16.mxu0 0
        %1473 = vmatpush1.bf16.msra.mxu0 0
        %1474 = vmatprep.subr.bf16.mxu0 0
        %1475 = vmatpush1.bf16.msra.mxu0 0
        %1476 = vmatprep.subr.bf16.mxu0 0
        %1477 = vmatpush1.bf16.msra.mxu0 0
        %1478 = vmatprep.subr.bf16.mxu0 0
        %1479 = vmatpush1.bf16.msra.mxu0 0
        %1480 = vmatprep.subr.bf16.mxu0 0
        %1481 = vmatpush1.bf16.msra.mxu0 0
        %1482 = vmatprep.subr.bf16.mxu0 0
        %1483 = vmatpush1.bf16.msra.mxu0 0
        %1484 = vmatprep.subr.bf16.mxu0 0
        %1485 = vmatpush1.bf16.msra.mxu0 0
        %1486 = vmatprep.subr.bf16.mxu0 0
        %1487 = vmatpush1.bf16.msra.mxu0 0
        %1488 = vmatprep.mubr.bf16.mxu0 0
        %1489 = vmatmul.mubr.bf16.gmra.mrb[0].mxu0 %v1451
        %v1490 = vpop.f32.mrb[0].mxu0
        %v1491 = vadd.f32 0.0, %v1490
        %v1492 = vpop.f32.mrb[0].mxu0
        %v1493 = vpop.f32.mrb[0].mxu0
        %v1494 = vpop.f32.mrb[0].mxu0
        %1495 = vdwg.mxu0
        %1497 = vrot.lane.b32.xlu0 %v1267, 8
        %v1498 = vpop.permute.xlu0 %1497
        %1501 = vrot.lane.b32.xlu0 %v1379, 16
        %v1502 = vpop.permute.xlu0 %1501
        %1505 = vrot.lane.b32.xlu0 %v1491, 24
        %v1506 = vpop.permute.xlu0 %1505
        %v1508 = vsel %vm1044, %v1155, %v1498
        %vm1509 = vcmask 130048
        %v1510 = vsel %vm1509, %v1508, %v1502
        %vm1511 = vcmask 195584
        %v1512 = vsel %vm1511, %v1510, %v1506
        %v1513 = vpack.c.bf16 %v1512, %v1512
        %v1515 = vlaneseq
        %v1516 = vshrl.u32 %v1515, 7
        %v1517 = vsub.s32 0, %v1516
        %v1518 = vrot.slane %v977, %v1517
        %v1524 = vunpack.c.l.b16 %v973
        %v1525 = vunpack.c.l.b16 %v974
        %v1526 = vunpack.c.l.b16 %v975
        %v1527 = vunpack.c.l.b16 %v976
        %v1528 = vpack.c.b16 %v1525, %v1524
        %v1529 = vpack.c.b16 %v1527, %v1526
        %v1533 = vsel %vm937, %v1513, 0
        %1535 = vmatprep.subr.bf16.mxu0 0
        %1536 = vmatpush1.bf16.msra.mxu0 %v1528
        %1537 = vmatprep.subr.bf16.mxu0 0
        %1538 = vmatpush1.bf16.msra.mxu0 %v1529
        %1539 = vmatprep.subr.bf16.mxu0 0
        %1540 = vmatpush1.bf16.msra.mxu0 0
        %1541 = vmatprep.subr.bf16.mxu0 0
        %1542 = vmatpush1.bf16.msra.mxu0 0
        %1543 = vmatprep.subr.bf16.mxu0 0
        %1544 = vmatpush1.bf16.msra.mxu0 0
        %1545 = vmatprep.subr.bf16.mxu0 0
        %1546 = vmatpush1.bf16.msra.mxu0 0
        %1547 = vmatprep.subr.bf16.mxu0 0
        %1548 = vmatpush1.bf16.msra.mxu0 0
        %1549 = vmatprep.subr.bf16.mxu0 0
        %1550 = vmatpush1.bf16.msra.mxu0 0
        %1551 = vmatprep.subr.bf16.mxu0 0
        %1552 = vmatpush1.bf16.msra.mxu0 0
        %1553 = vmatprep.subr.bf16.mxu0 0
        %1554 = vmatpush1.bf16.msra.mxu0 0
        %1555 = vmatprep.subr.bf16.mxu0 0
        %1556 = vmatpush1.bf16.msra.mxu0 0
        %1557 = vmatprep.subr.bf16.mxu0 0
        %1558 = vmatpush1.bf16.msra.mxu0 0
        %1559 = vmatprep.subr.bf16.mxu0 0
        %1560 = vmatpush1.bf16.msra.mxu0 0
        %1561 = vmatprep.subr.bf16.mxu0 0
        %1562 = vmatpush1.bf16.msra.mxu0 0
        %1563 = vmatprep.subr.bf16.mxu0 0
        %1564 = vmatpush1.bf16.msra.mxu0 0
        %1565 = vmatprep.subr.bf16.mxu0 0
        %1566 = vmatpush1.bf16.msra.mxu0 0
        %1567 = vmatprep.mubr.bf16.mxu0 0
        %1568 = vmatmul.mubr.bf16.gmra.mrb[0].mxu0 %v1533
        %v1569 = vpop.f32.mrb[0].mxu0
        %v1570 = vadd.f32 %v1518, %v1569
        %v1571 = vpop.f32.mrb[0].mxu0
        %v1572 = vpop.f32.mrb[0].mxu0
        %v1573 = vpop.f32.mrb[0].mxu0
        %1574 = vdwg.mxu0
        %v1575 = vadd.f32 %v966, %v1570
        %v1576 = vld [vmem:[%s23] sm:$0x1]
        %v1577 = vld [vmem:[%s25] sm:$0x1]
        %v1578 = vsel %vm937, %v1575, 0.0
        %1579 = vadd.xlane.f32.xlu0 %v1578
        %v1580 = vpop.xlane.xlu0 %1579
        %v1581 = vmul.f32 %v1575, %v1575
        %v1582 = vsel %vm937, %v1581, 0.0
        %1583 = vadd.xlane.f32.xlu0 %v1582
        %v1584 = vpop.xlane.xlu0 %1583
        %v1585 = vmul.f32 %v1580, 0.03125
        %v1586 = vmul.f32 %v1584, 0.03125
        %v1587 = vmul.f32 %v1585, %v1585
        %v1588 = vsub.f32 %v1586, %v1587
        %v1589 = vsub.f32 %v1575, %v1585
        %v1590 = vadd.f32 %v1588, 1e-12
        %v1591 = vrsqrt.pop %v1590
        %v1592 = vmul.f32 %v1589, %v1591
        %v1594 = vlaneseq
        %v1595 = vshrl.u32 %v1594, 7
        %v1596 = vsub.s32 0, %v1595
        %v1597 = vrot.slane %v1576, %v1596
        %v1599 = vmul.f32 %v1592, %v1597
        %v1601 = vlaneseq
        %v1602 = vshrl.u32 %v1601, 7
        %v1603 = vsub.s32 0, %v1602
        %v1604 = vrot.slane %v1577, %v1603
        %v1606 = vadd.f32 %v1599, %v1604
        %v1607 = vld [vmem:[%s7] sm:$0x1f]
        %v1608 = vld [vmem:[%s9] sm:$0x1f]
        %v1609 = vld [vmem:[%s27] sm:$0xf]
        %v1610 = vld [vmem:[%s27 + $0x4] sm:$0xf]
        %v1611 = vld [vmem:[%s27 + $0x8] sm:$0xf]
        %v1612 = vld [vmem:[%s27 + $0xc] sm:$0xf]
        %v1613 = vld [vmem:[%s29] sm:$0x1]
        %v1614 = vld [vmem:[%s31] sm:$0xf]
        %v1615 = vld [vmem:[%s31 + $0x4] sm:$0xf]
        %v1616 = vld [vmem:[%s31 + $0x8] sm:$0xf]
        %v1617 = vld [vmem:[%s31 + $0xc] sm:$0xf]
        %v1618 = vld [vmem:[%s33] sm:$0x1]
        %v1619 = vpack.c.bf16 %v1606, %v1606
        %v1621 = vlaneseq
        %v1622 = vshrl.u32 %v1621, 7
        %v1623 = vsub.s32 0, %v1622
        %v1624 = vrot.slane %v1613, %v1623
        %v1630 = vunpack.c.l.b16 %v1609
        %v1631 = vunpack.c.l.b16 %v1610
        %v1632 = vunpack.c.l.b16 %v1611
        %v1633 = vunpack.c.l.b16 %v1612
        %v1634 = vpack.c.b16 %v1631, %v1630
        %v1635 = vpack.c.b16 %v1633, %v1632
        %v1639 = vsel %vm937, %v1619, 0
        %1641 = vmatprep.subr.bf16.mxu0 0
        %1642 = vmatpush1.bf16.msra.mxu0 %v1634
        %1643 = vmatprep.subr.bf16.mxu0 0
        %1644 = vmatpush1.bf16.msra.mxu0 %v1635
        %1645 = vmatprep.subr.bf16.mxu0 0
        %1646 = vmatpush1.bf16.msra.mxu0 0
        %1647 = vmatprep.subr.bf16.mxu0 0
        %1648 = vmatpush1.bf16.msra.mxu0 0
        %1649 = vmatprep.subr.bf16.mxu0 0
        %1650 = vmatpush1.bf16.msra.mxu0 0
        %1651 = vmatprep.subr.bf16.mxu0 0
        %1652 = vmatpush1.bf16.msra.mxu0 0
        %1653 = vmatprep.subr.bf16.mxu0 0
        %1654 = vmatpush1.bf16.msra.mxu0 0
        %1655 = vmatprep.subr.bf16.mxu0 0
        %1656 = vmatpush1.bf16.msra.mxu0 0
        %1657 = vmatprep.subr.bf16.mxu0 0
        %1658 = vmatpush1.bf16.msra.mxu0 0
        %1659 = vmatprep.subr.bf16.mxu0 0
        %1660 = vmatpush1.bf16.msra.mxu0 0
        %1661 = vmatprep.subr.bf16.mxu0 0
        %1662 = vmatpush1.bf16.msra.mxu0 0
        %1663 = vmatprep.subr.bf16.mxu0 0
        %1664 = vmatpush1.bf16.msra.mxu0 0
        %1665 = vmatprep.subr.bf16.mxu0 0
        %1666 = vmatpush1.bf16.msra.mxu0 0
        %1667 = vmatprep.subr.bf16.mxu0 0
        %1668 = vmatpush1.bf16.msra.mxu0 0
        %1669 = vmatprep.subr.bf16.mxu0 0
        %1670 = vmatpush1.bf16.msra.mxu0 0
        %1671 = vmatprep.subr.bf16.mxu0 0
        %1672 = vmatpush1.bf16.msra.mxu0 0
        %1673 = vmatprep.mubr.bf16.mxu0 0
        %1674 = vmatmul.mubr.bf16.gmra.mrb[0].mxu0 %v1639
        %v1675 = vpop.f32.mrb[0].mxu0
        %v1676 = vadd.f32 %v1624, %v1675
        %v1677 = vpop.f32.mrb[0].mxu0
        %v1678 = vpop.f32.mrb[0].mxu0
        %v1679 = vpop.f32.mrb[0].mxu0
        %1680 = vdwg.mxu0
        %v1681 = vpack.c.bf16 %v1607, %v1607
        %v1682 = vpack.c.bf16 %v1608, %v1608
        %v1683 = vpack.c.bf16 %v1676, %v1676
        %v1685 = vsel %vm1044, %v1683, 0
        %v1688 = vsel %vm1044, %v1681, 0
        %1690 = vmatprep.subr.bf16.mxu0 0
        %1691 = vmatpush1.bf16.xpose.msra.mxu0 %v1688
        %1692 = vmatprep.subr.bf16.mxu0 0
        %1693 = vmatpush1.bf16.xpose.msra.mxu0 0
        %1694 = vmatprep.subr.bf16.mxu0 0
        %1695 = vmatpush1.bf16.xpose.msra.mxu0 0
        %1696 = vmatprep.subr.bf16.mxu0 0
        %1697 = vmatpush1.bf16.xpose.msra.mxu0 0
        %1698 = vmatprep.subr.bf16.mxu0 0
        %1699 = vmatpush1.bf16.xpose.msra.mxu0 0
        %1700 = vmatprep.subr.bf16.mxu0 0
        %1701 = vmatpush1.bf16.xpose.msra.mxu0 0
        %1702 = vmatprep.subr.bf16.mxu0 0
        %1703 = vmatpush1.bf16.xpose.msra.mxu0 0
        %1704 = vmatprep.subr.bf16.mxu0 0
        %1705 = vmatpush1.bf16.xpose.msra.mxu0 0
        %1706 = vmatprep.subr.bf16.mxu0 0
        %1707 = vmatpush1.bf16.xpose.msra.mxu0 0
        %1708 = vmatprep.subr.bf16.mxu0 0
        %1709 = vmatpush1.bf16.xpose.msra.mxu0 0
        %1710 = vmatprep.subr.bf16.mxu0 0
        %1711 = vmatpush1.bf16.xpose.msra.mxu0 0
        %1712 = vmatprep.subr.bf16.mxu0 0
        %1713 = vmatpush1.bf16.xpose.msra.mxu0 0
        %1714 = vmatprep.subr.bf16.mxu0 0
        %1715 = vmatpush1.bf16.xpose.msra.mxu0 0
        %1716 = vmatprep.subr.bf16.mxu0 0
        %1717 = vmatpush1.bf16.xpose.msra.mxu0 0
        %1718 = vmatprep.subr.bf16.mxu0 0
        %1719 = vmatpush1.bf16.xpose.msra.mxu0 0
        %1720 = vmatprep.subr.bf16.mxu0 0
        %1721 = vmatpush1.bf16.xpose.msra.mxu0 0
        %1722 = vmatprep.mubr.bf16.mxu0 0
        %1723 = vmatmul.mubr.bf16.gmra.mrb[0].mxu0 %v1685
        %v1724 = vpop.f32.mrb[0].mxu0
        %v1725 = vadd.f32 0.0, %v1724
        %v1726 = vpop.f32.mrb[0].mxu0
        %v1727 = vpop.f32.mrb[0].mxu0
        %v1728 = vpop.f32.mrb[0].mxu0
        %1729 = vdwg.mxu0
        %v1730 = vmul.f32 %v1725, 0.35355338
        %vm1731 = vcmask 39936
        %v1732 = vsel %vm1731, %v1730, -inf
        %1733 = vmax.xlane.f32.xlu0 %v1732
        %v1734 = vpop.xlane.xlu0 %1733
        %v1735 = vsub.f32 %v1730, %v1734
        %v1736 = vmul.f32 %v1735, 1.442695
        %v1737 = vpow.pop %v1736
        %v1738 = vsel %vm1731, %v1737, 0.0
        %1739 = vadd.xlane.f32.xlu0 %v1738
        %v1740 = vpop.xlane.xlu0 %1739
        %v1741 = vrcp.pop %v1740
        %v1742 = vmul.f32 %v1737, %v1741
        %v1743 = vpack.c.bf16 %v1742, %v1742
        %v1745 = vsel %vm1731, %v1743, 0
        %vm1747 = vcmask 1041408
        %vm1748 = vcmask 1042432
        %v1749 = vsel %vm1747, 4294967295, 65535
        %v1750 = vsel %vm1748, %v1749, 0
        %v1752 = vand.u32 %v1682, %v1750
        %1754 = vmatprep.subr.bf16.mxu0 0
        %1755 = vmatpush1.bf16.msra.mxu0 %v1752
        %1756 = vmatprep.subr.bf16.mxu0 0
        %1757 = vmatpush1.bf16.msra.mxu0 0
        %1758 = vmatprep.subr.bf16.mxu0 0
        %1759 = vmatpush1.bf16.msra.mxu0 0
        %1760 = vmatprep.subr.bf16.mxu0 0
        %1761 = vmatpush1.bf16.msra.mxu0 0
        %1762 = vmatprep.subr.bf16.mxu0 0
        %1763 = vmatpush1.bf16.msra.mxu0 0
        %1764 = vmatprep.subr.bf16.mxu0 0
        %1765 = vmatpush1.bf16.msra.mxu0 0
        %1766 = vmatprep.subr.bf16.mxu0 0
        %1767 = vmatpush1.bf16.msra.mxu0 0
        %1768 = vmatprep.subr.bf16.mxu0 0
        %1769 = vmatpush1.bf16.msra.mxu0 0
        %1770 = vmatprep.subr.bf16.mxu0 0
        %1771 = vmatpush1.bf16.msra.mxu0 0
        %1772 = vmatprep.subr.bf16.mxu0 0
        %1773 = vmatpush1.bf16.msra.mxu0 0
        %1774 = vmatprep.subr.bf16.mxu0 0
        %1775 = vmatpush1.bf16.msra.mxu0 0
        %1776 = vmatprep.subr.bf16.mxu0 0
        %1777 = vmatpush1.bf16.msra.mxu0 0
        %1778 = vmatprep.subr.bf16.mxu0 0
        %1779 = vmatpush1.bf16.msra.mxu0 0
        %1780 = vmatprep.subr.bf16.mxu0 0
        %1781 = vmatpush1.bf16.msra.mxu0 0
        %1782 = vmatprep.subr.bf16.mxu0 0
        %1783 = vmatpush1.bf16.msra.mxu0 0
        %1784 = vmatprep.subr.bf16.mxu0 0
        %1785 = vmatpush1.bf16.msra.mxu0 0
        %1786 = vmatprep.mubr.bf16.mxu0 0
        %1787 = vmatmul.mubr.bf16.gmra.mrb[0].mxu0 %v1745
        %v1788 = vpop.f32.mrb[0].mxu0
        %v1789 = vadd.f32 0.0, %v1788
        %v1790 = vpop.f32.mrb[0].mxu0
        %v1791 = vpop.f32.mrb[0].mxu0
        %v1792 = vpop.f32.mrb[0].mxu0
        %1793 = vdwg.mxu0
        %1795 = vrot.lane.b32.xlu0 %v1683, 120
        %v1796 = vpop.permute.xlu0 %1795
        %1798 = vrot.lane.b32.xlu0 %v1681, 120
        %v1799 = vpop.permute.xlu0 %1798
        %v1801 = vsel %vm1044, %v1796, 0
        %v1804 = vsel %vm1044, %v1799, 0
        %1806 = vmatprep.subr.bf16.mxu0 0
        %1807 = vmatpush1.bf16.xpose.msra.mxu0 %v1804
        %1808 = vmatprep.subr.bf16.mxu0 0
        %1809 = vmatpush1.bf16.xpose.msra.mxu0 0
        %1810 = vmatprep.subr.bf16.mxu0 0
        %1811 = vmatpush1.bf16.xpose.msra.mxu0 0
        %1812 = vmatprep.subr.bf16.mxu0 0
        %1813 = vmatpush1.bf16.xpose.msra.mxu0 0
        %1814 = vmatprep.subr.bf16.mxu0 0
        %1815 = vmatpush1.bf16.xpose.msra.mxu0 0
        %1816 = vmatprep.subr.bf16.mxu0 0
        %1817 = vmatpush1.bf16.xpose.msra.mxu0 0
        %1818 = vmatprep.subr.bf16.mxu0 0
        %1819 = vmatpush1.bf16.xpose.msra.mxu0 0
        %1820 = vmatprep.subr.bf16.mxu0 0
        %1821 = vmatpush1.bf16.xpose.msra.mxu0 0
        %1822 = vmatprep.subr.bf16.mxu0 0
        %1823 = vmatpush1.bf16.xpose.msra.mxu0 0
        %1824 = vmatprep.subr.bf16.mxu0 0
        %1825 = vmatpush1.bf16.xpose.msra.mxu0 0
        %1826 = vmatprep.subr.bf16.mxu0 0
        %1827 = vmatpush1.bf16.xpose.msra.mxu0 0
        %1828 = vmatprep.subr.bf16.mxu0 0
        %1829 = vmatpush1.bf16.xpose.msra.mxu0 0
        %1830 = vmatprep.subr.bf16.mxu0 0
        %1831 = vmatpush1.bf16.xpose.msra.mxu0 0
        %1832 = vmatprep.subr.bf16.mxu0 0
        %1833 = vmatpush1.bf16.xpose.msra.mxu0 0
        %1834 = vmatprep.subr.bf16.mxu0 0
        %1835 = vmatpush1.bf16.xpose.msra.mxu0 0
        %1836 = vmatprep.subr.bf16.mxu0 0
        %1837 = vmatpush1.bf16.xpose.msra.mxu0 0
        %1838 = vmatprep.mubr.bf16.mxu0 0
        %1839 = vmatmul.mubr.bf16.gmra.mrb[0].mxu0 %v1801
        %v1840 = vpop.f32.mrb[0].mxu0
        %v1841 = vadd.f32 0.0, %v1840
        %v1842 = vpop.f32.mrb[0].mxu0
        %v1843 = vpop.f32.mrb[0].mxu0
        %v1844 = vpop.f32.mrb[0].mxu0
        %1845 = vdwg.mxu0
        %v1846 = vmul.f32 %v1841, 0.35355338
        %v1847 = vsel %vm1731, %v1846, -inf
        %1848 = vmax.xlane.f32.xlu0 %v1847
        %v1849 = vpop.xlane.xlu0 %1848
        %v1850 = vsub.f32 %v1846, %v1849
        %v1851 = vmul.f32 %v1850, 1.442695
        %v1852 = vpow.pop %v1851
        %v1853 = vsel %vm1731, %v1852, 0.0
        %1854 = vadd.xlane.f32.xlu0 %v1853
        %v1855 = vpop.xlane.xlu0 %1854
        %v1856 = vrcp.pop %v1855
        %v1857 = vmul.f32 %v1852, %v1856
        %v1858 = vpack.c.bf16 %v1857, %v1857
        %1860 = vrot.lane.b32.xlu0 %v1682, 120
        %v1861 = vpop.permute.xlu0 %1860
        %v1863 = vsel %vm1731, %v1858, 0
        %v1866 = vand.u32 %v1861, %v1750
        %1868 = vmatprep.subr.bf16.mxu0 0
        %1869 = vmatpush1.bf16.msra.mxu0 %v1866
        %1870 = vmatprep.subr.bf16.mxu0 0
        %1871 = vmatpush1.bf16.msra.mxu0 0
        %1872 = vmatprep.subr.bf16.mxu0 0
        %1873 = vmatpush1.bf16.msra.mxu0 0
        %1874 = vmatprep.subr.bf16.mxu0 0
        %1875 = vmatpush1.bf16.msra.mxu0 0
        %1876 = vmatprep.subr.bf16.mxu0 0
        %1877 = vmatpush1.bf16.msra.mxu0 0
        %1878 = vmatprep.subr.bf16.mxu0 0
        %1879 = vmatpush1.bf16.msra.mxu0 0
        %1880 = vmatprep.subr.bf16.mxu0 0
        %1881 = vmatpush1.bf16.msra.mxu0 0
        %1882 = vmatprep.subr.bf16.mxu0 0
        %1883 = vmatpush1.bf16.msra.mxu0 0
        %1884 = vmatprep.subr.bf16.mxu0 0
        %1885 = vmatpush1.bf16.msra.mxu0 0
        %1886 = vmatprep.subr.bf16.mxu0 0
        %1887 = vmatpush1.bf16.msra.mxu0 0
        %1888 = vmatprep.subr.bf16.mxu0 0
        %1889 = vmatpush1.bf16.msra.mxu0 0
        %1890 = vmatprep.subr.bf16.mxu0 0
        %1891 = vmatpush1.bf16.msra.mxu0 0
        %1892 = vmatprep.subr.bf16.mxu0 0
        %1893 = vmatpush1.bf16.msra.mxu0 0
        %1894 = vmatprep.subr.bf16.mxu0 0
        %1895 = vmatpush1.bf16.msra.mxu0 0
        %1896 = vmatprep.subr.bf16.mxu0 0
        %1897 = vmatpush1.bf16.msra.mxu0 0
        %1898 = vmatprep.subr.bf16.mxu0 0
        %1899 = vmatpush1.bf16.msra.mxu0 0
        %1900 = vmatprep.mubr.bf16.mxu0 0
        %1901 = vmatmul.mubr.bf16.gmra.mrb[0].mxu0 %v1863
        %v1902 = vpop.f32.mrb[0].mxu0
        %v1903 = vadd.f32 0.0, %v1902
        %v1904 = vpop.f32.mrb[0].mxu0
        %v1905 = vpop.f32.mrb[0].mxu0
        %v1906 = vpop.f32.mrb[0].mxu0
        %1907 = vdwg.mxu0
        %1908 = vrot.lane.b32.xlu0 %v1683, 112
        %v1909 = vpop.permute.xlu0 %1908
        %1910 = vrot.lane.b32.xlu0 %v1681, 112
        %v1911 = vpop.permute.xlu0 %1910
        %v1913 = vsel %vm1044, %v1909, 0
        %v1916 = vsel %vm1044, %v1911, 0
        %1918 = vmatprep.subr.bf16.mxu0 0
        %1919 = vmatpush1.bf16.xpose.msra.mxu0 %v1916
        %1920 = vmatprep.subr.bf16.mxu0 0
        %1921 = vmatpush1.bf16.xpose.msra.mxu0 0
        %1922 = vmatprep.subr.bf16.mxu0 0
        %1923 = vmatpush1.bf16.xpose.msra.mxu0 0
        %1924 = vmatprep.subr.bf16.mxu0 0
        %1925 = vmatpush1.bf16.xpose.msra.mxu0 0
        %1926 = vmatprep.subr.bf16.mxu0 0
        %1927 = vmatpush1.bf16.xpose.msra.mxu0 0
        %1928 = vmatprep.subr.bf16.mxu0 0
        %1929 = vmatpush1.bf16.xpose.msra.mxu0 0
        %1930 = vmatprep.subr.bf16.mxu0 0
        %1931 = vmatpush1.bf16.xpose.msra.mxu0 0
        %1932 = vmatprep.subr.bf16.mxu0 0
        %1933 = vmatpush1.bf16.xpose.msra.mxu0 0
        %1934 = vmatprep.subr.bf16.mxu0 0
        %1935 = vmatpush1.bf16.xpose.msra.mxu0 0
        %1936 = vmatprep.subr.bf16.mxu0 0
        %1937 = vmatpush1.bf16.xpose.msra.mxu0 0
        %1938 = vmatprep.subr.bf16.mxu0 0
        %1939 = vmatpush1.bf16.xpose.msra.mxu0 0
        %1940 = vmatprep.subr.bf16.mxu0 0
        %1941 = vmatpush1.bf16.xpose.msra.mxu0 0
        %1942 = vmatprep.subr.bf16.mxu0 0
        %1943 = vmatpush1.bf16.xpose.msra.mxu0 0
        %1944 = vmatprep.subr.bf16.mxu0 0
        %1945 = vmatpush1.bf16.xpose.msra.mxu0 0
        %1946 = vmatprep.subr.bf16.mxu0 0
        %1947 = vmatpush1.bf16.xpose.msra.mxu0 0
        %1948 = vmatprep.subr.bf16.mxu0 0
        %1949 = vmatpush1.bf16.xpose.msra.mxu0 0
        %1950 = vmatprep.mubr.bf16.mxu0 0
        %1951 = vmatmul.mubr.bf16.gmra.mrb[0].mxu0 %v1913
        %v1952 = vpop.f32.mrb[0].mxu0
        %v1953 = vadd.f32 0.0, %v1952
        %v1954 = vpop.f32.mrb[0].mxu0
        %v1955 = vpop.f32.mrb[0].mxu0
        %v1956 = vpop.f32.mrb[0].mxu0
        %1957 = vdwg.mxu0
        %v1958 = vmul.f32 %v1953, 0.35355338
        %v1959 = vsel %vm1731, %v1958, -inf
        %1960 = vmax.xlane.f32.xlu0 %v1959
        %v1961 = vpop.xlane.xlu0 %1960
        %v1962 = vsub.f32 %v1958, %v1961
        %v1963 = vmul.f32 %v1962, 1.442695
        %v1964 = vpow.pop %v1963
        %v1965 = vsel %vm1731, %v1964, 0.0
        %1966 = vadd.xlane.f32.xlu0 %v1965
        %v1967 = vpop.xlane.xlu0 %1966
        %v1968 = vrcp.pop %v1967
        %v1969 = vmul.f32 %v1964, %v1968
        %v1970 = vpack.c.bf16 %v1969, %v1969
        %1971 = vrot.lane.b32.xlu0 %v1682, 112
        %v1972 = vpop.permute.xlu0 %1971
        %v1974 = vsel %vm1731, %v1970, 0
        %v1977 = vand.u32 %v1972, %v1750
        %1979 = vmatprep.subr.bf16.mxu0 0
        %1980 = vmatpush1.bf16.msra.mxu0 %v1977
        %1981 = vmatprep.subr.bf16.mxu0 0
        %1982 = vmatpush1.bf16.msra.mxu0 0
        %1983 = vmatprep.subr.bf16.mxu0 0
        %1984 = vmatpush1.bf16.msra.mxu0 0
        %1985 = vmatprep.subr.bf16.mxu0 0
        %1986 = vmatpush1.bf16.msra.mxu0 0
        %1987 = vmatprep.subr.bf16.mxu0 0
        %1988 = vmatpush1.bf16.msra.mxu0 0
        %1989 = vmatprep.subr.bf16.mxu0 0
        %1990 = vmatpush1.bf16.msra.mxu0 0
        %1991 = vmatprep.subr.bf16.mxu0 0
        %1992 = vmatpush1.bf16.msra.mxu0 0
        %1993 = vmatprep.subr.bf16.mxu0 0
        %1994 = vmatpush1.bf16.msra.mxu0 0
        %1995 = vmatprep.subr.bf16.mxu0 0
        %1996 = vmatpush1.bf16.msra.mxu0 0
        %1997 = vmatprep.subr.bf16.mxu0 0
        %1998 = vmatpush1.bf16.msra.mxu0 0
        %1999 = vmatprep.subr.bf16.mxu0 0
        %2000 = vmatpush1.bf16.msra.mxu0 0
        %2001 = vmatprep.subr.bf16.mxu0 0
        %2002 = vmatpush1.bf16.msra.mxu0 0
        %2003 = vmatprep.subr.bf16.mxu0 0
        %2004 = vmatpush1.bf16.msra.mxu0 0
        %2005 = vmatprep.subr.bf16.mxu0 0
        %2006 = vmatpush1.bf16.msra.mxu0 0
        %2007 = vmatprep.subr.bf16.mxu0 0
        %2008 = vmatpush1.bf16.msra.mxu0 0
        %2009 = vmatprep.subr.bf16.mxu0 0
        %2010 = vmatpush1.bf16.msra.mxu0 0
        %2011 = vmatprep.mubr.bf16.mxu0 0
        %2012 = vmatmul.mubr.bf16.gmra.mrb[0].mxu0 %v1974
        %v2013 = vpop.f32.mrb[0].mxu0
        %v2014 = vadd.f32 0.0, %v2013
        %v2015 = vpop.f32.mrb[0].mxu0
        %v2016 = vpop.f32.mrb[0].mxu0
        %v2017 = vpop.f32.mrb[0].mxu0
        %2018 = vdwg.mxu0
        %2019 = vrot.lane.b32.xlu0 %v1683, 104
        %v2020 = vpop.permute.xlu0 %2019
        %2021 = vrot.lane.b32.xlu0 %v1681, 104
        %v2022 = vpop.permute.xlu0 %2021
        %v2024 = vsel %vm1044, %v2020, 0
        %v2027 = vsel %vm1044, %v2022, 0
        %2029 = vmatprep.subr.bf16.mxu0 0
        %2030 = vmatpush1.bf16.xpose.msra.mxu0 %v2027
        %2031 = vmatprep.subr.bf16.mxu0 0
        %2032 = vmatpush1.bf16.xpose.msra.mxu0 0
        %2033 = vmatprep.subr.bf16.mxu0 0
        %2034 = vmatpush1.bf16.xpose.msra.mxu0 0
        %2035 = vmatprep.subr.bf16.mxu0 0
        %2036 = vmatpush1.bf16.xpose.msra.mxu0 0
        %2037 = vmatprep.subr.bf16.mxu0 0
        %2038 = vmatpush1.bf16.xpose.msra.mxu0 0
        %2039 = vmatprep.subr.bf16.mxu0 0
        %2040 = vmatpush1.bf16.xpose.msra.mxu0 0
        %2041 = vmatprep.subr.bf16.mxu0 0
        %2042 = vmatpush1.bf16.xpose.msra.mxu0 0
        %2043 = vmatprep.subr.bf16.mxu0 0
        %2044 = vmatpush1.bf16.xpose.msra.mxu0 0
        %2045 = vmatprep.subr.bf16.mxu0 0
        %2046 = vmatpush1.bf16.xpose.msra.mxu0 0
        %2047 = vmatprep.subr.bf16.mxu0 0
        %2048 = vmatpush1.bf16.xpose.msra.mxu0 0
        %2049 = vmatprep.subr.bf16.mxu0 0
        %2050 = vmatpush1.bf16.xpose.msra.mxu0 0
        %2051 = vmatprep.subr.bf16.mxu0 0
        %2052 = vmatpush1.bf16.xpose.msra.mxu0 0
        %2053 = vmatprep.subr.bf16.mxu0 0
        %2054 = vmatpush1.bf16.xpose.msra.mxu0 0
        %2055 = vmatprep.subr.bf16.mxu0 0
        %2056 = vmatpush1.bf16.xpose.msra.mxu0 0
        %2057 = vmatprep.subr.bf16.mxu0 0
        %2058 = vmatpush1.bf16.xpose.msra.mxu0 0
        %2059 = vmatprep.subr.bf16.mxu0 0
        %2060 = vmatpush1.bf16.xpose.msra.mxu0 0
        %2061 = vmatprep.mubr.bf16.mxu0 0
        %2062 = vmatmul.mubr.bf16.gmra.mrb[0].mxu0 %v2024
        %v2063 = vpop.f32.mrb[0].mxu0
        %v2064 = vadd.f32 0.0, %v2063
        %v2065 = vpop.f32.mrb[0].mxu0
        %v2066 = vpop.f32.mrb[0].mxu0
        %v2067 = vpop.f32.mrb[0].mxu0
        %2068 = vdwg.mxu0
        %v2069 = vmul.f32 %v2064, 0.35355338
        %v2070 = vsel %vm1731, %v2069, -inf
        %2071 = vmax.xlane.f32.xlu0 %v2070
        %v2072 = vpop.xlane.xlu0 %2071
        %v2073 = vsub.f32 %v2069, %v2072
        %v2074 = vmul.f32 %v2073, 1.442695
        %v2075 = vpow.pop %v2074
        %v2076 = vsel %vm1731, %v2075, 0.0
        %2077 = vadd.xlane.f32.xlu0 %v2076
        %v2078 = vpop.xlane.xlu0 %2077
        %v2079 = vrcp.pop %v2078
        %v2080 = vmul.f32 %v2075, %v2079
        %v2081 = vpack.c.bf16 %v2080, %v2080
        %2082 = vrot.lane.b32.xlu0 %v1682, 104
        %v2083 = vpop.permute.xlu0 %2082
        %v2085 = vsel %vm1731, %v2081, 0
        %v2088 = vand.u32 %v2083, %v1750
        %2090 = vmatprep.subr.bf16.mxu0 0
        %2091 = vmatpush1.bf16.msra.mxu0 %v2088
        %2092 = vmatprep.subr.bf16.mxu0 0
        %2093 = vmatpush1.bf16.msra.mxu0 0
        %2094 = vmatprep.subr.bf16.mxu0 0
        %2095 = vmatpush1.bf16.msra.mxu0 0
        %2096 = vmatprep.subr.bf16.mxu0 0
        %2097 = vmatpush1.bf16.msra.mxu0 0
        %2098 = vmatprep.subr.bf16.mxu0 0
        %2099 = vmatpush1.bf16.msra.mxu0 0
        %2100 = vmatprep.subr.bf16.mxu0 0
        %2101 = vmatpush1.bf16.msra.mxu0 0
        %2102 = vmatprep.subr.bf16.mxu0 0
        %2103 = vmatpush1.bf16.msra.mxu0 0
        %2104 = vmatprep.subr.bf16.mxu0 0
        %2105 = vmatpush1.bf16.msra.mxu0 0
        %2106 = vmatprep.subr.bf16.mxu0 0
        %2107 = vmatpush1.bf16.msra.mxu0 0
        %2108 = vmatprep.subr.bf16.mxu0 0
        %2109 = vmatpush1.bf16.msra.mxu0 0
        %2110 = vmatprep.subr.bf16.mxu0 0
        %2111 = vmatpush1.bf16.msra.mxu0 0
        %2112 = vmatprep.subr.bf16.mxu0 0
        %2113 = vmatpush1.bf16.msra.mxu0 0
        %2114 = vmatprep.subr.bf16.mxu0 0
        %2115 = vmatpush1.bf16.msra.mxu0 0
        %2116 = vmatprep.subr.bf16.mxu0 0
        %2117 = vmatpush1.bf16.msra.mxu0 0
        %2118 = vmatprep.subr.bf16.mxu0 0
        %2119 = vmatpush1.bf16.msra.mxu0 0
        %2120 = vmatprep.subr.bf16.mxu0 0
        %2121 = vmatpush1.bf16.msra.mxu0 0
        %2122 = vmatprep.mubr.bf16.mxu0 0
        %2123 = vmatmul.mubr.bf16.gmra.mrb[0].mxu0 %v2085
        %v2124 = vpop.f32.mrb[0].mxu0
        %v2125 = vadd.f32 0.0, %v2124
        %v2126 = vpop.f32.mrb[0].mxu0
        %v2127 = vpop.f32.mrb[0].mxu0
        %v2128 = vpop.f32.mrb[0].mxu0
        %2129 = vdwg.mxu0
        %2131 = vrot.lane.b32.xlu0 %v1903, 8
        %v2132 = vpop.permute.xlu0 %2131
        %2135 = vrot.lane.b32.xlu0 %v2014, 16
        %v2136 = vpop.permute.xlu0 %2135
        %2139 = vrot.lane.b32.xlu0 %v2125, 24
        %v2140 = vpop.permute.xlu0 %2139
        %v2142 = vsel %vm1044, %v1789, %v2132
        %v2143 = vsel %vm1509, %v2142, %v2136
        %v2144 = vsel %vm1511, %v2143, %v2140
        %v2145 = vpack.c.bf16 %v2144, %v2144
        %v2147 = vlaneseq
        %v2148 = vshrl.u32 %v2147, 7
        %v2149 = vsub.s32 0, %v2148
        %v2150 = vrot.slane %v1618, %v2149
        %v2156 = vunpack.c.l.b16 %v1614
        %v2157 = vunpack.c.l.b16 %v1615
        %v2158 = vunpack.c.l.b16 %v1616
        %v2159 = vunpack.c.l.b16 %v1617
        %v2160 = vpack.c.b16 %v2157, %v2156
        %v2161 = vpack.c.b16 %v2159, %v2158
        %v2165 = vsel %vm937, %v2145, 0
        %2167 = vmatprep.subr.bf16.mxu0 0
        %2168 = vmatpush1.bf16.msra.mxu0 %v2160
        %2169 = vmatprep.subr.bf16.mxu0 0
        %2170 = vmatpush1.bf16.msra.mxu0 %v2161
        %2171 = vmatprep.subr.bf16.mxu0 0
        %2172 = vmatpush1.bf16.msra.mxu0 0
        %2173 = vmatprep.subr.bf16.mxu0 0
        %2174 = vmatpush1.bf16.msra.mxu0 0
        %2175 = vmatprep.subr.bf16.mxu0 0
        %2176 = vmatpush1.bf16.msra.mxu0 0
        %2177 = vmatprep.subr.bf16.mxu0 0
        %2178 = vmatpush1.bf16.msra.mxu0 0
        %2179 = vmatprep.subr.bf16.mxu0 0
        %2180 = vmatpush1.bf16.msra.mxu0 0
        %2181 = vmatprep.subr.bf16.mxu0 0
        %2182 = vmatpush1.bf16.msra.mxu0 0
        %2183 = vmatprep.subr.bf16.mxu0 0
        %2184 = vmatpush1.bf16.msra.mxu0 0
        %2185 = vmatprep.subr.bf16.mxu0 0
        %2186 = vmatpush1.bf16.msra.mxu0 0
        %2187 = vmatprep.subr.bf16.mxu0 0
        %2188 = vmatpush1.bf16.msra.mxu0 0
        %2189 = vmatprep.subr.bf16.mxu0 0
        %2190 = vmatpush1.bf16.msra.mxu0 0
        %2191 = vmatprep.subr.bf16.mxu0 0
        %2192 = vmatpush1.bf16.msra.mxu0 0
        %2193 = vmatprep.subr.bf16.mxu0 0
        %2194 = vmatpush1.bf16.msra.mxu0 0
        %2195 = vmatprep.subr.bf16.mxu0 0
        %2196 = vmatpush1.bf16.msra.mxu0 0
        %2197 = vmatprep.subr.bf16.mxu0 0
        %2198 = vmatpush1.bf16.msra.mxu0 0
        %2199 = vmatprep.mubr.bf16.mxu0 0
        %2200 = vmatmul.mubr.bf16.gmra.mrb[0].mxu0 %v2165
        %v2201 = vpop.f32.mrb[0].mxu0
        %v2202 = vadd.f32 %v2150, %v2201
        %v2203 = vpop.f32.mrb[0].mxu0
        %v2204 = vpop.f32.mrb[0].mxu0
        %v2205 = vpop.f32.mrb[0].mxu0
        %2206 = vdwg.mxu0
        %v2207 = vadd.f32 %v1606, %v2202
        %v2208 = vld [vmem:[%s35] sm:$0x1]
        %v2209 = vld [vmem:[%s37] sm:$0x1]
        %v2210 = vsel %vm937, %v2207, 0.0
        %2211 = vadd.xlane.f32.xlu0 %v2210
        %v2212 = vpop.xlane.xlu0 %2211
        %v2213 = vmul.f32 %v2207, %v2207
        %v2214 = vsel %vm937, %v2213, 0.0
        %2215 = vadd.xlane.f32.xlu0 %v2214
        %v2216 = vpop.xlane.xlu0 %2215
        %v2217 = vmul.f32 %v2212, 0.03125
        %v2218 = vmul.f32 %v2216, 0.03125
        %v2219 = vmul.f32 %v2217, %v2217
        %v2220 = vsub.f32 %v2218, %v2219
        %v2221 = vsub.f32 %v2207, %v2217
        %v2222 = vadd.f32 %v2220, 1e-12
        %v2223 = vrsqrt.pop %v2222
        %v2224 = vmul.f32 %v2221, %v2223
        %v2226 = vlaneseq
        %v2227 = vshrl.u32 %v2226, 7
        %v2228 = vsub.s32 0, %v2227
        %v2229 = vrot.slane %v2208, %v2228
        %v2231 = vmul.f32 %v2224, %v2229
        %v2233 = vlaneseq
        %v2234 = vshrl.u32 %v2233, 7
        %v2235 = vsub.s32 0, %v2234
        %v2236 = vrot.slane %v2209, %v2235
        %v2238 = vadd.f32 %v2231, %v2236
        %v2239 = vld [vmem:[%s39] sm:$0xf]
        %v2240 = vld [vmem:[%s39 + $0x4] sm:$0xf]
        %v2241 = vld [vmem:[%s39 + $0x8] sm:$0xf]
        %v2242 = vld [vmem:[%s39 + $0xc] sm:$0xf]
        %v2243 = vpack.c.bf16 %v2238, %v2238
        %v2244 = vld [vmem:[%s41] sm:$0x1]
        %v2246 = vlaneseq
        %v2247 = vshrl.u32 %v2246, 7
        %v2248 = vsub.s32 0, %v2247
        %v2249 = vrot.slane %v2244, %v2248
        %v2255 = vunpack.c.l.b16 %v2239
        %v2256 = vunpack.c.l.b16 %v2240
        %v2257 = vunpack.c.l.b16 %v2241
        %v2258 = vunpack.c.l.b16 %v2242
        %v2259 = vpack.c.b16 %v2256, %v2255
        %v2260 = vpack.c.b16 %v2258, %v2257
        %v2264 = vsel %vm937, %v2243, 0
        %2266 = vmatprep.subr.bf16.mxu0 0
        %2267 = vmatpush1.bf16.msra.mxu0 %v2259
        %2268 = vmatprep.subr.bf16.mxu0 0
        %2269 = vmatpush1.bf16.msra.mxu0 %v2260
        %2270 = vmatprep.subr.bf16.mxu0 0
        %2271 = vmatpush1.bf16.msra.mxu0 0
        %2272 = vmatprep.subr.bf16.mxu0 0
        %2273 = vmatpush1.bf16.msra.mxu0 0
        %2274 = vmatprep.subr.bf16.mxu0 0
        %2275 = vmatpush1.bf16.msra.mxu0 0
        %2276 = vmatprep.subr.bf16.mxu0 0
        %2277 = vmatpush1.bf16.msra.mxu0 0
        %2278 = vmatprep.subr.bf16.mxu0 0
        %2279 = vmatpush1.bf16.msra.mxu0 0
        %2280 = vmatprep.subr.bf16.mxu0 0
        %2281 = vmatpush1.bf16.msra.mxu0 0
        %2282 = vmatprep.subr.bf16.mxu0 0
        %2283 = vmatpush1.bf16.msra.mxu0 0
        %2284 = vmatprep.subr.bf16.mxu0 0
        %2285 = vmatpush1.bf16.msra.mxu0 0
        %2286 = vmatprep.subr.bf16.mxu0 0
        %2287 = vmatpush1.bf16.msra.mxu0 0
        %2288 = vmatprep.subr.bf16.mxu0 0
        %2289 = vmatpush1.bf16.msra.mxu0 0
        %2290 = vmatprep.subr.bf16.mxu0 0
        %2291 = vmatpush1.bf16.msra.mxu0 0
        %2292 = vmatprep.subr.bf16.mxu0 0
        %2293 = vmatpush1.bf16.msra.mxu0 0
        %2294 = vmatprep.subr.bf16.mxu0 0
        %2295 = vmatpush1.bf16.msra.mxu0 0
        %2296 = vmatprep.subr.bf16.mxu0 0
        %2297 = vmatpush1.bf16.msra.mxu0 0
        %2298 = vmatprep.mubr.bf16.mxu0 0
        %2299 = vmatmul.mubr.bf16.gmra.mrb[0].mxu0 %v2264
        %v2300 = vpop.f32.mrb[0].mxu0
        %v2301 = vadd.f32 %v2249, %v2300
        %v2302 = vpop.f32.mrb[0].mxu0
        %v2303 = vpop.f32.mrb[0].mxu0
        %v2304 = vpop.f32.mrb[0].mxu0
        %2305 = vdwg.mxu0
        %v2306 = vmul.f32 %v2301, %v2301
        %v2307 = vmul.f32 %v2301, %v2306
        %v2308 = vmul.f32 %v2307, 0.044715
        %v2309 = vadd.f32 %v2301, %v2308
        %v2310 = vmul.f32 %v2309, 0.7978846
        %v2311 = vtanh.pop %v2310
        %v2312 = vadd.f32 %v2311, 1.0
        %v2313 = vmul.f32 %v2312, 0.5
        %v2314 = vmul.f32 %v2301, %v2313
        %v2315 = vld [vmem:[%s43] sm:$0xf]
        %v2316 = vld [vmem:[%s43 + $0x4] sm:$0xf]
        %v2317 = vld [vmem:[%s43 + $0x8] sm:$0xf]
        %v2318 = vld [vmem:[%s43 + $0xc] sm:$0xf]
        %v2319 = vld [vmem:[%s43 + $0x10] sm:$0xf]
        %v2320 = vld [vmem:[%s43 + $0x14] sm:$0xf]
        %v2321 = vld [vmem:[%s43 + $0x18] sm:$0xf]
        %v2322 = vld [vmem:[%s43 + $0x1c] sm:$0xf]
        %v2323 = vld [vmem:[%s43 + $0x20] sm:$0xf]
        %v2324 = vld [vmem:[%s43 + $0x24] sm:$0xf]
        %v2325 = vld [vmem:[%s43 + $0x28] sm:$0xf]
        %v2326 = vld [vmem:[%s43 + $0x2c] sm:$0xf]
        %v2327 = vld [vmem:[%s43 + $0x30] sm:$0xf]
        %v2328 = vld [vmem:[%s43 + $0x34] sm:$0xf]
        %v2329 = vld [vmem:[%s43 + $0x38] sm:$0xf]
        %v2330 = vld [vmem:[%s43 + $0x3c] sm:$0xf]
        %v2331 = vpack.c.bf16 %v2314, %v2314
        %v2332 = vld [vmem:[%s45] sm:$0x1]
        %v2334 = vlaneseq
        %v2335 = vshrl.u32 %v2334, 7
        %v2336 = vsub.s32 0, %v2335
        %v2337 = vrot.slane %v2332, %v2336
        %v2355 = vunpack.c.l.b16 %v2315
        %v2356 = vunpack.c.l.b16 %v2316
        %v2357 = vunpack.c.l.b16 %v2317
        %v2358 = vunpack.c.l.b16 %v2318
        %v2359 = vunpack.c.l.b16 %v2319
        %v2360 = vunpack.c.l.b16 %v2320
        %v2361 = vunpack.c.l.b16 %v2321
        %v2362 = vunpack.c.l.b16 %v2322
        %v2363 = vunpack.c.l.b16 %v2323
        %v2364 = vunpack.c.l.b16 %v2324
        %v2365 = vunpack.c.l.b16 %v2325
        %v2366 = vunpack.c.l.b16 %v2326
        %v2367 = vunpack.c.l.b16 %v2327
        %v2368 = vunpack.c.l.b16 %v2328
        %v2369 = vunpack.c.l.b16 %v2329
        %v2370 = vunpack.c.l.b16 %v2330
        %v2371 = vpack.c.b16 %v2356, %v2355
        %v2372 = vpack.c.b16 %v2358, %v2357
        %v2373 = vpack.c.b16 %v2360, %v2359
        %v2374 = vpack.c.b16 %v2362, %v2361
        %v2375 = vpack.c.b16 %v2364, %v2363
        %v2376 = vpack.c.b16 %v2366, %v2365
        %v2377 = vpack.c.b16 %v2368, %v2367
        %v2378 = vpack.c.b16 %v2370, %v2369
        %2387 = vmatprep.subr.bf16.mxu0 0
        %2388 = vmatpush1.bf16.msra.mxu0 %v2371
        %2389 = vmatprep.subr.bf16.mxu0 0
        %2390 = vmatpush1.bf16.msra.mxu0 %v2372
        %2391 = vmatprep.subr.bf16.mxu0 0
        %2392 = vmatpush1.bf16.msra.mxu0 %v2373
        %2393 = vmatprep.subr.bf16.mxu0 0
        %2394 = vmatpush1.bf16.msra.mxu0 %v2374
        %2395 = vmatprep.subr.bf16.mxu0 0
        %2396 = vmatpush1.bf16.msra.mxu0 %v2375
        %2397 = vmatprep.subr.bf16.mxu0 0
        %2398 = vmatpush1.bf16.msra.mxu0 %v2376
        %2399 = vmatprep.subr.bf16.mxu0 0
        %2400 = vmatpush1.bf16.msra.mxu0 %v2377
        %2401 = vmatprep.subr.bf16.mxu0 0
        %2402 = vmatpush1.bf16.msra.mxu0 %v2378
        %2403 = vmatprep.subr.bf16.mxu0 0
        %2404 = vmatpush1.bf16.msra.mxu0 0
        %2405 = vmatprep.subr.bf16.mxu0 0
        %2406 = vmatpush1.bf16.msra.mxu0 0
        %2407 = vmatprep.subr.bf16.mxu0 0
        %2408 = vmatpush1.bf16.msra.mxu0 0
        %2409 = vmatprep.subr.bf16.mxu0 0
        %2410 = vmatpush1.bf16.msra.mxu0 0
        %2411 = vmatprep.subr.bf16.mxu0 0
        %2412 = vmatpush1.bf16.msra.mxu0 0
        %2413 = vmatprep.subr.bf16.mxu0 0
        %2414 = vmatpush1.bf16.msra.mxu0 0
        %2415 = vmatprep.subr.bf16.mxu0 0
        %2416 = vmatpush1.bf16.msra.mxu0 0
        %2417 = vmatprep.subr.bf16.mxu0 0
        %2418 = vmatpush1.bf16.msra.mxu0 0
        %2419 = vmatprep.mubr.bf16.mxu0 0
        %2420 = vmatmul.mubr.bf16.gmra.mrb[0].mxu0 %v2331
        %v2421 = vpop.f32.mrb[0].mxu0
        %v2422 = vadd.f32 %v2337, %v2421
        %v2423 = vpop.f32.mrb[0].mxu0
        %v2424 = vpop.f32.mrb[0].mxu0
        %v2425 = vpop.f32.mrb[0].mxu0
        %2426 = vdwg.mxu0
        %v2427 = vadd.f32 %v2238, %v2422
        %v2428 = vld [vmem:[%s47] sm:$0x1]
        %v2429 = vld [vmem:[%s49] sm:$0x1]
        %v2430 = vsel %vm937, %v2427, 0.0
        %2431 = vadd.xlane.f32.xlu0 %v2430
        %v2432 = vpop.xlane.xlu0 %2431
        %v2433 = vmul.f32 %v2427, %v2427
        %v2434 = vsel %vm937, %v2433, 0.0
        %2435 = vadd.xlane.f32.xlu0 %v2434
        %v2436 = vpop.xlane.xlu0 %2435
        %v2437 = vmul.f32 %v2432, 0.03125
        %v2438 = vmul.f32 %v2436, 0.03125
        %v2439 = vmul.f32 %v2437, %v2437
        %v2440 = vsub.f32 %v2438, %v2439
        %v2441 = vsub.f32 %v2427, %v2437
        %v2442 = vadd.f32 %v2440, 1e-12
        %v2443 = vrsqrt.pop %v2442
        %v2444 = vmul.f32 %v2441, %v2443
        %v2446 = vlaneseq
        %v2447 = vshrl.u32 %v2446, 7
        %v2448 = vsub.s32 0, %v2447
        %v2449 = vrot.slane %v2428, %v2448
        %v2451 = vmul.f32 %v2444, %v2449
        %v2453 = vlaneseq
        %v2454 = vshrl.u32 %v2453, 7
        %v2455 = vsub.s32 0, %v2454
        %v2456 = vrot.slane %v2429, %v2455
        %v2458 = vadd.f32 %v2451, %v2456
        %s2459 = scalar_lea.vmem %s15, 16
        %v2460 = vld [vmem:[%s2459] sm:$0xf]
        %v2461 = vld [vmem:[%s2459 + $0x4] sm:$0xf]
        %v2462 = vld [vmem:[%s2459 + $0x8] sm:$0xf]
        %v2463 = vld [vmem:[%s2459 + $0xc] sm:$0xf]
        %s2464 = scalar_lea.vmem %s17, 1
        %v2465 = vld [vmem:[%s2464] sm:$0x1]
        %s2466 = scalar_lea.vmem %s19, 16
        %v2467 = vld [vmem:[%s2466] sm:$0xf]
        %v2468 = vld [vmem:[%s2466 + $0x4] sm:$0xf]
        %v2469 = vld [vmem:[%s2466 + $0x8] sm:$0xf]
        %v2470 = vld [vmem:[%s2466 + $0xc] sm:$0xf]
        %s2471 = scalar_lea.vmem %s21, 1
        %v2472 = vld [vmem:[%s2471] sm:$0x1]
        %v2473 = vpack.c.bf16 %v2458, %v2458
        %v2475 = vlaneseq
        %v2476 = vshrl.u32 %v2475, 7
        %v2477 = vsub.s32 0, %v2476
        %v2478 = vrot.slane %v2465, %v2477
        %v2484 = vunpack.c.l.b16 %v2460
        %v2485 = vunpack.c.l.b16 %v2461
        %v2486 = vunpack.c.l.b16 %v2462
        %v2487 = vunpack.c.l.b16 %v2463
        %v2488 = vpack.c.b16 %v2485, %v2484
        %v2489 = vpack.c.b16 %v2487, %v2486
        %v2493 = vsel %vm937, %v2473, 0
        %2495 = vmatprep.subr.bf16.mxu0 0
        %2496 = vmatpush1.bf16.msra.mxu0 %v2488
        %2497 = vmatprep.subr.bf16.mxu0 0
        %2498 = vmatpush1.bf16.msra.mxu0 %v2489
        %2499 = vmatprep.subr.bf16.mxu0 0
        %2500 = vmatpush1.bf16.msra.mxu0 0
        %2501 = vmatprep.subr.bf16.mxu0 0
        %2502 = vmatpush1.bf16.msra.mxu0 0
        %2503 = vmatprep.subr.bf16.mxu0 0
        %2504 = vmatpush1.bf16.msra.mxu0 0
        %2505 = vmatprep.subr.bf16.mxu0 0
        %2506 = vmatpush1.bf16.msra.mxu0 0
        %2507 = vmatprep.subr.bf16.mxu0 0
        %2508 = vmatpush1.bf16.msra.mxu0 0
        %2509 = vmatprep.subr.bf16.mxu0 0
        %2510 = vmatpush1.bf16.msra.mxu0 0
        %2511 = vmatprep.subr.bf16.mxu0 0
        %2512 = vmatpush1.bf16.msra.mxu0 0
        %2513 = vmatprep.subr.bf16.mxu0 0
        %2514 = vmatpush1.bf16.msra.mxu0 0
        %2515 = vmatprep.subr.bf16.mxu0 0
        %2516 = vmatpush1.bf16.msra.mxu0 0
        %2517 = vmatprep.subr.bf16.mxu0 0
        %2518 = vmatpush1.bf16.msra.mxu0 0
        %2519 = vmatprep.subr.bf16.mxu0 0
        %2520 = vmatpush1.bf16.msra.mxu0 0
        %2521 = vmatprep.subr.bf16.mxu0 0
        %2522 = vmatpush1.bf16.msra.mxu0 0
        %2523 = vmatprep.subr.bf16.mxu0 0
        %2524 = vmatpush1.bf16.msra.mxu0 0
        %2525 = vmatprep.subr.bf16.mxu0 0
        %2526 = vmatpush1.bf16.msra.mxu0 0
        %2527 = vmatprep.mubr.bf16.mxu0 0
        %2528 = vmatmul.mubr.bf16.gmra.mrb[0].mxu0 %v2493
        %v2529 = vpop.f32.mrb[0].mxu0
        %v2530 = vadd.f32 %v2478, %v2529
        %v2531 = vpop.f32.mrb[0].mxu0
        %v2532 = vpop.f32.mrb[0].mxu0
        %v2533 = vpop.f32.mrb[0].mxu0
        %2534 = vdwg.mxu0
        %v2535 = vpack.c.bf16 %v2530, %v2530
        %2537 = vrot.lane.b32.xlu0 %v2535, 96
        %v2538 = vpop.permute.xlu0 %2537
        %v2540 = vsel %vm1044, %v2535, 0
        %v2543 = vsel %vm1044, %v2538, 0
        %2545 = vmatprep.subr.bf16.mxu0 0
        %2546 = vmatpush1.bf16.xpose.msra.mxu0 %v2543
        %2547 = vmatprep.subr.bf16.mxu0 0
        %2548 = vmatpush1.bf16.xpose.msra.mxu0 0
        %2549 = vmatprep.subr.bf16.mxu0 0
        %2550 = vmatpush1.bf16.xpose.msra.mxu0 0
        %2551 = vmatprep.subr.bf16.mxu0 0
        %2552 = vmatpush1.bf16.xpose.msra.mxu0 0
        %2553 = vmatprep.subr.bf16.mxu0 0
        %2554 = vmatpush1.bf16.xpose.msra.mxu0 0
        %2555 = vmatprep.subr.bf16.mxu0 0
        %2556 = vmatpush1.bf16.xpose.msra.mxu0 0
        %2557 = vmatprep.subr.bf16.mxu0 0
        %2558 = vmatpush1.bf16.xpose.msra.mxu0 0
        %2559 = vmatprep.subr.bf16.mxu0 0
        %2560 = vmatpush1.bf16.xpose.msra.mxu0 0
        %2561 = vmatprep.subr.bf16.mxu0 0
        %2562 = vmatpush1.bf16.xpose.msra.mxu0 0
        %2563 = vmatprep.subr.bf16.mxu0 0
        %2564 = vmatpush1.bf16.xpose.msra.mxu0 0
        %2565 = vmatprep.subr.bf16.mxu0 0
        %2566 = vmatpush1.bf16.xpose.msra.mxu0 0
        %2567 = vmatprep.subr.bf16.mxu0 0
        %2568 = vmatpush1.bf16.xpose.msra.mxu0 0
        %2569 = vmatprep.subr.bf16.mxu0 0
        %2570 = vmatpush1.bf16.xpose.msra.mxu0 0
        %2571 = vmatprep.subr.bf16.mxu0 0
        %2572 = vmatpush1.bf16.xpose.msra.mxu0 0
        %2573 = vmatprep.subr.bf16.mxu0 0
        %2574 = vmatpush1.bf16.xpose.msra.mxu0 0
        %2575 = vmatprep.subr.bf16.mxu0 0
        %2576 = vmatpush1.bf16.xpose.msra.mxu0 0
        %2577 = vmatprep.mubr.bf16.mxu0 0
        %2578 = vmatmul.mubr.bf16.gmra.mrb[0].mxu0 %v2540
        %v2579 = vpop.f32.mrb[0].mxu0
        %v2580 = vadd.f32 0.0, %v2579
        %v2581 = vpop.f32.mrb[0].mxu0
        %v2582 = vpop.f32.mrb[0].mxu0
        %v2583 = vpop.f32.mrb[0].mxu0
        %2584 = vdwg.mxu0
        %v2585 = vmul.f32 %v2580, 0.35355338
        %v2586 = vadd.f32 %v2585, %v1096
        %v2587 = vsel %vm1044, %v2586, -inf
        %2588 = vmax.xlane.f32.xlu0 %v2587
        %v2589 = vpop.xlane.xlu0 %2588
        %v2590 = vsub.f32 %v2586, %v2589
        %v2591 = vmul.f32 %v2590, 1.442695
        %v2592 = vpow.pop %v2591
        %v2593 = vsel %vm1044, %v2592, 0.0
        %2594 = vadd.xlane.f32.xlu0 %v2593
        %v2595 = vpop.xlane.xlu0 %2594
        %v2596 = vrcp.pop %v2595
        %v2597 = vmul.f32 %v2592, %v2596
        %v2598 = vpack.c.bf16 %v2597, %v2597
        %2599 = vrot.lane.b32.xlu0 %v2535, 64
        %v2600 = vpop.permute.xlu0 %2599
        %v2602 = vsel %vm1044, %v2598, 0
        %v2605 = vsel %vm1116, %v2600, 0
        %2607 = vmatprep.subr.bf16.mxu0 0
        %2608 = vmatpush1.bf16.msra.mxu0 %v2605
        %2609 = vmatprep.subr.bf16.mxu0 0
        %2610 = vmatpush1.bf16.msra.mxu0 0
        %2611 = vmatprep.subr.bf16.mxu0 0
        %2612 = vmatpush1.bf16.msra.mxu0 0
        %2613 = vmatprep.subr.bf16.mxu0 0
        %2614 = vmatpush1.bf16.msra.mxu0 0
        %2615 = vmatprep.subr.bf16.mxu0 0
        %2616 = vmatpush1.bf16.msra.mxu0 0
        %2617 = vmatprep.subr.bf16.mxu0 0
        %2618 = vmatpush1.bf16.msra.mxu0 0
        %2619 = vmatprep.subr.bf16.mxu0 0
        %2620 = vmatpush1.bf16.msra.mxu0 0
        %2621 = vmatprep.subr.bf16.mxu0 0
        %2622 = vmatpush1.bf16.msra.mxu0 0
        %2623 = vmatprep.subr.bf16.mxu0 0
        %2624 = vmatpush1.bf16.msra.mxu0 0
        %2625 = vmatprep.subr.bf16.mxu0 0
        %2626 = vmatpush1.bf16.msra.mxu0 0
        %2627 = vmatprep.subr.bf16.mxu0 0
        %2628 = vmatpush1.bf16.msra.mxu0 0
        %2629 = vmatprep.subr.bf16.mxu0 0
        %2630 = vmatpush1.bf16.msra.mxu0 0
        %2631 = vmatprep.subr.bf16.mxu0 0
        %2632 = vmatpush1.bf16.msra.mxu0 0
        %2633 = vmatprep.subr.bf16.mxu0 0
        %2634 = vmatpush1.bf16.msra.mxu0 0
        %2635 = vmatprep.subr.bf16.mxu0 0
        %2636 = vmatpush1.bf16.msra.mxu0 0
        %2637 = vmatprep.subr.bf16.mxu0 0
        %2638 = vmatpush1.bf16.msra.mxu0 0
        %2639 = vmatprep.mubr.bf16.mxu0 0
        %2640 = vmatmul.mubr.bf16.gmra.mrb[0].mxu0 %v2602
        %v2641 = vpop.f32.mrb[0].mxu0
        %v2642 = vadd.f32 0.0, %v2641
        %v2643 = vpop.f32.mrb[0].mxu0
        %v2644 = vpop.f32.mrb[0].mxu0
        %v2645 = vpop.f32.mrb[0].mxu0
        %2646 = vdwg.mxu0
        %2647 = vrot.lane.b32.xlu0 %v2535, 120
        %v2648 = vpop.permute.xlu0 %2647
        %2649 = vrot.lane.b32.xlu0 %v2535, 88
        %v2650 = vpop.permute.xlu0 %2649
        %v2652 = vsel %vm1044, %v2648, 0
        %v2655 = vsel %vm1044, %v2650, 0
        %2657 = vmatprep.subr.bf16.mxu0 0
        %2658 = vmatpush1.bf16.xpose.msra.mxu0 %v2655
        %2659 = vmatprep.subr.bf16.mxu0 0
        %2660 = vmatpush1.bf16.xpose.msra.mxu0 0
        %2661 = vmatprep.subr.bf16.mxu0 0
        %2662 = vmatpush1.bf16.xpose.msra.mxu0 0
        %2663 = vmatprep.subr.bf16.mxu0 0
        %2664 = vmatpush1.bf16.xpose.msra.mxu0 0
        %2665 = vmatprep.subr.bf16.mxu0 0
        %2666 = vmatpush1.bf16.xpose.msra.mxu0 0
        %2667 = vmatprep.subr.bf16.mxu0 0
        %2668 = vmatpush1.bf16.xpose.msra.mxu0 0
        %2669 = vmatprep.subr.bf16.mxu0 0
        %2670 = vmatpush1.bf16.xpose.msra.mxu0 0
        %2671 = vmatprep.subr.bf16.mxu0 0
        %2672 = vmatpush1.bf16.xpose.msra.mxu0 0
        %2673 = vmatprep.subr.bf16.mxu0 0
        %2674 = vmatpush1.bf16.xpose.msra.mxu0 0
        %2675 = vmatprep.subr.bf16.mxu0 0
        %2676 = vmatpush1.bf16.xpose.msra.mxu0 0
        %2677 = vmatprep.subr.bf16.mxu0 0
        %2678 = vmatpush1.bf16.xpose.msra.mxu0 0
        %2679 = vmatprep.subr.bf16.mxu0 0
        %2680 = vmatpush1.bf16.xpose.msra.mxu0 0
        %2681 = vmatprep.subr.bf16.mxu0 0
        %2682 = vmatpush1.bf16.xpose.msra.mxu0 0
        %2683 = vmatprep.subr.bf16.mxu0 0
        %2684 = vmatpush1.bf16.xpose.msra.mxu0 0
        %2685 = vmatprep.subr.bf16.mxu0 0
        %2686 = vmatpush1.bf16.xpose.msra.mxu0 0
        %2687 = vmatprep.subr.bf16.mxu0 0
        %2688 = vmatpush1.bf16.xpose.msra.mxu0 0
        %2689 = vmatprep.mubr.bf16.mxu0 0
        %2690 = vmatmul.mubr.bf16.gmra.mrb[0].mxu0 %v2652
        %v2691 = vpop.f32.mrb[0].mxu0
        %v2692 = vadd.f32 0.0, %v2691
        %v2693 = vpop.f32.mrb[0].mxu0
        %v2694 = vpop.f32.mrb[0].mxu0
        %v2695 = vpop.f32.mrb[0].mxu0
        %2696 = vdwg.mxu0
        %v2697 = vmul.f32 %v2692, 0.35355338
        %v2698 = vadd.f32 %v2697, %v1096
        %v2699 = vsel %vm1044, %v2698, -inf
        %2700 = vmax.xlane.f32.xlu0 %v2699
        %v2701 = vpop.xlane.xlu0 %2700
        %v2702 = vsub.f32 %v2698, %v2701
        %v2703 = vmul.f32 %v2702, 1.442695
        %v2704 = vpow.pop %v2703
        %v2705 = vsel %vm1044, %v2704, 0.0
        %2706 = vadd.xlane.f32.xlu0 %v2705
        %v2707 = vpop.xlane.xlu0 %2706
        %v2708 = vrcp.pop %v2707
        %v2709 = vmul.f32 %v2704, %v2708
        %v2710 = vpack.c.bf16 %v2709, %v2709
        %2711 = vrot.lane.b32.xlu0 %v2535, 56
        %v2712 = vpop.permute.xlu0 %2711
        %v2714 = vsel %vm1044, %v2710, 0
        %v2717 = vsel %vm1116, %v2712, 0
        %2719 = vmatprep.subr.bf16.mxu0 0
        %2720 = vmatpush1.bf16.msra.mxu0 %v2717
        %2721 = vmatprep.subr.bf16.mxu0 0
        %2722 = vmatpush1.bf16.msra.mxu0 0
        %2723 = vmatprep.subr.bf16.mxu0 0
        %2724 = vmatpush1.bf16.msra.mxu0 0
        %2725 = vmatprep.subr.bf16.mxu0 0
        %2726 = vmatpush1.bf16.msra.mxu0 0
        %2727 = vmatprep.subr.bf16.mxu0 0
        %2728 = vmatpush1.bf16.msra.mxu0 0
        %2729 = vmatprep.subr.bf16.mxu0 0
        %2730 = vmatpush1.bf16.msra.mxu0 0
        %2731 = vmatprep.subr.bf16.mxu0 0
        %2732 = vmatpush1.bf16.msra.mxu0 0
        %2733 = vmatprep.subr.bf16.mxu0 0
        %2734 = vmatpush1.bf16.msra.mxu0 0
        %2735 = vmatprep.subr.bf16.mxu0 0
        %2736 = vmatpush1.bf16.msra.mxu0 0
        %2737 = vmatprep.subr.bf16.mxu0 0
        %2738 = vmatpush1.bf16.msra.mxu0 0
        %2739 = vmatprep.subr.bf16.mxu0 0
        %2740 = vmatpush1.bf16.msra.mxu0 0
        %2741 = vmatprep.subr.bf16.mxu0 0
        %2742 = vmatpush1.bf16.msra.mxu0 0
        %2743 = vmatprep.subr.bf16.mxu0 0
        %2744 = vmatpush1.bf16.msra.mxu0 0
        %2745 = vmatprep.subr.bf16.mxu0 0
        %2746 = vmatpush1.bf16.msra.mxu0 0
        %2747 = vmatprep.subr.bf16.mxu0 0
        %2748 = vmatpush1.bf16.msra.mxu0 0
        %2749 = vmatprep.subr.bf16.mxu0 0
        %2750 = vmatpush1.bf16.msra.mxu0 0
        %2751 = vmatprep.mubr.bf16.mxu0 0
        %2752 = vmatmul.mubr.bf16.gmra.mrb[0].mxu0 %v2714
        %v2753 = vpop.f32.mrb[0].mxu0
        %v2754 = vadd.f32 0.0, %v2753
        %v2755 = vpop.f32.mrb[0].mxu0
        %v2756 = vpop.f32.mrb[0].mxu0
        %v2757 = vpop.f32.mrb[0].mxu0
        %2758 = vdwg.mxu0
        %2759 = vrot.lane.b32.xlu0 %v2535, 112
        %v2760 = vpop.permute.xlu0 %2759
        %2761 = vrot.lane.b32.xlu0 %v2535, 80
        %v2762 = vpop.permute.xlu0 %2761
        %v2764 = vsel %vm1044, %v2760, 0
        %v2767 = vsel %vm1044, %v2762, 0
        %2769 = vmatprep.subr.bf16.mxu0 0
        %2770 = vmatpush1.bf16.xpose.msra.mxu0 %v2767
        %2771 = vmatprep.subr.bf16.mxu0 0
        %2772 = vmatpush1.bf16.xpose.msra.mxu0 0
        %2773 = vmatprep.subr.bf16.mxu0 0
        %2774 = vmatpush1.bf16.xpose.msra.mxu0 0
        %2775 = vmatprep.subr.bf16.mxu0 0
        %2776 = vmatpush1.bf16.xpose.msra.mxu0 0
        %2777 = vmatprep.subr.bf16.mxu0 0
        %2778 = vmatpush1.bf16.xpose.msra.mxu0 0
        %2779 = vmatprep.subr.bf16.mxu0 0
        %2780 = vmatpush1.bf16.xpose.msra.mxu0 0
        %2781 = vmatprep.subr.bf16.mxu0 0
        %2782 = vmatpush1.bf16.xpose.msra.mxu0 0
        %2783 = vmatprep.subr.bf16.mxu0 0
        %2784 = vmatpush1.bf16.xpose.msra.mxu0 0
        %2785 = vmatprep.subr.bf16.mxu0 0
        %2786 = vmatpush1.bf16.xpose.msra.mxu0 0
        %2787 = vmatprep.subr.bf16.mxu0 0
        %2788 = vmatpush1.bf16.xpose.msra.mxu0 0
        %2789 = vmatprep.subr.bf16.mxu0 0
        %2790 = vmatpush1.bf16.xpose.msra.mxu0 0
        %2791 = vmatprep.subr.bf16.mxu0 0
        %2792 = vmatpush1.bf16.xpose.msra.mxu0 0
        %2793 = vmatprep.subr.bf16.mxu0 0
        %2794 = vmatpush1.bf16.xpose.msra.mxu0 0
        %2795 = vmatprep.subr.bf16.mxu0 0
        %2796 = vmatpush1.bf16.xpose.msra.mxu0 0
        %2797 = vmatprep.subr.bf16.mxu0 0
        %2798 = vmatpush1.bf16.xpose.msra.mxu0 0
        %2799 = vmatprep.subr.bf16.mxu0 0
        %2800 = vmatpush1.bf16.xpose.msra.mxu0 0
        %2801 = vmatprep.mubr.bf16.mxu0 0
        %2802 = vmatmul.mubr.bf16.gmra.mrb[0].mxu0 %v2764
        %v2803 = vpop.f32.mrb[0].mxu0
        %v2804 = vadd.f32 0.0, %v2803
        %v2805 = vpop.f32.mrb[0].mxu0
        %v2806 = vpop.f32.mrb[0].mxu0
        %v2807 = vpop.f32.mrb[0].mxu0
        %2808 = vdwg.mxu0
        %v2809 = vmul.f32 %v2804, 0.35355338
        %v2810 = vadd.f32 %v2809, %v1096
        %v2811 = vsel %vm1044, %v2810, -inf
        %2812 = vmax.xlane.f32.xlu0 %v2811
        %v2813 = vpop.xlane.xlu0 %2812
        %v2814 = vsub.f32 %v2810, %v2813
        %v2815 = vmul.f32 %v2814, 1.442695
        %v2816 = vpow.pop %v2815
        %v2817 = vsel %vm1044, %v2816, 0.0
        %2818 = vadd.xlane.f32.xlu0 %v2817
        %v2819 = vpop.xlane.xlu0 %2818
        %v2820 = vrcp.pop %v2819
        %v2821 = vmul.f32 %v2816, %v2820
        %v2822 = vpack.c.bf16 %v2821, %v2821
        %2823 = vrot.lane.b32.xlu0 %v2535, 48
        %v2824 = vpop.permute.xlu0 %2823
        %v2826 = vsel %vm1044, %v2822, 0
        %v2829 = vsel %vm1116, %v2824, 0
        %2831 = vmatprep.subr.bf16.mxu0 0
        %2832 = vmatpush1.bf16.msra.mxu0 %v2829
        %2833 = vmatprep.subr.bf16.mxu0 0
        %2834 = vmatpush1.bf16.msra.mxu0 0
        %2835 = vmatprep.subr.bf16.mxu0 0
        %2836 = vmatpush1.bf16.msra.mxu0 0
        %2837 = vmatprep.subr.bf16.mxu0 0
        %2838 = vmatpush1.bf16.msra.mxu0 0
        %2839 = vmatprep.subr.bf16.mxu0 0
        %2840 = vmatpush1.bf16.msra.mxu0 0
        %2841 = vmatprep.subr.bf16.mxu0 0
        %2842 = vmatpush1.bf16.msra.mxu0 0
        %2843 = vmatprep.subr.bf16.mxu0 0
        %2844 = vmatpush1.bf16.msra.mxu0 0
        %2845 = vmatprep.subr.bf16.mxu0 0
        %2846 = vmatpush1.bf16.msra.mxu0 0
        %2847 = vmatprep.subr.bf16.mxu0 0
        %2848 = vmatpush1.bf16.msra.mxu0 0
        %2849 = vmatprep.subr.bf16.mxu0 0
        %2850 = vmatpush1.bf16.msra.mxu0 0
        %2851 = vmatprep.subr.bf16.mxu0 0
        %2852 = vmatpush1.bf16.msra.mxu0 0
        %2853 = vmatprep.subr.bf16.mxu0 0
        %2854 = vmatpush1.bf16.msra.mxu0 0
        %2855 = vmatprep.subr.bf16.mxu0 0
        %2856 = vmatpush1.bf16.msra.mxu0 0
        %2857 = vmatprep.subr.bf16.mxu0 0
        %2858 = vmatpush1.bf16.msra.mxu0 0
        %2859 = vmatprep.subr.bf16.mxu0 0
        %2860 = vmatpush1.bf16.msra.mxu0 0
        %2861 = vmatprep.subr.bf16.mxu0 0
        %2862 = vmatpush1.bf16.msra.mxu0 0
        %2863 = vmatprep.mubr.bf16.mxu0 0
        %2864 = vmatmul.mubr.bf16.gmra.mrb[0].mxu0 %v2826
        %v2865 = vpop.f32.mrb[0].mxu0
        %v2866 = vadd.f32 0.0, %v2865
        %v2867 = vpop.f32.mrb[0].mxu0
        %v2868 = vpop.f32.mrb[0].mxu0
        %v2869 = vpop.f32.mrb[0].mxu0
        %2870 = vdwg.mxu0
        %2871 = vrot.lane.b32.xlu0 %v2535, 104
        %v2872 = vpop.permute.xlu0 %2871
        %2873 = vrot.lane.b32.xlu0 %v2535, 72
        %v2874 = vpop.permute.xlu0 %2873
        %v2876 = vsel %vm1044, %v2872, 0
        %v2879 = vsel %vm1044, %v2874, 0
        %2881 = vmatprep.subr.bf16.mxu0 0
        %2882 = vmatpush1.bf16.xpose.msra.mxu0 %v2879
        %2883 = vmatprep.subr.bf16.mxu0 0
        %2884 = vmatpush1.bf16.xpose.msra.mxu0 0
        %2885 = vmatprep.subr.bf16.mxu0 0
        %2886 = vmatpush1.bf16.xpose.msra.mxu0 0
        %2887 = vmatprep.subr.bf16.mxu0 0
        %2888 = vmatpush1.bf16.xpose.msra.mxu0 0
        %2889 = vmatprep.subr.bf16.mxu0 0
        %2890 = vmatpush1.bf16.xpose.msra.mxu0 0
        %2891 = vmatprep.subr.bf16.mxu0 0
        %2892 = vmatpush1.bf16.xpose.msra.mxu0 0
        %2893 = vmatprep.subr.bf16.mxu0 0
        %2894 = vmatpush1.bf16.xpose.msra.mxu0 0
        %2895 = vmatprep.subr.bf16.mxu0 0
        %2896 = vmatpush1.bf16.xpose.msra.mxu0 0
        %2897 = vmatprep.subr.bf16.mxu0 0
        %2898 = vmatpush1.bf16.xpose.msra.mxu0 0
        %2899 = vmatprep.subr.bf16.mxu0 0
        %2900 = vmatpush1.bf16.xpose.msra.mxu0 0
        %2901 = vmatprep.subr.bf16.mxu0 0
        %2902 = vmatpush1.bf16.xpose.msra.mxu0 0
        %2903 = vmatprep.subr.bf16.mxu0 0
        %2904 = vmatpush1.bf16.xpose.msra.mxu0 0
        %2905 = vmatprep.subr.bf16.mxu0 0
        %2906 = vmatpush1.bf16.xpose.msra.mxu0 0
        %2907 = vmatprep.subr.bf16.mxu0 0
        %2908 = vmatpush1.bf16.xpose.msra.mxu0 0
        %2909 = vmatprep.subr.bf16.mxu0 0
        %2910 = vmatpush1.bf16.xpose.msra.mxu0 0
        %2911 = vmatprep.subr.bf16.mxu0 0
        %2912 = vmatpush1.bf16.xpose.msra.mxu0 0
        %2913 = vmatprep.mubr.bf16.mxu0 0
        %2914 = vmatmul.mubr.bf16.gmra.mrb[0].mxu0 %v2876
        %v2915 = vpop.f32.mrb[0].mxu0
        %v2916 = vadd.f32 0.0, %v2915
        %v2917 = vpop.f32.mrb[0].mxu0
        %v2918 = vpop.f32.mrb[0].mxu0
        %v2919 = vpop.f32.mrb[0].mxu0
        %2920 = vdwg.mxu0
        %v2921 = vmul.f32 %v2916, 0.35355338
        %v2922 = vadd.f32 %v2921, %v1096
        %v2923 = vsel %vm1044, %v2922, -inf
        %2924 = vmax.xlane.f32.xlu0 %v2923
        %v2925 = vpop.xlane.xlu0 %2924
        %v2926 = vsub.f32 %v2922, %v2925
        %v2927 = vmul.f32 %v2926, 1.442695
        %v2928 = vpow.pop %v2927
        %v2929 = vsel %vm1044, %v2928, 0.0
        %2930 = vadd.xlane.f32.xlu0 %v2929
        %v2931 = vpop.xlane.xlu0 %2930
        %v2932 = vrcp.pop %v2931
        %v2933 = vmul.f32 %v2928, %v2932
        %v2934 = vpack.c.bf16 %v2933, %v2933
        %2935 = vrot.lane.b32.xlu0 %v2535, 40
        %v2936 = vpop.permute.xlu0 %2935
        %v2938 = vsel %vm1044, %v2934, 0
        %v2941 = vsel %vm1116, %v2936, 0
        %2943 = vmatprep.subr.bf16.mxu0 0
        %2944 = vmatpush1.bf16.msra.mxu0 %v2941
        %2945 = vmatprep.subr.bf16.mxu0 0
        %2946 = vmatpush1.bf16.msra.mxu0 0
        %2947 = vmatprep.subr.bf16.mxu0 0
        %2948 = vmatpush1.bf16.msra.mxu0 0
        %2949 = vmatprep.subr.bf16.mxu0 0
        %2950 = vmatpush1.bf16.msra.mxu0 0
        %2951 = vmatprep.subr.bf16.mxu0 0
        %2952 = vmatpush1.bf16.msra.mxu0 0
        %2953 = vmatprep.subr.bf16.mxu0 0
        %2954 = vmatpush1.bf16.msra.mxu0 0
        %2955 = vmatprep.subr.bf16.mxu0 0
        %2956 = vmatpush1.bf16.msra.mxu0 0
        %2957 = vmatprep.subr.bf16.mxu0 0
        %2958 = vmatpush1.bf16.msra.mxu0 0
        %2959 = vmatprep.subr.bf16.mxu0 0
        %2960 = vmatpush1.bf16.msra.mxu0 0
        %2961 = vmatprep.subr.bf16.mxu0 0
        %2962 = vmatpush1.bf16.msra.mxu0 0
        %2963 = vmatprep.subr.bf16.mxu0 0
        %2964 = vmatpush1.bf16.msra.mxu0 0
        %2965 = vmatprep.subr.bf16.mxu0 0
        %2966 = vmatpush1.bf16.msra.mxu0 0
        %2967 = vmatprep.subr.bf16.mxu0 0
        %2968 = vmatpush1.bf16.msra.mxu0 0
        %2969 = vmatprep.subr.bf16.mxu0 0
        %2970 = vmatpush1.bf16.msra.mxu0 0
        %2971 = vmatprep.subr.bf16.mxu0 0
        %2972 = vmatpush1.bf16.msra.mxu0 0
        %2973 = vmatprep.subr.bf16.mxu0 0
        %2974 = vmatpush1.bf16.msra.mxu0 0
        %2975 = vmatprep.mubr.bf16.mxu0 0
        %2976 = vmatmul.mubr.bf16.gmra.mrb[0].mxu0 %v2938
        %v2977 = vpop.f32.mrb[0].mxu0
        %v2978 = vadd.f32 0.0, %v2977
        %v2979 = vpop.f32.mrb[0].mxu0
        %v2980 = vpop.f32.mrb[0].mxu0
        %v2981 = vpop.f32.mrb[0].mxu0
        %2982 = vdwg.mxu0
        %2984 = vrot.lane.b32.xlu0 %v2754, 8
        %v2985 = vpop.permute.xlu0 %2984
        %2988 = vrot.lane.b32.xlu0 %v2866, 16
        %v2989 = vpop.permute.xlu0 %2988
        %2992 = vrot.lane.b32.xlu0 %v2978, 24
        %v2993 = vpop.permute.xlu0 %2992
        %v2995 = vsel %vm1044, %v2642, %v2985
        %v2996 = vsel %vm1509, %v2995, %v2989
        %v2997 = vsel %vm1511, %v2996, %v2993
        %v2998 = vpack.c.bf16 %v2997, %v2997
        %v3000 = vlaneseq
        %v3001 = vshrl.u32 %v3000, 7
        %v3002 = vsub.s32 0, %v3001
        %v3003 = vrot.slane %v2472, %v3002
        %v3009 = vunpack.c.l.b16 %v2467
        %v3010 = vunpack.c.l.b16 %v2468
        %v3011 = vunpack.c.l.b16 %v2469
        %v3012 = vunpack.c.l.b16 %v2470
        %v3013 = vpack.c.b16 %v3010, %v3009
        %v3014 = vpack.c.b16 %v3012, %v3011
        %v3018 = vsel %vm937, %v2998, 0
        %3020 = vmatprep.subr.bf16.mxu0 0
        %3021 = vmatpush1.bf16.msra.mxu0 %v3013
        %3022 = vmatprep.subr.bf16.mxu0 0
        %3023 = vmatpush1.bf16.msra.mxu0 %v3014
        %3024 = vmatprep.subr.bf16.mxu0 0
        %3025 = vmatpush1.bf16.msra.mxu0 0
        %3026 = vmatprep.subr.bf16.mxu0 0
        %3027 = vmatpush1.bf16.msra.mxu0 0
        %3028 = vmatprep.subr.bf16.mxu0 0
        %3029 = vmatpush1.bf16.msra.mxu0 0
        %3030 = vmatprep.subr.bf16.mxu0 0
        %3031 = vmatpush1.bf16.msra.mxu0 0
        %3032 = vmatprep.subr.bf16.mxu0 0
        %3033 = vmatpush1.bf16.msra.mxu0 0
        %3034 = vmatprep.subr.bf16.mxu0 0
        %3035 = vmatpush1.bf16.msra.mxu0 0
        %3036 = vmatprep.subr.bf16.mxu0 0
        %3037 = vmatpush1.bf16.msra.mxu0 0
        %3038 = vmatprep.subr.bf16.mxu0 0
        %3039 = vmatpush1.bf16.msra.mxu0 0
        %3040 = vmatprep.subr.bf16.mxu0 0
        %3041 = vmatpush1.bf16.msra.mxu0 0
        %3042 = vmatprep.subr.bf16.mxu0 0
        %3043 = vmatpush1.bf16.msra.mxu0 0
        %3044 = vmatprep.subr.bf16.mxu0 0
        %3045 = vmatpush1.bf16.msra.mxu0 0
        %3046 = vmatprep.subr.bf16.mxu0 0
        %3047 = vmatpush1.bf16.msra.mxu0 0
        %3048 = vmatprep.subr.bf16.mxu0 0
        %3049 = vmatpush1.bf16.msra.mxu0 0
        %3050 = vmatprep.subr.bf16.mxu0 0
        %3051 = vmatpush1.bf16.msra.mxu0 0
        %3052 = vmatprep.mubr.bf16.mxu0 0
        %3053 = vmatmul.mubr.bf16.gmra.mrb[0].mxu0 %v3018
        %v3054 = vpop.f32.mrb[0].mxu0
        %v3055 = vadd.f32 %v3003, %v3054
        %v3056 = vpop.f32.mrb[0].mxu0
        %v3057 = vpop.f32.mrb[0].mxu0
        %v3058 = vpop.f32.mrb[0].mxu0
        %3059 = vdwg.mxu0
        %v3060 = vadd.f32 %v2458, %v3055
        %s3061 = scalar_lea.vmem %s23, 1
        %v3062 = vld [vmem:[%s3061] sm:$0x1]
        %s3063 = scalar_lea.vmem %s25, 1
        %v3064 = vld [vmem:[%s3063] sm:$0x1]
        %v3065 = vsel %vm937, %v3060, 0.0
        %3066 = vadd.xlane.f32.xlu0 %v3065
        %v3067 = vpop.xlane.xlu0 %3066
        %v3068 = vmul.f32 %v3060, %v3060
        %v3069 = vsel %vm937, %v3068, 0.0
        %3070 = vadd.xlane.f32.xlu0 %v3069
        %v3071 = vpop.xlane.xlu0 %3070
        %v3072 = vmul.f32 %v3067, 0.03125
        %v3073 = vmul.f32 %v3071, 0.03125
        %v3074 = vmul.f32 %v3072, %v3072
        %v3075 = vsub.f32 %v3073, %v3074
        %v3076 = vsub.f32 %v3060, %v3072
        %v3077 = vadd.f32 %v3075, 1e-12
        %v3078 = vrsqrt.pop %v3077
        %v3079 = vmul.f32 %v3076, %v3078
        %v3081 = vlaneseq
        %v3082 = vshrl.u32 %v3081, 7
        %v3083 = vsub.s32 0, %v3082
        %v3084 = vrot.slane %v3062, %v3083
        %v3086 = vmul.f32 %v3079, %v3084
        %v3088 = vlaneseq
        %v3089 = vshrl.u32 %v3088, 7
        %v3090 = vsub.s32 0, %v3089
        %v3091 = vrot.slane %v3064, %v3090
        %v3093 = vadd.f32 %v3086, %v3091
        %s3094 = scalar_lea.vmem %s7, 8
        %v3095 = vld [vmem:[%s3094] sm:$0x1f]
        %s3096 = scalar_lea.vmem %s9, 8
        %v3097 = vld [vmem:[%s3096] sm:$0x1f]
        %s3098 = scalar_lea.vmem %s27, 16
        %v3099 = vld [vmem:[%s3098] sm:$0xf]
        %v3100 = vld [vmem:[%s3098 + $0x4] sm:$0xf]
        %v3101 = vld [vmem:[%s3098 + $0x8] sm:$0xf]
        %v3102 = vld [vmem:[%s3098 + $0xc] sm:$0xf]
        %s3103 = scalar_lea.vmem %s29, 1
        %v3104 = vld [vmem:[%s3103] sm:$0x1]
        %s3105 = scalar_lea.vmem %s31, 16
        %v3106 = vld [vmem:[%s3105] sm:$0xf]
        %v3107 = vld [vmem:[%s3105 + $0x4] sm:$0xf]
        %v3108 = vld [vmem:[%s3105 + $0x8] sm:$0xf]
        %v3109 = vld [vmem:[%s3105 + $0xc] sm:$0xf]
        %s3110 = scalar_lea.vmem %s33, 1
        %v3111 = vld [vmem:[%s3110] sm:$0x1]
        %v3112 = vpack.c.bf16 %v3093, %v3093
        %v3114 = vlaneseq
        %v3115 = vshrl.u32 %v3114, 7
        %v3116 = vsub.s32 0, %v3115
        %v3117 = vrot.slane %v3104, %v3116
        %v3123 = vunpack.c.l.b16 %v3099
        %v3124 = vunpack.c.l.b16 %v3100
        %v3125 = vunpack.c.l.b16 %v3101
        %v3126 = vunpack.c.l.b16 %v3102
        %v3127 = vpack.c.b16 %v3124, %v3123
        %v3128 = vpack.c.b16 %v3126, %v3125
        %v3132 = vsel %vm937, %v3112, 0
        %3134 = vmatprep.subr.bf16.mxu0 0
        %3135 = vmatpush1.bf16.msra.mxu0 %v3127
        %3136 = vmatprep.subr.bf16.mxu0 0
        %3137 = vmatpush1.bf16.msra.mxu0 %v3128
        %3138 = vmatprep.subr.bf16.mxu0 0
        %3139 = vmatpush1.bf16.msra.mxu0 0
        %3140 = vmatprep.subr.bf16.mxu0 0
        %3141 = vmatpush1.bf16.msra.mxu0 0
        %3142 = vmatprep.subr.bf16.mxu0 0
        %3143 = vmatpush1.bf16.msra.mxu0 0
        %3144 = vmatprep.subr.bf16.mxu0 0
        %3145 = vmatpush1.bf16.msra.mxu0 0
        %3146 = vmatprep.subr.bf16.mxu0 0
        %3147 = vmatpush1.bf16.msra.mxu0 0
        %3148 = vmatprep.subr.bf16.mxu0 0
        %3149 = vmatpush1.bf16.msra.mxu0 0
        %3150 = vmatprep.subr.bf16.mxu0 0
        %3151 = vmatpush1.bf16.msra.mxu0 0
        %3152 = vmatprep.subr.bf16.mxu0 0
        %3153 = vmatpush1.bf16.msra.mxu0 0
        %3154 = vmatprep.subr.bf16.mxu0 0
        %3155 = vmatpush1.bf16.msra.mxu0 0
        %3156 = vmatprep.subr.bf16.mxu0 0
        %3157 = vmatpush1.bf16.msra.mxu0 0
        %3158 = vmatprep.subr.bf16.mxu0 0
        %3159 = vmatpush1.bf16.msra.mxu0 0
        %3160 = vmatprep.subr.bf16.mxu0 0
        %3161 = vmatpush1.bf16.msra.mxu0 0
        %3162 = vmatprep.subr.bf16.mxu0 0
        %3163 = vmatpush1.bf16.msra.mxu0 0
        %3164 = vmatprep.subr.bf16.mxu0 0
        %3165 = vmatpush1.bf16.msra.mxu0 0
        %3166 = vmatprep.mubr.bf16.mxu0 0
        %3167 = vmatmul.mubr.bf16.gmra.mrb[0].mxu0 %v3132
        %v3168 = vpop.f32.mrb[0].mxu0
        %v3169 = vadd.f32 %v3117, %v3168
        %v3170 = vpop.f32.mrb[0].mxu0
        %v3171 = vpop.f32.mrb[0].mxu0
        %v3172 = vpop.f32.mrb[0].mxu0
        %3173 = vdwg.mxu0
        %v3174 = vpack.c.bf16 %v3095, %v3095
        %v3175 = vpack.c.bf16 %v3097, %v3097
        %v3176 = vpack.c.bf16 %v3169, %v3169
        %v3178 = vsel %vm1044, %v3176, 0
        %v3181 = vsel %vm1044, %v3174, 0
        %3183 = vmatprep.subr.bf16.mxu0 0
        %3184 = vmatpush1.bf16.xpose.msra.mxu0 %v3181
        %3185 = vmatprep.subr.bf16.mxu0 0
        %3186 = vmatpush1.bf16.xpose.msra.mxu0 0
        %3187 = vmatprep.subr.bf16.mxu0 0
        %3188 = vmatpush1.bf16.xpose.msra.mxu0 0
        %3189 = vmatprep.subr.bf16.mxu0 0
        %3190 = vmatpush1.bf16.xpose.msra.mxu0 0
        %3191 = vmatprep.subr.bf16.mxu0 0
        %3192 = vmatpush1.bf16.xpose.msra.mxu0 0
        %3193 = vmatprep.subr.bf16.mxu0 0
        %3194 = vmatpush1.bf16.xpose.msra.mxu0 0
        %3195 = vmatprep.subr.bf16.mxu0 0
        %3196 = vmatpush1.bf16.xpose.msra.mxu0 0
        %3197 = vmatprep.subr.bf16.mxu0 0
        %3198 = vmatpush1.bf16.xpose.msra.mxu0 0
        %3199 = vmatprep.subr.bf16.mxu0 0
        %3200 = vmatpush1.bf16.xpose.msra.mxu0 0
        %3201 = vmatprep.subr.bf16.mxu0 0
        %3202 = vmatpush1.bf16.xpose.msra.mxu0 0
        %3203 = vmatprep.subr.bf16.mxu0 0
        %3204 = vmatpush1.bf16.xpose.msra.mxu0 0
        %3205 = vmatprep.subr.bf16.mxu0 0
        %3206 = vmatpush1.bf16.xpose.msra.mxu0 0
        %3207 = vmatprep.subr.bf16.mxu0 0
        %3208 = vmatpush1.bf16.xpose.msra.mxu0 0
        %3209 = vmatprep.subr.bf16.mxu0 0
        %3210 = vmatpush1.bf16.xpose.msra.mxu0 0
        %3211 = vmatprep.subr.bf16.mxu0 0
        %3212 = vmatpush1.bf16.xpose.msra.mxu0 0
        %3213 = vmatprep.subr.bf16.mxu0 0
        %3214 = vmatpush1.bf16.xpose.msra.mxu0 0
        %3215 = vmatprep.mubr.bf16.mxu0 0
        %3216 = vmatmul.mubr.bf16.gmra.mrb[0].mxu0 %v3178
        %v3217 = vpop.f32.mrb[0].mxu0
        %v3218 = vadd.f32 0.0, %v3217
        %v3219 = vpop.f32.mrb[0].mxu0
        %v3220 = vpop.f32.mrb[0].mxu0
        %v3221 = vpop.f32.mrb[0].mxu0
        %3222 = vdwg.mxu0
        %v3223 = vmul.f32 %v3218, 0.35355338
        %v3224 = vsel %vm1731, %v3223, -inf
        %3225 = vmax.xlane.f32.xlu0 %v3224
        %v3226 = vpop.xlane.xlu0 %3225
        %v3227 = vsub.f32 %v3223, %v3226
        %v3228 = vmul.f32 %v3227, 1.442695
        %v3229 = vpow.pop %v3228
        %v3230 = vsel %vm1731, %v3229, 0.0
        %3231 = vadd.xlane.f32.xlu0 %v3230
        %v3232 = vpop.xlane.xlu0 %3231
        %v3233 = vrcp.pop %v3232
        %v3234 = vmul.f32 %v3229, %v3233
        %v3235 = vpack.c.bf16 %v3234, %v3234
        %v3237 = vsel %vm1731, %v3235, 0
        %v3240 = vand.u32 %v3175, %v1750
        %3242 = vmatprep.subr.bf16.mxu0 0
        %3243 = vmatpush1.bf16.msra.mxu0 %v3240
        %3244 = vmatprep.subr.bf16.mxu0 0
        %3245 = vmatpush1.bf16.msra.mxu0 0
        %3246 = vmatprep.subr.bf16.mxu0 0
        %3247 = vmatpush1.bf16.msra.mxu0 0
        %3248 = vmatprep.subr.bf16.mxu0 0
        %3249 = vmatpush1.bf16.msra.mxu0 0
        %3250 = vmatprep.subr.bf16.mxu0 0
        %3251 = vmatpush1.bf16.msra.mxu0 0
        %3252 = vmatprep.subr.bf16.mxu0 0
        %3253 = vmatpush1.bf16.msra.mxu0 0
        %3254 = vmatprep.subr.bf16.mxu0 0
        %3255 = vmatpush1.bf16.msra.mxu0 0
        %3256 = vmatprep.subr.bf16.mxu0 0
        %3257 = vmatpush1.bf16.msra.mxu0 0
        %3258 = vmatprep.subr.bf16.mxu0 0
        %3259 = vmatpush1.bf16.msra.mxu0 0
        %3260 = vmatprep.subr.bf16.mxu0 0
        %3261 = vmatpush1.bf16.msra.mxu0 0
        %3262 = vmatprep.subr.bf16.mxu0 0
        %3263 = vmatpush1.bf16.msra.mxu0 0
        %3264 = vmatprep.subr.bf16.mxu0 0
        %3265 = vmatpush1.bf16.msra.mxu0 0
        %3266 = vmatprep.subr.bf16.mxu0 0
        %3267 = vmatpush1.bf16.msra.mxu0 0
        %3268 = vmatprep.subr.bf16.mxu0 0
        %3269 = vmatpush1.bf16.msra.mxu0 0
        %3270 = vmatprep.subr.bf16.mxu0 0
        %3271 = vmatpush1.bf16.msra.mxu0 0
        %3272 = vmatprep.subr.bf16.mxu0 0
        %3273 = vmatpush1.bf16.msra.mxu0 0
        %3274 = vmatprep.mubr.bf16.mxu0 0
        %3275 = vmatmul.mubr.bf16.gmra.mrb[0].mxu0 %v3237
        %v3276 = vpop.f32.mrb[0].mxu0
        %v3277 = vadd.f32 0.0, %v3276
        %v3278 = vpop.f32.mrb[0].mxu0
        %v3279 = vpop.f32.mrb[0].mxu0
        %v3280 = vpop.f32.mrb[0].mxu0
        %3281 = vdwg.mxu0
        %3283 = vrot.lane.b32.xlu0 %v3176, 120
        %v3284 = vpop.permute.xlu0 %3283
        %3286 = vrot.lane.b32.xlu0 %v3174, 120
        %v3287 = vpop.permute.xlu0 %3286
        %v3289 = vsel %vm1044, %v3284, 0
        %v3292 = vsel %vm1044, %v3287, 0
        %3294 = vmatprep.subr.bf16.mxu0 0
        %3295 = vmatpush1.bf16.xpose.msra.mxu0 %v3292
        %3296 = vmatprep.subr.bf16.mxu0 0
        %3297 = vmatpush1.bf16.xpose.msra.mxu0 0
        %3298 = vmatprep.subr.bf16.mxu0 0
        %3299 = vmatpush1.bf16.xpose.msra.mxu0 0
        %3300 = vmatprep.subr.bf16.mxu0 0
        %3301 = vmatpush1.bf16.xpose.msra.mxu0 0
        %3302 = vmatprep.subr.bf16.mxu0 0
        %3303 = vmatpush1.bf16.xpose.msra.mxu0 0
        %3304 = vmatprep.subr.bf16.mxu0 0
        %3305 = vmatpush1.bf16.xpose.msra.mxu0 0
        %3306 = vmatprep.subr.bf16.mxu0 0
        %3307 = vmatpush1.bf16.xpose.msra.mxu0 0
        %3308 = vmatprep.subr.bf16.mxu0 0
        %3309 = vmatpush1.bf16.xpose.msra.mxu0 0
        %3310 = vmatprep.subr.bf16.mxu0 0
        %3311 = vmatpush1.bf16.xpose.msra.mxu0 0
        %3312 = vmatprep.subr.bf16.mxu0 0
        %3313 = vmatpush1.bf16.xpose.msra.mxu0 0
        %3314 = vmatprep.subr.bf16.mxu0 0
        %3315 = vmatpush1.bf16.xpose.msra.mxu0 0
        %3316 = vmatprep.subr.bf16.mxu0 0
        %3317 = vmatpush1.bf16.xpose.msra.mxu0 0
        %3318 = vmatprep.subr.bf16.mxu0 0
        %3319 = vmatpush1.bf16.xpose.msra.mxu0 0
        %3320 = vmatprep.subr.bf16.mxu0 0
        %3321 = vmatpush1.bf16.xpose.msra.mxu0 0
        %3322 = vmatprep.subr.bf16.mxu0 0
        %3323 = vmatpush1.bf16.xpose.msra.mxu0 0
        %3324 = vmatprep.subr.bf16.mxu0 0
        %3325 = vmatpush1.bf16.xpose.msra.mxu0 0
        %3326 = vmatprep.mubr.bf16.mxu0 0
        %3327 = vmatmul.mubr.bf16.gmra.mrb[0].mxu0 %v3289
        %v3328 = vpop.f32.mrb[0].mxu0
        %v3329 = vadd.f32 0.0, %v3328
        %v3330 = vpop.f32.mrb[0].mxu0
        %v3331 = vpop.f32.mrb[0].mxu0
        %v3332 = vpop.f32.mrb[0].mxu0
        %3333 = vdwg.mxu0
        %v3334 = vmul.f32 %v3329, 0.35355338
        %v3335 = vsel %vm1731, %v3334, -inf
        %3336 = vmax.xlane.f32.xlu0 %v3335
        %v3337 = vpop.xlane.xlu0 %3336
        %v3338 = vsub.f32 %v3334, %v3337
        %v3339 = vmul.f32 %v3338, 1.442695
        %v3340 = vpow.pop %v3339
        %v3341 = vsel %vm1731, %v3340, 0.0
        %3342 = vadd.xlane.f32.xlu0 %v3341
        %v3343 = vpop.xlane.xlu0 %3342
        %v3344 = vrcp.pop %v3343
        %v3345 = vmul.f32 %v3340, %v3344
        %v3346 = vpack.c.bf16 %v3345, %v3345
        %3348 = vrot.lane.b32.xlu0 %v3175, 120
        %v3349 = vpop.permute.xlu0 %3348
        %v3351 = vsel %vm1731, %v3346, 0
        %v3354 = vand.u32 %v3349, %v1750
        %3356 = vmatprep.subr.bf16.mxu0 0
        %3357 = vmatpush1.bf16.msra.mxu0 %v3354
        %3358 = vmatprep.subr.bf16.mxu0 0
        %3359 = vmatpush1.bf16.msra.mxu0 0
        %3360 = vmatprep.subr.bf16.mxu0 0
        %3361 = vmatpush1.bf16.msra.mxu0 0
        %3362 = vmatprep.subr.bf16.mxu0 0
        %3363 = vmatpush1.bf16.msra.mxu0 0
        %3364 = vmatprep.subr.bf16.mxu0 0
        %3365 = vmatpush1.bf16.msra.mxu0 0
        %3366 = vmatprep.subr.bf16.mxu0 0
        %3367 = vmatpush1.bf16.msra.mxu0 0
        %3368 = vmatprep.subr.bf16.mxu0 0
        %3369 = vmatpush1.bf16.msra.mxu0 0
        %3370 = vmatprep.subr.bf16.mxu0 0
        %3371 = vmatpush1.bf16.msra.mxu0 0
        %3372 = vmatprep.subr.bf16.mxu0 0
        %3373 = vmatpush1.bf16.msra.mxu0 0
        %3374 = vmatprep.subr.bf16.mxu0 0
        %3375 = vmatpush1.bf16.msra.mxu0 0
        %3376 = vmatprep.subr.bf16.mxu0 0
        %3377 = vmatpush1.bf16.msra.mxu0 0
        %3378 = vmatprep.subr.bf16.mxu0 0
        %3379 = vmatpush1.bf16.msra.mxu0 0
        %3380 = vmatprep.subr.bf16.mxu0 0
        %3381 = vmatpush1.bf16.msra.mxu0 0
        %3382 = vmatprep.subr.bf16.mxu0 0
        %3383 = vmatpush1.bf16.msra.mxu0 0
        %3384 = vmatprep.subr.bf16.mxu0 0
        %3385 = vmatpush1.bf16.msra.mxu0 0
        %3386 = vmatprep.subr.bf16.mxu0 0
        %3387 = vmatpush1.bf16.msra.mxu0 0
        %3388 = vmatprep.mubr.bf16.mxu0 0
        %3389 = vmatmul.mubr.bf16.gmra.mrb[0].mxu0 %v3351
        %v3390 = vpop.f32.mrb[0].mxu0
        %v3391 = vadd.f32 0.0, %v3390
        %v3392 = vpop.f32.mrb[0].mxu0
        %v3393 = vpop.f32.mrb[0].mxu0
        %v3394 = vpop.f32.mrb[0].mxu0
        %3395 = vdwg.mxu0
        %3396 = vrot.lane.b32.xlu0 %v3176, 112
        %v3397 = vpop.permute.xlu0 %3396
        %3398 = vrot.lane.b32.xlu0 %v3174, 112
        %v3399 = vpop.permute.xlu0 %3398
        %v3401 = vsel %vm1044, %v3397, 0
        %v3404 = vsel %vm1044, %v3399, 0
        %3406 = vmatprep.subr.bf16.mxu0 0
        %3407 = vmatpush1.bf16.xpose.msra.mxu0 %v3404
        %3408 = vmatprep.subr.bf16.mxu0 0
        %3409 = vmatpush1.bf16.xpose.msra.mxu0 0
        %3410 = vmatprep.subr.bf16.mxu0 0
        %3411 = vmatpush1.bf16.xpose.msra.mxu0 0
        %3412 = vmatprep.subr.bf16.mxu0 0
        %3413 = vmatpush1.bf16.xpose.msra.mxu0 0
        %3414 = vmatprep.subr.bf16.mxu0 0
        %3415 = vmatpush1.bf16.xpose.msra.mxu0 0
        %3416 = vmatprep.subr.bf16.mxu0 0
        %3417 = vmatpush1.bf16.xpose.msra.mxu0 0
        %3418 = vmatprep.subr.bf16.mxu0 0
        %3419 = vmatpush1.bf16.xpose.msra.mxu0 0
        %3420 = vmatprep.subr.bf16.mxu0 0
        %3421 = vmatpush1.bf16.xpose.msra.mxu0 0
        %3422 = vmatprep.subr.bf16.mxu0 0
        %3423 = vmatpush1.bf16.xpose.msra.mxu0 0
        %3424 = vmatprep.subr.bf16.mxu0 0
        %3425 = vmatpush1.bf16.xpose.msra.mxu0 0
        %3426 = vmatprep.subr.bf16.mxu0 0
        %3427 = vmatpush1.bf16.xpose.msra.mxu0 0
        %3428 = vmatprep.subr.bf16.mxu0 0
        %3429 = vmatpush1.bf16.xpose.msra.mxu0 0
        %3430 = vmatprep.subr.bf16.mxu0 0
        %3431 = vmatpush1.bf16.xpose.msra.mxu0 0
        %3432 = vmatprep.subr.bf16.mxu0 0
        %3433 = vmatpush1.bf16.xpose.msra.mxu0 0
        %3434 = vmatprep.subr.bf16.mxu0 0
        %3435 = vmatpush1.bf16.xpose.msra.mxu0 0
        %3436 = vmatprep.subr.bf16.mxu0 0
        %3437 = vmatpush1.bf16.xpose.msra.mxu0 0
        %3438 = vmatprep.mubr.bf16.mxu0 0
        %3439 = vmatmul.mubr.bf16.gmra.mrb[0].mxu0 %v3401
        %v3440 = vpop.f32.mrb[0].mxu0
        %v3441 = vadd.f32 0.0, %v3440
        %v3442 = vpop.f32.mrb[0].mxu0
        %v3443 = vpop.f32.mrb[0].mxu0
        %v3444 = vpop.f32.mrb[0].mxu0
        %3445 = vdwg.mxu0
        %v3446 = vmul.f32 %v3441, 0.35355338
        %v3447 = vsel %vm1731, %v3446, -inf
        %3448 = vmax.xlane.f32.xlu0 %v3447
        %v3449 = vpop.xlane.xlu0 %3448
        %v3450 = vsub.f32 %v3446, %v3449
        %v3451 = vmul.f32 %v3450, 1.442695
        %v3452 = vpow.pop %v3451
        %v3453 = vsel %vm1731, %v3452, 0.0
        %3454 = vadd.xlane.f32.xlu0 %v3453
        %v3455 = vpop.xlane.xlu0 %3454
        %v3456 = vrcp.pop %v3455
        %v3457 = vmul.f32 %v3452, %v3456
        %v3458 = vpack.c.bf16 %v3457, %v3457
        %3459 = vrot.lane.b32.xlu0 %v3175, 112
        %v3460 = vpop.permute.xlu0 %3459
        %v3462 = vsel %vm1731, %v3458, 0
        %v3465 = vand.u32 %v3460, %v1750
        %3467 = vmatprep.subr.bf16.mxu0 0
        %3468 = vmatpush1.bf16.msra.mxu0 %v3465
        %3469 = vmatprep.subr.bf16.mxu0 0
        %3470 = vmatpush1.bf16.msra.mxu0 0
        %3471 = vmatprep.subr.bf16.mxu0 0
        %3472 = vmatpush1.bf16.msra.mxu0 0
        %3473 = vmatprep.subr.bf16.mxu0 0
        %3474 = vmatpush1.bf16.msra.mxu0 0
        %3475 = vmatprep.subr.bf16.mxu0 0
        %3476 = vmatpush1.bf16.msra.mxu0 0
        %3477 = vmatprep.subr.bf16.mxu0 0
        %3478 = vmatpush1.bf16.msra.mxu0 0
        %3479 = vmatprep.subr.bf16.mxu0 0
        %3480 = vmatpush1.bf16.msra.mxu0 0
        %3481 = vmatprep.subr.bf16.mxu0 0
        %3482 = vmatpush1.bf16.msra.mxu0 0
        %3483 = vmatprep.subr.bf16.mxu0 0
        %3484 = vmatpush1.bf16.msra.mxu0 0
        %3485 = vmatprep.subr.bf16.mxu0 0
        %3486 = vmatpush1.bf16.msra.mxu0 0
        %3487 = vmatprep.subr.bf16.mxu0 0
        %3488 = vmatpush1.bf16.msra.mxu0 0
        %3489 = vmatprep.subr.bf16.mxu0 0
        %3490 = vmatpush1.bf16.msra.mxu0 0
        %3491 = vmatprep.subr.bf16.mxu0 0
        %3492 = vmatpush1.bf16.msra.mxu0 0
        %3493 = vmatprep.subr.bf16.mxu0 0
        %3494 = vmatpush1.bf16.msra.mxu0 0
        %3495 = vmatprep.subr.bf16.mxu0 0
        %3496 = vmatpush1.bf16.msra.mxu0 0
        %3497 = vmatprep.subr.bf16.mxu0 0
        %3498 = vmatpush1.bf16.msra.mxu0 0
        %3499 = vmatprep.mubr.bf16.mxu0 0
        %3500 = vmatmul.mubr.bf16.gmra.mrb[0].mxu0 %v3462
        %v3501 = vpop.f32.mrb[0].mxu0
        %v3502 = vadd.f32 0.0, %v3501
        %v3503 = vpop.f32.mrb[0].mxu0
        %v3504 = vpop.f32.mrb[0].mxu0
        %v3505 = vpop.f32.mrb[0].mxu0
        %3506 = vdwg.mxu0
        %3507 = vrot.lane.b32.xlu0 %v3176, 104
        %v3508 = vpop.permute.xlu0 %3507
        %3509 = vrot.lane.b32.xlu0 %v3174, 104
        %v3510 = vpop.permute.xlu0 %3509
        %v3512 = vsel %vm1044, %v3508, 0
        %v3515 = vsel %vm1044, %v3510, 0
        %3517 = vmatprep.subr.bf16.mxu0 0
        %3518 = vmatpush1.bf16.xpose.msra.mxu0 %v3515
        %3519 = vmatprep.subr.bf16.mxu0 0
        %3520 = vmatpush1.bf16.xpose.msra.mxu0 0
        %3521 = vmatprep.subr.bf16.mxu0 0
        %3522 = vmatpush1.bf16.xpose.msra.mxu0 0
        %3523 = vmatprep.subr.bf16.mxu0 0
        %3524 = vmatpush1.bf16.xpose.msra.mxu0 0
        %3525 = vmatprep.subr.bf16.mxu0 0
        %3526 = vmatpush1.bf16.xpose.msra.mxu0 0
        %3527 = vmatprep.subr.bf16.mxu0 0
        %3528 = vmatpush1.bf16.xpose.msra.mxu0 0
        %3529 = vmatprep.subr.bf16.mxu0 0
        %3530 = vmatpush1.bf16.xpose.msra.mxu0 0
        %3531 = vmatprep.subr.bf16.mxu0 0
        %3532 = vmatpush1.bf16.xpose.msra.mxu0 0
        %3533 = vmatprep.subr.bf16.mxu0 0
        %3534 = vmatpush1.bf16.xpose.msra.mxu0 0
        %3535 = vmatprep.subr.bf16.mxu0 0
        %3536 = vmatpush1.bf16.xpose.msra.mxu0 0
        %3537 = vmatprep.subr.bf16.mxu0 0
        %3538 = vmatpush1.bf16.xpose.msra.mxu0 0
        %3539 = vmatprep.subr.bf16.mxu0 0
        %3540 = vmatpush1.bf16.xpose.msra.mxu0 0
        %3541 = vmatprep.subr.bf16.mxu0 0
        %3542 = vmatpush1.bf16.xpose.msra.mxu0 0
        %3543 = vmatprep.subr.bf16.mxu0 0
        %3544 = vmatpush1.bf16.xpose.msra.mxu0 0
        %3545 = vmatprep.subr.bf16.mxu0 0
        %3546 = vmatpush1.bf16.xpose.msra.mxu0 0
        %3547 = vmatprep.subr.bf16.mxu0 0
        %3548 = vmatpush1.bf16.xpose.msra.mxu0 0
        %3549 = vmatprep.mubr.bf16.mxu0 0
        %3550 = vmatmul.mubr.bf16.gmra.mrb[0].mxu0 %v3512
        %v3551 = vpop.f32.mrb[0].mxu0
        %v3552 = vadd.f32 0.0, %v3551
        %v3553 = vpop.f32.mrb[0].mxu0
        %v3554 = vpop.f32.mrb[0].mxu0
        %v3555 = vpop.f32.mrb[0].mxu0
        %3556 = vdwg.mxu0
        %v3557 = vmul.f32 %v3552, 0.35355338
        %v3558 = vsel %vm1731, %v3557, -inf
        %3559 = vmax.xlane.f32.xlu0 %v3558
        %v3560 = vpop.xlane.xlu0 %3559
        %v3561 = vsub.f32 %v3557, %v3560
        %v3562 = vmul.f32 %v3561, 1.442695
        %v3563 = vpow.pop %v3562
        %v3564 = vsel %vm1731, %v3563, 0.0
        %3565 = vadd.xlane.f32.xlu0 %v3564
        %v3566 = vpop.xlane.xlu0 %3565
        %v3567 = vrcp.pop %v3566
        %v3568 = vmul.f32 %v3563, %v3567
        %v3569 = vpack.c.bf16 %v3568, %v3568
        %3570 = vrot.lane.b32.xlu0 %v3175, 104
        %v3571 = vpop.permute.xlu0 %3570
        %v3573 = vsel %vm1731, %v3569, 0
        %v3576 = vand.u32 %v3571, %v1750
        %3578 = vmatprep.subr.bf16.mxu0 0
        %3579 = vmatpush1.bf16.msra.mxu0 %v3576
        %3580 = vmatprep.subr.bf16.mxu0 0
        %3581 = vmatpush1.bf16.msra.mxu0 0
        %3582 = vmatprep.subr.bf16.mxu0 0
        %3583 = vmatpush1.bf16.msra.mxu0 0
        %3584 = vmatprep.subr.bf16.mxu0 0
        %3585 = vmatpush1.bf16.msra.mxu0 0
        %3586 = vmatprep.subr.bf16.mxu0 0
        %3587 = vmatpush1.bf16.msra.mxu0 0
        %3588 = vmatprep.subr.bf16.mxu0 0
        %3589 = vmatpush1.bf16.msra.mxu0 0
        %3590 = vmatprep.subr.bf16.mxu0 0
        %3591 = vmatpush1.bf16.msra.mxu0 0
        %3592 = vmatprep.subr.bf16.mxu0 0
        %3593 = vmatpush1.bf16.msra.mxu0 0
        %3594 = vmatprep.subr.bf16.mxu0 0
        %3595 = vmatpush1.bf16.msra.mxu0 0
        %3596 = vmatprep.subr.bf16.mxu0 0
        %3597 = vmatpush1.bf16.msra.mxu0 0
        %3598 = vmatprep.subr.bf16.mxu0 0
        %3599 = vmatpush1.bf16.msra.mxu0 0
        %3600 = vmatprep.subr.bf16.mxu0 0
        %3601 = vmatpush1.bf16.msra.mxu0 0
        %3602 = vmatprep.subr.bf16.mxu0 0
        %3603 = vmatpush1.bf16.msra.mxu0 0
        %3604 = vmatprep.subr.bf16.mxu0 0
        %3605 = vmatpush1.bf16.msra.mxu0 0
        %3606 = vmatprep.subr.bf16.mxu0 0
        %3607 = vmatpush1.bf16.msra.mxu0 0
        %3608 = vmatprep.subr.bf16.mxu0 0
        %3609 = vmatpush1.bf16.msra.mxu0 0
        %3610 = vmatprep.mubr.bf16.mxu0 0
        %3611 = vmatmul.mubr.bf16.gmra.mrb[0].mxu0 %v3573
        %v3612 = vpop.f32.mrb[0].mxu0
        %v3613 = vadd.f32 0.0, %v3612
        %v3614 = vpop.f32.mrb[0].mxu0
        %v3615 = vpop.f32.mrb[0].mxu0
        %v3616 = vpop.f32.mrb[0].mxu0
        %3617 = vdwg.mxu0
        %3619 = vrot.lane.b32.xlu0 %v3391, 8
        %v3620 = vpop.permute.xlu0 %3619
        %3623 = vrot.lane.b32.xlu0 %v3502, 16
        %v3624 = vpop.permute.xlu0 %3623
        %3627 = vrot.lane.b32.xlu0 %v3613, 24
        %v3628 = vpop.permute.xlu0 %3627
        %v3630 = vsel %vm1044, %v3277, %v3620
        %v3631 = vsel %vm1509, %v3630, %v3624
        %v3632 = vsel %vm1511, %v3631, %v3628
        %v3633 = vpack.c.bf16 %v3632, %v3632
        %v3635 = vlaneseq
        %v3636 = vshrl.u32 %v3635, 7
        %v3637 = vsub.s32 0, %v3636
        %v3638 = vrot.slane %v3111, %v3637
        %v3644 = vunpack.c.l.b16 %v3106
        %v3645 = vunpack.c.l.b16 %v3107
        %v3646 = vunpack.c.l.b16 %v3108
        %v3647 = vunpack.c.l.b16 %v3109
        %v3648 = vpack.c.b16 %v3645, %v3644
        %v3649 = vpack.c.b16 %v3647, %v3646
        %v3653 = vsel %vm937, %v3633, 0
        %3655 = vmatprep.subr.bf16.mxu0 0
        %3656 = vmatpush1.bf16.msra.mxu0 %v3648
        %3657 = vmatprep.subr.bf16.mxu0 0
        %3658 = vmatpush1.bf16.msra.mxu0 %v3649
        %3659 = vmatprep.subr.bf16.mxu0 0
        %3660 = vmatpush1.bf16.msra.mxu0 0
        %3661 = vmatprep.subr.bf16.mxu0 0
        %3662 = vmatpush1.bf16.msra.mxu0 0
        %3663 = vmatprep.subr.bf16.mxu0 0
        %3664 = vmatpush1.bf16.msra.mxu0 0
        %3665 = vmatprep.subr.bf16.mxu0 0
        %3666 = vmatpush1.bf16.msra.mxu0 0
        %3667 = vmatprep.subr.bf16.mxu0 0
        %3668 = vmatpush1.bf16.msra.mxu0 0
        %3669 = vmatprep.subr.bf16.mxu0 0
        %3670 = vmatpush1.bf16.msra.mxu0 0
        %3671 = vmatprep.subr.bf16.mxu0 0
        %3672 = vmatpush1.bf16.msra.mxu0 0
        %3673 = vmatprep.subr.bf16.mxu0 0
        %3674 = vmatpush1.bf16.msra.mxu0 0
        %3675 = vmatprep.subr.bf16.mxu0 0
        %3676 = vmatpush1.bf16.msra.mxu0 0
        %3677 = vmatprep.subr.bf16.mxu0 0
        %3678 = vmatpush1.bf16.msra.mxu0 0
        %3679 = vmatprep.subr.bf16.mxu0 0
        %3680 = vmatpush1.bf16.msra.mxu0 0
        %3681 = vmatprep.subr.bf16.mxu0 0
        %3682 = vmatpush1.bf16.msra.mxu0 0
        %3683 = vmatprep.subr.bf16.mxu0 0
        %3684 = vmatpush1.bf16.msra.mxu0 0
        %3685 = vmatprep.subr.bf16.mxu0 0
        %3686 = vmatpush1.bf16.msra.mxu0 0
        %3687 = vmatprep.mubr.bf16.mxu0 0
        %3688 = vmatmul.mubr.bf16.gmra.mrb[0].mxu0 %v3653
        %v3689 = vpop.f32.mrb[0].mxu0
        %v3690 = vadd.f32 %v3638, %v3689
        %v3691 = vpop.f32.mrb[0].mxu0
        %v3692 = vpop.f32.mrb[0].mxu0
        %v3693 = vpop.f32.mrb[0].mxu0
        %3694 = vdwg.mxu0
        %v3695 = vadd.f32 %v3093, %v3690
        %s3696 = scalar_lea.vmem %s35, 1
        %v3697 = vld [vmem:[%s3696] sm:$0x1]
        %s3698 = scalar_lea.vmem %s37, 1
        %v3699 = vld [vmem:[%s3698] sm:$0x1]
        %v3700 = vsel %vm937, %v3695, 0.0
        %3701 = vadd.xlane.f32.xlu0 %v3700
        %v3702 = vpop.xlane.xlu0 %3701
        %v3703 = vmul.f32 %v3695, %v3695
        %v3704 = vsel %vm937, %v3703, 0.0
        %3705 = vadd.xlane.f32.xlu0 %v3704
        %v3706 = vpop.xlane.xlu0 %3705
        %v3707 = vmul.f32 %v3702, 0.03125
        %v3708 = vmul.f32 %v3706, 0.03125
        %v3709 = vmul.f32 %v3707, %v3707
        %v3710 = vsub.f32 %v3708, %v3709
        %v3711 = vsub.f32 %v3695, %v3707
        %v3712 = vadd.f32 %v3710, 1e-12
        %v3713 = vrsqrt.pop %v3712
        %v3714 = vmul.f32 %v3711, %v3713
        %v3716 = vlaneseq
        %v3717 = vshrl.u32 %v3716, 7
        %v3718 = vsub.s32 0, %v3717
        %v3719 = vrot.slane %v3697, %v3718
        %v3721 = vmul.f32 %v3714, %v3719
        %v3723 = vlaneseq
        %v3724 = vshrl.u32 %v3723, 7
        %v3725 = vsub.s32 0, %v3724
        %v3726 = vrot.slane %v3699, %v3725
        %v3728 = vadd.f32 %v3721, %v3726
        %s3729 = scalar_lea.vmem %s39, 16
        %v3730 = vld [vmem:[%s3729] sm:$0xf]
        %v3731 = vld [vmem:[%s3729 + $0x4] sm:$0xf]
        %v3732 = vld [vmem:[%s3729 + $0x8] sm:$0xf]
        %v3733 = vld [vmem:[%s3729 + $0xc] sm:$0xf]
        %v3734 = vpack.c.bf16 %v3728, %v3728
        %s3735 = scalar_lea.vmem %s41, 1
        %v3736 = vld [vmem:[%s3735] sm:$0x1]
        %v3738 = vlaneseq
        %v3739 = vshrl.u32 %v3738, 7
        %v3740 = vsub.s32 0, %v3739
        %v3741 = vrot.slane %v3736, %v3740
        %v3747 = vunpack.c.l.b16 %v3730
        %v3748 = vunpack.c.l.b16 %v3731
        %v3749 = vunpack.c.l.b16 %v3732
        %v3750 = vunpack.c.l.b16 %v3733
        %v3751 = vpack.c.b16 %v3748, %v3747
        %v3752 = vpack.c.b16 %v3750, %v3749
        %v3756 = vsel %vm937, %v3734, 0
        %3758 = vmatprep.subr.bf16.mxu0 0
        %3759 = vmatpush1.bf16.msra.mxu0 %v3751
        %3760 = vmatprep.subr.bf16.mxu0 0
        %3761 = vmatpush1.bf16.msra.mxu0 %v3752
        %3762 = vmatprep.subr.bf16.mxu0 0
        %3763 = vmatpush1.bf16.msra.mxu0 0
        %3764 = vmatprep.subr.bf16.mxu0 0
        %3765 = vmatpush1.bf16.msra.mxu0 0
        %3766 = vmatprep.subr.bf16.mxu0 0
        %3767 = vmatpush1.bf16.msra.mxu0 0
        %3768 = vmatprep.subr.bf16.mxu0 0
        %3769 = vmatpush1.bf16.msra.mxu0 0
        %3770 = vmatprep.subr.bf16.mxu0 0
        %3771 = vmatpush1.bf16.msra.mxu0 0
        %3772 = vmatprep.subr.bf16.mxu0 0
        %3773 = vmatpush1.bf16.msra.mxu0 0
        %3774 = vmatprep.subr.bf16.mxu0 0
        %3775 = vmatpush1.bf16.msra.mxu0 0
        %3776 = vmatprep.subr.bf16.mxu0 0
        %3777 = vmatpush1.bf16.msra.mxu0 0
        %3778 = vmatprep.subr.bf16.mxu0 0
        %3779 = vmatpush1.bf16.msra.mxu0 0
        %3780 = vmatprep.subr.bf16.mxu0 0
        %3781 = vmatpush1.bf16.msra.mxu0 0
        %3782 = vmatprep.subr.bf16.mxu0 0
        %3783 = vmatpush1.bf16.msra.mxu0 0
        %3784 = vmatprep.subr.bf16.mxu0 0
        %3785 = vmatpush1.bf16.msra.mxu0 0
        %3786 = vmatprep.subr.bf16.mxu0 0
        %3787 = vmatpush1.bf16.msra.mxu0 0
        %3788 = vmatprep.subr.bf16.mxu0 0
        %3789 = vmatpush1.bf16.msra.mxu0 0
        %3790 = vmatprep.mubr.bf16.mxu0 0
        %3791 = vmatmul.mubr.bf16.gmra.mrb[0].mxu0 %v3756
        %v3792 = vpop.f32.mrb[0].mxu0
        %v3793 = vadd.f32 %v3741, %v3792
        %v3794 = vpop.f32.mrb[0].mxu0
        %v3795 = vpop.f32.mrb[0].mxu0
        %v3796 = vpop.f32.mrb[0].mxu0
        %3797 = vdwg.mxu0
        %v3798 = vmul.f32 %v3793, %v3793
        %v3799 = vmul.f32 %v3793, %v3798
        %v3800 = vmul.f32 %v3799, 0.044715
        %v3801 = vadd.f32 %v3793, %v3800
        %v3802 = vmul.f32 %v3801, 0.7978846
        %v3803 = vtanh.pop %v3802
        %v3804 = vadd.f32 %v3803, 1.0
        %v3805 = vmul.f32 %v3804, 0.5
        %v3806 = vmul.f32 %v3793, %v3805
        %s3807 = scalar_lea.vmem %s43, 64
        %v3808 = vld [vmem:[%s3807] sm:$0xf]
        %v3809 = vld [vmem:[%s3807 + $0x4] sm:$0xf]
        %v3810 = vld [vmem:[%s3807 + $0x8] sm:$0xf]
        %v3811 = vld [vmem:[%s3807 + $0xc] sm:$0xf]
        %v3812 = vld [vmem:[%s3807 + $0x10] sm:$0xf]
        %v3813 = vld [vmem:[%s3807 + $0x14] sm:$0xf]
        %v3814 = vld [vmem:[%s3807 + $0x18] sm:$0xf]
        %v3815 = vld [vmem:[%s3807 + $0x1c] sm:$0xf]
        %v3816 = vld [vmem:[%s3807 + $0x20] sm:$0xf]
        %v3817 = vld [vmem:[%s3807 + $0x24] sm:$0xf]
        %v3818 = vld [vmem:[%s3807 + $0x28] sm:$0xf]
        %v3819 = vld [vmem:[%s3807 + $0x2c] sm:$0xf]
        %v3820 = vld [vmem:[%s3807 + $0x30] sm:$0xf]
        %v3821 = vld [vmem:[%s3807 + $0x34] sm:$0xf]
        %v3822 = vld [vmem:[%s3807 + $0x38] sm:$0xf]
        %v3823 = vld [vmem:[%s3807 + $0x3c] sm:$0xf]
        %v3824 = vpack.c.bf16 %v3806, %v3806
        %s3825 = scalar_lea.vmem %s45, 1
        %v3826 = vld [vmem:[%s3825] sm:$0x1]
        %v3828 = vlaneseq
        %v3829 = vshrl.u32 %v3828, 7
        %v3830 = vsub.s32 0, %v3829
        %v3831 = vrot.slane %v3826, %v3830
        %v3849 = vunpack.c.l.b16 %v3808
        %v3850 = vunpack.c.l.b16 %v3809
        %v3851 = vunpack.c.l.b16 %v3810
        %v3852 = vunpack.c.l.b16 %v3811
        %v3853 = vunpack.c.l.b16 %v3812
        %v3854 = vunpack.c.l.b16 %v3813
        %v3855 = vunpack.c.l.b16 %v3814
        %v3856 = vunpack.c.l.b16 %v3815
        %v3857 = vunpack.c.l.b16 %v3816
        %v3858 = vunpack.c.l.b16 %v3817
        %v3859 = vunpack.c.l.b16 %v3818
        %v3860 = vunpack.c.l.b16 %v3819
        %v3861 = vunpack.c.l.b16 %v3820
        %v3862 = vunpack.c.l.b16 %v3821
        %v3863 = vunpack.c.l.b16 %v3822
        %v3864 = vunpack.c.l.b16 %v3823
        %v3865 = vpack.c.b16 %v3850, %v3849
        %v3866 = vpack.c.b16 %v3852, %v3851
        %v3867 = vpack.c.b16 %v3854, %v3853
        %v3868 = vpack.c.b16 %v3856, %v3855
        %v3869 = vpack.c.b16 %v3858, %v3857
        %v3870 = vpack.c.b16 %v3860, %v3859
        %v3871 = vpack.c.b16 %v3862, %v3861
        %v3872 = vpack.c.b16 %v3864, %v3863
        %3881 = vmatprep.subr.bf16.mxu0 0
        %3882 = vmatpush1.bf16.msra.mxu0 %v3865
        %3883 = vmatprep.subr.bf16.mxu0 0
        %3884 = vmatpush1.bf16.msra.mxu0 %v3866
        %3885 = vmatprep.subr.bf16.mxu0 0
        %3886 = vmatpush1.bf16.msra.mxu0 %v3867
        %3887 = vmatprep.subr.bf16.mxu0 0
        %3888 = vmatpush1.bf16.msra.mxu0 %v3868
        %3889 = vmatprep.subr.bf16.mxu0 0
        %3890 = vmatpush1.bf16.msra.mxu0 %v3869
        %3891 = vmatprep.subr.bf16.mxu0 0
        %3892 = vmatpush1.bf16.msra.mxu0 %v3870
        %3893 = vmatprep.subr.bf16.mxu0 0
        %3894 = vmatpush1.bf16.msra.mxu0 %v3871
        %3895 = vmatprep.subr.bf16.mxu0 0
        %3896 = vmatpush1.bf16.msra.mxu0 %v3872
        %3897 = vmatprep.subr.bf16.mxu0 0
        %3898 = vmatpush1.bf16.msra.mxu0 0
        %3899 = vmatprep.subr.bf16.mxu0 0
        %3900 = vmatpush1.bf16.msra.mxu0 0
        %3901 = vmatprep.subr.bf16.mxu0 0
        %3902 = vmatpush1.bf16.msra.mxu0 0
        %3903 = vmatprep.subr.bf16.mxu0 0
        %3904 = vmatpush1.bf16.msra.mxu0 0
        %3905 = vmatprep.subr.bf16.mxu0 0
        %3906 = vmatpush1.bf16.msra.mxu0 0
        %3907 = vmatprep.subr.bf16.mxu0 0
        %3908 = vmatpush1.bf16.msra.mxu0 0
        %3909 = vmatprep.subr.bf16.mxu0 0
        %3910 = vmatpush1.bf16.msra.mxu0 0
        %3911 = vmatprep.subr.bf16.mxu0 0
        %3912 = vmatpush1.bf16.msra.mxu0 0
        %3913 = vmatprep.mubr.bf16.mxu0 0
        %3914 = vmatmul.mubr.bf16.gmra.mrb[0].mxu0 %v3824
        %v3915 = vpop.f32.mrb[0].mxu0
        %v3916 = vadd.f32 %v3831, %v3915
        %v3917 = vpop.f32.mrb[0].mxu0
        %v3918 = vpop.f32.mrb[0].mxu0
        %v3919 = vpop.f32.mrb[0].mxu0
        %3920 = vdwg.mxu0
        %v3921 = vadd.f32 %v3728, %v3916
        %s3922 = scalar_lea.vmem %s47, 1
        %v3923 = vld [vmem:[%s3922] sm:$0x1]
        %s3924 = scalar_lea.vmem %s49, 1
        %v3925 = vld [vmem:[%s3924] sm:$0x1]
        %v3926 = vsel %vm937, %v3921, 0.0
        %3927 = vadd.xlane.f32.xlu0 %v3926
        %v3928 = vpop.xlane.xlu0 %3927
        %v3929 = vmul.f32 %v3921, %v3921
        %v3930 = vsel %vm937, %v3929, 0.0
        %3931 = vadd.xlane.f32.xlu0 %v3930
        %v3932 = vpop.xlane.xlu0 %3931
        %v3933 = vmul.f32 %v3928, 0.03125
        %v3934 = vmul.f32 %v3932, 0.03125
        %v3935 = vmul.f32 %v3933, %v3933
        %v3936 = vsub.f32 %v3934, %v3935
        %v3937 = vsub.f32 %v3921, %v3933
        %v3938 = vadd.f32 %v3936, 1e-12
        %v3939 = vrsqrt.pop %v3938
        %v3940 = vmul.f32 %v3937, %v3939
        %v3942 = vlaneseq
        %v3943 = vshrl.u32 %v3942, 7
        %v3944 = vsub.s32 0, %v3943
        %v3945 = vrot.slane %v3923, %v3944
        %v3947 = vmul.f32 %v3940, %v3945
        %v3949 = vlaneseq
        %v3950 = vshrl.u32 %v3949, 7
        %v3951 = vsub.s32 0, %v3950
        %v3952 = vrot.slane %v3925, %v3951
        %v3954 = vadd.f32 %v3947, %v3952
        %v3955 = vlaneseq
        %v3956 = vshrl.u32 %v3955, 7
        %v3957 = vstv %s928
        %vm3958 = vcmp.eq.s32.totalorder %v3956, %v3957
        %v3959 = vsel %vm3958, 1, 0
        %v3960 = vcvt.s32.f32 %v3959
        %v3961 = vmul.f32 %v3954, %v3960
        %v3962 = vsel %vm937, %v3961, 0.0
        %v3963 = vrot.slane %v3962, 4
        %v3964 = vadd.f32 %v3962, %v3963
        %v3965 = vrot.slane %v3964, 2
        %v3966 = vadd.f32 %v3964, %v3965
        %v3967 = vrot.slane %v3966, 1
        %v3968 = vadd.f32 %v3966, %v3967
        %v3969 = vld [vmem:[%s51] sm:$0xf]
        %v3970 = vld [vmem:[%s51 + $0x4] sm:$0xf]
        %v3971 = vld [vmem:[%s51 + $0x8] sm:$0xf]
        %v3972 = vld [vmem:[%s51 + $0xc] sm:$0xf]
        %v3973 = vpack.c.bf16 %v3968, %v3968
        %v3974 = vld [vmem:[%s53] sm:$0x1]
        %v3979 = vunpack.c.l.b16 %v3969
        %v3980 = vunpack.c.l.b16 %v3970
        %v3981 = vunpack.c.l.b16 %v3971
        %v3982 = vunpack.c.l.b16 %v3972
        %v3983 = vpack.c.b16 %v3980, %v3979
        %v3984 = vpack.c.b16 %v3982, %v3981
        %v3988 = vsel %vm937, %v3973, 0
        %3990 = vmatprep.subr.bf16.mxu0 0
        %3991 = vmatpush1.bf16.msra.mxu0 %v3983
        %3992 = vmatprep.subr.bf16.mxu0 0
        %3993 = vmatpush1.bf16.msra.mxu0 %v3984
        %3994 = vmatprep.subr.bf16.mxu0 0
        %3995 = vmatpush1.bf16.msra.mxu0 0
        %3996 = vmatprep.subr.bf16.mxu0 0
        %3997 = vmatpush1.bf16.msra.mxu0 0
        %3998 = vmatprep.subr.bf16.mxu0 0
        %3999 = vmatpush1.bf16.msra.mxu0 0
        %4000 = vmatprep.subr.bf16.mxu0 0
        %4001 = vmatpush1.bf16.msra.mxu0 0
        %4002 = vmatprep.subr.bf16.mxu0 0
        %4003 = vmatpush1.bf16.msra.mxu0 0
        %4004 = vmatprep.subr.bf16.mxu0 0
        %4005 = vmatpush1.bf16.msra.mxu0 0
        %4006 = vmatprep.subr.bf16.mxu0 0
        %4007 = vmatpush1.bf16.msra.mxu0 0
        %4008 = vmatprep.subr.bf16.mxu0 0
        %4009 = vmatpush1.bf16.msra.mxu0 0
        %4010 = vmatprep.subr.bf16.mxu0 0
        %4011 = vmatpush1.bf16.msra.mxu0 0
        %4012 = vmatprep.subr.bf16.mxu0 0
        %4013 = vmatpush1.bf16.msra.mxu0 0
        %4014 = vmatprep.subr.bf16.mxu0 0
        %4015 = vmatpush1.bf16.msra.mxu0 0
        %4016 = vmatprep.subr.bf16.mxu0 0
        %4017 = vmatpush1.bf16.msra.mxu0 0
        %4018 = vmatprep.subr.bf16.mxu0 0
        %4019 = vmatpush1.bf16.msra.mxu0 0
        %4020 = vmatprep.subr.bf16.mxu0 0
        %4021 = vmatpush1.bf16.msra.mxu0 0
        %4022 = vmatprep.mubr.bf16.mxu0 0
        %4023 = vmatmul.mubr.bf16.gmra.mrb[0].mxu0 %v3988
        %v4024 = vpop.f32.mrb[0].mxu0
        %v4025 = vadd.f32 %v3974, %v4024
        %v4026 = vpop.f32.mrb[0].mxu0
        %v4027 = vpop.f32.mrb[0].mxu0
        %v4028 = vpop.f32.mrb[0].mxu0
        %4029 = vdwg.mxu0
        %v4030 = vmul.f32 %v4025, %v4025
        %v4031 = vmul.f32 %v4025, %v4030
        %v4032 = vmul.f32 %v4031, 0.044715
        %v4033 = vadd.f32 %v4025, %v4032
        %v4034 = vmul.f32 %v4033, 0.7978846
        %v4035 = vtanh.pop %v4034
        %v4036 = vadd.f32 %v4035, 1.0
        %v4037 = vmul.f32 %v4036, 0.5
        %v4038 = vmul.f32 %v4025, %v4037
        %v4039 = vld [vmem:[%s55] sm:$0x1]
        %v4040 = vld [vmem:[%s57] sm:$0x1]
        %vm4041 = vcmask 253952
        %v4042 = vsel %vm4041, %v4038, 0.0
        %4043 = vadd.xlane.f32.xlu0 %v4042
        %v4044 = vpop.xlane.xlu0 %4043
        %v4045 = vmul.f32 %v4038, %v4038
        %v4046 = vsel %vm4041, %v4045, 0.0
        %4047 = vadd.xlane.f32.xlu0 %v4046
        %v4048 = vpop.xlane.xlu0 %4047
        %v4049 = vmul.f32 %v4044, 0.03125
        %v4050 = vmul.f32 %v4048, 0.03125
        %v4051 = vmul.f32 %v4049, %v4049
        %v4052 = vsub.f32 %v4050, %v4051
        %v4053 = vsub.f32 %v4038, %v4049
        %v4054 = vadd.f32 %v4052, 1e-12
        %v4055 = vrsqrt.pop %v4054
        %v4056 = vmul.f32 %v4053, %v4055
        %v4057 = vmul.f32 %v4056, %v4039
        %v4058 = vadd.f32 %v4057, %v4040
        %v4059 = vld [vmem:[%s59] sm:$0xf]
        %v4060 = vld [vmem:[%s59 + $0x4] sm:$0xf]
        %v4061 = vld [vmem:[%s59 + $0x8] sm:$0xf]
        %v4062 = vld [vmem:[%s59 + $0xc] sm:$0xf]
        %v4063 = vpack.c.bf16 %v4058, %v4058
        %v4064 = vld [vmem:[%s61] sm:$0x1]
        %v4069 = vunpack.c.l.b16 %v4059
        %v4070 = vunpack.c.l.b16 %v4060
        %v4071 = vunpack.c.l.b16 %v4061
        %v4072 = vunpack.c.l.b16 %v4062
        %v4073 = vpack.c.b16 %v4070, %v4069
        %v4074 = vpack.c.b16 %v4072, %v4071
        %v4078 = vsel %vm937, %v4063, 0
        %4080 = vmatprep.subr.bf16.mxu0 0
        %4081 = vmatpush1.bf16.msra.mxu0 %v4073
        %4082 = vmatprep.subr.bf16.mxu0 0
        %4083 = vmatpush1.bf16.msra.mxu0 %v4074
        %4084 = vmatprep.subr.bf16.mxu0 0
        %4085 = vmatpush1.bf16.msra.mxu0 0
        %4086 = vmatprep.subr.bf16.mxu0 0
        %4087 = vmatpush1.bf16.msra.mxu0 0
        %4088 = vmatprep.subr.bf16.mxu0 0
        %4089 = vmatpush1.bf16.msra.mxu0 0
        %4090 = vmatprep.subr.bf16.mxu0 0
        %4091 = vmatpush1.bf16.msra.mxu0 0
        %4092 = vmatprep.subr.bf16.mxu0 0
        %4093 = vmatpush1.bf16.msra.mxu0 0
        %4094 = vmatprep.subr.bf16.mxu0 0
        %4095 = vmatpush1.bf16.msra.mxu0 0
        %4096 = vmatprep.subr.bf16.mxu0 0
        %4097 = vmatpush1.bf16.msra.mxu0 0
        %4098 = vmatprep.subr.bf16.mxu0 0
        %4099 = vmatpush1.bf16.msra.mxu0 0
        %4100 = vmatprep.subr.bf16.mxu0 0
        %4101 = vmatpush1.bf16.msra.mxu0 0
        %4102 = vmatprep.subr.bf16.mxu0 0
        %4103 = vmatpush1.bf16.msra.mxu0 0
        %4104 = vmatprep.subr.bf16.mxu0 0
        %4105 = vmatpush1.bf16.msra.mxu0 0
        %4106 = vmatprep.subr.bf16.mxu0 0
        %4107 = vmatpush1.bf16.msra.mxu0 0
        %4108 = vmatprep.subr.bf16.mxu0 0
        %4109 = vmatpush1.bf16.msra.mxu0 0
        %4110 = vmatprep.subr.bf16.mxu0 0
        %4111 = vmatpush1.bf16.msra.mxu0 0
        %4112 = vmatprep.mubr.bf16.mxu0 0
        %4113 = vmatmul.mubr.bf16.gmra.mrb[0].mxu0 %v4078
        %v4114 = vpop.f32.mrb[0].mxu0
        %v4115 = vadd.f32 %v4064, %v4114
        %v4116 = vpop.f32.mrb[0].mxu0
        %v4117 = vpop.f32.mrb[0].mxu0
        %v4118 = vpop.f32.mrb[0].mxu0
        %4119 = vdwg.mxu0
        %vm4120 = vcmask 516096
        %v4121 = vsel %vm4120, %v4115, -inf
        %4122 = vmax.xlane.f32.xlu0 %v4121
        %v4123 = vpop.xlane.xlu0 %4122
        %v4124 = vlaneseq
        %v4125 = vand.u32 %v4124, 127
        %vm4126 = vcmp.ge.f32.partialorder %v4115, %v4123
        %v4127 = vsel %vm4126, %v4125, 64
        %v4128 = vsel %vm4120, %v4127, 2147483647
        %v4129 = vand.u32 %v4128, 65535
        %v4130 = vshra.s32 %v4128, 16
        %v4131 = vcvt.s32.f32 %v4129
        %v4132 = vcvt.s32.f32 %v4130
        %4133 = vmin.xlane.f32.xlu0 %v4132
        %v4134 = vpop.xlane.xlu0 %4133
        %vm4135 = vcmp.eq.f32.partialorder %v4132, %v4134
        %v4136 = vsel %vm4135, %v4131, inf
        %4137 = vmin.xlane.f32.xlu0 %v4136
        %v4138 = vpop.xlane.xlu0 %4137
        %v4139 = vcvt.f32.s32 %v4138
        %v4140 = vcvt.f32.s32 %v4134
        %v4141 = vshll.u32 %v4140, 16
        %v4142 = vadd.s32 %v4141, %v4139
        %4143 = vst [vmem:[%s926] sm:$0x1] %v4142
      $region144: #{_albef_device.3} parent=139 // pred_fallthru
        _
      %p4144 = scmp.ge.s32.totalorder %s928, %s929
      // Predicated region
      $region145: #{_albef_device.3} parent=139 // pred_check
        %p4145 = pneg %p4144
      $region146: #{_albef_device.3} parent=139 // pred_check_branch
        %4147 = sbr.rel (%p4145) target = $region148
      $region147: #{_albef_device.3} parent=139 // pred_region
        %4148 = vst [vmem:[%s926] sm:$0x1] 0
      $region148: #{_albef_device.3} parent=139 // pred_fallthru
        _
      %p4149 = scmp.lt.s32.totalorder %s75, 6
      %s4150 = scalar_select %p4149, %s75, 6
      %s4151 = scalar_lea.vmem %s63, %s4150
      // Predicated region
      $region149: #{_albef_device.3} parent=139 // pred_check
        %p4152 = pneg %p728
      $region150: #{_albef_device.3} parent=139 // pred_check_branch
        %4154 = sbr.rel (%p4152) target = $region152
      $region151: #{_albef_device.3} parent=139 // pred_region
        _
      $region152: #{_albef_device.3} parent=139 // pred_fallthru
        _
    $region140: #{_albef_device.3} parent=5 // pred_fallthru
      _
    %p4155 = scmp.le.s32.totalorder 2, %s70
    // Predicated region
    $region153: #{_albef_device.3} parent=5 // pred_check
      %p4156 = pneg %p4155
    $region154: #{_albef_device.3} parent=5 // pred_check_branch
      %4158 = sbr.rel (%p4156) target = $region156
    $region155: #{_albef_device.3} parent=5 // pred_region
      %s4159 = ssub.s32 %s70, 2
      // Predicated region
      $region157: #{_albef_device.3} parent=155 // pred_check
        %p4160 = pneg %p734
      $region158: #{_albef_device.3} parent=155 // pred_check_branch
        %4162 = sbr.rel (%p4160) target = $region160
      $region159: #{_albef_device.3} parent=155 // pred_region
        %p4163 = scmp.lt.s32.totalorder %s76, 6
        %s4164 = scalar_select %p4163, %s76, 6
        %s4165 = scalar_lea.vmem %s63, %s4164
      $region160: #{_albef_device.3} parent=155 // pred_fallthru
        _
    $region156: #{_albef_device.3} parent=5 // pred_fallthru
      _
  $region6: #{_albef_device.3} parent=0 // loop_footer
    %s74 = sadd.s32 1, %s70
  $region7: #{_albef_device.3} parent=0 // loop_footer_branch
    %69 = sbr.rel target = $region3
  $region8: #{_albef_device.3} parent=0 // loop_exit
    _

</llo_original>
